<compile_context>
chip_gen: v7x
topology: tpu7x:2x2x1
jax: 0.10.0
libtpu: 0.0.40
codegen_flags: <defaults>
</compile_context>

<pallas_src>
from functools import partial

import jax
import jax.numpy as jnp
from jax.experimental import pallas as pl
from jax.experimental.pallas import tpu as pltpu


def _vmem_spec():
    # whole-array block resident in VMEM (no grid -> single invocation)
    return pl.BlockSpec(memory_space=pltpu.MemorySpace.VMEM)


# ---------------------------------------------------------------------------
# One fused kernel: BiLSTM -> CNN trio -> heads.
# ---------------------------------------------------------------------------
def fused_model_kernel(x_ref, wih_ref, blstm_ref, whh_ref,
                       wcnn_ref, bcnn_ref, whead_ref, bhead_ref,
                       wfin_ref, bfin_ref,
                       out_ref, lstm_ref):
    f32 = jnp.float32
    bf16 = jnp.bfloat16

    Bp = out_ref.shape[0]                  # sublane-padded batch (multiple of 8)
    TBp = x_ref.shape[0]                   # rows ordered (t outer, b inner)
    T = TBp // Bp
    HL = whh_ref.shape[0] // 2             # lane-padded per-gate width (128)
    GL = 4 * HL                            # per-direction gate block (512)

    def mm(a, w):
        return jnp.dot(a, w, preferred_element_type=f32)

    # ---- LSTM: hoisted input projection (both directions, all gates) --------
    pre = mm(x_ref[...].astype(bf16), wih_ref[...]) + blstm_ref[...]   # (T*Bp, 2*GL) f32

    # zero only the pad row-blocks of the scratch (t = -2, -1 and t = T);
    # every in-range row is fully overwritten by the recurrence below.
    lstm_ref[0:2 * Bp, :] = jnp.zeros((2 * Bp, 2 * HL), f32)
    lstm_ref[(T + 2) * Bp:(T + 3) * Bp, :] = jnp.zeros((Bp, 2 * HL), f32)

    whh = whh_ref[...]                     # (2*HL, 2*GL) bf16, block-diagonal

    h = jnp.zeros((Bp, 2 * HL), f32)       # [h_fwd | h_bwd], 128-lane blocks
    c = jnp.zeros((2 * Bp, HL), f32)       # rows [0:Bp]=c_fwd, [Bp:2Bp]=c_bwd

    # fully unrolled recurrence, fwd & bwd interleaved, ONE MXU matmul per step
    for s in range(T):
        t_f = s
        t_b = T - 1 - s
        rec = mm(h.astype(bf16), whh)                             # (Bp, 2*GL) f32

        # per-timestep slices of `pre` start on 8-row boundaries (full vregs)
        g_f = pre[t_f * Bp:(t_f + 1) * Bp, 0:GL] + rec[:, 0:GL]
        g_b = pre[t_b * Bp:(t_b + 1) * Bp, GL:2 * GL] + rec[:, GL:2 * GL]

        # fuse fwd/bwd nonlinearities: sublane-stack, one sigmoid + one tanh.
        # packed gate order per direction: (i, f, o, g), each 128 lanes wide.
        g = jnp.concatenate([g_f, g_b], axis=0)                   # (2*Bp, GL)
        sig = jax.nn.sigmoid(g[:, 0:3 * HL])                      # i | f | o
        gt = jnp.tanh(g[:, 3 * HL:4 * HL])                        # g
        c = sig[:, HL:2 * HL] * c + sig[:, 0:HL] * gt
        hh = sig[:, 2 * HL:3 * HL] * jnp.tanh(c)                  # (2*Bp, HL)

        # re-assemble persistent hidden state; 128-lane boundary -> free
        h = jnp.concatenate([hh[0:Bp, :], hh[Bp:2 * Bp, :]], axis=1)

        # L[b, t] lives at padded row (t + 2)*Bp + b; fwd lanes 0:HL, bwd HL:2HL
        lstm_ref[(t_f + 2) * Bp:(t_f + 3) * Bp, 0:HL] = hh[0:Bp, :]
        lstm_ref[(t_b + 2) * Bp:(t_b + 3) * Bp, HL:2 * HL] = hh[Bp:2 * Bp, :]

    # ---- CNN trio: 4 accumulated tap matmuls over aligned windows -----------
    # tap k rows (t, b) hold L[b, t - 2 + k]; k*Bp offsets are sublane-aligned.
    acc = jnp.zeros((T * Bp, 3 * HL), f32)
    for k in range(4):
        tap = lstm_ref[k * Bp:(k + T) * Bp, :].astype(bf16)       # (T*Bp, 2*HL)
        acc = acc + mm(tap, wcnn_ref[k])                          # (T*Bp, 3*HL)
    y = jax.nn.relu(acc + bcnn_ref[...])                          # [c2 | c3 | c4]
    s_sum = y[:, 0:HL] + y[:, HL:2 * HL] + y[:, 2 * HL:3 * HL]    # (T*Bp, HL)

    # ---- heads (language == 0 branch) ---------------------------------------
    # regroup (t, b) rows into (Bp, T*HL): every slice is an exact (8,128)
    # vreg tile, so this is pure vreg reassembly (no XLU shuffles).
    s_flat = jnp.concatenate(
        [s_sum[t * Bp:(t + 1) * Bp, :] for t in range(T)], axis=1)   # (Bp, T*HL)

    headout = mm(s_flat.astype(bf16), whead_ref[...]) + bhead_ref[...]  # (Bp, 4*HL)
    final = mm(headout.astype(bf16), wfin_ref[...]) + bfin_ref[...]     # (Bp, HL)

    out_ref[...] = final                  # single unmasked 128-lane-wide store


# ---------------------------------------------------------------------------
# Wrapper: transpose/pad the input to the padded time-major slab, one call.
# ---------------------------------------------------------------------------
@partial(jax.jit, static_argnames=("out_dim",))
def model_forward(x, params, out_dim):
    B, T, D = x.shape
    Bp = ((B + 7) // 8) * 8               # sublane-pad the batch
    HL = 128

    x_tm = jnp.transpose(x, (1, 0, 2))                           # (T, B, D)
    x_tm = jnp.pad(x_tm, ((0, 0), (0, Bp - B), (0, 0)))          # (T, Bp, D)
    x_tm = x_tm.reshape(T * Bp, D)

    final = pl.pallas_call(
        fused_model_kernel,
        out_shape=jax.ShapeDtypeStruct((Bp, HL), jnp.float32),
        in_specs=[_vmem_spec()] * 10,
        out_specs=_vmem_spec(),
        scratch_shapes=[pltpu.VMEM(((T + 3) * Bp, 2 * HL), jnp.float32)],
    )(x_tm, params["wih_all"], params["b_lstm"], params["whh_blk"],
      params["w_cnn"], params["b_cnn"], params["w_head"], params["b_head"],
      params["w_fin"], params["b_fin"])

    cls = final[:B, :out_dim]
    inten = final[:B, out_dim:out_dim + 1]
    return cls, inten


# ---------------------------------------------------------------------------
# Deterministic parameter init (shapes match the nn.Module; xavier-uniform-ish,
# LSTM biases zeroed as in init_weights()), packed + lane/sublane padded and
# cast to bf16 (matmul weights only) for the fused kernel.
# ---------------------------------------------------------------------------
def init_params(key, *, input_dim, seq_len, hidden, output_dim):
    D, T, H, OUT = input_dim, seq_len, hidden, output_dim
    HL = 128                               # lane-padded per-gate / channel block
    GL = 4 * HL
    keys = iter(jax.random.split(key, 64))

    def xavier(shape):
        fan_in, fan_out = shape[-2], shape[-1]
        a = (6.0 / (fan_in + fan_out)) ** 0.5
        return jax.random.uniform(next(keys), shape, jnp.float32, -a, a)

    def bias(shape):
        return jax.random.uniform(next(keys), shape, jnp.float32, -0.1, 0.1)

    order = "ifog"   # packed gate order: sigmoid gates first, tanh gate last

    # ---- LSTM: lane-padded gate blocks, biases zeroed (init_weights) --------
    wih_all = jnp.zeros((D, 2 * GL), jnp.float32)
    whh_blk = jnp.zeros((2 * HL, 2 * GL), jnp.float32)    # block-diag fwd/bwd
    for d in range(2):                                    # 0 = fwd, 1 = bwd
        for gi, _g in enumerate(order):
            col = d * GL + gi * HL
            wih_all = wih_all.at[:, col:col + H].set(xavier((D, H)))
            whh_blk = whh_blk.at[d * HL:d * HL + H, col:col + H].set(
                xavier((H, H)))
    b_lstm = jnp.zeros((1, 2 * GL), jnp.float32)

    # ---- Conv weights: per-tap (2*HL, 3*HL) matrices, cols [c2 | c3 | c4] ----
    def embed2h(w):                        # (2H, H) -> (2*HL, HL) zero-padded
        out = jnp.zeros((2 * HL, HL), jnp.float32)
        out = out.at[0:H, 0:H].set(w[0:H])
        out = out.at[HL:HL + H, 0:H].set(w[H:2 * H])
        return out

    w2 = xavier((2, 2 * H, H)); b2 = bias((1, H))
    w3 = xavier((3, 2 * H, H)); b3 = bias((1, H))
    w4 = xavier((4, 2 * H, H)); b4 = bias((1, H))

    # taps are [L[t-2], L[t-1], L[t], L[t+1]] = k = 0..3
    placement = [
        (1, 0, w2[0]), (2, 0, w2[1]),                                  # conv k=2
        (1, 1, w3[0]), (2, 1, w3[1]), (3, 1, w3[2]),                   # conv k=3
        (0, 2, w4[0]), (1, 2, w4[1]), (2, 2, w4[2]), (3, 2, w4[3]),    # conv k=4
    ]
    w_cnn = jnp.zeros((4, 2 * HL, 3 * HL), jnp.float32)
    for tap, cb, w in placement:
        w_cnn = w_cnn.at[tap, :, cb * HL:(cb + 1) * HL].set(embed2h(w))
    b_cnn = jnp.zeros((1, 3 * HL), jnp.float32)
    b_cnn = b_cnn.at[:, 0:H].set(b2)
    b_cnn = b_cnn.at[:, HL:HL + H].set(b3)
    b_cnn = b_cnn.at[:, 2 * HL:2 * HL + H].set(b4)

    # ---- heads: [hi_cl | sh_cl | hi_in | sh_in], each padded to 128 lanes ----
    w_head = jnp.zeros((T * HL, 4 * HL), jnp.float32)
    b_head = jnp.zeros((1, 4 * HL), jnp.float32)
    for hb in range(4):
        w = xavier((T * H, 100))
        b = bias((1, 100))
        for t in range(T):
            w_head = w_head.at[t * HL:t * HL + H, hb * HL:hb * HL + 100].set(
                w[t * H:(t + 1) * H, :])
        b_head = b_head.at[:, hb * HL:hb * HL + 100].set(b)

    # ---- final projections packed block-diagonal (4*HL, 128) ----------------
    # contraction rows follow headout lane blocks; cols [0:OUT]=cls, [OUT]=int
    wcl = xavier((200, OUT)); bcl = bias((1, OUT))
    win = xavier((200, 1));   bin_ = bias((1, 1))
    w_fin = jnp.zeros((4 * HL, HL), jnp.float32)
    w_fin = w_fin.at[0:100, 0:OUT].set(wcl[0:100])                       # hi_cl
    w_fin = w_fin.at[HL:HL + 100, 0:OUT].set(wcl[100:200])               # sh_cl
    w_fin = w_fin.at[2 * HL:2 * HL + 100, OUT:OUT + 1].set(win[0:100])   # hi_in
    w_fin = w_fin.at[3 * HL:3 * HL + 100, OUT:OUT + 1].set(win[100:200]) # sh_in
    b_fin = jnp.zeros((1, HL), jnp.float32)
    b_fin = b_fin.at[:, 0:OUT].set(bcl)
    b_fin = b_fin.at[:, OUT:OUT + 1].set(bin_)

    bf = jnp.bfloat16
    return dict(
        wih_all=wih_all.astype(bf), b_lstm=b_lstm, whh_blk=whh_blk.astype(bf),
        w_cnn=w_cnn.astype(bf), b_cnn=b_cnn,
        w_head=w_head.astype(bf), b_head=b_head,
        w_fin=w_fin.astype(bf), b_fin=b_fin)


if __name__ == "__main__":
    # small shapes: batch=2, seq_len=8, input_dim=32; hidden_dim=50 and the
    # 100/200-wide heads are fixed by the module; output_dim = len(labels2Idx) = 9.
    B, T, D, H, OUT = 2, 8, 32, 50, 9

    key = jax.random.PRNGKey(0)
    pkey, xkey = jax.random.split(key)
    params = init_params(pkey, input_dim=D, seq_len=T, hidden=H, output_dim=OUT)
    x = jax.random.normal(xkey, (B, T, D), jnp.float32)   # ip[0]; language -> 0

    cls, inten = model_forward(x, params, out_dim=OUT)
    jax.block_until_ready((cls, inten))

    assert cls.shape == (B, OUT) and inten.shape == (B, 1)
    assert bool(jnp.all(jnp.isfinite(cls))) and bool(jnp.all(jnp.isfinite(inten)))
    print("KERNEL_OK")
</pallas_src>

<mosaic_0001>
module attributes {stable_mosaic.version = 11 : i64} {
  func.func @fused_model_kernel(%arg0: memref<64x32xf32, #tpu.memory_space<vmem>>, %arg1: memref<32x1024xbf16, #tpu.memory_space<vmem>>, %arg2: memref<1x1024xf32, #tpu.memory_space<vmem>>, %arg3: memref<256x1024xbf16, #tpu.memory_space<vmem>>, %arg4: memref<4x256x384xbf16, #tpu.memory_space<vmem>>, %arg5: memref<1x384xf32, #tpu.memory_space<vmem>>, %arg6: memref<1024x512xbf16, #tpu.memory_space<vmem>>, %arg7: memref<1x512xf32, #tpu.memory_space<vmem>>, %arg8: memref<512x128xbf16, #tpu.memory_space<vmem>>, %arg9: memref<1x128xf32, #tpu.memory_space<vmem>>, %arg10: memref<8x128xf32, #tpu.memory_space<vmem>>, %arg11: memref<88x256xf32, #tpu.memory_space<vmem>>) attributes {dimension_semantics = [], scalar_prefetch = 0 : i64, scratch_operands = 1 : i64, tpu.core_type = #tpu.core_type<tc>} {
    %c0 = arith.constant 0 : index
    %c0_0 = arith.constant 0 : index
    %0 = vector.load %arg0[%c0, %c0_0] : memref<64x32xf32, #tpu.memory_space<vmem>>, vector<64x32xf32>
    %1 = arith.truncf %0 : vector<64x32xf32> to vector<64x32xbf16>
    %c0_1 = arith.constant 0 : index
    %c0_2 = arith.constant 0 : index
    %2 = vector.load %arg1[%c0_1, %c0_2] : memref<32x1024xbf16, #tpu.memory_space<vmem>>, vector<32x1024xbf16>
    %cst = arith.constant dense<0.000000e+00> : vector<64x1024xf32>
    %3 = tpu.matmul %1, %2, %cst {dimension_numbers = #tpu.dot_dimension_numbers<[1], [0], [0], [1], [0, 0, 1, 1], [], []>} : vector<64x32xbf16>, vector<32x1024xbf16>, vector<64x1024xf32> -> vector<64x1024xf32>
    %c0_3 = arith.constant 0 : index
    %c0_4 = arith.constant 0 : index
    %4 = vector.load %arg2[%c0_3, %c0_4] : memref<1x1024xf32, #tpu.memory_space<vmem>>, vector<1x1024xf32>
    %5 = vector.broadcast %4 : vector<1x1024xf32> to vector<64x1024xf32>
    %6 = arith.addf %3, %5 : vector<64x1024xf32>
    %cst_5 = arith.constant 0.000000e+00 : f32
    %7 = vector.broadcast %cst_5 : f32 to vector<16x256xf32>
    %c0_6 = arith.constant 0 : index
    %c0_7 = arith.constant 0 : index
    %8 = vector.load %arg11[%c0_6, %c0_7] : memref<88x256xf32, #tpu.memory_space<vmem>>, vector<16x256xf32>
    tpu.vector_store %arg11[%c0_6, %c0_7], %7 {strides = array<i32>} : memref<88x256xf32, #tpu.memory_space<vmem>>, vector<16x256xf32>,
    %cst_8 = arith.constant 0.000000e+00 : f32
    %9 = vector.broadcast %cst_8 : f32 to vector<8x256xf32>
    %c80 = arith.constant 80 : index
    %c0_9 = arith.constant 0 : index
    %10 = vector.load %arg11[%c80, %c0_9] : memref<88x256xf32, #tpu.memory_space<vmem>>, vector<8x256xf32>
    tpu.vector_store %arg11[%c80, %c0_9], %9 {strides = array<i32>} : memref<88x256xf32, #tpu.memory_space<vmem>>, vector<8x256xf32>,
    %c0_10 = arith.constant 0 : index
    %c0_11 = arith.constant 0 : index
    %11 = vector.load %arg3[%c0_10, %c0_11] : memref<256x1024xbf16, #tpu.memory_space<vmem>>, vector<256x1024xbf16>
    %cst_12 = arith.constant 0.000000e+00 : f32
    %12 = vector.broadcast %cst_12 : f32 to vector<8x256xf32>
    %cst_13 = arith.constant 0.000000e+00 : f32
    %13 = vector.broadcast %cst_13 : f32 to vector<16x128xf32>
    %14 = arith.truncf %12 : vector<8x256xf32> to vector<8x256xbf16>
    %cst_14 = arith.constant dense<0.000000e+00> : vector<8x1024xf32>
    %15 = tpu.matmul %14, %11, %cst_14 {dimension_numbers = #tpu.dot_dimension_numbers<[1], [0], [0], [1], [0, 0, 1, 1], [], []>} : vector<8x256xbf16>, vector<256x1024xbf16>, vector<8x1024xf32> -> vector<8x1024xf32>
    %16 = vector.extract_strided_slice %6 {offsets = [0, 0], sizes = [8, 512], strides = [1, 1]} : vector<64x1024xf32> to vector<8x512xf32>
    %17 = vector.extract_strided_slice %15 {offsets = [0, 0], sizes = [8, 512], strides = [1, 1]} : vector<8x1024xf32> to vector<8x512xf32>
    %18 = arith.addf %16, %17 : vector<8x512xf32>
    %19 = vector.extract_strided_slice %6 {offsets = [56, 512], sizes = [8, 512], strides = [1, 1]} : vector<64x1024xf32> to vector<8x512xf32>
    %20 = vector.extract_strided_slice %15 {offsets = [0, 512], sizes = [8, 512], strides = [1, 1]} : vector<8x1024xf32> to vector<8x512xf32>
    %21 = arith.addf %19, %20 : vector<8x512xf32>
    %22 = tpu.concatenate %18, %21 in 0 : vector<8x512xf32>, vector<8x512xf32> -> vector<16x512xf32>
    %23 = vector.extract_strided_slice %22 {offsets = [0, 0], sizes = [16, 384], strides = [1, 1]} : vector<16x512xf32> to vector<16x384xf32>
    %24 = arith.negf %23 : vector<16x384xf32>
    %25 = math.exp %24 : vector<16x384xf32>
    %cst_15 = arith.constant 1.000000e+00 : f32
    %26 = vector.broadcast %cst_15 : f32 to vector<16x384xf32>
    %27 = arith.addf %26, %25 : vector<16x384xf32>
    %28 = arith.divf %26, %27 : vector<16x384xf32>
    %29 = vector.extract_strided_slice %22 {offsets = [0, 384], sizes = [16, 128], strides = [1, 1]} : vector<16x512xf32> to vector<16x128xf32>
    %30 = math.tanh %29 : vector<16x128xf32>
    %31 = vector.extract_strided_slice %28 {offsets = [0, 128], sizes = [16, 128], strides = [1, 1]} : vector<16x384xf32> to vector<16x128xf32>
    %32 = arith.mulf %31, %13 : vector<16x128xf32>
    %33 = vector.extract_strided_slice %28 {offsets = [0, 0], sizes = [16, 128], strides = [1, 1]} : vector<16x384xf32> to vector<16x128xf32>
    %34 = arith.mulf %33, %30 : vector<16x128xf32>
    %35 = arith.addf %32, %34 : vector<16x128xf32>
    %36 = vector.extract_strided_slice %28 {offsets = [0, 256], sizes = [16, 128], strides = [1, 1]} : vector<16x384xf32> to vector<16x128xf32>
    %37 = math.tanh %35 : vector<16x128xf32>
    %38 = arith.mulf %36, %37 : vector<16x128xf32>
    %39 = vector.extract_strided_slice %38 {offsets = [0, 0], sizes = [8, 128], strides = [1, 1]} : vector<16x128xf32> to vector<8x128xf32>
    %40 = vector.extract_strided_slice %38 {offsets = [8, 0], sizes = [8, 128], strides = [1, 1]} : vector<16x128xf32> to vector<8x128xf32>
    %41 = tpu.concatenate %39, %40 in 1 : vector<8x128xf32>, vector<8x128xf32> -> vector<8x256xf32>
    %42 = vector.extract_strided_slice %38 {offsets = [0, 0], sizes = [8, 128], strides = [1, 1]} : vector<16x128xf32> to vector<8x128xf32>
    %c16 = arith.constant 16 : index
    %c0_16 = arith.constant 0 : index
    %43 = vector.load %arg11[%c16, %c0_16] : memref<88x256xf32, #tpu.memory_space<vmem>>, vector<8x128xf32>
    tpu.vector_store %arg11[%c16, %c0_16], %42 {strides = array<i32>} : memref<88x256xf32, #tpu.memory_space<vmem>>, vector<8x128xf32>,
    %44 = vector.extract_strided_slice %38 {offsets = [8, 0], sizes = [8, 128], strides = [1, 1]} : vector<16x128xf32> to vector<8x128xf32>
    %c72 = arith.constant 72 : index
    %c128 = arith.constant 128 : index
    %45 = vector.load %arg11[%c72, %c128] : memref<88x256xf32, #tpu.memory_space<vmem>>, vector<8x128xf32>
    tpu.vector_store %arg11[%c72, %c128], %44 {strides = array<i32>} : memref<88x256xf32, #tpu.memory_space<vmem>>, vector<8x128xf32>,
    %46 = arith.truncf %41 : vector<8x256xf32> to vector<8x256xbf16>
    %cst_17 = arith.constant dense<0.000000e+00> : vector<8x1024xf32>
    %47 = tpu.matmul %46, %11, %cst_17 {dimension_numbers = #tpu.dot_dimension_numbers<[1], [0], [0], [1], [0, 0, 1, 1], [], []>} : vector<8x256xbf16>, vector<256x1024xbf16>, vector<8x1024xf32> -> vector<8x1024xf32>
    %48 = vector.extract_strided_slice %6 {offsets = [8, 0], sizes = [8, 512], strides = [1, 1]} : vector<64x1024xf32> to vector<8x512xf32>
    %49 = vector.extract_strided_slice %47 {offsets = [0, 0], sizes = [8, 512], strides = [1, 1]} : vector<8x1024xf32> to vector<8x512xf32>
    %50 = arith.addf %48, %49 : vector<8x512xf32>
    %51 = vector.extract_strided_slice %6 {offsets = [48, 512], sizes = [8, 512], strides = [1, 1]} : vector<64x1024xf32> to vector<8x512xf32>
    %52 = vector.extract_strided_slice %47 {offsets = [0, 512], sizes = [8, 512], strides = [1, 1]} : vector<8x1024xf32> to vector<8x512xf32>
    %53 = arith.addf %51, %52 : vector<8x512xf32>
    %54 = tpu.concatenate %50, %53 in 0 : vector<8x512xf32>, vector<8x512xf32> -> vector<16x512xf32>
    %55 = vector.extract_strided_slice %54 {offsets = [0, 0], sizes = [16, 384], strides = [1, 1]} : vector<16x512xf32> to vector<16x384xf32>
    %56 = arith.negf %55 : vector<16x384xf32>
    %57 = math.exp %56 : vector<16x384xf32>
    %cst_18 = arith.constant 1.000000e+00 : f32
    %58 = vector.broadcast %cst_18 : f32 to vector<16x384xf32>
    %59 = arith.addf %58, %57 : vector<16x384xf32>
    %60 = arith.divf %58, %59 : vector<16x384xf32>
    %61 = vector.extract_strided_slice %54 {offsets = [0, 384], sizes = [16, 128], strides = [1, 1]} : vector<16x512xf32> to vector<16x128xf32>
    %62 = math.tanh %61 : vector<16x128xf32>
    %63 = vector.extract_strided_slice %60 {offsets = [0, 128], sizes = [16, 128], strides = [1, 1]} : vector<16x384xf32> to vector<16x128xf32>
    %64 = arith.mulf %63, %35 : vector<16x128xf32>
    %65 = vector.extract_strided_slice %60 {offsets = [0, 0], sizes = [16, 128], strides = [1, 1]} : vector<16x384xf32> to vector<16x128xf32>
    %66 = arith.mulf %65, %62 : vector<16x128xf32>
    %67 = arith.addf %64, %66 : vector<16x128xf32>
    %68 = vector.extract_strided_slice %60 {offsets = [0, 256], sizes = [16, 128], strides = [1, 1]} : vector<16x384xf32> to vector<16x128xf32>
    %69 = math.tanh %67 : vector<16x128xf32>
    %70 = arith.mulf %68, %69 : vector<16x128xf32>
    %71 = vector.extract_strided_slice %70 {offsets = [0, 0], sizes = [8, 128], strides = [1, 1]} : vector<16x128xf32> to vector<8x128xf32>
    %72 = vector.extract_strided_slice %70 {offsets = [8, 0], sizes = [8, 128], strides = [1, 1]} : vector<16x128xf32> to vector<8x128xf32>
    %73 = tpu.concatenate %71, %72 in 1 : vector<8x128xf32>, vector<8x128xf32> -> vector<8x256xf32>
    %74 = vector.extract_strided_slice %70 {offsets = [0, 0], sizes = [8, 128], strides = [1, 1]} : vector<16x128xf32> to vector<8x128xf32>
    %c24 = arith.constant 24 : index
    %c0_19 = arith.constant 0 : index
    %75 = vector.load %arg11[%c24, %c0_19] : memref<88x256xf32, #tpu.memory_space<vmem>>, vector<8x128xf32>
    tpu.vector_store %arg11[%c24, %c0_19], %74 {strides = array<i32>} : memref<88x256xf32, #tpu.memory_space<vmem>>, vector<8x128xf32>,
    %76 = vector.extract_strided_slice %70 {offsets = [8, 0], sizes = [8, 128], strides = [1, 1]} : vector<16x128xf32> to vector<8x128xf32>
    %c64 = arith.constant 64 : index
    %c128_20 = arith.constant 128 : index
    %77 = vector.load %arg11[%c64, %c128_20] : memref<88x256xf32, #tpu.memory_space<vmem>>, vector<8x128xf32>
    tpu.vector_store %arg11[%c64, %c128_20], %76 {strides = array<i32>} : memref<88x256xf32, #tpu.memory_space<vmem>>, vector<8x128xf32>,
    %78 = arith.truncf %73 : vector<8x256xf32> to vector<8x256xbf16>
    %cst_21 = arith.constant dense<0.000000e+00> : vector<8x1024xf32>
    %79 = tpu.matmul %78, %11, %cst_21 {dimension_numbers = #tpu.dot_dimension_numbers<[1], [0], [0], [1], [0, 0, 1, 1], [], []>} : vector<8x256xbf16>, vector<256x1024xbf16>, vector<8x1024xf32> -> vector<8x1024xf32>
    %80 = vector.extract_strided_slice %6 {offsets = [16, 0], sizes = [8, 512], strides = [1, 1]} : vector<64x1024xf32> to vector<8x512xf32>
    %81 = vector.extract_strided_slice %79 {offsets = [0, 0], sizes = [8, 512], strides = [1, 1]} : vector<8x1024xf32> to vector<8x512xf32>
    %82 = arith.addf %80, %81 : vector<8x512xf32>
    %83 = vector.extract_strided_slice %6 {offsets = [40, 512], sizes = [8, 512], strides = [1, 1]} : vector<64x1024xf32> to vector<8x512xf32>
    %84 = vector.extract_strided_slice %79 {offsets = [0, 512], sizes = [8, 512], strides = [1, 1]} : vector<8x1024xf32> to vector<8x512xf32>
    %85 = arith.addf %83, %84 : vector<8x512xf32>
    %86 = tpu.concatenate %82, %85 in 0 : vector<8x512xf32>, vector<8x512xf32> -> vector<16x512xf32>
    %87 = vector.extract_strided_slice %86 {offsets = [0, 0], sizes = [16, 384], strides = [1, 1]} : vector<16x512xf32> to vector<16x384xf32>
    %88 = arith.negf %87 : vector<16x384xf32>
    %89 = math.exp %88 : vector<16x384xf32>
    %cst_22 = arith.constant 1.000000e+00 : f32
    %90 = vector.broadcast %cst_22 : f32 to vector<16x384xf32>
    %91 = arith.addf %90, %89 : vector<16x384xf32>
    %92 = arith.divf %90, %91 : vector<16x384xf32>
    %93 = vector.extract_strided_slice %86 {offsets = [0, 384], sizes = [16, 128], strides = [1, 1]} : vector<16x512xf32> to vector<16x128xf32>
    %94 = math.tanh %93 : vector<16x128xf32>
    %95 = vector.extract_strided_slice %92 {offsets = [0, 128], sizes = [16, 128], strides = [1, 1]} : vector<16x384xf32> to vector<16x128xf32>
    %96 = arith.mulf %95, %67 : vector<16x128xf32>
    %97 = vector.extract_strided_slice %92 {offsets = [0, 0], sizes = [16, 128], strides = [1, 1]} : vector<16x384xf32> to vector<16x128xf32>
    %98 = arith.mulf %97, %94 : vector<16x128xf32>
    %99 = arith.addf %96, %98 : vector<16x128xf32>
    %100 = vector.extract_strided_slice %92 {offsets = [0, 256], sizes = [16, 128], strides = [1, 1]} : vector<16x384xf32> to vector<16x128xf32>
    %101 = math.tanh %99 : vector<16x128xf32>
    %102 = arith.mulf %100, %101 : vector<16x128xf32>
    %103 = vector.extract_strided_slice %102 {offsets = [0, 0], sizes = [8, 128], strides = [1, 1]} : vector<16x128xf32> to vector<8x128xf32>
    %104 = vector.extract_strided_slice %102 {offsets = [8, 0], sizes = [8, 128], strides = [1, 1]} : vector<16x128xf32> to vector<8x128xf32>
    %105 = tpu.concatenate %103, %104 in 1 : vector<8x128xf32>, vector<8x128xf32> -> vector<8x256xf32>
    %106 = vector.extract_strided_slice %102 {offsets = [0, 0], sizes = [8, 128], strides = [1, 1]} : vector<16x128xf32> to vector<8x128xf32>
    %c32 = arith.constant 32 : index
    %c0_23 = arith.constant 0 : index
    %107 = vector.load %arg11[%c32, %c0_23] : memref<88x256xf32, #tpu.memory_space<vmem>>, vector<8x128xf32>
    tpu.vector_store %arg11[%c32, %c0_23], %106 {strides = array<i32>} : memref<88x256xf32, #tpu.memory_space<vmem>>, vector<8x128xf32>,
    %108 = vector.extract_strided_slice %102 {offsets = [8, 0], sizes = [8, 128], strides = [1, 1]} : vector<16x128xf32> to vector<8x128xf32>
    %c56 = arith.constant 56 : index
    %c128_24 = arith.constant 128 : index
    %109 = vector.load %arg11[%c56, %c128_24] : memref<88x256xf32, #tpu.memory_space<vmem>>, vector<8x128xf32>
    tpu.vector_store %arg11[%c56, %c128_24], %108 {strides = array<i32>} : memref<88x256xf32, #tpu.memory_space<vmem>>, vector<8x128xf32>,
    %110 = arith.truncf %105 : vector<8x256xf32> to vector<8x256xbf16>
    %cst_25 = arith.constant dense<0.000000e+00> : vector<8x1024xf32>
    %111 = tpu.matmul %110, %11, %cst_25 {dimension_numbers = #tpu.dot_dimension_numbers<[1], [0], [0], [1], [0, 0, 1, 1], [], []>} : vector<8x256xbf16>, vector<256x1024xbf16>, vector<8x1024xf32> -> vector<8x1024xf32>
    %112 = vector.extract_strided_slice %6 {offsets = [24, 0], sizes = [8, 512], strides = [1, 1]} : vector<64x1024xf32> to vector<8x512xf32>
    %113 = vector.extract_strided_slice %111 {offsets = [0, 0], sizes = [8, 512], strides = [1, 1]} : vector<8x1024xf32> to vector<8x512xf32>
    %114 = arith.addf %112, %113 : vector<8x512xf32>
    %115 = vector.extract_strided_slice %6 {offsets = [32, 512], sizes = [8, 512], strides = [1, 1]} : vector<64x1024xf32> to vector<8x512xf32>
    %116 = vector.extract_strided_slice %111 {offsets = [0, 512], sizes = [8, 512], strides = [1, 1]} : vector<8x1024xf32> to vector<8x512xf32>
    %117 = arith.addf %115, %116 : vector<8x512xf32>
    %118 = tpu.concatenate %114, %117 in 0 : vector<8x512xf32>, vector<8x512xf32> -> vector<16x512xf32>
    %119 = vector.extract_strided_slice %118 {offsets = [0, 0], sizes = [16, 384], strides = [1, 1]} : vector<16x512xf32> to vector<16x384xf32>
    %120 = arith.negf %119 : vector<16x384xf32>
    %121 = math.exp %120 : vector<16x384xf32>
    %cst_26 = arith.constant 1.000000e+00 : f32
    %122 = vector.broadcast %cst_26 : f32 to vector<16x384xf32>
    %123 = arith.addf %122, %121 : vector<16x384xf32>
    %124 = arith.divf %122, %123 : vector<16x384xf32>
    %125 = vector.extract_strided_slice %118 {offsets = [0, 384], sizes = [16, 128], strides = [1, 1]} : vector<16x512xf32> to vector<16x128xf32>
    %126 = math.tanh %125 : vector<16x128xf32>
    %127 = vector.extract_strided_slice %124 {offsets = [0, 128], sizes = [16, 128], strides = [1, 1]} : vector<16x384xf32> to vector<16x128xf32>
    %128 = arith.mulf %127, %99 : vector<16x128xf32>
    %129 = vector.extract_strided_slice %124 {offsets = [0, 0], sizes = [16, 128], strides = [1, 1]} : vector<16x384xf32> to vector<16x128xf32>
    %130 = arith.mulf %129, %126 : vector<16x128xf32>
    %131 = arith.addf %128, %130 : vector<16x128xf32>
    %132 = vector.extract_strided_slice %124 {offsets = [0, 256], sizes = [16, 128], strides = [1, 1]} : vector<16x384xf32> to vector<16x128xf32>
    %133 = math.tanh %131 : vector<16x128xf32>
    %134 = arith.mulf %132, %133 : vector<16x128xf32>
    %135 = vector.extract_strided_slice %134 {offsets = [0, 0], sizes = [8, 128], strides = [1, 1]} : vector<16x128xf32> to vector<8x128xf32>
    %136 = vector.extract_strided_slice %134 {offsets = [8, 0], sizes = [8, 128], strides = [1, 1]} : vector<16x128xf32> to vector<8x128xf32>
    %137 = tpu.concatenate %135, %136 in 1 : vector<8x128xf32>, vector<8x128xf32> -> vector<8x256xf32>
    %138 = vector.extract_strided_slice %134 {offsets = [0, 0], sizes = [8, 128], strides = [1, 1]} : vector<16x128xf32> to vector<8x128xf32>
    %c40 = arith.constant 40 : index
    %c0_27 = arith.constant 0 : index
    %139 = vector.load %arg11[%c40, %c0_27] : memref<88x256xf32, #tpu.memory_space<vmem>>, vector<8x128xf32>
    tpu.vector_store %arg11[%c40, %c0_27], %138 {strides = array<i32>} : memref<88x256xf32, #tpu.memory_space<vmem>>, vector<8x128xf32>,
    %140 = vector.extract_strided_slice %134 {offsets = [8, 0], sizes = [8, 128], strides = [1, 1]} : vector<16x128xf32> to vector<8x128xf32>
    %c48 = arith.constant 48 : index
    %c128_28 = arith.constant 128 : index
    %141 = vector.load %arg11[%c48, %c128_28] : memref<88x256xf32, #tpu.memory_space<vmem>>, vector<8x128xf32>
    tpu.vector_store %arg11[%c48, %c128_28], %140 {strides = array<i32>} : memref<88x256xf32, #tpu.memory_space<vmem>>, vector<8x128xf32>,
    %142 = arith.truncf %137 : vector<8x256xf32> to vector<8x256xbf16>
    %cst_29 = arith.constant dense<0.000000e+00> : vector<8x1024xf32>
    %143 = tpu.matmul %142, %11, %cst_29 {dimension_numbers = #tpu.dot_dimension_numbers<[1], [0], [0], [1], [0, 0, 1, 1], [], []>} : vector<8x256xbf16>, vector<256x1024xbf16>, vector<8x1024xf32> -> vector<8x1024xf32>
    %144 = vector.extract_strided_slice %6 {offsets = [32, 0], sizes = [8, 512], strides = [1, 1]} : vector<64x1024xf32> to vector<8x512xf32>
    %145 = vector.extract_strided_slice %143 {offsets = [0, 0], sizes = [8, 512], strides = [1, 1]} : vector<8x1024xf32> to vector<8x512xf32>
    %146 = arith.addf %144, %145 : vector<8x512xf32>
    %147 = vector.extract_strided_slice %6 {offsets = [24, 512], sizes = [8, 512], strides = [1, 1]} : vector<64x1024xf32> to vector<8x512xf32>
    %148 = vector.extract_strided_slice %143 {offsets = [0, 512], sizes = [8, 512], strides = [1, 1]} : vector<8x1024xf32> to vector<8x512xf32>
    %149 = arith.addf %147, %148 : vector<8x512xf32>
    %150 = tpu.concatenate %146, %149 in 0 : vector<8x512xf32>, vector<8x512xf32> -> vector<16x512xf32>
    %151 = vector.extract_strided_slice %150 {offsets = [0, 0], sizes = [16, 384], strides = [1, 1]} : vector<16x512xf32> to vector<16x384xf32>
    %152 = arith.negf %151 : vector<16x384xf32>
    %153 = math.exp %152 : vector<16x384xf32>
    %cst_30 = arith.constant 1.000000e+00 : f32
    %154 = vector.broadcast %cst_30 : f32 to vector<16x384xf32>
    %155 = arith.addf %154, %153 : vector<16x384xf32>
    %156 = arith.divf %154, %155 : vector<16x384xf32>
    %157 = vector.extract_strided_slice %150 {offsets = [0, 384], sizes = [16, 128], strides = [1, 1]} : vector<16x512xf32> to vector<16x128xf32>
    %158 = math.tanh %157 : vector<16x128xf32>
    %159 = vector.extract_strided_slice %156 {offsets = [0, 128], sizes = [16, 128], strides = [1, 1]} : vector<16x384xf32> to vector<16x128xf32>
    %160 = arith.mulf %159, %131 : vector<16x128xf32>
    %161 = vector.extract_strided_slice %156 {offsets = [0, 0], sizes = [16, 128], strides = [1, 1]} : vector<16x384xf32> to vector<16x128xf32>
    %162 = arith.mulf %161, %158 : vector<16x128xf32>
    %163 = arith.addf %160, %162 : vector<16x128xf32>
    %164 = vector.extract_strided_slice %156 {offsets = [0, 256], sizes = [16, 128], strides = [1, 1]} : vector<16x384xf32> to vector<16x128xf32>
    %165 = math.tanh %163 : vector<16x128xf32>
    %166 = arith.mulf %164, %165 : vector<16x128xf32>
    %167 = vector.extract_strided_slice %166 {offsets = [0, 0], sizes = [8, 128], strides = [1, 1]} : vector<16x128xf32> to vector<8x128xf32>
    %168 = vector.extract_strided_slice %166 {offsets = [8, 0], sizes = [8, 128], strides = [1, 1]} : vector<16x128xf32> to vector<8x128xf32>
    %169 = tpu.concatenate %167, %168 in 1 : vector<8x128xf32>, vector<8x128xf32> -> vector<8x256xf32>
    %170 = vector.extract_strided_slice %166 {offsets = [0, 0], sizes = [8, 128], strides = [1, 1]} : vector<16x128xf32> to vector<8x128xf32>
    %c48_31 = arith.constant 48 : index
    %c0_32 = arith.constant 0 : index
    %171 = vector.load %arg11[%c48_31, %c0_32] : memref<88x256xf32, #tpu.memory_space<vmem>>, vector<8x128xf32>
    tpu.vector_store %arg11[%c48_31, %c0_32], %170 {strides = array<i32>} : memref<88x256xf32, #tpu.memory_space<vmem>>, vector<8x128xf32>,
    %172 = vector.extract_strided_slice %166 {offsets = [8, 0], sizes = [8, 128], strides = [1, 1]} : vector<16x128xf32> to vector<8x128xf32>
    %c40_33 = arith.constant 40 : index
    %c128_34 = arith.constant 128 : index
    %173 = vector.load %arg11[%c40_33, %c128_34] : memref<88x256xf32, #tpu.memory_space<vmem>>, vector<8x128xf32>
    tpu.vector_store %arg11[%c40_33, %c128_34], %172 {strides = array<i32>} : memref<88x256xf32, #tpu.memory_space<vmem>>, vector<8x128xf32>,
    %174 = arith.truncf %169 : vector<8x256xf32> to vector<8x256xbf16>
    %cst_35 = arith.constant dense<0.000000e+00> : vector<8x1024xf32>
    %175 = tpu.matmul %174, %11, %cst_35 {dimension_numbers = #tpu.dot_dimension_numbers<[1], [0], [0], [1], [0, 0, 1, 1], [], []>} : vector<8x256xbf16>, vector<256x1024xbf16>, vector<8x1024xf32> -> vector<8x1024xf32>
    %176 = vector.extract_strided_slice %6 {offsets = [40, 0], sizes = [8, 512], strides = [1, 1]} : vector<64x1024xf32> to vector<8x512xf32>
    %177 = vector.extract_strided_slice %175 {offsets = [0, 0], sizes = [8, 512], strides = [1, 1]} : vector<8x1024xf32> to vector<8x512xf32>
    %178 = arith.addf %176, %177 : vector<8x512xf32>
    %179 = vector.extract_strided_slice %6 {offsets = [16, 512], sizes = [8, 512], strides = [1, 1]} : vector<64x1024xf32> to vector<8x512xf32>
    %180 = vector.extract_strided_slice %175 {offsets = [0, 512], sizes = [8, 512], strides = [1, 1]} : vector<8x1024xf32> to vector<8x512xf32>
    %181 = arith.addf %179, %180 : vector<8x512xf32>
    %182 = tpu.concatenate %178, %181 in 0 : vector<8x512xf32>, vector<8x512xf32> -> vector<16x512xf32>
    %183 = vector.extract_strided_slice %182 {offsets = [0, 0], sizes = [16, 384], strides = [1, 1]} : vector<16x512xf32> to vector<16x384xf32>
    %184 = arith.negf %183 : vector<16x384xf32>
    %185 = math.exp %184 : vector<16x384xf32>
    %cst_36 = arith.constant 1.000000e+00 : f32
    %186 = vector.broadcast %cst_36 : f32 to vector<16x384xf32>
    %187 = arith.addf %186, %185 : vector<16x384xf32>
    %188 = arith.divf %186, %187 : vector<16x384xf32>
    %189 = vector.extract_strided_slice %182 {offsets = [0, 384], sizes = [16, 128], strides = [1, 1]} : vector<16x512xf32> to vector<16x128xf32>
    %190 = math.tanh %189 : vector<16x128xf32>
    %191 = vector.extract_strided_slice %188 {offsets = [0, 128], sizes = [16, 128], strides = [1, 1]} : vector<16x384xf32> to vector<16x128xf32>
    %192 = arith.mulf %191, %163 : vector<16x128xf32>
    %193 = vector.extract_strided_slice %188 {offsets = [0, 0], sizes = [16, 128], strides = [1, 1]} : vector<16x384xf32> to vector<16x128xf32>
    %194 = arith.mulf %193, %190 : vector<16x128xf32>
    %195 = arith.addf %192, %194 : vector<16x128xf32>
    %196 = vector.extract_strided_slice %188 {offsets = [0, 256], sizes = [16, 128], strides = [1, 1]} : vector<16x384xf32> to vector<16x128xf32>
    %197 = math.tanh %195 : vector<16x128xf32>
    %198 = arith.mulf %196, %197 : vector<16x128xf32>
    %199 = vector.extract_strided_slice %198 {offsets = [0, 0], sizes = [8, 128], strides = [1, 1]} : vector<16x128xf32> to vector<8x128xf32>
    %200 = vector.extract_strided_slice %198 {offsets = [8, 0], sizes = [8, 128], strides = [1, 1]} : vector<16x128xf32> to vector<8x128xf32>
    %201 = tpu.concatenate %199, %200 in 1 : vector<8x128xf32>, vector<8x128xf32> -> vector<8x256xf32>
    %202 = vector.extract_strided_slice %198 {offsets = [0, 0], sizes = [8, 128], strides = [1, 1]} : vector<16x128xf32> to vector<8x128xf32>
    %c56_37 = arith.constant 56 : index
    %c0_38 = arith.constant 0 : index
    %203 = vector.load %arg11[%c56_37, %c0_38] : memref<88x256xf32, #tpu.memory_space<vmem>>, vector<8x128xf32>
    tpu.vector_store %arg11[%c56_37, %c0_38], %202 {strides = array<i32>} : memref<88x256xf32, #tpu.memory_space<vmem>>, vector<8x128xf32>,
    %204 = vector.extract_strided_slice %198 {offsets = [8, 0], sizes = [8, 128], strides = [1, 1]} : vector<16x128xf32> to vector<8x128xf32>
    %c32_39 = arith.constant 32 : index
    %c128_40 = arith.constant 128 : index
    %205 = vector.load %arg11[%c32_39, %c128_40] : memref<88x256xf32, #tpu.memory_space<vmem>>, vector<8x128xf32>
    tpu.vector_store %arg11[%c32_39, %c128_40], %204 {strides = array<i32>} : memref<88x256xf32, #tpu.memory_space<vmem>>, vector<8x128xf32>,
    %206 = arith.truncf %201 : vector<8x256xf32> to vector<8x256xbf16>
    %cst_41 = arith.constant dense<0.000000e+00> : vector<8x1024xf32>
    %207 = tpu.matmul %206, %11, %cst_41 {dimension_numbers = #tpu.dot_dimension_numbers<[1], [0], [0], [1], [0, 0, 1, 1], [], []>} : vector<8x256xbf16>, vector<256x1024xbf16>, vector<8x1024xf32> -> vector<8x1024xf32>
    %208 = vector.extract_strided_slice %6 {offsets = [48, 0], sizes = [8, 512], strides = [1, 1]} : vector<64x1024xf32> to vector<8x512xf32>
    %209 = vector.extract_strided_slice %207 {offsets = [0, 0], sizes = [8, 512], strides = [1, 1]} : vector<8x1024xf32> to vector<8x512xf32>
    %210 = arith.addf %208, %209 : vector<8x512xf32>
    %211 = vector.extract_strided_slice %6 {offsets = [8, 512], sizes = [8, 512], strides = [1, 1]} : vector<64x1024xf32> to vector<8x512xf32>
    %212 = vector.extract_strided_slice %207 {offsets = [0, 512], sizes = [8, 512], strides = [1, 1]} : vector<8x1024xf32> to vector<8x512xf32>
    %213 = arith.addf %211, %212 : vector<8x512xf32>
    %214 = tpu.concatenate %210, %213 in 0 : vector<8x512xf32>, vector<8x512xf32> -> vector<16x512xf32>
    %215 = vector.extract_strided_slice %214 {offsets = [0, 0], sizes = [16, 384], strides = [1, 1]} : vector<16x512xf32> to vector<16x384xf32>
    %216 = arith.negf %215 : vector<16x384xf32>
    %217 = math.exp %216 : vector<16x384xf32>
    %cst_42 = arith.constant 1.000000e+00 : f32
    %218 = vector.broadcast %cst_42 : f32 to vector<16x384xf32>
    %219 = arith.addf %218, %217 : vector<16x384xf32>
    %220 = arith.divf %218, %219 : vector<16x384xf32>
    %221 = vector.extract_strided_slice %214 {offsets = [0, 384], sizes = [16, 128], strides = [1, 1]} : vector<16x512xf32> to vector<16x128xf32>
    %222 = math.tanh %221 : vector<16x128xf32>
    %223 = vector.extract_strided_slice %220 {offsets = [0, 128], sizes = [16, 128], strides = [1, 1]} : vector<16x384xf32> to vector<16x128xf32>
    %224 = arith.mulf %223, %195 : vector<16x128xf32>
    %225 = vector.extract_strided_slice %220 {offsets = [0, 0], sizes = [16, 128], strides = [1, 1]} : vector<16x384xf32> to vector<16x128xf32>
    %226 = arith.mulf %225, %222 : vector<16x128xf32>
    %227 = arith.addf %224, %226 : vector<16x128xf32>
    %228 = vector.extract_strided_slice %220 {offsets = [0, 256], sizes = [16, 128], strides = [1, 1]} : vector<16x384xf32> to vector<16x128xf32>
    %229 = math.tanh %227 : vector<16x128xf32>
    %230 = arith.mulf %228, %229 : vector<16x128xf32>
    %231 = vector.extract_strided_slice %230 {offsets = [0, 0], sizes = [8, 128], strides = [1, 1]} : vector<16x128xf32> to vector<8x128xf32>
    %232 = vector.extract_strided_slice %230 {offsets = [8, 0], sizes = [8, 128], strides = [1, 1]} : vector<16x128xf32> to vector<8x128xf32>
    %233 = tpu.concatenate %231, %232 in 1 : vector<8x128xf32>, vector<8x128xf32> -> vector<8x256xf32>
    %234 = vector.extract_strided_slice %230 {offsets = [0, 0], sizes = [8, 128], strides = [1, 1]} : vector<16x128xf32> to vector<8x128xf32>
    %c64_43 = arith.constant 64 : index
    %c0_44 = arith.constant 0 : index
    %235 = vector.load %arg11[%c64_43, %c0_44] : memref<88x256xf32, #tpu.memory_space<vmem>>, vector<8x128xf32>
    tpu.vector_store %arg11[%c64_43, %c0_44], %234 {strides = array<i32>} : memref<88x256xf32, #tpu.memory_space<vmem>>, vector<8x128xf32>,
    %236 = vector.extract_strided_slice %230 {offsets = [8, 0], sizes = [8, 128], strides = [1, 1]} : vector<16x128xf32> to vector<8x128xf32>
    %c24_45 = arith.constant 24 : index
    %c128_46 = arith.constant 128 : index
    %237 = vector.load %arg11[%c24_45, %c128_46] : memref<88x256xf32, #tpu.memory_space<vmem>>, vector<8x128xf32>
    tpu.vector_store %arg11[%c24_45, %c128_46], %236 {strides = array<i32>} : memref<88x256xf32, #tpu.memory_space<vmem>>, vector<8x128xf32>,
    %238 = arith.truncf %233 : vector<8x256xf32> to vector<8x256xbf16>
    %cst_47 = arith.constant dense<0.000000e+00> : vector<8x1024xf32>
    %239 = tpu.matmul %238, %11, %cst_47 {dimension_numbers = #tpu.dot_dimension_numbers<[1], [0], [0], [1], [0, 0, 1, 1], [], []>} : vector<8x256xbf16>, vector<256x1024xbf16>, vector<8x1024xf32> -> vector<8x1024xf32>
    %240 = vector.extract_strided_slice %6 {offsets = [56, 0], sizes = [8, 512], strides = [1, 1]} : vector<64x1024xf32> to vector<8x512xf32>
    %241 = vector.extract_strided_slice %239 {offsets = [0, 0], sizes = [8, 512], strides = [1, 1]} : vector<8x1024xf32> to vector<8x512xf32>
    %242 = arith.addf %240, %241 : vector<8x512xf32>
    %243 = vector.extract_strided_slice %6 {offsets = [0, 512], sizes = [8, 512], strides = [1, 1]} : vector<64x1024xf32> to vector<8x512xf32>
    %244 = vector.extract_strided_slice %239 {offsets = [0, 512], sizes = [8, 512], strides = [1, 1]} : vector<8x1024xf32> to vector<8x512xf32>
    %245 = arith.addf %243, %244 : vector<8x512xf32>
    %246 = tpu.concatenate %242, %245 in 0 : vector<8x512xf32>, vector<8x512xf32> -> vector<16x512xf32>
    %247 = vector.extract_strided_slice %246 {offsets = [0, 0], sizes = [16, 384], strides = [1, 1]} : vector<16x512xf32> to vector<16x384xf32>
    %248 = arith.negf %247 : vector<16x384xf32>
    %249 = math.exp %248 : vector<16x384xf32>
    %cst_48 = arith.constant 1.000000e+00 : f32
    %250 = vector.broadcast %cst_48 : f32 to vector<16x384xf32>
    %251 = arith.addf %250, %249 : vector<16x384xf32>
    %252 = arith.divf %250, %251 : vector<16x384xf32>
    %253 = vector.extract_strided_slice %246 {offsets = [0, 384], sizes = [16, 128], strides = [1, 1]} : vector<16x512xf32> to vector<16x128xf32>
    %254 = math.tanh %253 : vector<16x128xf32>
    %255 = vector.extract_strided_slice %252 {offsets = [0, 128], sizes = [16, 128], strides = [1, 1]} : vector<16x384xf32> to vector<16x128xf32>
    %256 = arith.mulf %255, %227 : vector<16x128xf32>
    %257 = vector.extract_strided_slice %252 {offsets = [0, 0], sizes = [16, 128], strides = [1, 1]} : vector<16x384xf32> to vector<16x128xf32>
    %258 = arith.mulf %257, %254 : vector<16x128xf32>
    %259 = arith.addf %256, %258 : vector<16x128xf32>
    %260 = vector.extract_strided_slice %252 {offsets = [0, 256], sizes = [16, 128], strides = [1, 1]} : vector<16x384xf32> to vector<16x128xf32>
    %261 = math.tanh %259 : vector<16x128xf32>
    %262 = arith.mulf %260, %261 : vector<16x128xf32>
    %263 = vector.extract_strided_slice %262 {offsets = [0, 0], sizes = [8, 128], strides = [1, 1]} : vector<16x128xf32> to vector<8x128xf32>
    %c72_49 = arith.constant 72 : index
    %c0_50 = arith.constant 0 : index
    %264 = vector.load %arg11[%c72_49, %c0_50] : memref<88x256xf32, #tpu.memory_space<vmem>>, vector<8x128xf32>
    tpu.vector_store %arg11[%c72_49, %c0_50], %263 {strides = array<i32>} : memref<88x256xf32, #tpu.memory_space<vmem>>, vector<8x128xf32>,
    %265 = vector.extract_strided_slice %262 {offsets = [8, 0], sizes = [8, 128], strides = [1, 1]} : vector<16x128xf32> to vector<8x128xf32>
    %c16_51 = arith.constant 16 : index
    %c128_52 = arith.constant 128 : index
    %266 = vector.load %arg11[%c16_51, %c128_52] : memref<88x256xf32, #tpu.memory_space<vmem>>, vector<8x128xf32>
    tpu.vector_store %arg11[%c16_51, %c128_52], %265 {strides = array<i32>} : memref<88x256xf32, #tpu.memory_space<vmem>>, vector<8x128xf32>,
    %cst_53 = arith.constant 0.000000e+00 : f32
    %267 = vector.broadcast %cst_53 : f32 to vector<64x384xf32>
    %c0_54 = arith.constant 0 : index
    %c0_55 = arith.constant 0 : index
    %268 = vector.load %arg11[%c0_54, %c0_55] : memref<88x256xf32, #tpu.memory_space<vmem>>, vector<64x256xf32>
    %269 = arith.truncf %268 : vector<64x256xf32> to vector<64x256xbf16>
    %c0_56 = arith.constant 0 : index
    %c0_57 = arith.constant 0 : index
    %c0_58 = arith.constant 0 : index
    %270 = vector.load %arg4[%c0_56, %c0_57, %c0_58] : memref<4x256x384xbf16, #tpu.memory_space<vmem>>, vector<1x256x384xbf16>
    %271 = vector.shape_cast %270 : vector<1x256x384xbf16> to vector<256x384xbf16>
    %cst_59 = arith.constant dense<0.000000e+00> : vector<64x384xf32>
    %272 = tpu.matmul %269, %271, %cst_59 {dimension_numbers = #tpu.dot_dimension_numbers<[1], [0], [0], [1], [0, 0, 1, 1], [], []>} : vector<64x256xbf16>, vector<256x384xbf16>, vector<64x384xf32> -> vector<64x384xf32>
    %273 = arith.addf %267, %272 : vector<64x384xf32>
    %c8 = arith.constant 8 : index
    %c0_60 = arith.constant 0 : index
    %274 = vector.load %arg11[%c8, %c0_60] : memref<88x256xf32, #tpu.memory_space<vmem>>, vector<64x256xf32>
    %275 = arith.truncf %274 : vector<64x256xf32> to vector<64x256xbf16>
    %c1 = arith.constant 1 : index
    %c0_61 = arith.constant 0 : index
    %c0_62 = arith.constant 0 : index
    %276 = vector.load %arg4[%c1, %c0_61, %c0_62] : memref<4x256x384xbf16, #tpu.memory_space<vmem>>, vector<1x256x384xbf16>
    %277 = vector.shape_cast %276 : vector<1x256x384xbf16> to vector<256x384xbf16>
    %cst_63 = arith.constant dense<0.000000e+00> : vector<64x384xf32>
    %278 = tpu.matmul %275, %277, %cst_63 {dimension_numbers = #tpu.dot_dimension_numbers<[1], [0], [0], [1], [0, 0, 1, 1], [], []>} : vector<64x256xbf16>, vector<256x384xbf16>, vector<64x384xf32> -> vector<64x384xf32>
    %279 = arith.addf %273, %278 : vector<64x384xf32>
    %c16_64 = arith.constant 16 : index
    %c0_65 = arith.constant 0 : index
    %280 = vector.load %arg11[%c16_64, %c0_65] : memref<88x256xf32, #tpu.memory_space<vmem>>, vector<64x256xf32>
    %281 = arith.truncf %280 : vector<64x256xf32> to vector<64x256xbf16>
    %c2 = arith.constant 2 : index
    %c0_66 = arith.constant 0 : index
    %c0_67 = arith.constant 0 : index
    %282 = vector.load %arg4[%c2, %c0_66, %c0_67] : memref<4x256x384xbf16, #tpu.memory_space<vmem>>, vector<1x256x384xbf16>
    %283 = vector.shape_cast %282 : vector<1x256x384xbf16> to vector<256x384xbf16>
    %cst_68 = arith.constant dense<0.000000e+00> : vector<64x384xf32>
    %284 = tpu.matmul %281, %283, %cst_68 {dimension_numbers = #tpu.dot_dimension_numbers<[1], [0], [0], [1], [0, 0, 1, 1], [], []>} : vector<64x256xbf16>, vector<256x384xbf16>, vector<64x384xf32> -> vector<64x384xf32>
    %285 = arith.addf %279, %284 : vector<64x384xf32>
    %c24_69 = arith.constant 24 : index
    %c0_70 = arith.constant 0 : index
    %286 = vector.load %arg11[%c24_69, %c0_70] : memref<88x256xf32, #tpu.memory_space<vmem>>, vector<64x256xf32>
    %287 = arith.truncf %286 : vector<64x256xf32> to vector<64x256xbf16>
    %c3 = arith.constant 3 : index
    %c0_71 = arith.constant 0 : index
    %c0_72 = arith.constant 0 : index
    %288 = vector.load %arg4[%c3, %c0_71, %c0_72] : memref<4x256x384xbf16, #tpu.memory_space<vmem>>, vector<1x256x384xbf16>
    %289 = vector.shape_cast %288 : vector<1x256x384xbf16> to vector<256x384xbf16>
    %cst_73 = arith.constant dense<0.000000e+00> : vector<64x384xf32>
    %290 = tpu.matmul %287, %289, %cst_73 {dimension_numbers = #tpu.dot_dimension_numbers<[1], [0], [0], [1], [0, 0, 1, 1], [], []>} : vector<64x256xbf16>, vector<256x384xbf16>, vector<64x384xf32> -> vector<64x384xf32>
    %291 = arith.addf %285, %290 : vector<64x384xf32>
    %c0_74 = arith.constant 0 : index
    %c0_75 = arith.constant 0 : index
    %292 = vector.load %arg5[%c0_74, %c0_75] : memref<1x384xf32, #tpu.memory_space<vmem>>, vector<1x384xf32>
    %293 = vector.broadcast %292 : vector<1x384xf32> to vector<64x384xf32>
    %294 = arith.addf %291, %293 : vector<64x384xf32>
    %cst_76 = arith.constant 0.000000e+00 : f32
    %295 = vector.broadcast %cst_76 : f32 to vector<64x384xf32>
    %296 = arith.maximumf %294, %295 : vector<64x384xf32>
    %297 = vector.extract_strided_slice %296 {offsets = [0, 0], sizes = [64, 128], strides = [1, 1]} : vector<64x384xf32> to vector<64x128xf32>
    %298 = vector.extract_strided_slice %296 {offsets = [0, 128], sizes = [64, 128], strides = [1, 1]} : vector<64x384xf32> to vector<64x128xf32>
    %299 = arith.addf %297, %298 : vector<64x128xf32>
    %300 = vector.extract_strided_slice %296 {offsets = [0, 256], sizes = [64, 128], strides = [1, 1]} : vector<64x384xf32> to vector<64x128xf32>
    %301 = arith.addf %299, %300 : vector<64x128xf32>
    %302 = vector.extract_strided_slice %301 {offsets = [0, 0], sizes = [8, 128], strides = [1, 1]} : vector<64x128xf32> to vector<8x128xf32>
    %303 = vector.extract_strided_slice %301 {offsets = [8, 0], sizes = [8, 128], strides = [1, 1]} : vector<64x128xf32> to vector<8x128xf32>
    %304 = vector.extract_strided_slice %301 {offsets = [16, 0], sizes = [8, 128], strides = [1, 1]} : vector<64x128xf32> to vector<8x128xf32>
    %305 = vector.extract_strided_slice %301 {offsets = [24, 0], sizes = [8, 128], strides = [1, 1]} : vector<64x128xf32> to vector<8x128xf32>
    %306 = vector.extract_strided_slice %301 {offsets = [32, 0], sizes = [8, 128], strides = [1, 1]} : vector<64x128xf32> to vector<8x128xf32>
    %307 = vector.extract_strided_slice %301 {offsets = [40, 0], sizes = [8, 128], strides = [1, 1]} : vector<64x128xf32> to vector<8x128xf32>
    %308 = vector.extract_strided_slice %301 {offsets = [48, 0], sizes = [8, 128], strides = [1, 1]} : vector<64x128xf32> to vector<8x128xf32>
    %309 = vector.extract_strided_slice %301 {offsets = [56, 0], sizes = [8, 128], strides = [1, 1]} : vector<64x128xf32> to vector<8x128xf32>
    %310 = tpu.concatenate %302, %303, %304, %305, %306, %307, %308, %309 in 1 : vector<8x128xf32>, vector<8x128xf32>, vector<8x128xf32>, vector<8x128xf32>, vector<8x128xf32>, vector<8x128xf32>, vector<8x128xf32>, vector<8x128xf32> -> vector<8x1024xf32>
    %311 = arith.truncf %310 : vector<8x1024xf32> to vector<8x1024xbf16>
    %c0_77 = arith.constant 0 : index
    %c0_78 = arith.constant 0 : index
    %312 = vector.load %arg6[%c0_77, %c0_78] : memref<1024x512xbf16, #tpu.memory_space<vmem>>, vector<1024x512xbf16>
    %cst_79 = arith.constant dense<0.000000e+00> : vector<8x512xf32>
    %313 = tpu.matmul %311, %312, %cst_79 {dimension_numbers = #tpu.dot_dimension_numbers<[1], [0], [0], [1], [0, 0, 1, 1], [], []>} : vector<8x1024xbf16>, vector<1024x512xbf16>, vector<8x512xf32> -> vector<8x512xf32>
    %c0_80 = arith.constant 0 : index
    %c0_81 = arith.constant 0 : index
    %314 = vector.load %arg7[%c0_80, %c0_81] : memref<1x512xf32, #tpu.memory_space<vmem>>, vector<1x512xf32>
    %315 = vector.broadcast %314 : vector<1x512xf32> to vector<8x512xf32>
    %316 = arith.addf %313, %315 : vector<8x512xf32>
    %317 = arith.truncf %316 : vector<8x512xf32> to vector<8x512xbf16>
    %c0_82 = arith.constant 0 : index
    %c0_83 = arith.constant 0 : index
    %318 = vector.load %arg8[%c0_82, %c0_83] : memref<512x128xbf16, #tpu.memory_space<vmem>>, vector<512x128xbf16>
    %cst_84 = arith.constant dense<0.000000e+00> : vector<8x128xf32>
    %319 = tpu.matmul %317, %318, %cst_84 {dimension_numbers = #tpu.dot_dimension_numbers<[1], [0], [0], [1], [0, 0, 1, 1], [], []>} : vector<8x512xbf16>, vector<512x128xbf16>, vector<8x128xf32> -> vector<8x128xf32>
    %c0_85 = arith.constant 0 : index
    %c0_86 = arith.constant 0 : index
    %320 = vector.load %arg9[%c0_85, %c0_86] : memref<1x128xf32, #tpu.memory_space<vmem>>, vector<1x128xf32>
    %321 = vector.broadcast %320 : vector<1x128xf32> to vector<8x128xf32>
    %322 = arith.addf %319, %321 : vector<8x128xf32>
    %c0_87 = arith.constant 0 : index
    %c0_88 = arith.constant 0 : index
    %323 = vector.load %arg10[%c0_87, %c0_88] : memref<8x128xf32, #tpu.memory_space<vmem>>, vector<8x128xf32>
    tpu.vector_store %arg10[%c0_87, %c0_88], %322 {strides = array<i32>} : memref<8x128xf32, #tpu.memory_space<vmem>>, vector<8x128xf32>,
    return
  }
}

</mosaic_0001>

<llo_original>
// kernel: model_forward.1
$region0: #{model_forward.1}
  #allocation0 [shape = 'u32[]', space=smem, size = 0x4, offset = 0x4, fixed_abs, tag = 'smem constant byte address 0x4 - core index']
  #allocation1 [shape = 'u32[144,128]{1,0:T(1,128)}', space=vmem, size = 0x12000, scoped, tag = 'internal scratch']
  #allocation2 [shape = 'f32[88,256]{1,0:T(8,128)}', space=vmem, size = 0x16000, scoped, tag = 'scratch operand']
  %s0 = inlined_call_operand.vmem [shape: f32[64,32], index: 0, kind: input, shape index: {}]
  %s1 = inlined_call_operand.vmem [shape: bf16[32,1024], index: 1, kind: input, shape index: {}]
  %s2 = inlined_call_operand.vmem [shape: f32[1,1024], index: 2, kind: input, shape index: {}]
  %s3 = inlined_call_operand.hbm [shape: bf16[256,1024], index: 3, kind: input, shape index: {}]
  %s4 = inlined_call_operand.hbm [shape: bf16[4,256,384], index: 4, kind: input, shape index: {}]
  %s5 = inlined_call_operand.vmem [shape: f32[1,384], index: 5, kind: input, shape index: {}]
  %s6 = inlined_call_operand.hbm [shape: bf16[1024,512], index: 6, kind: input, shape index: {}]
  %s7 = inlined_call_operand.vmem [shape: f32[1,512], index: 7, kind: input, shape index: {}]
  %s8 = inlined_call_operand.hbm [shape: bf16[512,128], index: 8, kind: input, shape index: {}]
  %s9 = inlined_call_operand.vmem [shape: f32[1,128], index: 9, kind: input, shape index: {}]
  %s10 = inlined_call_operand.vmem [shape: f32[8,128], index: 10, kind: output, shape index: {}]
  %s11 = sld [smem:[#allocation0]]
  $region66: #{model_forward.1} parent=0
    _
  %s13 = ssub.s32 1, %s11
  %s14 = scalar_select 0, %s13, %s11
  $region1: #{model_forward.1} parent=0
    #allocation3 [shape = 'u8[524288]{0}', space=vmem, size = 0x80000, scoped, tag = 'input window, operand 3, single buffered']
    #allocation4 [shape = 's32[1]{0}', space=sflag, size = 0x4, scoped, tag = 'scoped memory for model_forward.1']
    #allocation5 [shape = 'u8[786432]{0}', space=vmem, size = 0xc0000, scoped, tag = 'input window, operand 4, single buffered']
    #allocation6 [shape = 's32[1]{0}', space=sflag, size = 0x4, scoped, tag = 'scoped memory for model_forward.1']
    #allocation7 [shape = 'u8[1048576]{0}', space=vmem, size = 0x100000, scoped, tag = 'input window, operand 6, single buffered']
    #allocation8 [shape = 'u8[131072]{0}', space=vmem, size = 0x20000, scoped, tag = 'input window, operand 8, single buffered']
    #allocation9 [shape = 's32[1]{0}', space=sflag, size = 0x4, scoped, tag = 'scoped memory for model_forward.1']
    %15 = vsyncpa [#allocation4], 0
    %16 = vsyncpa [#allocation6], 0
    %17 = vsyncpa [#allocation9], 0
    // Predicated region
    $region2: #{model_forward.1} parent=1 // pred_check
      _
    $region3: #{model_forward.1} parent=1 // pred_check_branch
      %19 = sbr.rel (0) target = $region5
    $region4: #{model_forward.1} parent=1 // pred_region
      _
    $region5: #{model_forward.1} parent=1 // pred_fallthru
      _
    // Predicated region
    $region6: #{model_forward.1} parent=1 // pred_check
      _
    $region7: #{model_forward.1} parent=1 // pred_check_branch
      %21 = sbr.rel (0) target = $region9
    $region8: #{model_forward.1} parent=1 // pred_region
      _
    $region9: #{model_forward.1} parent=1 // pred_fallthru
      _
    // Predicated region
    $region10: #{model_forward.1} parent=1 // pred_check
      _
    $region11: #{model_forward.1} parent=1 // pred_check_branch
      %23 = sbr.rel (0) target = $region13
    $region12: #{model_forward.1} parent=1 // pred_region
      _
    $region13: #{model_forward.1} parent=1 // pred_fallthru
      _
    // Predicated region
    $region14: #{model_forward.1} parent=1 // pred_check
      _
    $region15: #{model_forward.1} parent=1 // pred_check_branch
      %25 = sbr.rel (0) target = $region17
    $region16: #{model_forward.1} parent=1 // pred_region
      %s27 = ssub.s32 16384, 16384
      %28 = vsyncadd [#allocation4], %s27
      %s29 = sshll.u32 [#allocation3], 4
      %s30 = int_to_ptr.vmem [resolvable:$true] %s29
      %35 = dma.hbm_to_vmem [thread:$0]  %s3, 16384, %s30, [#allocation4], 512, 512, 32
    $region17: #{model_forward.1} parent=1 // pred_fallthru
      _
    // Predicated region
    $region18: #{model_forward.1} parent=1 // pred_check
      _
    $region19: #{model_forward.1} parent=1 // pred_check_branch
      %37 = sbr.rel (0) target = $region21
    $region20: #{model_forward.1} parent=1 // pred_region
      %s39 = ssub.s32 24576, 24576
      %40 = vsyncadd [#allocation6], %s39
      %s41 = sshll.u32 [#allocation5], 4
      %s42 = int_to_ptr.vmem [resolvable:$true] %s41
      %47 = dma.hbm_to_vmem [thread:$0]  %s4, 24576, %s42, [#allocation6], 192, 192, 12
    $region21: #{model_forward.1} parent=1 // pred_fallthru
      _
    // Predicated region
    $region22: #{model_forward.1} parent=1 // pred_check
      _
    $region23: #{model_forward.1} parent=1 // pred_check_branch
      %49 = sbr.rel (0) target = $region25
    $region24: #{model_forward.1} parent=1 // pred_region
      _
    $region25: #{model_forward.1} parent=1 // pred_fallthru
      _
    // Predicated region
    $region26: #{model_forward.1} parent=1 // pred_check
      _
    $region27: #{model_forward.1} parent=1 // pred_check_branch
      %51 = sbr.rel (0) target = $region29
    $region28: #{model_forward.1} parent=1 // pred_region
      %s53 = ssub.s32 32768, 32768
      %54 = vsyncadd [#allocation6], %s53
      %s55 = sshll.u32 [#allocation7], 4
      %s56 = int_to_ptr.vmem [resolvable:$true] %s55
      %61 = dma.hbm_to_vmem [thread:$0]  %s6, 32768, %s56, [#allocation6], 256, 256, 16
    $region29: #{model_forward.1} parent=1 // pred_fallthru
      _
    // Predicated region
    $region30: #{model_forward.1} parent=1 // pred_check
      _
    $region31: #{model_forward.1} parent=1 // pred_check_branch
      %63 = sbr.rel (0) target = $region33
    $region32: #{model_forward.1} parent=1 // pred_region
      _
    $region33: #{model_forward.1} parent=1 // pred_fallthru
      _
    // Predicated region
    $region34: #{model_forward.1} parent=1 // pred_check
      _
    $region35: #{model_forward.1} parent=1 // pred_check_branch
      %65 = sbr.rel (0) target = $region37
    $region36: #{model_forward.1} parent=1 // pred_region
      %s67 = ssub.s32 4096, 4096
      %68 = vsyncadd [#allocation9], %s67
      %s69 = sshll.u32 [#allocation8], 4
      %s70 = int_to_ptr.vmem [resolvable:$true] %s69
      %75 = dma.hbm_to_vmem [thread:$0]  %s8, 4096, %s70, [#allocation9], 64, 64, 4
    $region37: #{model_forward.1} parent=1 // pred_fallthru
      _
    // Predicated region
    $region38: #{model_forward.1} parent=1 // pred_check
      _
    $region39: #{model_forward.1} parent=1 // pred_check_branch
      %77 = sbr.rel (0) target = $region41
    $region40: #{model_forward.1} parent=1 // pred_region
      _
    $region41: #{model_forward.1} parent=1 // pred_fallthru
      _
    // Predicated region
    $region42: #{model_forward.1} parent=1 // pred_check
      _
    $region43: #{model_forward.1} parent=1 // pred_check_branch
      %79 = sbr.rel (0) target = $region45
    $region44: #{model_forward.1} parent=1 // pred_region
      %80 = dma.done [#allocation4], 16384
    $region45: #{model_forward.1} parent=1 // pred_fallthru
      _
    // Predicated region
    $region46: #{model_forward.1} parent=1 // pred_check
      _
    $region47: #{model_forward.1} parent=1 // pred_check_branch
      %82 = sbr.rel (0) target = $region49
    $region48: #{model_forward.1} parent=1 // pred_region
      %83 = dma.done [#allocation6], 24576
    $region49: #{model_forward.1} parent=1 // pred_fallthru
      _
    // Predicated region
    $region50: #{model_forward.1} parent=1 // pred_check
      _
    $region51: #{model_forward.1} parent=1 // pred_check_branch
      %85 = sbr.rel (0) target = $region53
    $region52: #{model_forward.1} parent=1 // pred_region
      %86 = dma.done [#allocation6], 32768
    $region53: #{model_forward.1} parent=1 // pred_fallthru
      _
    // Predicated region
    $region54: #{model_forward.1} parent=1 // pred_check
      _
    $region55: #{model_forward.1} parent=1 // pred_check_branch
      %88 = sbr.rel (0) target = $region57
    $region56: #{model_forward.1} parent=1 // pred_region
      %89 = dma.done [#allocation9], 4096
    $region57: #{model_forward.1} parent=1 // pred_fallthru
      _
    %v91 = vld [vmem:[%s0] sm:$0xff]
    %v92 = vld [vmem:[%s0 + $0x8] sm:$0xff]
    %v93 = vld [vmem:[%s0 + $0x10] sm:$0xff]
    %v94 = vld [vmem:[%s0 + $0x18] sm:$0xff]
    %v95 = vld [vmem:[%s0 + $0x20] sm:$0xff]
    %v96 = vld [vmem:[%s0 + $0x28] sm:$0xff]
    %v97 = vld [vmem:[%s0 + $0x30] sm:$0xff]
    %v98 = vld [vmem:[%s0 + $0x38] sm:$0xff]
    %v99 = vpack.c.bf16 %v92, %v91
    %v100 = vpack.c.bf16 %v94, %v93
    %v101 = vpack.c.bf16 %v96, %v95
    %v102 = vpack.c.bf16 %v98, %v97
    %v103 = vld [vmem:[%s1] sm:$0xff]
    %v104 = vld [vmem:[%s1 + $0x8] sm:$0xff]
    %v105 = vld [vmem:[%s1 + $0x10] sm:$0xff]
    %v106 = vld [vmem:[%s1 + $0x18] sm:$0xff]
    %v107 = vld [vmem:[%s1 + $0x20] sm:$0xff]
    %v108 = vld [vmem:[%s1 + $0x28] sm:$0xff]
    %v109 = vld [vmem:[%s1 + $0x30] sm:$0xff]
    %v110 = vld [vmem:[%s1 + $0x38] sm:$0xff]
    %v111 = vld [vmem:[%s1 + $0x40] sm:$0xff]
    %v112 = vld [vmem:[%s1 + $0x48] sm:$0xff]
    %v113 = vld [vmem:[%s1 + $0x50] sm:$0xff]
    %v114 = vld [vmem:[%s1 + $0x58] sm:$0xff]
    %v115 = vld [vmem:[%s1 + $0x60] sm:$0xff]
    %v116 = vld [vmem:[%s1 + $0x68] sm:$0xff]
    %v117 = vld [vmem:[%s1 + $0x70] sm:$0xff]
    %v118 = vld [vmem:[%s1 + $0x78] sm:$0xff]
    %v119 = vld [vmem:[%s2] sm:$0xff]
    %v121 = vlaneseq
    %v122 = vshrl.u32 %v121, 7
    %v123 = vsub.s32 0, %v122
    %v124 = vrot.slane %v119, %v123
    %v125 = vlaneseq
    %v126 = vshrl.u32 %v125, 7
    %v127 = vsub.s32 1, %v126
    %v128 = vrot.slane %v119, %v127
    %v129 = vlaneseq
    %v130 = vshrl.u32 %v129, 7
    %v131 = vsub.s32 2, %v130
    %v132 = vrot.slane %v119, %v131
    %v133 = vlaneseq
    %v134 = vshrl.u32 %v133, 7
    %v135 = vsub.s32 3, %v134
    %v136 = vrot.slane %v119, %v135
    %v137 = vlaneseq
    %v138 = vshrl.u32 %v137, 7
    %v139 = vsub.s32 4, %v138
    %v140 = vrot.slane %v119, %v139
    %v141 = vlaneseq
    %v142 = vshrl.u32 %v141, 7
    %v143 = vsub.s32 5, %v142
    %v144 = vrot.slane %v119, %v143
    %v145 = vlaneseq
    %v146 = vshrl.u32 %v145, 7
    %v147 = vsub.s32 6, %v146
    %v148 = vrot.slane %v119, %v147
    %v149 = vlaneseq
    %v150 = vshrl.u32 %v149, 7
    %v151 = vsub.s32 7, %v150
    %v152 = vrot.slane %v119, %v151
    %v177 = vunpack.c.l.b16 %v103
    %v178 = vunpack.c.h.b16 %v103
    %v179 = vunpack.c.l.b16 %v104
    %v180 = vunpack.c.h.b16 %v104
    %v181 = vunpack.c.l.b16 %v105
    %v182 = vunpack.c.h.b16 %v105
    %v183 = vunpack.c.l.b16 %v106
    %v184 = vunpack.c.h.b16 %v106
    %v185 = vunpack.c.l.b16 %v107
    %v186 = vunpack.c.h.b16 %v107
    %v187 = vunpack.c.l.b16 %v108
    %v188 = vunpack.c.h.b16 %v108
    %v189 = vunpack.c.l.b16 %v109
    %v190 = vunpack.c.h.b16 %v109
    %v191 = vunpack.c.l.b16 %v110
    %v192 = vunpack.c.h.b16 %v110
    %v193 = vunpack.c.l.b16 %v111
    %v194 = vunpack.c.h.b16 %v111
    %v195 = vunpack.c.l.b16 %v112
    %v196 = vunpack.c.h.b16 %v112
    %v197 = vunpack.c.l.b16 %v113
    %v198 = vunpack.c.h.b16 %v113
    %v199 = vunpack.c.l.b16 %v114
    %v200 = vunpack.c.h.b16 %v114
    %v201 = vunpack.c.l.b16 %v115
    %v202 = vunpack.c.h.b16 %v115
    %v203 = vunpack.c.l.b16 %v116
    %v204 = vunpack.c.h.b16 %v116
    %v205 = vunpack.c.l.b16 %v117
    %v206 = vunpack.c.h.b16 %v117
    %v207 = vunpack.c.l.b16 %v118
    %v208 = vunpack.c.h.b16 %v118
    %v209 = vpack.c.b16 %v185, %v177
    %v210 = vpack.c.b16 %v186, %v178
    %v211 = vpack.c.b16 %v187, %v179
    %v212 = vpack.c.b16 %v188, %v180
    %v213 = vpack.c.b16 %v189, %v181
    %v214 = vpack.c.b16 %v190, %v182
    %v215 = vpack.c.b16 %v191, %v183
    %v216 = vpack.c.b16 %v192, %v184
    %v217 = vpack.c.b16 %v201, %v193
    %v218 = vpack.c.b16 %v202, %v194
    %v219 = vpack.c.b16 %v203, %v195
    %v220 = vpack.c.b16 %v204, %v196
    %v221 = vpack.c.b16 %v205, %v197
    %v222 = vpack.c.b16 %v206, %v198
    %v223 = vpack.c.b16 %v207, %v199
    %v224 = vpack.c.b16 %v208, %v200
    %vm241 = vcmask 261120
    %v243 = vsel %vm241, %v99, 0
    %v246 = vsel %vm241, %v100, 0
    %v249 = vsel %vm241, %v101, 0
    %v252 = vsel %vm241, %v102, 0
    %254 = vmatprep.subr.bf16.mxu0 %v210
    %255 = vmatpush1.bf16.msra.mxu0 %v209
    %256 = vmatprep.subr.bf16.mxu0 %v218
    %257 = vmatpush1.bf16.msra.mxu0 %v217
    %258 = vmatprep.subr.bf16.mxu0 0
    %259 = vmatpush1.bf16.msra.mxu0 0
    %260 = vmatprep.subr.bf16.mxu0 0
    %261 = vmatpush1.bf16.msra.mxu0 0
    %262 = vmatprep.subr.bf16.mxu0 0
    %263 = vmatpush1.bf16.msra.mxu0 0
    %264 = vmatprep.subr.bf16.mxu0 0
    %265 = vmatpush1.bf16.msra.mxu0 0
    %266 = vmatprep.subr.bf16.mxu0 0
    %267 = vmatpush1.bf16.msra.mxu0 0
    %268 = vmatprep.subr.bf16.mxu0 0
    %269 = vmatpush1.bf16.msra.mxu0 0
    %270 = vmatprep.subr.bf16.mxu0 0
    %271 = vmatpush1.bf16.msra.mxu0 0
    %272 = vmatprep.subr.bf16.mxu0 0
    %273 = vmatpush1.bf16.msra.mxu0 0
    %274 = vmatprep.subr.bf16.mxu0 0
    %275 = vmatpush1.bf16.msra.mxu0 0
    %276 = vmatprep.subr.bf16.mxu0 0
    %277 = vmatpush1.bf16.msra.mxu0 0
    %278 = vmatprep.subr.bf16.mxu0 0
    %279 = vmatpush1.bf16.msra.mxu0 0
    %280 = vmatprep.subr.bf16.mxu0 0
    %281 = vmatpush1.bf16.msra.mxu0 0
    %282 = vmatprep.subr.bf16.mxu0 0
    %283 = vmatpush1.bf16.msra.mxu0 0
    %284 = vmatprep.subr.bf16.mxu0 0
    %285 = vmatpush1.bf16.msra.mxu0 0
    %286 = vmatprep.mubr.bf16.mxu0 0
    %287 = vmatmul.mubr.bf16.gmra.mrb[0].mxu0 %v243
    %v288 = vpop.f32.mrb[0].mxu0
    %v289 = vadd.f32 %v124, %v288
    %v290 = vpop.f32.mrb[0].mxu0
    %v291 = vadd.f32 %v128, %v290
    %v292 = vpop.f32.mrb[0].mxu0
    %v293 = vadd.f32 %v124, %v292
    %v294 = vpop.f32.mrb[0].mxu0
    %v295 = vadd.f32 %v128, %v294
    %296 = vmatprep.mubr.bf16.mxu0 0
    %297 = vmatmul.mubr.bf16.gmra.mrb[0].mxu0 %v246
    %v298 = vpop.f32.mrb[0].mxu0
    %v299 = vadd.f32 %v124, %v298
    %v300 = vpop.f32.mrb[0].mxu0
    %v301 = vadd.f32 %v128, %v300
    %v302 = vpop.f32.mrb[0].mxu0
    %v303 = vadd.f32 %v124, %v302
    %v304 = vpop.f32.mrb[0].mxu0
    %v305 = vadd.f32 %v128, %v304
    %306 = vmatprep.mubr.bf16.mxu0 0
    %307 = vmatmul.mubr.bf16.gmra.mrb[0].mxu0 %v249
    %v308 = vpop.f32.mrb[0].mxu0
    %v309 = vadd.f32 %v124, %v308
    %v310 = vpop.f32.mrb[0].mxu0
    %v311 = vadd.f32 %v128, %v310
    %v312 = vpop.f32.mrb[0].mxu0
    %v313 = vadd.f32 %v124, %v312
    %v314 = vpop.f32.mrb[0].mxu0
    %v315 = vadd.f32 %v128, %v314
    %316 = vmatprep.mubr.bf16.mxu0 0
    %317 = vmatmul.mubr.bf16.gmra.mrb[0].mxu0 %v252
    %v318 = vpop.f32.mrb[0].mxu0
    %v319 = vadd.f32 %v124, %v318
    %v320 = vpop.f32.mrb[0].mxu0
    %v321 = vadd.f32 %v128, %v320
    %v322 = vpop.f32.mrb[0].mxu0
    %v323 = vadd.f32 %v124, %v322
    %v324 = vpop.f32.mrb[0].mxu0
    %v325 = vadd.f32 %v128, %v324
    %326 = vdwg.mxu0
    %327 = vmatprep.subr.bf16.mxu0 %v212
    %328 = vmatpush1.bf16.msra.mxu0 %v211
    %329 = vmatprep.subr.bf16.mxu0 %v220
    %330 = vmatpush1.bf16.msra.mxu0 %v219
    %331 = vmatprep.subr.bf16.mxu0 0
    %332 = vmatpush1.bf16.msra.mxu0 0
    %333 = vmatprep.subr.bf16.mxu0 0
    %334 = vmatpush1.bf16.msra.mxu0 0
    %335 = vmatprep.subr.bf16.mxu0 0
    %336 = vmatpush1.bf16.msra.mxu0 0
    %337 = vmatprep.subr.bf16.mxu0 0
    %338 = vmatpush1.bf16.msra.mxu0 0
    %339 = vmatprep.subr.bf16.mxu0 0
    %340 = vmatpush1.bf16.msra.mxu0 0
    %341 = vmatprep.subr.bf16.mxu0 0
    %342 = vmatpush1.bf16.msra.mxu0 0
    %343 = vmatprep.subr.bf16.mxu0 0
    %344 = vmatpush1.bf16.msra.mxu0 0
    %345 = vmatprep.subr.bf16.mxu0 0
    %346 = vmatpush1.bf16.msra.mxu0 0
    %347 = vmatprep.subr.bf16.mxu0 0
    %348 = vmatpush1.bf16.msra.mxu0 0
    %349 = vmatprep.subr.bf16.mxu0 0
    %350 = vmatpush1.bf16.msra.mxu0 0
    %351 = vmatprep.subr.bf16.mxu0 0
    %352 = vmatpush1.bf16.msra.mxu0 0
    %353 = vmatprep.subr.bf16.mxu0 0
    %354 = vmatpush1.bf16.msra.mxu0 0
    %355 = vmatprep.subr.bf16.mxu0 0
    %356 = vmatpush1.bf16.msra.mxu0 0
    %357 = vmatprep.subr.bf16.mxu0 0
    %358 = vmatpush1.bf16.msra.mxu0 0
    %359 = vmatprep.mubr.bf16.mxu0 0
    %360 = vmatmul.mubr.bf16.gmra.mrb[0].mxu0 %v243
    %v361 = vpop.f32.mrb[0].mxu0
    %v362 = vadd.f32 %v132, %v361
    %v363 = vpop.f32.mrb[0].mxu0
    %v364 = vadd.f32 %v136, %v363
    %v365 = vpop.f32.mrb[0].mxu0
    %v366 = vadd.f32 %v132, %v365
    %v367 = vpop.f32.mrb[0].mxu0
    %v368 = vadd.f32 %v136, %v367
    %369 = vmatprep.mubr.bf16.mxu0 0
    %370 = vmatmul.mubr.bf16.gmra.mrb[0].mxu0 %v246
    %v371 = vpop.f32.mrb[0].mxu0
    %v372 = vadd.f32 %v132, %v371
    %v373 = vpop.f32.mrb[0].mxu0
    %v374 = vadd.f32 %v136, %v373
    %v375 = vpop.f32.mrb[0].mxu0
    %v376 = vadd.f32 %v132, %v375
    %v377 = vpop.f32.mrb[0].mxu0
    %v378 = vadd.f32 %v136, %v377
    %379 = vmatprep.mubr.bf16.mxu0 0
    %380 = vmatmul.mubr.bf16.gmra.mrb[0].mxu0 %v249
    %v381 = vpop.f32.mrb[0].mxu0
    %v382 = vadd.f32 %v132, %v381
    %v383 = vpop.f32.mrb[0].mxu0
    %v384 = vadd.f32 %v136, %v383
    %v385 = vpop.f32.mrb[0].mxu0
    %v386 = vadd.f32 %v132, %v385
    %v387 = vpop.f32.mrb[0].mxu0
    %v388 = vadd.f32 %v136, %v387
    %389 = vmatprep.mubr.bf16.mxu0 0
    %390 = vmatmul.mubr.bf16.gmra.mrb[0].mxu0 %v252
    %v391 = vpop.f32.mrb[0].mxu0
    %v392 = vadd.f32 %v132, %v391
    %v393 = vpop.f32.mrb[0].mxu0
    %v394 = vadd.f32 %v136, %v393
    %v395 = vpop.f32.mrb[0].mxu0
    %v396 = vadd.f32 %v132, %v395
    %v397 = vpop.f32.mrb[0].mxu0
    %v398 = vadd.f32 %v136, %v397
    %399 = vdwg.mxu0
    %400 = vmatprep.subr.bf16.mxu0 %v214
    %401 = vmatpush1.bf16.msra.mxu0 %v213
    %402 = vmatprep.subr.bf16.mxu0 %v222
    %403 = vmatpush1.bf16.msra.mxu0 %v221
    %404 = vmatprep.subr.bf16.mxu0 0
    %405 = vmatpush1.bf16.msra.mxu0 0
    %406 = vmatprep.subr.bf16.mxu0 0
    %407 = vmatpush1.bf16.msra.mxu0 0
    %408 = vmatprep.subr.bf16.mxu0 0
    %409 = vmatpush1.bf16.msra.mxu0 0
    %410 = vmatprep.subr.bf16.mxu0 0
    %411 = vmatpush1.bf16.msra.mxu0 0
    %412 = vmatprep.subr.bf16.mxu0 0
    %413 = vmatpush1.bf16.msra.mxu0 0
    %414 = vmatprep.subr.bf16.mxu0 0
    %415 = vmatpush1.bf16.msra.mxu0 0
    %416 = vmatprep.subr.bf16.mxu0 0
    %417 = vmatpush1.bf16.msra.mxu0 0
    %418 = vmatprep.subr.bf16.mxu0 0
    %419 = vmatpush1.bf16.msra.mxu0 0
    %420 = vmatprep.subr.bf16.mxu0 0
    %421 = vmatpush1.bf16.msra.mxu0 0
    %422 = vmatprep.subr.bf16.mxu0 0
    %423 = vmatpush1.bf16.msra.mxu0 0
    %424 = vmatprep.subr.bf16.mxu0 0
    %425 = vmatpush1.bf16.msra.mxu0 0
    %426 = vmatprep.subr.bf16.mxu0 0
    %427 = vmatpush1.bf16.msra.mxu0 0
    %428 = vmatprep.subr.bf16.mxu0 0
    %429 = vmatpush1.bf16.msra.mxu0 0
    %430 = vmatprep.subr.bf16.mxu0 0
    %431 = vmatpush1.bf16.msra.mxu0 0
    %432 = vmatprep.mubr.bf16.mxu0 0
    %433 = vmatmul.mubr.bf16.gmra.mrb[0].mxu0 %v243
    %v434 = vpop.f32.mrb[0].mxu0
    %v435 = vadd.f32 %v140, %v434
    %v436 = vpop.f32.mrb[0].mxu0
    %v437 = vadd.f32 %v144, %v436
    %v438 = vpop.f32.mrb[0].mxu0
    %v439 = vadd.f32 %v140, %v438
    %v440 = vpop.f32.mrb[0].mxu0
    %v441 = vadd.f32 %v144, %v440
    %442 = vmatprep.mubr.bf16.mxu0 0
    %443 = vmatmul.mubr.bf16.gmra.mrb[0].mxu0 %v246
    %v444 = vpop.f32.mrb[0].mxu0
    %v445 = vadd.f32 %v140, %v444
    %v446 = vpop.f32.mrb[0].mxu0
    %v447 = vadd.f32 %v144, %v446
    %v448 = vpop.f32.mrb[0].mxu0
    %v449 = vadd.f32 %v140, %v448
    %v450 = vpop.f32.mrb[0].mxu0
    %v451 = vadd.f32 %v144, %v450
    %452 = vmatprep.mubr.bf16.mxu0 0
    %453 = vmatmul.mubr.bf16.gmra.mrb[0].mxu0 %v249
    %v454 = vpop.f32.mrb[0].mxu0
    %v455 = vadd.f32 %v140, %v454
    %v456 = vpop.f32.mrb[0].mxu0
    %v457 = vadd.f32 %v144, %v456
    %v458 = vpop.f32.mrb[0].mxu0
    %v459 = vadd.f32 %v140, %v458
    %v460 = vpop.f32.mrb[0].mxu0
    %v461 = vadd.f32 %v144, %v460
    %462 = vmatprep.mubr.bf16.mxu0 0
    %463 = vmatmul.mubr.bf16.gmra.mrb[0].mxu0 %v252
    %v464 = vpop.f32.mrb[0].mxu0
    %v465 = vadd.f32 %v140, %v464
    %v466 = vpop.f32.mrb[0].mxu0
    %v467 = vadd.f32 %v144, %v466
    %v468 = vpop.f32.mrb[0].mxu0
    %v469 = vadd.f32 %v140, %v468
    %v470 = vpop.f32.mrb[0].mxu0
    %v471 = vadd.f32 %v144, %v470
    %472 = vdwg.mxu0
    %473 = vmatprep.subr.bf16.mxu0 %v216
    %474 = vmatpush1.bf16.msra.mxu0 %v215
    %475 = vmatprep.subr.bf16.mxu0 %v224
    %476 = vmatpush1.bf16.msra.mxu0 %v223
    %477 = vmatprep.subr.bf16.mxu0 0
    %478 = vmatpush1.bf16.msra.mxu0 0
    %479 = vmatprep.subr.bf16.mxu0 0
    %480 = vmatpush1.bf16.msra.mxu0 0
    %481 = vmatprep.subr.bf16.mxu0 0
    %482 = vmatpush1.bf16.msra.mxu0 0
    %483 = vmatprep.subr.bf16.mxu0 0
    %484 = vmatpush1.bf16.msra.mxu0 0
    %485 = vmatprep.subr.bf16.mxu0 0
    %486 = vmatpush1.bf16.msra.mxu0 0
    %487 = vmatprep.subr.bf16.mxu0 0
    %488 = vmatpush1.bf16.msra.mxu0 0
    %489 = vmatprep.subr.bf16.mxu0 0
    %490 = vmatpush1.bf16.msra.mxu0 0
    %491 = vmatprep.subr.bf16.mxu0 0
    %492 = vmatpush1.bf16.msra.mxu0 0
    %493 = vmatprep.subr.bf16.mxu0 0
    %494 = vmatpush1.bf16.msra.mxu0 0
    %495 = vmatprep.subr.bf16.mxu0 0
    %496 = vmatpush1.bf16.msra.mxu0 0
    %497 = vmatprep.subr.bf16.mxu0 0
    %498 = vmatpush1.bf16.msra.mxu0 0
    %499 = vmatprep.subr.bf16.mxu0 0
    %500 = vmatpush1.bf16.msra.mxu0 0
    %501 = vmatprep.subr.bf16.mxu0 0
    %502 = vmatpush1.bf16.msra.mxu0 0
    %503 = vmatprep.subr.bf16.mxu0 0
    %504 = vmatpush1.bf16.msra.mxu0 0
    %505 = vmatprep.mubr.bf16.mxu0 0
    %506 = vmatmul.mubr.bf16.gmra.mrb[0].mxu0 %v243
    %v507 = vpop.f32.mrb[0].mxu0
    %v508 = vadd.f32 %v148, %v507
    %v509 = vpop.f32.mrb[0].mxu0
    %v510 = vadd.f32 %v152, %v509
    %v511 = vpop.f32.mrb[0].mxu0
    %v512 = vadd.f32 %v148, %v511
    %v513 = vpop.f32.mrb[0].mxu0
    %v514 = vadd.f32 %v152, %v513
    %515 = vmatprep.mubr.bf16.mxu0 0
    %516 = vmatmul.mubr.bf16.gmra.mrb[0].mxu0 %v246
    %v517 = vpop.f32.mrb[0].mxu0
    %v518 = vadd.f32 %v148, %v517
    %v519 = vpop.f32.mrb[0].mxu0
    %v520 = vadd.f32 %v152, %v519
    %v521 = vpop.f32.mrb[0].mxu0
    %v522 = vadd.f32 %v148, %v521
    %v523 = vpop.f32.mrb[0].mxu0
    %v524 = vadd.f32 %v152, %v523
    %525 = vmatprep.mubr.bf16.mxu0 0
    %526 = vmatmul.mubr.bf16.gmra.mrb[0].mxu0 %v249
    %v527 = vpop.f32.mrb[0].mxu0
    %v528 = vadd.f32 %v148, %v527
    %v529 = vpop.f32.mrb[0].mxu0
    %v530 = vadd.f32 %v152, %v529
    %v531 = vpop.f32.mrb[0].mxu0
    %v532 = vadd.f32 %v148, %v531
    %v533 = vpop.f32.mrb[0].mxu0
    %v534 = vadd.f32 %v152, %v533
    %535 = vmatprep.mubr.bf16.mxu0 0
    %536 = vmatmul.mubr.bf16.gmra.mrb[0].mxu0 %v252
    %v537 = vpop.f32.mrb[0].mxu0
    %v538 = vadd.f32 %v148, %v537
    %v539 = vpop.f32.mrb[0].mxu0
    %v540 = vadd.f32 %v152, %v539
    %v541 = vpop.f32.mrb[0].mxu0
    %v542 = vadd.f32 %v148, %v541
    %v543 = vpop.f32.mrb[0].mxu0
    %v544 = vadd.f32 %v152, %v543
    %545 = vdwg.mxu0
    %546 = vst [vmem:[#allocation2] sm:$0xff] 0.0
    %547 = vst [vmem:[#allocation2 + $0x8] sm:$0xff] 0.0
    %548 = vst [vmem:[#allocation2 + $0x10] sm:$0xff] 0.0
    %549 = vst [vmem:[#allocation2 + $0x18] sm:$0xff] 0.0
    %550 = vst [vmem:[#allocation2 + $0xa0] sm:$0xff] 0.0
    %551 = vst [vmem:[#allocation2 + $0xa8] sm:$0xff] 0.0
    %v552 = vld [vmem:[#allocation3] sm:$0xff]
    %v553 = vld [vmem:[#allocation3 + $0x8] sm:$0xff]
    %v554 = vld [vmem:[#allocation3 + $0x10] sm:$0xff]
    %v555 = vld [vmem:[#allocation3 + $0x18] sm:$0xff]
    %v556 = vld [vmem:[#allocation3 + $0x20] sm:$0xff]
    %v557 = vld [vmem:[#allocation3 + $0x28] sm:$0xff]
    %v558 = vld [vmem:[#allocation3 + $0x30] sm:$0xff]
    %v559 = vld [vmem:[#allocation3 + $0x38] sm:$0xff]
    %v560 = vld [vmem:[#allocation3 + $0x40] sm:$0xff]
    %v561 = vld [vmem:[#allocation3 + $0x48] sm:$0xff]
    %v562 = vld [vmem:[#allocation3 + $0x50] sm:$0xff]
    %v563 = vld [vmem:[#allocation3 + $0x58] sm:$0xff]
    %v564 = vld [vmem:[#allocation3 + $0x60] sm:$0xff]
    %v565 = vld [vmem:[#allocation3 + $0x68] sm:$0xff]
    %v566 = vld [vmem:[#allocation3 + $0x70] sm:$0xff]
    %v567 = vld [vmem:[#allocation3 + $0x78] sm:$0xff]
    %v568 = vld [vmem:[#allocation3 + $0x80] sm:$0xff]
    %v569 = vld [vmem:[#allocation3 + $0x88] sm:$0xff]
    %v570 = vld [vmem:[#allocation3 + $0x90] sm:$0xff]
    %v571 = vld [vmem:[#allocation3 + $0x98] sm:$0xff]
    %v572 = vld [vmem:[#allocation3 + $0xa0] sm:$0xff]
    %v573 = vld [vmem:[#allocation3 + $0xa8] sm:$0xff]
    %v574 = vld [vmem:[#allocation3 + $0xb0] sm:$0xff]
    %v575 = vld [vmem:[#allocation3 + $0xb8] sm:$0xff]
    %v576 = vld [vmem:[#allocation3 + $0xc0] sm:$0xff]
    %v577 = vld [vmem:[#allocation3 + $0xc8] sm:$0xff]
    %v578 = vld [vmem:[#allocation3 + $0xd0] sm:$0xff]
    %v579 = vld [vmem:[#allocation3 + $0xd8] sm:$0xff]
    %v580 = vld [vmem:[#allocation3 + $0xe0] sm:$0xff]
    %v581 = vld [vmem:[#allocation3 + $0xe8] sm:$0xff]
    %v582 = vld [vmem:[#allocation3 + $0xf0] sm:$0xff]
    %v583 = vld [vmem:[#allocation3 + $0xf8] sm:$0xff]
    %v584 = vld [vmem:[#allocation3 + $0x100] sm:$0xff]
    %v585 = vld [vmem:[#allocation3 + $0x108] sm:$0xff]
    %v586 = vld [vmem:[#allocation3 + $0x110] sm:$0xff]
    %v587 = vld [vmem:[#allocation3 + $0x118] sm:$0xff]
    %v588 = vld [vmem:[#allocation3 + $0x120] sm:$0xff]
    %v589 = vld [vmem:[#allocation3 + $0x128] sm:$0xff]
    %v590 = vld [vmem:[#allocation3 + $0x130] sm:$0xff]
    %v591 = vld [vmem:[#allocation3 + $0x138] sm:$0xff]
    %v592 = vld [vmem:[#allocation3 + $0x140] sm:$0xff]
    %v593 = vld [vmem:[#allocation3 + $0x148] sm:$0xff]
    %v594 = vld [vmem:[#allocation3 + $0x150] sm:$0xff]
    %v595 = vld [vmem:[#allocation3 + $0x158] sm:$0xff]
    %v596 = vld [vmem:[#allocation3 + $0x160] sm:$0xff]
    %v597 = vld [vmem:[#allocation3 + $0x168] sm:$0xff]
    %v598 = vld [vmem:[#allocation3 + $0x170] sm:$0xff]
    %v599 = vld [vmem:[#allocation3 + $0x178] sm:$0xff]
    %v600 = vld [vmem:[#allocation3 + $0x180] sm:$0xff]
    %v601 = vld [vmem:[#allocation3 + $0x188] sm:$0xff]
    %v602 = vld [vmem:[#allocation3 + $0x190] sm:$0xff]
    %v603 = vld [vmem:[#allocation3 + $0x198] sm:$0xff]
    %v604 = vld [vmem:[#allocation3 + $0x1a0] sm:$0xff]
    %v605 = vld [vmem:[#allocation3 + $0x1a8] sm:$0xff]
    %v606 = vld [vmem:[#allocation3 + $0x1b0] sm:$0xff]
    %v607 = vld [vmem:[#allocation3 + $0x1b8] sm:$0xff]
    %v608 = vld [vmem:[#allocation3 + $0x1c0] sm:$0xff]
    %v609 = vld [vmem:[#allocation3 + $0x1c8] sm:$0xff]
    %v610 = vld [vmem:[#allocation3 + $0x1d0] sm:$0xff]
    %v611 = vld [vmem:[#allocation3 + $0x1d8] sm:$0xff]
    %v612 = vld [vmem:[#allocation3 + $0x1e0] sm:$0xff]
    %v613 = vld [vmem:[#allocation3 + $0x1e8] sm:$0xff]
    %v614 = vld [vmem:[#allocation3 + $0x1f0] sm:$0xff]
    %v615 = vld [vmem:[#allocation3 + $0x1f8] sm:$0xff]
    %v616 = vld [vmem:[#allocation3 + $0x200] sm:$0xff]
    %v617 = vld [vmem:[#allocation3 + $0x208] sm:$0xff]
    %v618 = vld [vmem:[#allocation3 + $0x210] sm:$0xff]
    %v619 = vld [vmem:[#allocation3 + $0x218] sm:$0xff]
    %v620 = vld [vmem:[#allocation3 + $0x220] sm:$0xff]
    %v621 = vld [vmem:[#allocation3 + $0x228] sm:$0xff]
    %v622 = vld [vmem:[#allocation3 + $0x230] sm:$0xff]
    %v623 = vld [vmem:[#allocation3 + $0x238] sm:$0xff]
    %v624 = vld [vmem:[#allocation3 + $0x240] sm:$0xff]
    %v625 = vld [vmem:[#allocation3 + $0x248] sm:$0xff]
    %v626 = vld [vmem:[#allocation3 + $0x250] sm:$0xff]
    %v627 = vld [vmem:[#allocation3 + $0x258] sm:$0xff]
    %v628 = vld [vmem:[#allocation3 + $0x260] sm:$0xff]
    %v629 = vld [vmem:[#allocation3 + $0x268] sm:$0xff]
    %v630 = vld [vmem:[#allocation3 + $0x270] sm:$0xff]
    %v631 = vld [vmem:[#allocation3 + $0x278] sm:$0xff]
    %v632 = vld [vmem:[#allocation3 + $0x280] sm:$0xff]
    %v633 = vld [vmem:[#allocation3 + $0x288] sm:$0xff]
    %v634 = vld [vmem:[#allocation3 + $0x290] sm:$0xff]
    %v635 = vld [vmem:[#allocation3 + $0x298] sm:$0xff]
    %v636 = vld [vmem:[#allocation3 + $0x2a0] sm:$0xff]
    %v637 = vld [vmem:[#allocation3 + $0x2a8] sm:$0xff]
    %v638 = vld [vmem:[#allocation3 + $0x2b0] sm:$0xff]
    %v639 = vld [vmem:[#allocation3 + $0x2b8] sm:$0xff]
    %v640 = vld [vmem:[#allocation3 + $0x2c0] sm:$0xff]
    %v641 = vld [vmem:[#allocation3 + $0x2c8] sm:$0xff]
    %v642 = vld [vmem:[#allocation3 + $0x2d0] sm:$0xff]
    %v643 = vld [vmem:[#allocation3 + $0x2d8] sm:$0xff]
    %v644 = vld [vmem:[#allocation3 + $0x2e0] sm:$0xff]
    %v645 = vld [vmem:[#allocation3 + $0x2e8] sm:$0xff]
    %v646 = vld [vmem:[#allocation3 + $0x2f0] sm:$0xff]
    %v647 = vld [vmem:[#allocation3 + $0x2f8] sm:$0xff]
    %v648 = vld [vmem:[#allocation3 + $0x300] sm:$0xff]
    %v649 = vld [vmem:[#allocation3 + $0x308] sm:$0xff]
    %v650 = vld [vmem:[#allocation3 + $0x310] sm:$0xff]
    %v651 = vld [vmem:[#allocation3 + $0x318] sm:$0xff]
    %v652 = vld [vmem:[#allocation3 + $0x320] sm:$0xff]
    %v653 = vld [vmem:[#allocation3 + $0x328] sm:$0xff]
    %v654 = vld [vmem:[#allocation3 + $0x330] sm:$0xff]
    %v655 = vld [vmem:[#allocation3 + $0x338] sm:$0xff]
    %v656 = vld [vmem:[#allocation3 + $0x340] sm:$0xff]
    %v657 = vld [vmem:[#allocation3 + $0x348] sm:$0xff]
    %v658 = vld [vmem:[#allocation3 + $0x350] sm:$0xff]
    %v659 = vld [vmem:[#allocation3 + $0x358] sm:$0xff]
    %v660 = vld [vmem:[#allocation3 + $0x360] sm:$0xff]
    %v661 = vld [vmem:[#allocation3 + $0x368] sm:$0xff]
    %v662 = vld [vmem:[#allocation3 + $0x370] sm:$0xff]
    %v663 = vld [vmem:[#allocation3 + $0x378] sm:$0xff]
    %v664 = vld [vmem:[#allocation3 + $0x380] sm:$0xff]
    %v665 = vld [vmem:[#allocation3 + $0x388] sm:$0xff]
    %v666 = vld [vmem:[#allocation3 + $0x390] sm:$0xff]
    %v667 = vld [vmem:[#allocation3 + $0x398] sm:$0xff]
    %v668 = vld [vmem:[#allocation3 + $0x3a0] sm:$0xff]
    %v669 = vld [vmem:[#allocation3 + $0x3a8] sm:$0xff]
    %v670 = vld [vmem:[#allocation3 + $0x3b0] sm:$0xff]
    %v671 = vld [vmem:[#allocation3 + $0x3b8] sm:$0xff]
    %v672 = vld [vmem:[#allocation3 + $0x3c0] sm:$0xff]
    %v673 = vld [vmem:[#allocation3 + $0x3c8] sm:$0xff]
    %v674 = vld [vmem:[#allocation3 + $0x3d0] sm:$0xff]
    %v675 = vld [vmem:[#allocation3 + $0x3d8] sm:$0xff]
    %v676 = vld [vmem:[#allocation3 + $0x3e0] sm:$0xff]
    %v677 = vld [vmem:[#allocation3 + $0x3e8] sm:$0xff]
    %v678 = vld [vmem:[#allocation3 + $0x3f0] sm:$0xff]
    %v679 = vld [vmem:[#allocation3 + $0x3f8] sm:$0xff]
    %v808 = vunpack.c.l.b16 %v552
    %v809 = vunpack.c.h.b16 %v552
    %v810 = vunpack.c.l.b16 %v553
    %v811 = vunpack.c.h.b16 %v553
    %v812 = vunpack.c.l.b16 %v554
    %v813 = vunpack.c.h.b16 %v554
    %v814 = vunpack.c.l.b16 %v555
    %v815 = vunpack.c.h.b16 %v555
    %v816 = vunpack.c.l.b16 %v556
    %v817 = vunpack.c.h.b16 %v556
    %v818 = vunpack.c.l.b16 %v557
    %v819 = vunpack.c.h.b16 %v557
    %v820 = vunpack.c.l.b16 %v558
    %v821 = vunpack.c.h.b16 %v558
    %v822 = vunpack.c.l.b16 %v559
    %v823 = vunpack.c.h.b16 %v559
    %v824 = vunpack.c.l.b16 %v560
    %v825 = vunpack.c.h.b16 %v560
    %v826 = vunpack.c.l.b16 %v561
    %v827 = vunpack.c.h.b16 %v561
    %v828 = vunpack.c.l.b16 %v562
    %v829 = vunpack.c.h.b16 %v562
    %v830 = vunpack.c.l.b16 %v563
    %v831 = vunpack.c.h.b16 %v563
    %v832 = vunpack.c.l.b16 %v564
    %v833 = vunpack.c.h.b16 %v564
    %v834 = vunpack.c.l.b16 %v565
    %v835 = vunpack.c.h.b16 %v565
    %v836 = vunpack.c.l.b16 %v566
    %v837 = vunpack.c.h.b16 %v566
    %v838 = vunpack.c.l.b16 %v567
    %v839 = vunpack.c.h.b16 %v567
    %v840 = vunpack.c.l.b16 %v568
    %v841 = vunpack.c.h.b16 %v568
    %v842 = vunpack.c.l.b16 %v569
    %v843 = vunpack.c.h.b16 %v569
    %v844 = vunpack.c.l.b16 %v570
    %v845 = vunpack.c.h.b16 %v570
    %v846 = vunpack.c.l.b16 %v571
    %v847 = vunpack.c.h.b16 %v571
    %v848 = vunpack.c.l.b16 %v572
    %v849 = vunpack.c.h.b16 %v572
    %v850 = vunpack.c.l.b16 %v573
    %v851 = vunpack.c.h.b16 %v573
    %v852 = vunpack.c.l.b16 %v574
    %v853 = vunpack.c.h.b16 %v574
    %v854 = vunpack.c.l.b16 %v575
    %v855 = vunpack.c.h.b16 %v575
    %v856 = vunpack.c.l.b16 %v576
    %v857 = vunpack.c.h.b16 %v576
    %v858 = vunpack.c.l.b16 %v577
    %v859 = vunpack.c.h.b16 %v577
    %v860 = vunpack.c.l.b16 %v578
    %v861 = vunpack.c.h.b16 %v578
    %v862 = vunpack.c.l.b16 %v579
    %v863 = vunpack.c.h.b16 %v579
    %v864 = vunpack.c.l.b16 %v580
    %v865 = vunpack.c.h.b16 %v580
    %v866 = vunpack.c.l.b16 %v581
    %v867 = vunpack.c.h.b16 %v581
    %v868 = vunpack.c.l.b16 %v582
    %v869 = vunpack.c.h.b16 %v582
    %v870 = vunpack.c.l.b16 %v583
    %v871 = vunpack.c.h.b16 %v583
    %v872 = vunpack.c.l.b16 %v584
    %v873 = vunpack.c.h.b16 %v584
    %v874 = vunpack.c.l.b16 %v585
    %v875 = vunpack.c.h.b16 %v585
    %v876 = vunpack.c.l.b16 %v586
    %v877 = vunpack.c.h.b16 %v586
    %v878 = vunpack.c.l.b16 %v587
    %v879 = vunpack.c.h.b16 %v587
    %v880 = vunpack.c.l.b16 %v588
    %v881 = vunpack.c.h.b16 %v588
    %v882 = vunpack.c.l.b16 %v589
    %v883 = vunpack.c.h.b16 %v589
    %v884 = vunpack.c.l.b16 %v590
    %v885 = vunpack.c.h.b16 %v590
    %v886 = vunpack.c.l.b16 %v591
    %v887 = vunpack.c.h.b16 %v591
    %v888 = vunpack.c.l.b16 %v592
    %v889 = vunpack.c.h.b16 %v592
    %v890 = vunpack.c.l.b16 %v593
    %v891 = vunpack.c.h.b16 %v593
    %v892 = vunpack.c.l.b16 %v594
    %v893 = vunpack.c.h.b16 %v594
    %v894 = vunpack.c.l.b16 %v595
    %v895 = vunpack.c.h.b16 %v595
    %v896 = vunpack.c.l.b16 %v596
    %v897 = vunpack.c.h.b16 %v596
    %v898 = vunpack.c.l.b16 %v597
    %v899 = vunpack.c.h.b16 %v597
    %v900 = vunpack.c.l.b16 %v598
    %v901 = vunpack.c.h.b16 %v598
    %v902 = vunpack.c.l.b16 %v599
    %v903 = vunpack.c.h.b16 %v599
    %v904 = vunpack.c.l.b16 %v600
    %v905 = vunpack.c.h.b16 %v600
    %v906 = vunpack.c.l.b16 %v601
    %v907 = vunpack.c.h.b16 %v601
    %v908 = vunpack.c.l.b16 %v602
    %v909 = vunpack.c.h.b16 %v602
    %v910 = vunpack.c.l.b16 %v603
    %v911 = vunpack.c.h.b16 %v603
    %v912 = vunpack.c.l.b16 %v604
    %v913 = vunpack.c.h.b16 %v604
    %v914 = vunpack.c.l.b16 %v605
    %v915 = vunpack.c.h.b16 %v605
    %v916 = vunpack.c.l.b16 %v606
    %v917 = vunpack.c.h.b16 %v606
    %v918 = vunpack.c.l.b16 %v607
    %v919 = vunpack.c.h.b16 %v607
    %v920 = vunpack.c.l.b16 %v608
    %v921 = vunpack.c.h.b16 %v608
    %v922 = vunpack.c.l.b16 %v609
    %v923 = vunpack.c.h.b16 %v609
    %v924 = vunpack.c.l.b16 %v610
    %v925 = vunpack.c.h.b16 %v610
    %v926 = vunpack.c.l.b16 %v611
    %v927 = vunpack.c.h.b16 %v611
    %v928 = vunpack.c.l.b16 %v612
    %v929 = vunpack.c.h.b16 %v612
    %v930 = vunpack.c.l.b16 %v613
    %v931 = vunpack.c.h.b16 %v613
    %v932 = vunpack.c.l.b16 %v614
    %v933 = vunpack.c.h.b16 %v614
    %v934 = vunpack.c.l.b16 %v615
    %v935 = vunpack.c.h.b16 %v615
    %v936 = vunpack.c.l.b16 %v616
    %v937 = vunpack.c.h.b16 %v616
    %v938 = vunpack.c.l.b16 %v617
    %v939 = vunpack.c.h.b16 %v617
    %v940 = vunpack.c.l.b16 %v618
    %v941 = vunpack.c.h.b16 %v618
    %v942 = vunpack.c.l.b16 %v619
    %v943 = vunpack.c.h.b16 %v619
    %v944 = vunpack.c.l.b16 %v620
    %v945 = vunpack.c.h.b16 %v620
    %v946 = vunpack.c.l.b16 %v621
    %v947 = vunpack.c.h.b16 %v621
    %v948 = vunpack.c.l.b16 %v622
    %v949 = vunpack.c.h.b16 %v622
    %v950 = vunpack.c.l.b16 %v623
    %v951 = vunpack.c.h.b16 %v623
    %v952 = vunpack.c.l.b16 %v624
    %v953 = vunpack.c.h.b16 %v624
    %v954 = vunpack.c.l.b16 %v625
    %v955 = vunpack.c.h.b16 %v625
    %v956 = vunpack.c.l.b16 %v626
    %v957 = vunpack.c.h.b16 %v626
    %v958 = vunpack.c.l.b16 %v627
    %v959 = vunpack.c.h.b16 %v627
    %v960 = vunpack.c.l.b16 %v628
    %v961 = vunpack.c.h.b16 %v628
    %v962 = vunpack.c.l.b16 %v629
    %v963 = vunpack.c.h.b16 %v629
    %v964 = vunpack.c.l.b16 %v630
    %v965 = vunpack.c.h.b16 %v630
    %v966 = vunpack.c.l.b16 %v631
    %v967 = vunpack.c.h.b16 %v631
    %v968 = vunpack.c.l.b16 %v632
    %v969 = vunpack.c.h.b16 %v632
    %v970 = vunpack.c.l.b16 %v633
    %v971 = vunpack.c.h.b16 %v633
    %v972 = vunpack.c.l.b16 %v634
    %v973 = vunpack.c.h.b16 %v634
    %v974 = vunpack.c.l.b16 %v635
    %v975 = vunpack.c.h.b16 %v635
    %v976 = vunpack.c.l.b16 %v636
    %v977 = vunpack.c.h.b16 %v636
    %v978 = vunpack.c.l.b16 %v637
    %v979 = vunpack.c.h.b16 %v637
    %v980 = vunpack.c.l.b16 %v638
    %v981 = vunpack.c.h.b16 %v638
    %v982 = vunpack.c.l.b16 %v639
    %v983 = vunpack.c.h.b16 %v639
    %v984 = vunpack.c.l.b16 %v640
    %v985 = vunpack.c.h.b16 %v640
    %v986 = vunpack.c.l.b16 %v641
    %v987 = vunpack.c.h.b16 %v641
    %v988 = vunpack.c.l.b16 %v642
    %v989 = vunpack.c.h.b16 %v642
    %v990 = vunpack.c.l.b16 %v643
    %v991 = vunpack.c.h.b16 %v643
    %v992 = vunpack.c.l.b16 %v644
    %v993 = vunpack.c.h.b16 %v644
    %v994 = vunpack.c.l.b16 %v645
    %v995 = vunpack.c.h.b16 %v645
    %v996 = vunpack.c.l.b16 %v646
    %v997 = vunpack.c.h.b16 %v646
    %v998 = vunpack.c.l.b16 %v647
    %v999 = vunpack.c.h.b16 %v647
    %v1000 = vunpack.c.l.b16 %v648
    %v1001 = vunpack.c.h.b16 %v648
    %v1002 = vunpack.c.l.b16 %v649
    %v1003 = vunpack.c.h.b16 %v649
    %v1004 = vunpack.c.l.b16 %v650
    %v1005 = vunpack.c.h.b16 %v650
    %v1006 = vunpack.c.l.b16 %v651
    %v1007 = vunpack.c.h.b16 %v651
    %v1008 = vunpack.c.l.b16 %v652
    %v1009 = vunpack.c.h.b16 %v652
    %v1010 = vunpack.c.l.b16 %v653
    %v1011 = vunpack.c.h.b16 %v653
    %v1012 = vunpack.c.l.b16 %v654
    %v1013 = vunpack.c.h.b16 %v654
    %v1014 = vunpack.c.l.b16 %v655
    %v1015 = vunpack.c.h.b16 %v655
    %v1016 = vunpack.c.l.b16 %v656
    %v1017 = vunpack.c.h.b16 %v656
    %v1018 = vunpack.c.l.b16 %v657
    %v1019 = vunpack.c.h.b16 %v657
    %v1020 = vunpack.c.l.b16 %v658
    %v1021 = vunpack.c.h.b16 %v658
    %v1022 = vunpack.c.l.b16 %v659
    %v1023 = vunpack.c.h.b16 %v659
    %v1024 = vunpack.c.l.b16 %v660
    %v1025 = vunpack.c.h.b16 %v660
    %v1026 = vunpack.c.l.b16 %v661
    %v1027 = vunpack.c.h.b16 %v661
    %v1028 = vunpack.c.l.b16 %v662
    %v1029 = vunpack.c.h.b16 %v662
    %v1030 = vunpack.c.l.b16 %v663
    %v1031 = vunpack.c.h.b16 %v663
    %v1032 = vunpack.c.l.b16 %v664
    %v1033 = vunpack.c.h.b16 %v664
    %v1034 = vunpack.c.l.b16 %v665
    %v1035 = vunpack.c.h.b16 %v665
    %v1036 = vunpack.c.l.b16 %v666
    %v1037 = vunpack.c.h.b16 %v666
    %v1038 = vunpack.c.l.b16 %v667
    %v1039 = vunpack.c.h.b16 %v667
    %v1040 = vunpack.c.l.b16 %v668
    %v1041 = vunpack.c.h.b16 %v668
    %v1042 = vunpack.c.l.b16 %v669
    %v1043 = vunpack.c.h.b16 %v669
    %v1044 = vunpack.c.l.b16 %v670
    %v1045 = vunpack.c.h.b16 %v670
    %v1046 = vunpack.c.l.b16 %v671
    %v1047 = vunpack.c.h.b16 %v671
    %v1048 = vunpack.c.l.b16 %v672
    %v1049 = vunpack.c.h.b16 %v672
    %v1050 = vunpack.c.l.b16 %v673
    %v1051 = vunpack.c.h.b16 %v673
    %v1052 = vunpack.c.l.b16 %v674
    %v1053 = vunpack.c.h.b16 %v674
    %v1054 = vunpack.c.l.b16 %v675
    %v1055 = vunpack.c.h.b16 %v675
    %v1056 = vunpack.c.l.b16 %v676
    %v1057 = vunpack.c.h.b16 %v676
    %v1058 = vunpack.c.l.b16 %v677
    %v1059 = vunpack.c.h.b16 %v677
    %v1060 = vunpack.c.l.b16 %v678
    %v1061 = vunpack.c.h.b16 %v678
    %v1062 = vunpack.c.l.b16 %v679
    %v1063 = vunpack.c.h.b16 %v679
    %v1064 = vpack.c.b16 %v816, %v808
    %v1065 = vpack.c.b16 %v817, %v809
    %v1066 = vpack.c.b16 %v818, %v810
    %v1067 = vpack.c.b16 %v819, %v811
    %v1068 = vpack.c.b16 %v820, %v812
    %v1069 = vpack.c.b16 %v821, %v813
    %v1070 = vpack.c.b16 %v822, %v814
    %v1071 = vpack.c.b16 %v823, %v815
    %v1072 = vpack.c.b16 %v832, %v824
    %v1073 = vpack.c.b16 %v833, %v825
    %v1074 = vpack.c.b16 %v834, %v826
    %v1075 = vpack.c.b16 %v835, %v827
    %v1076 = vpack.c.b16 %v836, %v828
    %v1077 = vpack.c.b16 %v837, %v829
    %v1078 = vpack.c.b16 %v838, %v830
    %v1079 = vpack.c.b16 %v839, %v831
    %v1080 = vpack.c.b16 %v848, %v840
    %v1081 = vpack.c.b16 %v849, %v841
    %v1082 = vpack.c.b16 %v850, %v842
    %v1083 = vpack.c.b16 %v851, %v843
    %v1084 = vpack.c.b16 %v852, %v844
    %v1085 = vpack.c.b16 %v853, %v845
    %v1086 = vpack.c.b16 %v854, %v846
    %v1087 = vpack.c.b16 %v855, %v847
    %v1088 = vpack.c.b16 %v864, %v856
    %v1089 = vpack.c.b16 %v865, %v857
    %v1090 = vpack.c.b16 %v866, %v858
    %v1091 = vpack.c.b16 %v867, %v859
    %v1092 = vpack.c.b16 %v868, %v860
    %v1093 = vpack.c.b16 %v869, %v861
    %v1094 = vpack.c.b16 %v870, %v862
    %v1095 = vpack.c.b16 %v871, %v863
    %v1096 = vpack.c.b16 %v880, %v872
    %v1097 = vpack.c.b16 %v881, %v873
    %v1098 = vpack.c.b16 %v882, %v874
    %v1099 = vpack.c.b16 %v883, %v875
    %v1100 = vpack.c.b16 %v884, %v876
    %v1101 = vpack.c.b16 %v885, %v877
    %v1102 = vpack.c.b16 %v886, %v878
    %v1103 = vpack.c.b16 %v887, %v879
    %v1104 = vpack.c.b16 %v896, %v888
    %v1105 = vpack.c.b16 %v897, %v889
    %v1106 = vpack.c.b16 %v898, %v890
    %v1107 = vpack.c.b16 %v899, %v891
    %v1108 = vpack.c.b16 %v900, %v892
    %v1109 = vpack.c.b16 %v901, %v893
    %v1110 = vpack.c.b16 %v902, %v894
    %v1111 = vpack.c.b16 %v903, %v895
    %v1112 = vpack.c.b16 %v912, %v904
    %v1113 = vpack.c.b16 %v913, %v905
    %v1114 = vpack.c.b16 %v914, %v906
    %v1115 = vpack.c.b16 %v915, %v907
    %v1116 = vpack.c.b16 %v916, %v908
    %v1117 = vpack.c.b16 %v917, %v909
    %v1118 = vpack.c.b16 %v918, %v910
    %v1119 = vpack.c.b16 %v919, %v911
    %v1120 = vpack.c.b16 %v928, %v920
    %v1121 = vpack.c.b16 %v929, %v921
    %v1122 = vpack.c.b16 %v930, %v922
    %v1123 = vpack.c.b16 %v931, %v923
    %v1124 = vpack.c.b16 %v932, %v924
    %v1125 = vpack.c.b16 %v933, %v925
    %v1126 = vpack.c.b16 %v934, %v926
    %v1127 = vpack.c.b16 %v935, %v927
    %v1128 = vpack.c.b16 %v944, %v936
    %v1129 = vpack.c.b16 %v945, %v937
    %v1130 = vpack.c.b16 %v946, %v938
    %v1131 = vpack.c.b16 %v947, %v939
    %v1132 = vpack.c.b16 %v948, %v940
    %v1133 = vpack.c.b16 %v949, %v941
    %v1134 = vpack.c.b16 %v950, %v942
    %v1135 = vpack.c.b16 %v951, %v943
    %v1136 = vpack.c.b16 %v960, %v952
    %v1137 = vpack.c.b16 %v961, %v953
    %v1138 = vpack.c.b16 %v962, %v954
    %v1139 = vpack.c.b16 %v963, %v955
    %v1140 = vpack.c.b16 %v964, %v956
    %v1141 = vpack.c.b16 %v965, %v957
    %v1142 = vpack.c.b16 %v966, %v958
    %v1143 = vpack.c.b16 %v967, %v959
    %v1144 = vpack.c.b16 %v976, %v968
    %v1145 = vpack.c.b16 %v977, %v969
    %v1146 = vpack.c.b16 %v978, %v970
    %v1147 = vpack.c.b16 %v979, %v971
    %v1148 = vpack.c.b16 %v980, %v972
    %v1149 = vpack.c.b16 %v981, %v973
    %v1150 = vpack.c.b16 %v982, %v974
    %v1151 = vpack.c.b16 %v983, %v975
    %v1152 = vpack.c.b16 %v992, %v984
    %v1153 = vpack.c.b16 %v993, %v985
    %v1154 = vpack.c.b16 %v994, %v986
    %v1155 = vpack.c.b16 %v995, %v987
    %v1156 = vpack.c.b16 %v996, %v988
    %v1157 = vpack.c.b16 %v997, %v989
    %v1158 = vpack.c.b16 %v998, %v990
    %v1159 = vpack.c.b16 %v999, %v991
    %v1160 = vpack.c.b16 %v1008, %v1000
    %v1161 = vpack.c.b16 %v1009, %v1001
    %v1162 = vpack.c.b16 %v1010, %v1002
    %v1163 = vpack.c.b16 %v1011, %v1003
    %v1164 = vpack.c.b16 %v1012, %v1004
    %v1165 = vpack.c.b16 %v1013, %v1005
    %v1166 = vpack.c.b16 %v1014, %v1006
    %v1167 = vpack.c.b16 %v1015, %v1007
    %v1168 = vpack.c.b16 %v1024, %v1016
    %v1169 = vpack.c.b16 %v1025, %v1017
    %v1170 = vpack.c.b16 %v1026, %v1018
    %v1171 = vpack.c.b16 %v1027, %v1019
    %v1172 = vpack.c.b16 %v1028, %v1020
    %v1173 = vpack.c.b16 %v1029, %v1021
    %v1174 = vpack.c.b16 %v1030, %v1022
    %v1175 = vpack.c.b16 %v1031, %v1023
    %v1176 = vpack.c.b16 %v1040, %v1032
    %v1177 = vpack.c.b16 %v1041, %v1033
    %v1178 = vpack.c.b16 %v1042, %v1034
    %v1179 = vpack.c.b16 %v1043, %v1035
    %v1180 = vpack.c.b16 %v1044, %v1036
    %v1181 = vpack.c.b16 %v1045, %v1037
    %v1182 = vpack.c.b16 %v1046, %v1038
    %v1183 = vpack.c.b16 %v1047, %v1039
    %v1184 = vpack.c.b16 %v1056, %v1048
    %v1185 = vpack.c.b16 %v1057, %v1049
    %v1186 = vpack.c.b16 %v1058, %v1050
    %v1187 = vpack.c.b16 %v1059, %v1051
    %v1188 = vpack.c.b16 %v1060, %v1052
    %v1189 = vpack.c.b16 %v1061, %v1053
    %v1190 = vpack.c.b16 %v1062, %v1054
    %v1191 = vpack.c.b16 %v1063, %v1055
    %1320 = vmatprep.subr.bf16.mxu0 %v1065
    %1321 = vmatpush1.bf16.msra.mxu0 %v1064
    %1322 = vmatprep.subr.bf16.mxu0 %v1073
    %1323 = vmatpush1.bf16.msra.mxu0 %v1072
    %1324 = vmatprep.subr.bf16.mxu0 %v1081
    %1325 = vmatpush1.bf16.msra.mxu0 %v1080
    %1326 = vmatprep.subr.bf16.mxu0 %v1089
    %1327 = vmatpush1.bf16.msra.mxu0 %v1088
    %1328 = vmatprep.subr.bf16.mxu0 %v1097
    %1329 = vmatpush1.bf16.msra.mxu0 %v1096
    %1330 = vmatprep.subr.bf16.mxu0 %v1105
    %1331 = vmatpush1.bf16.msra.mxu0 %v1104
    %1332 = vmatprep.subr.bf16.mxu0 %v1113
    %1333 = vmatpush1.bf16.msra.mxu0 %v1112
    %1334 = vmatprep.subr.bf16.mxu0 %v1121
    %1335 = vmatpush1.bf16.msra.mxu0 %v1120
    %1336 = vmatprep.subr.bf16.mxu0 %v1129
    %1337 = vmatpush1.bf16.msra.mxu0 %v1128
    %1338 = vmatprep.subr.bf16.mxu0 %v1137
    %1339 = vmatpush1.bf16.msra.mxu0 %v1136
    %1340 = vmatprep.subr.bf16.mxu0 %v1145
    %1341 = vmatpush1.bf16.msra.mxu0 %v1144
    %1342 = vmatprep.subr.bf16.mxu0 %v1153
    %1343 = vmatpush1.bf16.msra.mxu0 %v1152
    %1344 = vmatprep.subr.bf16.mxu0 %v1161
    %1345 = vmatpush1.bf16.msra.mxu0 %v1160
    %1346 = vmatprep.subr.bf16.mxu0 %v1169
    %1347 = vmatpush1.bf16.msra.mxu0 %v1168
    %1348 = vmatprep.subr.bf16.mxu0 %v1177
    %1349 = vmatpush1.bf16.msra.mxu0 %v1176
    %1350 = vmatprep.subr.bf16.mxu0 %v1185
    %1351 = vmatpush1.bf16.msra.mxu0 %v1184
    %1352 = vmatprep.mubr.bf16.mxu0 0
    %1353 = vmatmul.mubr.bf16.gmra.mrb[0].mxu0 0
    %v1354 = vpop.f32.mrb[0].mxu0
    %v1355 = vadd.f32 0.0, %v1354
    %v1356 = vpop.f32.mrb[0].mxu0
    %v1357 = vadd.f32 0.0, %v1356
    %v1358 = vpop.f32.mrb[0].mxu0
    %v1359 = vpop.f32.mrb[0].mxu0
    %1360 = vdwg.mxu0
    %1361 = vmatprep.subr.bf16.mxu0 %v1067
    %1362 = vmatpush1.bf16.msra.mxu0 %v1066
    %1363 = vmatprep.subr.bf16.mxu0 %v1075
    %1364 = vmatpush1.bf16.msra.mxu0 %v1074
    %1365 = vmatprep.subr.bf16.mxu0 %v1083
    %1366 = vmatpush1.bf16.msra.mxu0 %v1082
    %1367 = vmatprep.subr.bf16.mxu0 %v1091
    %1368 = vmatpush1.bf16.msra.mxu0 %v1090
    %1369 = vmatprep.subr.bf16.mxu0 %v1099
    %1370 = vmatpush1.bf16.msra.mxu0 %v1098
    %1371 = vmatprep.subr.bf16.mxu0 %v1107
    %1372 = vmatpush1.bf16.msra.mxu0 %v1106
    %1373 = vmatprep.subr.bf16.mxu0 %v1115
    %1374 = vmatpush1.bf16.msra.mxu0 %v1114
    %1375 = vmatprep.subr.bf16.mxu0 %v1123
    %1376 = vmatpush1.bf16.msra.mxu0 %v1122
    %1377 = vmatprep.subr.bf16.mxu0 %v1131
    %1378 = vmatpush1.bf16.msra.mxu0 %v1130
    %1379 = vmatprep.subr.bf16.mxu0 %v1139
    %1380 = vmatpush1.bf16.msra.mxu0 %v1138
    %1381 = vmatprep.subr.bf16.mxu0 %v1147
    %1382 = vmatpush1.bf16.msra.mxu0 %v1146
    %1383 = vmatprep.subr.bf16.mxu0 %v1155
    %1384 = vmatpush1.bf16.msra.mxu0 %v1154
    %1385 = vmatprep.subr.bf16.mxu0 %v1163
    %1386 = vmatpush1.bf16.msra.mxu0 %v1162
    %1387 = vmatprep.subr.bf16.mxu0 %v1171
    %1388 = vmatpush1.bf16.msra.mxu0 %v1170
    %1389 = vmatprep.subr.bf16.mxu0 %v1179
    %1390 = vmatpush1.bf16.msra.mxu0 %v1178
    %1391 = vmatprep.subr.bf16.mxu0 %v1187
    %1392 = vmatpush1.bf16.msra.mxu0 %v1186
    %1393 = vmatprep.mubr.bf16.mxu0 0
    %1394 = vmatmul.mubr.bf16.gmra.mrb[0].mxu0 0
    %v1395 = vpop.f32.mrb[0].mxu0
    %v1396 = vadd.f32 0.0, %v1395
    %v1397 = vpop.f32.mrb[0].mxu0
    %v1398 = vadd.f32 0.0, %v1397
    %v1399 = vpop.f32.mrb[0].mxu0
    %v1400 = vpop.f32.mrb[0].mxu0
    %1401 = vdwg.mxu0
    %1402 = vmatprep.subr.bf16.mxu0 %v1069
    %1403 = vmatpush1.bf16.msra.mxu0 %v1068
    %1404 = vmatprep.subr.bf16.mxu0 %v1077
    %1405 = vmatpush1.bf16.msra.mxu0 %v1076
    %1406 = vmatprep.subr.bf16.mxu0 %v1085
    %1407 = vmatpush1.bf16.msra.mxu0 %v1084
    %1408 = vmatprep.subr.bf16.mxu0 %v1093
    %1409 = vmatpush1.bf16.msra.mxu0 %v1092
    %1410 = vmatprep.subr.bf16.mxu0 %v1101
    %1411 = vmatpush1.bf16.msra.mxu0 %v1100
    %1412 = vmatprep.subr.bf16.mxu0 %v1109
    %1413 = vmatpush1.bf16.msra.mxu0 %v1108
    %1414 = vmatprep.subr.bf16.mxu0 %v1117
    %1415 = vmatpush1.bf16.msra.mxu0 %v1116
    %1416 = vmatprep.subr.bf16.mxu0 %v1125
    %1417 = vmatpush1.bf16.msra.mxu0 %v1124
    %1418 = vmatprep.subr.bf16.mxu0 %v1133
    %1419 = vmatpush1.bf16.msra.mxu0 %v1132
    %1420 = vmatprep.subr.bf16.mxu0 %v1141
    %1421 = vmatpush1.bf16.msra.mxu0 %v1140
    %1422 = vmatprep.subr.bf16.mxu0 %v1149
    %1423 = vmatpush1.bf16.msra.mxu0 %v1148
    %1424 = vmatprep.subr.bf16.mxu0 %v1157
    %1425 = vmatpush1.bf16.msra.mxu0 %v1156
    %1426 = vmatprep.subr.bf16.mxu0 %v1165
    %1427 = vmatpush1.bf16.msra.mxu0 %v1164
    %1428 = vmatprep.subr.bf16.mxu0 %v1173
    %1429 = vmatpush1.bf16.msra.mxu0 %v1172
    %1430 = vmatprep.subr.bf16.mxu0 %v1181
    %1431 = vmatpush1.bf16.msra.mxu0 %v1180
    %1432 = vmatprep.subr.bf16.mxu0 %v1189
    %1433 = vmatpush1.bf16.msra.mxu0 %v1188
    %1434 = vmatprep.mubr.bf16.mxu0 0
    %1435 = vmatmul.mubr.bf16.gmra.mrb[0].mxu0 0
    %v1436 = vpop.f32.mrb[0].mxu0
    %v1437 = vadd.f32 0.0, %v1436
    %v1438 = vpop.f32.mrb[0].mxu0
    %v1439 = vadd.f32 0.0, %v1438
    %v1440 = vpop.f32.mrb[0].mxu0
    %v1441 = vpop.f32.mrb[0].mxu0
    %1442 = vdwg.mxu0
    %1443 = vmatprep.subr.bf16.mxu0 %v1071
    %1444 = vmatpush1.bf16.msra.mxu0 %v1070
    %1445 = vmatprep.subr.bf16.mxu0 %v1079
    %1446 = vmatpush1.bf16.msra.mxu0 %v1078
    %1447 = vmatprep.subr.bf16.mxu0 %v1087
    %1448 = vmatpush1.bf16.msra.mxu0 %v1086
    %1449 = vmatprep.subr.bf16.mxu0 %v1095
    %1450 = vmatpush1.bf16.msra.mxu0 %v1094
    %1451 = vmatprep.subr.bf16.mxu0 %v1103
    %1452 = vmatpush1.bf16.msra.mxu0 %v1102
    %1453 = vmatprep.subr.bf16.mxu0 %v1111
    %1454 = vmatpush1.bf16.msra.mxu0 %v1110
    %1455 = vmatprep.subr.bf16.mxu0 %v1119
    %1456 = vmatpush1.bf16.msra.mxu0 %v1118
    %1457 = vmatprep.subr.bf16.mxu0 %v1127
    %1458 = vmatpush1.bf16.msra.mxu0 %v1126
    %1459 = vmatprep.subr.bf16.mxu0 %v1135
    %1460 = vmatpush1.bf16.msra.mxu0 %v1134
    %1461 = vmatprep.subr.bf16.mxu0 %v1143
    %1462 = vmatpush1.bf16.msra.mxu0 %v1142
    %1463 = vmatprep.subr.bf16.mxu0 %v1151
    %1464 = vmatpush1.bf16.msra.mxu0 %v1150
    %1465 = vmatprep.subr.bf16.mxu0 %v1159
    %1466 = vmatpush1.bf16.msra.mxu0 %v1158
    %1467 = vmatprep.subr.bf16.mxu0 %v1167
    %1468 = vmatpush1.bf16.msra.mxu0 %v1166
    %1469 = vmatprep.subr.bf16.mxu0 %v1175
    %1470 = vmatpush1.bf16.msra.mxu0 %v1174
    %1471 = vmatprep.subr.bf16.mxu0 %v1183
    %1472 = vmatpush1.bf16.msra.mxu0 %v1182
    %1473 = vmatprep.subr.bf16.mxu0 %v1191
    %1474 = vmatpush1.bf16.msra.mxu0 %v1190
    %1475 = vmatprep.mubr.bf16.mxu0 0
    %1476 = vmatmul.mubr.bf16.gmra.mrb[0].mxu0 0
    %v1477 = vpop.f32.mrb[0].mxu0
    %v1478 = vadd.f32 0.0, %v1477
    %v1479 = vpop.f32.mrb[0].mxu0
    %v1480 = vadd.f32 0.0, %v1479
    %v1481 = vpop.f32.mrb[0].mxu0
    %v1482 = vpop.f32.mrb[0].mxu0
    %1483 = vdwg.mxu0
    %v1484 = vadd.f32 %v289, %v1355
    %v1485 = vadd.f32 %v291, %v1357
    %v1486 = vadd.f32 %v362, %v1396
    %v1487 = vadd.f32 %v364, %v1398
    %v1488 = vadd.f32 %v469, %v1437
    %v1489 = vadd.f32 %v471, %v1439
    %v1490 = vadd.f32 %v542, %v1478
    %v1491 = vadd.f32 %v544, %v1480
    %v1492 = vxor.u32 %v1484, 2147483648
    %v1493 = vxor.u32 %v1485, 2147483648
    %v1494 = vxor.u32 %v1486, 2147483648
    %v1495 = vxor.u32 %v1488, 2147483648
    %v1496 = vxor.u32 %v1489, 2147483648
    %v1497 = vxor.u32 %v1490, 2147483648
    %v1498 = vmul.f32 %v1492, 1.442695
    %v1499 = vpow.pop %v1498
    %v1500 = vmul.f32 %v1493, 1.442695
    %v1501 = vpow.pop %v1500
    %v1502 = vmul.f32 %v1494, 1.442695
    %v1503 = vpow.pop %v1502
    %v1504 = vmul.f32 %v1495, 1.442695
    %v1505 = vpow.pop %v1504
    %v1506 = vmul.f32 %v1496, 1.442695
    %v1507 = vpow.pop %v1506
    %v1508 = vmul.f32 %v1497, 1.442695
    %v1509 = vpow.pop %v1508
    %v1510 = vadd.f32 %v1499, 1.0
    %v1511 = vadd.f32 %v1501, 1.0
    %v1512 = vadd.f32 %v1503, 1.0
    %v1513 = vadd.f32 %v1505, 1.0
    %v1514 = vadd.f32 %v1507, 1.0
    %v1515 = vadd.f32 %v1509, 1.0
    %v1516 = vrcp.pop %v1510
    %v1517 = vmul.f32 1.0, %v1516
    %v1518 = vrcp.pop %v1511
    %v1519 = vmul.f32 1.0, %v1518
    %v1520 = vrcp.pop %v1512
    %v1521 = vmul.f32 1.0, %v1520
    %v1522 = vrcp.pop %v1513
    %v1523 = vmul.f32 1.0, %v1522
    %v1524 = vrcp.pop %v1514
    %v1525 = vmul.f32 1.0, %v1524
    %v1526 = vrcp.pop %v1515
    %v1527 = vmul.f32 1.0, %v1526
    %v1528 = vtanh.pop %v1487
    %v1529 = vtanh.pop %v1491
    %v1530 = vmul.f32 %v1519, 0.0
    %v1531 = vmul.f32 %v1525, 0.0
    %v1532 = vmul.f32 %v1517, %v1528
    %v1533 = vmul.f32 %v1523, %v1529
    %v1534 = vadd.f32 %v1530, %v1532
    %v1535 = vadd.f32 %v1531, %v1533
    %v1536 = vtanh.pop %v1534
    %v1537 = vtanh.pop %v1535
    %v1538 = vmul.f32 %v1521, %v1536
    %v1539 = vmul.f32 %v1527, %v1537
    %1540 = vst [vmem:[#allocation2 + $0x20] sm:$0xff] %v1538
    %1541 = vst [vmem:[#allocation2 + $0x98] sm:$0xff] %v1539
    %v1542 = vpack.c.bf16 %v1538, %v1538
    %v1543 = vpack.c.bf16 %v1539, %v1539
    %1544 = vmatprep.subr.bf16.mxu0 %v1065
    %1545 = vmatpush1.bf16.msra.mxu0 %v1064
    %1546 = vmatprep.subr.bf16.mxu0 %v1073
    %1547 = vmatpush1.bf16.msra.mxu0 %v1072
    %1548 = vmatprep.subr.bf16.mxu0 %v1081
    %1549 = vmatpush1.bf16.msra.mxu0 %v1080
    %1550 = vmatprep.subr.bf16.mxu0 %v1089
    %1551 = vmatpush1.bf16.msra.mxu0 %v1088
    %1552 = vmatprep.subr.bf16.mxu0 %v1097
    %1553 = vmatpush1.bf16.msra.mxu0 %v1096
    %1554 = vmatprep.subr.bf16.mxu0 %v1105
    %1555 = vmatpush1.bf16.msra.mxu0 %v1104
    %1556 = vmatprep.subr.bf16.mxu0 %v1113
    %1557 = vmatpush1.bf16.msra.mxu0 %v1112
    %1558 = vmatprep.subr.bf16.mxu0 %v1121
    %1559 = vmatpush1.bf16.msra.mxu0 %v1120
    %1560 = vmatprep.subr.bf16.mxu0 %v1129
    %1561 = vmatpush1.bf16.msra.mxu0 %v1128
    %1562 = vmatprep.subr.bf16.mxu0 %v1137
    %1563 = vmatpush1.bf16.msra.mxu0 %v1136
    %1564 = vmatprep.subr.bf16.mxu0 %v1145
    %1565 = vmatpush1.bf16.msra.mxu0 %v1144
    %1566 = vmatprep.subr.bf16.mxu0 %v1153
    %1567 = vmatpush1.bf16.msra.mxu0 %v1152
    %1568 = vmatprep.subr.bf16.mxu0 %v1161
    %1569 = vmatpush1.bf16.msra.mxu0 %v1160
    %1570 = vmatprep.subr.bf16.mxu0 %v1169
    %1571 = vmatpush1.bf16.msra.mxu0 %v1168
    %1572 = vmatprep.subr.bf16.mxu0 %v1177
    %1573 = vmatpush1.bf16.msra.mxu0 %v1176
    %1574 = vmatprep.subr.bf16.mxu0 %v1185
    %1575 = vmatpush1.bf16.msra.mxu0 %v1184
    %1576 = vmatprep.mubr.bf16.mxu0 %v1543
    %1577 = vmatmul.mubr.bf16.gmra.mrb[0].mxu0 %v1542
    %v1578 = vpop.f32.mrb[0].mxu0
    %v1579 = vadd.f32 0.0, %v1578
    %v1580 = vpop.f32.mrb[0].mxu0
    %v1581 = vadd.f32 0.0, %v1580
    %v1582 = vpop.f32.mrb[0].mxu0
    %v1583 = vpop.f32.mrb[0].mxu0
    %1584 = vdwg.mxu0
    %1585 = vmatprep.subr.bf16.mxu0 %v1067
    %1586 = vmatpush1.bf16.msra.mxu0 %v1066
    %1587 = vmatprep.subr.bf16.mxu0 %v1075
    %1588 = vmatpush1.bf16.msra.mxu0 %v1074
    %1589 = vmatprep.subr.bf16.mxu0 %v1083
    %1590 = vmatpush1.bf16.msra.mxu0 %v1082
    %1591 = vmatprep.subr.bf16.mxu0 %v1091
    %1592 = vmatpush1.bf16.msra.mxu0 %v1090
    %1593 = vmatprep.subr.bf16.mxu0 %v1099
    %1594 = vmatpush1.bf16.msra.mxu0 %v1098
    %1595 = vmatprep.subr.bf16.mxu0 %v1107
    %1596 = vmatpush1.bf16.msra.mxu0 %v1106
    %1597 = vmatprep.subr.bf16.mxu0 %v1115
    %1598 = vmatpush1.bf16.msra.mxu0 %v1114
    %1599 = vmatprep.subr.bf16.mxu0 %v1123
    %1600 = vmatpush1.bf16.msra.mxu0 %v1122
    %1601 = vmatprep.subr.bf16.mxu0 %v1131
    %1602 = vmatpush1.bf16.msra.mxu0 %v1130
    %1603 = vmatprep.subr.bf16.mxu0 %v1139
    %1604 = vmatpush1.bf16.msra.mxu0 %v1138
    %1605 = vmatprep.subr.bf16.mxu0 %v1147
    %1606 = vmatpush1.bf16.msra.mxu0 %v1146
    %1607 = vmatprep.subr.bf16.mxu0 %v1155
    %1608 = vmatpush1.bf16.msra.mxu0 %v1154
    %1609 = vmatprep.subr.bf16.mxu0 %v1163
    %1610 = vmatpush1.bf16.msra.mxu0 %v1162
    %1611 = vmatprep.subr.bf16.mxu0 %v1171
    %1612 = vmatpush1.bf16.msra.mxu0 %v1170
    %1613 = vmatprep.subr.bf16.mxu0 %v1179
    %1614 = vmatpush1.bf16.msra.mxu0 %v1178
    %1615 = vmatprep.subr.bf16.mxu0 %v1187
    %1616 = vmatpush1.bf16.msra.mxu0 %v1186
    %1617 = vmatprep.mubr.bf16.mxu0 %v1543
    %1618 = vmatmul.mubr.bf16.gmra.mrb[0].mxu0 %v1542
    %v1619 = vpop.f32.mrb[0].mxu0
    %v1620 = vadd.f32 0.0, %v1619
    %v1621 = vpop.f32.mrb[0].mxu0
    %v1622 = vadd.f32 0.0, %v1621
    %v1623 = vpop.f32.mrb[0].mxu0
    %v1624 = vpop.f32.mrb[0].mxu0
    %1625 = vdwg.mxu0
    %1626 = vmatprep.subr.bf16.mxu0 %v1069
    %1627 = vmatpush1.bf16.msra.mxu0 %v1068
    %1628 = vmatprep.subr.bf16.mxu0 %v1077
    %1629 = vmatpush1.bf16.msra.mxu0 %v1076
    %1630 = vmatprep.subr.bf16.mxu0 %v1085
    %1631 = vmatpush1.bf16.msra.mxu0 %v1084
    %1632 = vmatprep.subr.bf16.mxu0 %v1093
    %1633 = vmatpush1.bf16.msra.mxu0 %v1092
    %1634 = vmatprep.subr.bf16.mxu0 %v1101
    %1635 = vmatpush1.bf16.msra.mxu0 %v1100
    %1636 = vmatprep.subr.bf16.mxu0 %v1109
    %1637 = vmatpush1.bf16.msra.mxu0 %v1108
    %1638 = vmatprep.subr.bf16.mxu0 %v1117
    %1639 = vmatpush1.bf16.msra.mxu0 %v1116
    %1640 = vmatprep.subr.bf16.mxu0 %v1125
    %1641 = vmatpush1.bf16.msra.mxu0 %v1124
    %1642 = vmatprep.subr.bf16.mxu0 %v1133
    %1643 = vmatpush1.bf16.msra.mxu0 %v1132
    %1644 = vmatprep.subr.bf16.mxu0 %v1141
    %1645 = vmatpush1.bf16.msra.mxu0 %v1140
    %1646 = vmatprep.subr.bf16.mxu0 %v1149
    %1647 = vmatpush1.bf16.msra.mxu0 %v1148
    %1648 = vmatprep.subr.bf16.mxu0 %v1157
    %1649 = vmatpush1.bf16.msra.mxu0 %v1156
    %1650 = vmatprep.subr.bf16.mxu0 %v1165
    %1651 = vmatpush1.bf16.msra.mxu0 %v1164
    %1652 = vmatprep.subr.bf16.mxu0 %v1173
    %1653 = vmatpush1.bf16.msra.mxu0 %v1172
    %1654 = vmatprep.subr.bf16.mxu0 %v1181
    %1655 = vmatpush1.bf16.msra.mxu0 %v1180
    %1656 = vmatprep.subr.bf16.mxu0 %v1189
    %1657 = vmatpush1.bf16.msra.mxu0 %v1188
    %1658 = vmatprep.mubr.bf16.mxu0 %v1543
    %1659 = vmatmul.mubr.bf16.gmra.mrb[0].mxu0 %v1542
    %v1660 = vpop.f32.mrb[0].mxu0
    %v1661 = vadd.f32 0.0, %v1660
    %v1662 = vpop.f32.mrb[0].mxu0
    %v1663 = vadd.f32 0.0, %v1662
    %v1664 = vpop.f32.mrb[0].mxu0
    %v1665 = vpop.f32.mrb[0].mxu0
    %1666 = vdwg.mxu0
    %1667 = vmatprep.subr.bf16.mxu0 %v1071
    %1668 = vmatpush1.bf16.msra.mxu0 %v1070
    %1669 = vmatprep.subr.bf16.mxu0 %v1079
    %1670 = vmatpush1.bf16.msra.mxu0 %v1078
    %1671 = vmatprep.subr.bf16.mxu0 %v1087
    %1672 = vmatpush1.bf16.msra.mxu0 %v1086
    %1673 = vmatprep.subr.bf16.mxu0 %v1095
    %1674 = vmatpush1.bf16.msra.mxu0 %v1094
    %1675 = vmatprep.subr.bf16.mxu0 %v1103
    %1676 = vmatpush1.bf16.msra.mxu0 %v1102
    %1677 = vmatprep.subr.bf16.mxu0 %v1111
    %1678 = vmatpush1.bf16.msra.mxu0 %v1110
    %1679 = vmatprep.subr.bf16.mxu0 %v1119
    %1680 = vmatpush1.bf16.msra.mxu0 %v1118
    %1681 = vmatprep.subr.bf16.mxu0 %v1127
    %1682 = vmatpush1.bf16.msra.mxu0 %v1126
    %1683 = vmatprep.subr.bf16.mxu0 %v1135
    %1684 = vmatpush1.bf16.msra.mxu0 %v1134
    %1685 = vmatprep.subr.bf16.mxu0 %v1143
    %1686 = vmatpush1.bf16.msra.mxu0 %v1142
    %1687 = vmatprep.subr.bf16.mxu0 %v1151
    %1688 = vmatpush1.bf16.msra.mxu0 %v1150
    %1689 = vmatprep.subr.bf16.mxu0 %v1159
    %1690 = vmatpush1.bf16.msra.mxu0 %v1158
    %1691 = vmatprep.subr.bf16.mxu0 %v1167
    %1692 = vmatpush1.bf16.msra.mxu0 %v1166
    %1693 = vmatprep.subr.bf16.mxu0 %v1175
    %1694 = vmatpush1.bf16.msra.mxu0 %v1174
    %1695 = vmatprep.subr.bf16.mxu0 %v1183
    %1696 = vmatpush1.bf16.msra.mxu0 %v1182
    %1697 = vmatprep.subr.bf16.mxu0 %v1191
    %1698 = vmatpush1.bf16.msra.mxu0 %v1190
    %1699 = vmatprep.mubr.bf16.mxu0 %v1543
    %1700 = vmatmul.mubr.bf16.gmra.mrb[0].mxu0 %v1542
    %v1701 = vpop.f32.mrb[0].mxu0
    %v1702 = vadd.f32 0.0, %v1701
    %v1703 = vpop.f32.mrb[0].mxu0
    %v1704 = vadd.f32 0.0, %v1703
    %v1705 = vpop.f32.mrb[0].mxu0
    %v1706 = vpop.f32.mrb[0].mxu0
    %1707 = vdwg.mxu0
    %v1708 = vadd.f32 %v293, %v1579
    %v1709 = vadd.f32 %v295, %v1581
    %v1710 = vadd.f32 %v366, %v1620
    %v1711 = vadd.f32 %v368, %v1622
    %v1712 = vadd.f32 %v465, %v1661
    %v1713 = vadd.f32 %v467, %v1663
    %v1714 = vadd.f32 %v538, %v1702
    %v1715 = vadd.f32 %v540, %v1704
    %v1716 = vxor.u32 %v1708, 2147483648
    %v1717 = vxor.u32 %v1709, 2147483648
    %v1718 = vxor.u32 %v1710, 2147483648
    %v1719 = vxor.u32 %v1712, 2147483648
    %v1720 = vxor.u32 %v1713, 2147483648
    %v1721 = vxor.u32 %v1714, 2147483648
    %v1722 = vmul.f32 %v1716, 1.442695
    %v1723 = vpow.pop %v1722
    %v1724 = vmul.f32 %v1717, 1.442695
    %v1725 = vpow.pop %v1724
    %v1726 = vmul.f32 %v1718, 1.442695
    %v1727 = vpow.pop %v1726
    %v1728 = vmul.f32 %v1719, 1.442695
    %v1729 = vpow.pop %v1728
    %v1730 = vmul.f32 %v1720, 1.442695
    %v1731 = vpow.pop %v1730
    %v1732 = vmul.f32 %v1721, 1.442695
    %v1733 = vpow.pop %v1732
    %v1734 = vadd.f32 %v1723, 1.0
    %v1735 = vadd.f32 %v1725, 1.0
    %v1736 = vadd.f32 %v1727, 1.0
    %v1737 = vadd.f32 %v1729, 1.0
    %v1738 = vadd.f32 %v1731, 1.0
    %v1739 = vadd.f32 %v1733, 1.0
    %v1740 = vrcp.pop %v1734
    %v1741 = vmul.f32 1.0, %v1740
    %v1742 = vrcp.pop %v1735
    %v1743 = vmul.f32 1.0, %v1742
    %v1744 = vrcp.pop %v1736
    %v1745 = vmul.f32 1.0, %v1744
    %v1746 = vrcp.pop %v1737
    %v1747 = vmul.f32 1.0, %v1746
    %v1748 = vrcp.pop %v1738
    %v1749 = vmul.f32 1.0, %v1748
    %v1750 = vrcp.pop %v1739
    %v1751 = vmul.f32 1.0, %v1750
    %v1752 = vtanh.pop %v1711
    %v1753 = vtanh.pop %v1715
    %v1754 = vmul.f32 %v1743, %v1534
    %v1755 = vmul.f32 %v1749, %v1535
    %v1756 = vmul.f32 %v1741, %v1752
    %v1757 = vmul.f32 %v1747, %v1753
    %v1758 = vadd.f32 %v1754, %v1756
    %v1759 = vadd.f32 %v1755, %v1757
    %v1760 = vtanh.pop %v1758
    %v1761 = vtanh.pop %v1759
    %v1762 = vmul.f32 %v1745, %v1760
    %v1763 = vmul.f32 %v1751, %v1761
    %1764 = vst [vmem:[#allocation2 + $0x30] sm:$0xff] %v1762
    %1765 = vst [vmem:[#allocation2 + $0x88] sm:$0xff] %v1763
    %v1766 = vpack.c.bf16 %v1762, %v1762
    %v1767 = vpack.c.bf16 %v1763, %v1763
    %1768 = vmatprep.subr.bf16.mxu0 %v1065
    %1769 = vmatpush1.bf16.msra.mxu0 %v1064
    %1770 = vmatprep.subr.bf16.mxu0 %v1073
    %1771 = vmatpush1.bf16.msra.mxu0 %v1072
    %1772 = vmatprep.subr.bf16.mxu0 %v1081
    %1773 = vmatpush1.bf16.msra.mxu0 %v1080
    %1774 = vmatprep.subr.bf16.mxu0 %v1089
    %1775 = vmatpush1.bf16.msra.mxu0 %v1088
    %1776 = vmatprep.subr.bf16.mxu0 %v1097
    %1777 = vmatpush1.bf16.msra.mxu0 %v1096
    %1778 = vmatprep.subr.bf16.mxu0 %v1105
    %1779 = vmatpush1.bf16.msra.mxu0 %v1104
    %1780 = vmatprep.subr.bf16.mxu0 %v1113
    %1781 = vmatpush1.bf16.msra.mxu0 %v1112
    %1782 = vmatprep.subr.bf16.mxu0 %v1121
    %1783 = vmatpush1.bf16.msra.mxu0 %v1120
    %1784 = vmatprep.subr.bf16.mxu0 %v1129
    %1785 = vmatpush1.bf16.msra.mxu0 %v1128
    %1786 = vmatprep.subr.bf16.mxu0 %v1137
    %1787 = vmatpush1.bf16.msra.mxu0 %v1136
    %1788 = vmatprep.subr.bf16.mxu0 %v1145
    %1789 = vmatpush1.bf16.msra.mxu0 %v1144
    %1790 = vmatprep.subr.bf16.mxu0 %v1153
    %1791 = vmatpush1.bf16.msra.mxu0 %v1152
    %1792 = vmatprep.subr.bf16.mxu0 %v1161
    %1793 = vmatpush1.bf16.msra.mxu0 %v1160
    %1794 = vmatprep.subr.bf16.mxu0 %v1169
    %1795 = vmatpush1.bf16.msra.mxu0 %v1168
    %1796 = vmatprep.subr.bf16.mxu0 %v1177
    %1797 = vmatpush1.bf16.msra.mxu0 %v1176
    %1798 = vmatprep.subr.bf16.mxu0 %v1185
    %1799 = vmatpush1.bf16.msra.mxu0 %v1184
    %1800 = vmatprep.mubr.bf16.mxu0 %v1767
    %1801 = vmatmul.mubr.bf16.gmra.mrb[0].mxu0 %v1766
    %v1802 = vpop.f32.mrb[0].mxu0
    %v1803 = vadd.f32 0.0, %v1802
    %v1804 = vpop.f32.mrb[0].mxu0
    %v1805 = vadd.f32 0.0, %v1804
    %v1806 = vpop.f32.mrb[0].mxu0
    %v1807 = vpop.f32.mrb[0].mxu0
    %1808 = vdwg.mxu0
    %1809 = vmatprep.subr.bf16.mxu0 %v1067
    %1810 = vmatpush1.bf16.msra.mxu0 %v1066
    %1811 = vmatprep.subr.bf16.mxu0 %v1075
    %1812 = vmatpush1.bf16.msra.mxu0 %v1074
    %1813 = vmatprep.subr.bf16.mxu0 %v1083
    %1814 = vmatpush1.bf16.msra.mxu0 %v1082
    %1815 = vmatprep.subr.bf16.mxu0 %v1091
    %1816 = vmatpush1.bf16.msra.mxu0 %v1090
    %1817 = vmatprep.subr.bf16.mxu0 %v1099
    %1818 = vmatpush1.bf16.msra.mxu0 %v1098
    %1819 = vmatprep.subr.bf16.mxu0 %v1107
    %1820 = vmatpush1.bf16.msra.mxu0 %v1106
    %1821 = vmatprep.subr.bf16.mxu0 %v1115
    %1822 = vmatpush1.bf16.msra.mxu0 %v1114
    %1823 = vmatprep.subr.bf16.mxu0 %v1123
    %1824 = vmatpush1.bf16.msra.mxu0 %v1122
    %1825 = vmatprep.subr.bf16.mxu0 %v1131
    %1826 = vmatpush1.bf16.msra.mxu0 %v1130
    %1827 = vmatprep.subr.bf16.mxu0 %v1139
    %1828 = vmatpush1.bf16.msra.mxu0 %v1138
    %1829 = vmatprep.subr.bf16.mxu0 %v1147
    %1830 = vmatpush1.bf16.msra.mxu0 %v1146
    %1831 = vmatprep.subr.bf16.mxu0 %v1155
    %1832 = vmatpush1.bf16.msra.mxu0 %v1154
    %1833 = vmatprep.subr.bf16.mxu0 %v1163
    %1834 = vmatpush1.bf16.msra.mxu0 %v1162
    %1835 = vmatprep.subr.bf16.mxu0 %v1171
    %1836 = vmatpush1.bf16.msra.mxu0 %v1170
    %1837 = vmatprep.subr.bf16.mxu0 %v1179
    %1838 = vmatpush1.bf16.msra.mxu0 %v1178
    %1839 = vmatprep.subr.bf16.mxu0 %v1187
    %1840 = vmatpush1.bf16.msra.mxu0 %v1186
    %1841 = vmatprep.mubr.bf16.mxu0 %v1767
    %1842 = vmatmul.mubr.bf16.gmra.mrb[0].mxu0 %v1766
    %v1843 = vpop.f32.mrb[0].mxu0
    %v1844 = vadd.f32 0.0, %v1843
    %v1845 = vpop.f32.mrb[0].mxu0
    %v1846 = vadd.f32 0.0, %v1845
    %v1847 = vpop.f32.mrb[0].mxu0
    %v1848 = vpop.f32.mrb[0].mxu0
    %1849 = vdwg.mxu0
    %1850 = vmatprep.subr.bf16.mxu0 %v1069
    %1851 = vmatpush1.bf16.msra.mxu0 %v1068
    %1852 = vmatprep.subr.bf16.mxu0 %v1077
    %1853 = vmatpush1.bf16.msra.mxu0 %v1076
    %1854 = vmatprep.subr.bf16.mxu0 %v1085
    %1855 = vmatpush1.bf16.msra.mxu0 %v1084
    %1856 = vmatprep.subr.bf16.mxu0 %v1093
    %1857 = vmatpush1.bf16.msra.mxu0 %v1092
    %1858 = vmatprep.subr.bf16.mxu0 %v1101
    %1859 = vmatpush1.bf16.msra.mxu0 %v1100
    %1860 = vmatprep.subr.bf16.mxu0 %v1109
    %1861 = vmatpush1.bf16.msra.mxu0 %v1108
    %1862 = vmatprep.subr.bf16.mxu0 %v1117
    %1863 = vmatpush1.bf16.msra.mxu0 %v1116
    %1864 = vmatprep.subr.bf16.mxu0 %v1125
    %1865 = vmatpush1.bf16.msra.mxu0 %v1124
    %1866 = vmatprep.subr.bf16.mxu0 %v1133
    %1867 = vmatpush1.bf16.msra.mxu0 %v1132
    %1868 = vmatprep.subr.bf16.mxu0 %v1141
    %1869 = vmatpush1.bf16.msra.mxu0 %v1140
    %1870 = vmatprep.subr.bf16.mxu0 %v1149
    %1871 = vmatpush1.bf16.msra.mxu0 %v1148
    %1872 = vmatprep.subr.bf16.mxu0 %v1157
    %1873 = vmatpush1.bf16.msra.mxu0 %v1156
    %1874 = vmatprep.subr.bf16.mxu0 %v1165
    %1875 = vmatpush1.bf16.msra.mxu0 %v1164
    %1876 = vmatprep.subr.bf16.mxu0 %v1173
    %1877 = vmatpush1.bf16.msra.mxu0 %v1172
    %1878 = vmatprep.subr.bf16.mxu0 %v1181
    %1879 = vmatpush1.bf16.msra.mxu0 %v1180
    %1880 = vmatprep.subr.bf16.mxu0 %v1189
    %1881 = vmatpush1.bf16.msra.mxu0 %v1188
    %1882 = vmatprep.mubr.bf16.mxu0 %v1767
    %1883 = vmatmul.mubr.bf16.gmra.mrb[0].mxu0 %v1766
    %v1884 = vpop.f32.mrb[0].mxu0
    %v1885 = vadd.f32 0.0, %v1884
    %v1886 = vpop.f32.mrb[0].mxu0
    %v1887 = vadd.f32 0.0, %v1886
    %v1888 = vpop.f32.mrb[0].mxu0
    %v1889 = vpop.f32.mrb[0].mxu0
    %1890 = vdwg.mxu0
    %1891 = vmatprep.subr.bf16.mxu0 %v1071
    %1892 = vmatpush1.bf16.msra.mxu0 %v1070
    %1893 = vmatprep.subr.bf16.mxu0 %v1079
    %1894 = vmatpush1.bf16.msra.mxu0 %v1078
    %1895 = vmatprep.subr.bf16.mxu0 %v1087
    %1896 = vmatpush1.bf16.msra.mxu0 %v1086
    %1897 = vmatprep.subr.bf16.mxu0 %v1095
    %1898 = vmatpush1.bf16.msra.mxu0 %v1094
    %1899 = vmatprep.subr.bf16.mxu0 %v1103
    %1900 = vmatpush1.bf16.msra.mxu0 %v1102
    %1901 = vmatprep.subr.bf16.mxu0 %v1111
    %1902 = vmatpush1.bf16.msra.mxu0 %v1110
    %1903 = vmatprep.subr.bf16.mxu0 %v1119
    %1904 = vmatpush1.bf16.msra.mxu0 %v1118
    %1905 = vmatprep.subr.bf16.mxu0 %v1127
    %1906 = vmatpush1.bf16.msra.mxu0 %v1126
    %1907 = vmatprep.subr.bf16.mxu0 %v1135
    %1908 = vmatpush1.bf16.msra.mxu0 %v1134
    %1909 = vmatprep.subr.bf16.mxu0 %v1143
    %1910 = vmatpush1.bf16.msra.mxu0 %v1142
    %1911 = vmatprep.subr.bf16.mxu0 %v1151
    %1912 = vmatpush1.bf16.msra.mxu0 %v1150
    %1913 = vmatprep.subr.bf16.mxu0 %v1159
    %1914 = vmatpush1.bf16.msra.mxu0 %v1158
    %1915 = vmatprep.subr.bf16.mxu0 %v1167
    %1916 = vmatpush1.bf16.msra.mxu0 %v1166
    %1917 = vmatprep.subr.bf16.mxu0 %v1175
    %1918 = vmatpush1.bf16.msra.mxu0 %v1174
    %1919 = vmatprep.subr.bf16.mxu0 %v1183
    %1920 = vmatpush1.bf16.msra.mxu0 %v1182
    %1921 = vmatprep.subr.bf16.mxu0 %v1191
    %1922 = vmatpush1.bf16.msra.mxu0 %v1190
    %1923 = vmatprep.mubr.bf16.mxu0 %v1767
    %1924 = vmatmul.mubr.bf16.gmra.mrb[0].mxu0 %v1766
    %v1925 = vpop.f32.mrb[0].mxu0
    %v1926 = vadd.f32 0.0, %v1925
    %v1927 = vpop.f32.mrb[0].mxu0
    %v1928 = vadd.f32 0.0, %v1927
    %v1929 = vpop.f32.mrb[0].mxu0
    %v1930 = vpop.f32.mrb[0].mxu0
    %1931 = vdwg.mxu0
    %v1932 = vadd.f32 %v299, %v1803
    %v1933 = vadd.f32 %v301, %v1805
    %v1934 = vadd.f32 %v372, %v1844
    %v1935 = vadd.f32 %v374, %v1846
    %v1936 = vadd.f32 %v459, %v1885
    %v1937 = vadd.f32 %v461, %v1887
    %v1938 = vadd.f32 %v532, %v1926
    %v1939 = vadd.f32 %v534, %v1928
    %v1940 = vxor.u32 %v1932, 2147483648
    %v1941 = vxor.u32 %v1933, 2147483648
    %v1942 = vxor.u32 %v1934, 2147483648
    %v1943 = vxor.u32 %v1936, 2147483648
    %v1944 = vxor.u32 %v1937, 2147483648
    %v1945 = vxor.u32 %v1938, 2147483648
    %v1946 = vmul.f32 %v1940, 1.442695
    %v1947 = vpow.pop %v1946
    %v1948 = vmul.f32 %v1941, 1.442695
    %v1949 = vpow.pop %v1948
    %v1950 = vmul.f32 %v1942, 1.442695
    %v1951 = vpow.pop %v1950
    %v1952 = vmul.f32 %v1943, 1.442695
    %v1953 = vpow.pop %v1952
    %v1954 = vmul.f32 %v1944, 1.442695
    %v1955 = vpow.pop %v1954
    %v1956 = vmul.f32 %v1945, 1.442695
    %v1957 = vpow.pop %v1956
    %v1958 = vadd.f32 %v1947, 1.0
    %v1959 = vadd.f32 %v1949, 1.0
    %v1960 = vadd.f32 %v1951, 1.0
    %v1961 = vadd.f32 %v1953, 1.0
    %v1962 = vadd.f32 %v1955, 1.0
    %v1963 = vadd.f32 %v1957, 1.0
    %v1964 = vrcp.pop %v1958
    %v1965 = vmul.f32 1.0, %v1964
    %v1966 = vrcp.pop %v1959
    %v1967 = vmul.f32 1.0, %v1966
    %v1968 = vrcp.pop %v1960
    %v1969 = vmul.f32 1.0, %v1968
    %v1970 = vrcp.pop %v1961
    %v1971 = vmul.f32 1.0, %v1970
    %v1972 = vrcp.pop %v1962
    %v1973 = vmul.f32 1.0, %v1972
    %v1974 = vrcp.pop %v1963
    %v1975 = vmul.f32 1.0, %v1974
    %v1976 = vtanh.pop %v1935
    %v1977 = vtanh.pop %v1939
    %v1978 = vmul.f32 %v1967, %v1758
    %v1979 = vmul.f32 %v1973, %v1759
    %v1980 = vmul.f32 %v1965, %v1976
    %v1981 = vmul.f32 %v1971, %v1977
    %v1982 = vadd.f32 %v1978, %v1980
    %v1983 = vadd.f32 %v1979, %v1981
    %v1984 = vtanh.pop %v1982
    %v1985 = vtanh.pop %v1983
    %v1986 = vmul.f32 %v1969, %v1984
    %v1987 = vmul.f32 %v1975, %v1985
    %1988 = vst [vmem:[#allocation2 + $0x40] sm:$0xff] %v1986
    %1989 = vst [vmem:[#allocation2 + $0x78] sm:$0xff] %v1987
    %v1990 = vpack.c.bf16 %v1986, %v1986
    %v1991 = vpack.c.bf16 %v1987, %v1987
    %1992 = vmatprep.subr.bf16.mxu0 %v1065
    %1993 = vmatpush1.bf16.msra.mxu0 %v1064
    %1994 = vmatprep.subr.bf16.mxu0 %v1073
    %1995 = vmatpush1.bf16.msra.mxu0 %v1072
    %1996 = vmatprep.subr.bf16.mxu0 %v1081
    %1997 = vmatpush1.bf16.msra.mxu0 %v1080
    %1998 = vmatprep.subr.bf16.mxu0 %v1089
    %1999 = vmatpush1.bf16.msra.mxu0 %v1088
    %2000 = vmatprep.subr.bf16.mxu0 %v1097
    %2001 = vmatpush1.bf16.msra.mxu0 %v1096
    %2002 = vmatprep.subr.bf16.mxu0 %v1105
    %2003 = vmatpush1.bf16.msra.mxu0 %v1104
    %2004 = vmatprep.subr.bf16.mxu0 %v1113
    %2005 = vmatpush1.bf16.msra.mxu0 %v1112
    %2006 = vmatprep.subr.bf16.mxu0 %v1121
    %2007 = vmatpush1.bf16.msra.mxu0 %v1120
    %2008 = vmatprep.subr.bf16.mxu0 %v1129
    %2009 = vmatpush1.bf16.msra.mxu0 %v1128
    %2010 = vmatprep.subr.bf16.mxu0 %v1137
    %2011 = vmatpush1.bf16.msra.mxu0 %v1136
    %2012 = vmatprep.subr.bf16.mxu0 %v1145
    %2013 = vmatpush1.bf16.msra.mxu0 %v1144
    %2014 = vmatprep.subr.bf16.mxu0 %v1153
    %2015 = vmatpush1.bf16.msra.mxu0 %v1152
    %2016 = vmatprep.subr.bf16.mxu0 %v1161
    %2017 = vmatpush1.bf16.msra.mxu0 %v1160
    %2018 = vmatprep.subr.bf16.mxu0 %v1169
    %2019 = vmatpush1.bf16.msra.mxu0 %v1168
    %2020 = vmatprep.subr.bf16.mxu0 %v1177
    %2021 = vmatpush1.bf16.msra.mxu0 %v1176
    %2022 = vmatprep.subr.bf16.mxu0 %v1185
    %2023 = vmatpush1.bf16.msra.mxu0 %v1184
    %2024 = vmatprep.mubr.bf16.mxu0 %v1991
    %2025 = vmatmul.mubr.bf16.gmra.mrb[0].mxu0 %v1990
    %v2026 = vpop.f32.mrb[0].mxu0
    %v2027 = vadd.f32 0.0, %v2026
    %v2028 = vpop.f32.mrb[0].mxu0
    %v2029 = vadd.f32 0.0, %v2028
    %v2030 = vpop.f32.mrb[0].mxu0
    %v2031 = vpop.f32.mrb[0].mxu0
    %2032 = vdwg.mxu0
    %2033 = vmatprep.subr.bf16.mxu0 %v1067
    %2034 = vmatpush1.bf16.msra.mxu0 %v1066
    %2035 = vmatprep.subr.bf16.mxu0 %v1075
    %2036 = vmatpush1.bf16.msra.mxu0 %v1074
    %2037 = vmatprep.subr.bf16.mxu0 %v1083
    %2038 = vmatpush1.bf16.msra.mxu0 %v1082
    %2039 = vmatprep.subr.bf16.mxu0 %v1091
    %2040 = vmatpush1.bf16.msra.mxu0 %v1090
    %2041 = vmatprep.subr.bf16.mxu0 %v1099
    %2042 = vmatpush1.bf16.msra.mxu0 %v1098
    %2043 = vmatprep.subr.bf16.mxu0 %v1107
    %2044 = vmatpush1.bf16.msra.mxu0 %v1106
    %2045 = vmatprep.subr.bf16.mxu0 %v1115
    %2046 = vmatpush1.bf16.msra.mxu0 %v1114
    %2047 = vmatprep.subr.bf16.mxu0 %v1123
    %2048 = vmatpush1.bf16.msra.mxu0 %v1122
    %2049 = vmatprep.subr.bf16.mxu0 %v1131
    %2050 = vmatpush1.bf16.msra.mxu0 %v1130
    %2051 = vmatprep.subr.bf16.mxu0 %v1139
    %2052 = vmatpush1.bf16.msra.mxu0 %v1138
    %2053 = vmatprep.subr.bf16.mxu0 %v1147
    %2054 = vmatpush1.bf16.msra.mxu0 %v1146
    %2055 = vmatprep.subr.bf16.mxu0 %v1155
    %2056 = vmatpush1.bf16.msra.mxu0 %v1154
    %2057 = vmatprep.subr.bf16.mxu0 %v1163
    %2058 = vmatpush1.bf16.msra.mxu0 %v1162
    %2059 = vmatprep.subr.bf16.mxu0 %v1171
    %2060 = vmatpush1.bf16.msra.mxu0 %v1170
    %2061 = vmatprep.subr.bf16.mxu0 %v1179
    %2062 = vmatpush1.bf16.msra.mxu0 %v1178
    %2063 = vmatprep.subr.bf16.mxu0 %v1187
    %2064 = vmatpush1.bf16.msra.mxu0 %v1186
    %2065 = vmatprep.mubr.bf16.mxu0 %v1991
    %2066 = vmatmul.mubr.bf16.gmra.mrb[0].mxu0 %v1990
    %v2067 = vpop.f32.mrb[0].mxu0
    %v2068 = vadd.f32 0.0, %v2067
    %v2069 = vpop.f32.mrb[0].mxu0
    %v2070 = vadd.f32 0.0, %v2069
    %v2071 = vpop.f32.mrb[0].mxu0
    %v2072 = vpop.f32.mrb[0].mxu0
    %2073 = vdwg.mxu0
    %2074 = vmatprep.subr.bf16.mxu0 %v1069
    %2075 = vmatpush1.bf16.msra.mxu0 %v1068
    %2076 = vmatprep.subr.bf16.mxu0 %v1077
    %2077 = vmatpush1.bf16.msra.mxu0 %v1076
    %2078 = vmatprep.subr.bf16.mxu0 %v1085
    %2079 = vmatpush1.bf16.msra.mxu0 %v1084
    %2080 = vmatprep.subr.bf16.mxu0 %v1093
    %2081 = vmatpush1.bf16.msra.mxu0 %v1092
    %2082 = vmatprep.subr.bf16.mxu0 %v1101
    %2083 = vmatpush1.bf16.msra.mxu0 %v1100
    %2084 = vmatprep.subr.bf16.mxu0 %v1109
    %2085 = vmatpush1.bf16.msra.mxu0 %v1108
    %2086 = vmatprep.subr.bf16.mxu0 %v1117
    %2087 = vmatpush1.bf16.msra.mxu0 %v1116
    %2088 = vmatprep.subr.bf16.mxu0 %v1125
    %2089 = vmatpush1.bf16.msra.mxu0 %v1124
    %2090 = vmatprep.subr.bf16.mxu0 %v1133
    %2091 = vmatpush1.bf16.msra.mxu0 %v1132
    %2092 = vmatprep.subr.bf16.mxu0 %v1141
    %2093 = vmatpush1.bf16.msra.mxu0 %v1140
    %2094 = vmatprep.subr.bf16.mxu0 %v1149
    %2095 = vmatpush1.bf16.msra.mxu0 %v1148
    %2096 = vmatprep.subr.bf16.mxu0 %v1157
    %2097 = vmatpush1.bf16.msra.mxu0 %v1156
    %2098 = vmatprep.subr.bf16.mxu0 %v1165
    %2099 = vmatpush1.bf16.msra.mxu0 %v1164
    %2100 = vmatprep.subr.bf16.mxu0 %v1173
    %2101 = vmatpush1.bf16.msra.mxu0 %v1172
    %2102 = vmatprep.subr.bf16.mxu0 %v1181
    %2103 = vmatpush1.bf16.msra.mxu0 %v1180
    %2104 = vmatprep.subr.bf16.mxu0 %v1189
    %2105 = vmatpush1.bf16.msra.mxu0 %v1188
    %2106 = vmatprep.mubr.bf16.mxu0 %v1991
    %2107 = vmatmul.mubr.bf16.gmra.mrb[0].mxu0 %v1990
    %v2108 = vpop.f32.mrb[0].mxu0
    %v2109 = vadd.f32 0.0, %v2108
    %v2110 = vpop.f32.mrb[0].mxu0
    %v2111 = vadd.f32 0.0, %v2110
    %v2112 = vpop.f32.mrb[0].mxu0
    %v2113 = vpop.f32.mrb[0].mxu0
    %2114 = vdwg.mxu0
    %2115 = vmatprep.subr.bf16.mxu0 %v1071
    %2116 = vmatpush1.bf16.msra.mxu0 %v1070
    %2117 = vmatprep.subr.bf16.mxu0 %v1079
    %2118 = vmatpush1.bf16.msra.mxu0 %v1078
    %2119 = vmatprep.subr.bf16.mxu0 %v1087
    %2120 = vmatpush1.bf16.msra.mxu0 %v1086
    %2121 = vmatprep.subr.bf16.mxu0 %v1095
    %2122 = vmatpush1.bf16.msra.mxu0 %v1094
    %2123 = vmatprep.subr.bf16.mxu0 %v1103
    %2124 = vmatpush1.bf16.msra.mxu0 %v1102
    %2125 = vmatprep.subr.bf16.mxu0 %v1111
    %2126 = vmatpush1.bf16.msra.mxu0 %v1110
    %2127 = vmatprep.subr.bf16.mxu0 %v1119
    %2128 = vmatpush1.bf16.msra.mxu0 %v1118
    %2129 = vmatprep.subr.bf16.mxu0 %v1127
    %2130 = vmatpush1.bf16.msra.mxu0 %v1126
    %2131 = vmatprep.subr.bf16.mxu0 %v1135
    %2132 = vmatpush1.bf16.msra.mxu0 %v1134
    %2133 = vmatprep.subr.bf16.mxu0 %v1143
    %2134 = vmatpush1.bf16.msra.mxu0 %v1142
    %2135 = vmatprep.subr.bf16.mxu0 %v1151
    %2136 = vmatpush1.bf16.msra.mxu0 %v1150
    %2137 = vmatprep.subr.bf16.mxu0 %v1159
    %2138 = vmatpush1.bf16.msra.mxu0 %v1158
    %2139 = vmatprep.subr.bf16.mxu0 %v1167
    %2140 = vmatpush1.bf16.msra.mxu0 %v1166
    %2141 = vmatprep.subr.bf16.mxu0 %v1175
    %2142 = vmatpush1.bf16.msra.mxu0 %v1174
    %2143 = vmatprep.subr.bf16.mxu0 %v1183
    %2144 = vmatpush1.bf16.msra.mxu0 %v1182
    %2145 = vmatprep.subr.bf16.mxu0 %v1191
    %2146 = vmatpush1.bf16.msra.mxu0 %v1190
    %2147 = vmatprep.mubr.bf16.mxu0 %v1991
    %2148 = vmatmul.mubr.bf16.gmra.mrb[0].mxu0 %v1990
    %v2149 = vpop.f32.mrb[0].mxu0
    %v2150 = vadd.f32 0.0, %v2149
    %v2151 = vpop.f32.mrb[0].mxu0
    %v2152 = vadd.f32 0.0, %v2151
    %v2153 = vpop.f32.mrb[0].mxu0
    %v2154 = vpop.f32.mrb[0].mxu0
    %2155 = vdwg.mxu0
    %v2156 = vadd.f32 %v303, %v2027
    %v2157 = vadd.f32 %v305, %v2029
    %v2158 = vadd.f32 %v376, %v2068
    %v2159 = vadd.f32 %v378, %v2070
    %v2160 = vadd.f32 %v455, %v2109
    %v2161 = vadd.f32 %v457, %v2111
    %v2162 = vadd.f32 %v528, %v2150
    %v2163 = vadd.f32 %v530, %v2152
    %v2164 = vxor.u32 %v2156, 2147483648
    %v2165 = vxor.u32 %v2157, 2147483648
    %v2166 = vxor.u32 %v2158, 2147483648
    %v2167 = vxor.u32 %v2160, 2147483648
    %v2168 = vxor.u32 %v2161, 2147483648
    %v2169 = vxor.u32 %v2162, 2147483648
    %v2170 = vmul.f32 %v2164, 1.442695
    %v2171 = vpow.pop %v2170
    %v2172 = vmul.f32 %v2165, 1.442695
    %v2173 = vpow.pop %v2172
    %v2174 = vmul.f32 %v2166, 1.442695
    %v2175 = vpow.pop %v2174
    %v2176 = vmul.f32 %v2167, 1.442695
    %v2177 = vpow.pop %v2176
    %v2178 = vmul.f32 %v2168, 1.442695
    %v2179 = vpow.pop %v2178
    %v2180 = vmul.f32 %v2169, 1.442695
    %v2181 = vpow.pop %v2180
    %v2182 = vadd.f32 %v2171, 1.0
    %v2183 = vadd.f32 %v2173, 1.0
    %v2184 = vadd.f32 %v2175, 1.0
    %v2185 = vadd.f32 %v2177, 1.0
    %v2186 = vadd.f32 %v2179, 1.0
    %v2187 = vadd.f32 %v2181, 1.0
    %v2188 = vrcp.pop %v2182
    %v2189 = vmul.f32 1.0, %v2188
    %v2190 = vrcp.pop %v2183
    %v2191 = vmul.f32 1.0, %v2190
    %v2192 = vrcp.pop %v2184
    %v2193 = vmul.f32 1.0, %v2192
    %v2194 = vrcp.pop %v2185
    %v2195 = vmul.f32 1.0, %v2194
    %v2196 = vrcp.pop %v2186
    %v2197 = vmul.f32 1.0, %v2196
    %v2198 = vrcp.pop %v2187
    %v2199 = vmul.f32 1.0, %v2198
    %v2200 = vtanh.pop %v2159
    %v2201 = vtanh.pop %v2163
    %v2202 = vmul.f32 %v2191, %v1982
    %v2203 = vmul.f32 %v2197, %v1983
    %v2204 = vmul.f32 %v2189, %v2200
    %v2205 = vmul.f32 %v2195, %v2201
    %v2206 = vadd.f32 %v2202, %v2204
    %v2207 = vadd.f32 %v2203, %v2205
    %v2208 = vtanh.pop %v2206
    %v2209 = vtanh.pop %v2207
    %v2210 = vmul.f32 %v2193, %v2208
    %v2211 = vmul.f32 %v2199, %v2209
    %2212 = vst [vmem:[#allocation2 + $0x50] sm:$0xff] %v2210
    %2213 = vst [vmem:[#allocation2 + $0x68] sm:$0xff] %v2211
    %v2214 = vpack.c.bf16 %v2210, %v2210
    %v2215 = vpack.c.bf16 %v2211, %v2211
    %2216 = vmatprep.subr.bf16.mxu0 %v1065
    %2217 = vmatpush1.bf16.msra.mxu0 %v1064
    %2218 = vmatprep.subr.bf16.mxu0 %v1073
    %2219 = vmatpush1.bf16.msra.mxu0 %v1072
    %2220 = vmatprep.subr.bf16.mxu0 %v1081
    %2221 = vmatpush1.bf16.msra.mxu0 %v1080
    %2222 = vmatprep.subr.bf16.mxu0 %v1089
    %2223 = vmatpush1.bf16.msra.mxu0 %v1088
    %2224 = vmatprep.subr.bf16.mxu0 %v1097
    %2225 = vmatpush1.bf16.msra.mxu0 %v1096
    %2226 = vmatprep.subr.bf16.mxu0 %v1105
    %2227 = vmatpush1.bf16.msra.mxu0 %v1104
    %2228 = vmatprep.subr.bf16.mxu0 %v1113
    %2229 = vmatpush1.bf16.msra.mxu0 %v1112
    %2230 = vmatprep.subr.bf16.mxu0 %v1121
    %2231 = vmatpush1.bf16.msra.mxu0 %v1120
    %2232 = vmatprep.subr.bf16.mxu0 %v1129
    %2233 = vmatpush1.bf16.msra.mxu0 %v1128
    %2234 = vmatprep.subr.bf16.mxu0 %v1137
    %2235 = vmatpush1.bf16.msra.mxu0 %v1136
    %2236 = vmatprep.subr.bf16.mxu0 %v1145
    %2237 = vmatpush1.bf16.msra.mxu0 %v1144
    %2238 = vmatprep.subr.bf16.mxu0 %v1153
    %2239 = vmatpush1.bf16.msra.mxu0 %v1152
    %2240 = vmatprep.subr.bf16.mxu0 %v1161
    %2241 = vmatpush1.bf16.msra.mxu0 %v1160
    %2242 = vmatprep.subr.bf16.mxu0 %v1169
    %2243 = vmatpush1.bf16.msra.mxu0 %v1168
    %2244 = vmatprep.subr.bf16.mxu0 %v1177
    %2245 = vmatpush1.bf16.msra.mxu0 %v1176
    %2246 = vmatprep.subr.bf16.mxu0 %v1185
    %2247 = vmatpush1.bf16.msra.mxu0 %v1184
    %2248 = vmatprep.mubr.bf16.mxu0 %v2215
    %2249 = vmatmul.mubr.bf16.gmra.mrb[0].mxu0 %v2214
    %v2250 = vpop.f32.mrb[0].mxu0
    %v2251 = vadd.f32 0.0, %v2250
    %v2252 = vpop.f32.mrb[0].mxu0
    %v2253 = vadd.f32 0.0, %v2252
    %v2254 = vpop.f32.mrb[0].mxu0
    %v2255 = vpop.f32.mrb[0].mxu0
    %2256 = vdwg.mxu0
    %2257 = vmatprep.subr.bf16.mxu0 %v1067
    %2258 = vmatpush1.bf16.msra.mxu0 %v1066
    %2259 = vmatprep.subr.bf16.mxu0 %v1075
    %2260 = vmatpush1.bf16.msra.mxu0 %v1074
    %2261 = vmatprep.subr.bf16.mxu0 %v1083
    %2262 = vmatpush1.bf16.msra.mxu0 %v1082
    %2263 = vmatprep.subr.bf16.mxu0 %v1091
    %2264 = vmatpush1.bf16.msra.mxu0 %v1090
    %2265 = vmatprep.subr.bf16.mxu0 %v1099
    %2266 = vmatpush1.bf16.msra.mxu0 %v1098
    %2267 = vmatprep.subr.bf16.mxu0 %v1107
    %2268 = vmatpush1.bf16.msra.mxu0 %v1106
    %2269 = vmatprep.subr.bf16.mxu0 %v1115
    %2270 = vmatpush1.bf16.msra.mxu0 %v1114
    %2271 = vmatprep.subr.bf16.mxu0 %v1123
    %2272 = vmatpush1.bf16.msra.mxu0 %v1122
    %2273 = vmatprep.subr.bf16.mxu0 %v1131
    %2274 = vmatpush1.bf16.msra.mxu0 %v1130
    %2275 = vmatprep.subr.bf16.mxu0 %v1139
    %2276 = vmatpush1.bf16.msra.mxu0 %v1138
    %2277 = vmatprep.subr.bf16.mxu0 %v1147
    %2278 = vmatpush1.bf16.msra.mxu0 %v1146
    %2279 = vmatprep.subr.bf16.mxu0 %v1155
    %2280 = vmatpush1.bf16.msra.mxu0 %v1154
    %2281 = vmatprep.subr.bf16.mxu0 %v1163
    %2282 = vmatpush1.bf16.msra.mxu0 %v1162
    %2283 = vmatprep.subr.bf16.mxu0 %v1171
    %2284 = vmatpush1.bf16.msra.mxu0 %v1170
    %2285 = vmatprep.subr.bf16.mxu0 %v1179
    %2286 = vmatpush1.bf16.msra.mxu0 %v1178
    %2287 = vmatprep.subr.bf16.mxu0 %v1187
    %2288 = vmatpush1.bf16.msra.mxu0 %v1186
    %2289 = vmatprep.mubr.bf16.mxu0 %v2215
    %2290 = vmatmul.mubr.bf16.gmra.mrb[0].mxu0 %v2214
    %v2291 = vpop.f32.mrb[0].mxu0
    %v2292 = vadd.f32 0.0, %v2291
    %v2293 = vpop.f32.mrb[0].mxu0
    %v2294 = vadd.f32 0.0, %v2293
    %v2295 = vpop.f32.mrb[0].mxu0
    %v2296 = vpop.f32.mrb[0].mxu0
    %2297 = vdwg.mxu0
    %2298 = vmatprep.subr.bf16.mxu0 %v1069
    %2299 = vmatpush1.bf16.msra.mxu0 %v1068
    %2300 = vmatprep.subr.bf16.mxu0 %v1077
    %2301 = vmatpush1.bf16.msra.mxu0 %v1076
    %2302 = vmatprep.subr.bf16.mxu0 %v1085
    %2303 = vmatpush1.bf16.msra.mxu0 %v1084
    %2304 = vmatprep.subr.bf16.mxu0 %v1093
    %2305 = vmatpush1.bf16.msra.mxu0 %v1092
    %2306 = vmatprep.subr.bf16.mxu0 %v1101
    %2307 = vmatpush1.bf16.msra.mxu0 %v1100
    %2308 = vmatprep.subr.bf16.mxu0 %v1109
    %2309 = vmatpush1.bf16.msra.mxu0 %v1108
    %2310 = vmatprep.subr.bf16.mxu0 %v1117
    %2311 = vmatpush1.bf16.msra.mxu0 %v1116
    %2312 = vmatprep.subr.bf16.mxu0 %v1125
    %2313 = vmatpush1.bf16.msra.mxu0 %v1124
    %2314 = vmatprep.subr.bf16.mxu0 %v1133
    %2315 = vmatpush1.bf16.msra.mxu0 %v1132
    %2316 = vmatprep.subr.bf16.mxu0 %v1141
    %2317 = vmatpush1.bf16.msra.mxu0 %v1140
    %2318 = vmatprep.subr.bf16.mxu0 %v1149
    %2319 = vmatpush1.bf16.msra.mxu0 %v1148
    %2320 = vmatprep.subr.bf16.mxu0 %v1157
    %2321 = vmatpush1.bf16.msra.mxu0 %v1156
    %2322 = vmatprep.subr.bf16.mxu0 %v1165
    %2323 = vmatpush1.bf16.msra.mxu0 %v1164
    %2324 = vmatprep.subr.bf16.mxu0 %v1173
    %2325 = vmatpush1.bf16.msra.mxu0 %v1172
    %2326 = vmatprep.subr.bf16.mxu0 %v1181
    %2327 = vmatpush1.bf16.msra.mxu0 %v1180
    %2328 = vmatprep.subr.bf16.mxu0 %v1189
    %2329 = vmatpush1.bf16.msra.mxu0 %v1188
    %2330 = vmatprep.mubr.bf16.mxu0 %v2215
    %2331 = vmatmul.mubr.bf16.gmra.mrb[0].mxu0 %v2214
    %v2332 = vpop.f32.mrb[0].mxu0
    %v2333 = vadd.f32 0.0, %v2332
    %v2334 = vpop.f32.mrb[0].mxu0
    %v2335 = vadd.f32 0.0, %v2334
    %v2336 = vpop.f32.mrb[0].mxu0
    %v2337 = vpop.f32.mrb[0].mxu0
    %2338 = vdwg.mxu0
    %2339 = vmatprep.subr.bf16.mxu0 %v1071
    %2340 = vmatpush1.bf16.msra.mxu0 %v1070
    %2341 = vmatprep.subr.bf16.mxu0 %v1079
    %2342 = vmatpush1.bf16.msra.mxu0 %v1078
    %2343 = vmatprep.subr.bf16.mxu0 %v1087
    %2344 = vmatpush1.bf16.msra.mxu0 %v1086
    %2345 = vmatprep.subr.bf16.mxu0 %v1095
    %2346 = vmatpush1.bf16.msra.mxu0 %v1094
    %2347 = vmatprep.subr.bf16.mxu0 %v1103
    %2348 = vmatpush1.bf16.msra.mxu0 %v1102
    %2349 = vmatprep.subr.bf16.mxu0 %v1111
    %2350 = vmatpush1.bf16.msra.mxu0 %v1110
    %2351 = vmatprep.subr.bf16.mxu0 %v1119
    %2352 = vmatpush1.bf16.msra.mxu0 %v1118
    %2353 = vmatprep.subr.bf16.mxu0 %v1127
    %2354 = vmatpush1.bf16.msra.mxu0 %v1126
    %2355 = vmatprep.subr.bf16.mxu0 %v1135
    %2356 = vmatpush1.bf16.msra.mxu0 %v1134
    %2357 = vmatprep.subr.bf16.mxu0 %v1143
    %2358 = vmatpush1.bf16.msra.mxu0 %v1142
    %2359 = vmatprep.subr.bf16.mxu0 %v1151
    %2360 = vmatpush1.bf16.msra.mxu0 %v1150
    %2361 = vmatprep.subr.bf16.mxu0 %v1159
    %2362 = vmatpush1.bf16.msra.mxu0 %v1158
    %2363 = vmatprep.subr.bf16.mxu0 %v1167
    %2364 = vmatpush1.bf16.msra.mxu0 %v1166
    %2365 = vmatprep.subr.bf16.mxu0 %v1175
    %2366 = vmatpush1.bf16.msra.mxu0 %v1174
    %2367 = vmatprep.subr.bf16.mxu0 %v1183
    %2368 = vmatpush1.bf16.msra.mxu0 %v1182
    %2369 = vmatprep.subr.bf16.mxu0 %v1191
    %2370 = vmatpush1.bf16.msra.mxu0 %v1190
    %2371 = vmatprep.mubr.bf16.mxu0 %v2215
    %2372 = vmatmul.mubr.bf16.gmra.mrb[0].mxu0 %v2214
    %v2373 = vpop.f32.mrb[0].mxu0
    %v2374 = vadd.f32 0.0, %v2373
    %v2375 = vpop.f32.mrb[0].mxu0
    %v2376 = vadd.f32 0.0, %v2375
    %v2377 = vpop.f32.mrb[0].mxu0
    %v2378 = vpop.f32.mrb[0].mxu0
    %2379 = vdwg.mxu0
    %v2380 = vadd.f32 %v309, %v2251
    %v2381 = vadd.f32 %v311, %v2253
    %v2382 = vadd.f32 %v382, %v2292
    %v2383 = vadd.f32 %v384, %v2294
    %v2384 = vadd.f32 %v449, %v2333
    %v2385 = vadd.f32 %v451, %v2335
    %v2386 = vadd.f32 %v522, %v2374
    %v2387 = vadd.f32 %v524, %v2376
    %v2388 = vxor.u32 %v2380, 2147483648
    %v2389 = vxor.u32 %v2381, 2147483648
    %v2390 = vxor.u32 %v2382, 2147483648
    %v2391 = vxor.u32 %v2384, 2147483648
    %v2392 = vxor.u32 %v2385, 2147483648
    %v2393 = vxor.u32 %v2386, 2147483648
    %v2394 = vmul.f32 %v2388, 1.442695
    %v2395 = vpow.pop %v2394
    %v2396 = vmul.f32 %v2389, 1.442695
    %v2397 = vpow.pop %v2396
    %v2398 = vmul.f32 %v2390, 1.442695
    %v2399 = vpow.pop %v2398
    %v2400 = vmul.f32 %v2391, 1.442695
    %v2401 = vpow.pop %v2400
    %v2402 = vmul.f32 %v2392, 1.442695
    %v2403 = vpow.pop %v2402
    %v2404 = vmul.f32 %v2393, 1.442695
    %v2405 = vpow.pop %v2404
    %v2406 = vadd.f32 %v2395, 1.0
    %v2407 = vadd.f32 %v2397, 1.0
    %v2408 = vadd.f32 %v2399, 1.0
    %v2409 = vadd.f32 %v2401, 1.0
    %v2410 = vadd.f32 %v2403, 1.0
    %v2411 = vadd.f32 %v2405, 1.0
    %v2412 = vrcp.pop %v2406
    %v2413 = vmul.f32 1.0, %v2412
    %v2414 = vrcp.pop %v2407
    %v2415 = vmul.f32 1.0, %v2414
    %v2416 = vrcp.pop %v2408
    %v2417 = vmul.f32 1.0, %v2416
    %v2418 = vrcp.pop %v2409
    %v2419 = vmul.f32 1.0, %v2418
    %v2420 = vrcp.pop %v2410
    %v2421 = vmul.f32 1.0, %v2420
    %v2422 = vrcp.pop %v2411
    %v2423 = vmul.f32 1.0, %v2422
    %v2424 = vtanh.pop %v2383
    %v2425 = vtanh.pop %v2387
    %v2426 = vmul.f32 %v2415, %v2206
    %v2427 = vmul.f32 %v2421, %v2207
    %v2428 = vmul.f32 %v2413, %v2424
    %v2429 = vmul.f32 %v2419, %v2425
    %v2430 = vadd.f32 %v2426, %v2428
    %v2431 = vadd.f32 %v2427, %v2429
    %v2432 = vtanh.pop %v2430
    %v2433 = vtanh.pop %v2431
    %v2434 = vmul.f32 %v2417, %v2432
    %v2435 = vmul.f32 %v2423, %v2433
    %2436 = vst [vmem:[#allocation2 + $0x60] sm:$0xff] %v2434
    %2437 = vst [vmem:[#allocation2 + $0x58] sm:$0xff] %v2435
    %v2438 = vpack.c.bf16 %v2434, %v2434
    %v2439 = vpack.c.bf16 %v2435, %v2435
    %2440 = vmatprep.subr.bf16.mxu0 %v1065
    %2441 = vmatpush1.bf16.msra.mxu0 %v1064
    %2442 = vmatprep.subr.bf16.mxu0 %v1073
    %2443 = vmatpush1.bf16.msra.mxu0 %v1072
    %2444 = vmatprep.subr.bf16.mxu0 %v1081
    %2445 = vmatpush1.bf16.msra.mxu0 %v1080
    %2446 = vmatprep.subr.bf16.mxu0 %v1089
    %2447 = vmatpush1.bf16.msra.mxu0 %v1088
    %2448 = vmatprep.subr.bf16.mxu0 %v1097
    %2449 = vmatpush1.bf16.msra.mxu0 %v1096
    %2450 = vmatprep.subr.bf16.mxu0 %v1105
    %2451 = vmatpush1.bf16.msra.mxu0 %v1104
    %2452 = vmatprep.subr.bf16.mxu0 %v1113
    %2453 = vmatpush1.bf16.msra.mxu0 %v1112
    %2454 = vmatprep.subr.bf16.mxu0 %v1121
    %2455 = vmatpush1.bf16.msra.mxu0 %v1120
    %2456 = vmatprep.subr.bf16.mxu0 %v1129
    %2457 = vmatpush1.bf16.msra.mxu0 %v1128
    %2458 = vmatprep.subr.bf16.mxu0 %v1137
    %2459 = vmatpush1.bf16.msra.mxu0 %v1136
    %2460 = vmatprep.subr.bf16.mxu0 %v1145
    %2461 = vmatpush1.bf16.msra.mxu0 %v1144
    %2462 = vmatprep.subr.bf16.mxu0 %v1153
    %2463 = vmatpush1.bf16.msra.mxu0 %v1152
    %2464 = vmatprep.subr.bf16.mxu0 %v1161
    %2465 = vmatpush1.bf16.msra.mxu0 %v1160
    %2466 = vmatprep.subr.bf16.mxu0 %v1169
    %2467 = vmatpush1.bf16.msra.mxu0 %v1168
    %2468 = vmatprep.subr.bf16.mxu0 %v1177
    %2469 = vmatpush1.bf16.msra.mxu0 %v1176
    %2470 = vmatprep.subr.bf16.mxu0 %v1185
    %2471 = vmatpush1.bf16.msra.mxu0 %v1184
    %2472 = vmatprep.mubr.bf16.mxu0 %v2439
    %2473 = vmatmul.mubr.bf16.gmra.mrb[0].mxu0 %v2438
    %v2474 = vpop.f32.mrb[0].mxu0
    %v2475 = vadd.f32 0.0, %v2474
    %v2476 = vpop.f32.mrb[0].mxu0
    %v2477 = vadd.f32 0.0, %v2476
    %v2478 = vpop.f32.mrb[0].mxu0
    %v2479 = vpop.f32.mrb[0].mxu0
    %2480 = vdwg.mxu0
    %2481 = vmatprep.subr.bf16.mxu0 %v1067
    %2482 = vmatpush1.bf16.msra.mxu0 %v1066
    %2483 = vmatprep.subr.bf16.mxu0 %v1075
    %2484 = vmatpush1.bf16.msra.mxu0 %v1074
    %2485 = vmatprep.subr.bf16.mxu0 %v1083
    %2486 = vmatpush1.bf16.msra.mxu0 %v1082
    %2487 = vmatprep.subr.bf16.mxu0 %v1091
    %2488 = vmatpush1.bf16.msra.mxu0 %v1090
    %2489 = vmatprep.subr.bf16.mxu0 %v1099
    %2490 = vmatpush1.bf16.msra.mxu0 %v1098
    %2491 = vmatprep.subr.bf16.mxu0 %v1107
    %2492 = vmatpush1.bf16.msra.mxu0 %v1106
    %2493 = vmatprep.subr.bf16.mxu0 %v1115
    %2494 = vmatpush1.bf16.msra.mxu0 %v1114
    %2495 = vmatprep.subr.bf16.mxu0 %v1123
    %2496 = vmatpush1.bf16.msra.mxu0 %v1122
    %2497 = vmatprep.subr.bf16.mxu0 %v1131
    %2498 = vmatpush1.bf16.msra.mxu0 %v1130
    %2499 = vmatprep.subr.bf16.mxu0 %v1139
    %2500 = vmatpush1.bf16.msra.mxu0 %v1138
    %2501 = vmatprep.subr.bf16.mxu0 %v1147
    %2502 = vmatpush1.bf16.msra.mxu0 %v1146
    %2503 = vmatprep.subr.bf16.mxu0 %v1155
    %2504 = vmatpush1.bf16.msra.mxu0 %v1154
    %2505 = vmatprep.subr.bf16.mxu0 %v1163
    %2506 = vmatpush1.bf16.msra.mxu0 %v1162
    %2507 = vmatprep.subr.bf16.mxu0 %v1171
    %2508 = vmatpush1.bf16.msra.mxu0 %v1170
    %2509 = vmatprep.subr.bf16.mxu0 %v1179
    %2510 = vmatpush1.bf16.msra.mxu0 %v1178
    %2511 = vmatprep.subr.bf16.mxu0 %v1187
    %2512 = vmatpush1.bf16.msra.mxu0 %v1186
    %2513 = vmatprep.mubr.bf16.mxu0 %v2439
    %2514 = vmatmul.mubr.bf16.gmra.mrb[0].mxu0 %v2438
    %v2515 = vpop.f32.mrb[0].mxu0
    %v2516 = vadd.f32 0.0, %v2515
    %v2517 = vpop.f32.mrb[0].mxu0
    %v2518 = vadd.f32 0.0, %v2517
    %v2519 = vpop.f32.mrb[0].mxu0
    %v2520 = vpop.f32.mrb[0].mxu0
    %2521 = vdwg.mxu0
    %2522 = vmatprep.subr.bf16.mxu0 %v1069
    %2523 = vmatpush1.bf16.msra.mxu0 %v1068
    %2524 = vmatprep.subr.bf16.mxu0 %v1077
    %2525 = vmatpush1.bf16.msra.mxu0 %v1076
    %2526 = vmatprep.subr.bf16.mxu0 %v1085
    %2527 = vmatpush1.bf16.msra.mxu0 %v1084
    %2528 = vmatprep.subr.bf16.mxu0 %v1093
    %2529 = vmatpush1.bf16.msra.mxu0 %v1092
    %2530 = vmatprep.subr.bf16.mxu0 %v1101
    %2531 = vmatpush1.bf16.msra.mxu0 %v1100
    %2532 = vmatprep.subr.bf16.mxu0 %v1109
    %2533 = vmatpush1.bf16.msra.mxu0 %v1108
    %2534 = vmatprep.subr.bf16.mxu0 %v1117
    %2535 = vmatpush1.bf16.msra.mxu0 %v1116
    %2536 = vmatprep.subr.bf16.mxu0 %v1125
    %2537 = vmatpush1.bf16.msra.mxu0 %v1124
    %2538 = vmatprep.subr.bf16.mxu0 %v1133
    %2539 = vmatpush1.bf16.msra.mxu0 %v1132
    %2540 = vmatprep.subr.bf16.mxu0 %v1141
    %2541 = vmatpush1.bf16.msra.mxu0 %v1140
    %2542 = vmatprep.subr.bf16.mxu0 %v1149
    %2543 = vmatpush1.bf16.msra.mxu0 %v1148
    %2544 = vmatprep.subr.bf16.mxu0 %v1157
    %2545 = vmatpush1.bf16.msra.mxu0 %v1156
    %2546 = vmatprep.subr.bf16.mxu0 %v1165
    %2547 = vmatpush1.bf16.msra.mxu0 %v1164
    %2548 = vmatprep.subr.bf16.mxu0 %v1173
    %2549 = vmatpush1.bf16.msra.mxu0 %v1172
    %2550 = vmatprep.subr.bf16.mxu0 %v1181
    %2551 = vmatpush1.bf16.msra.mxu0 %v1180
    %2552 = vmatprep.subr.bf16.mxu0 %v1189
    %2553 = vmatpush1.bf16.msra.mxu0 %v1188
    %2554 = vmatprep.mubr.bf16.mxu0 %v2439
    %2555 = vmatmul.mubr.bf16.gmra.mrb[0].mxu0 %v2438
    %v2556 = vpop.f32.mrb[0].mxu0
    %v2557 = vadd.f32 0.0, %v2556
    %v2558 = vpop.f32.mrb[0].mxu0
    %v2559 = vadd.f32 0.0, %v2558
    %v2560 = vpop.f32.mrb[0].mxu0
    %v2561 = vpop.f32.mrb[0].mxu0
    %2562 = vdwg.mxu0
    %2563 = vmatprep.subr.bf16.mxu0 %v1071
    %2564 = vmatpush1.bf16.msra.mxu0 %v1070
    %2565 = vmatprep.subr.bf16.mxu0 %v1079
    %2566 = vmatpush1.bf16.msra.mxu0 %v1078
    %2567 = vmatprep.subr.bf16.mxu0 %v1087
    %2568 = vmatpush1.bf16.msra.mxu0 %v1086
    %2569 = vmatprep.subr.bf16.mxu0 %v1095
    %2570 = vmatpush1.bf16.msra.mxu0 %v1094
    %2571 = vmatprep.subr.bf16.mxu0 %v1103
    %2572 = vmatpush1.bf16.msra.mxu0 %v1102
    %2573 = vmatprep.subr.bf16.mxu0 %v1111
    %2574 = vmatpush1.bf16.msra.mxu0 %v1110
    %2575 = vmatprep.subr.bf16.mxu0 %v1119
    %2576 = vmatpush1.bf16.msra.mxu0 %v1118
    %2577 = vmatprep.subr.bf16.mxu0 %v1127
    %2578 = vmatpush1.bf16.msra.mxu0 %v1126
    %2579 = vmatprep.subr.bf16.mxu0 %v1135
    %2580 = vmatpush1.bf16.msra.mxu0 %v1134
    %2581 = vmatprep.subr.bf16.mxu0 %v1143
    %2582 = vmatpush1.bf16.msra.mxu0 %v1142
    %2583 = vmatprep.subr.bf16.mxu0 %v1151
    %2584 = vmatpush1.bf16.msra.mxu0 %v1150
    %2585 = vmatprep.subr.bf16.mxu0 %v1159
    %2586 = vmatpush1.bf16.msra.mxu0 %v1158
    %2587 = vmatprep.subr.bf16.mxu0 %v1167
    %2588 = vmatpush1.bf16.msra.mxu0 %v1166
    %2589 = vmatprep.subr.bf16.mxu0 %v1175
    %2590 = vmatpush1.bf16.msra.mxu0 %v1174
    %2591 = vmatprep.subr.bf16.mxu0 %v1183
    %2592 = vmatpush1.bf16.msra.mxu0 %v1182
    %2593 = vmatprep.subr.bf16.mxu0 %v1191
    %2594 = vmatpush1.bf16.msra.mxu0 %v1190
    %2595 = vmatprep.mubr.bf16.mxu0 %v2439
    %2596 = vmatmul.mubr.bf16.gmra.mrb[0].mxu0 %v2438
    %v2597 = vpop.f32.mrb[0].mxu0
    %v2598 = vadd.f32 0.0, %v2597
    %v2599 = vpop.f32.mrb[0].mxu0
    %v2600 = vadd.f32 0.0, %v2599
    %v2601 = vpop.f32.mrb[0].mxu0
    %v2602 = vpop.f32.mrb[0].mxu0
    %2603 = vdwg.mxu0
    %v2604 = vadd.f32 %v313, %v2475
    %v2605 = vadd.f32 %v315, %v2477
    %v2606 = vadd.f32 %v386, %v2516
    %v2607 = vadd.f32 %v388, %v2518
    %v2608 = vadd.f32 %v445, %v2557
    %v2609 = vadd.f32 %v447, %v2559
    %v2610 = vadd.f32 %v518, %v2598
    %v2611 = vadd.f32 %v520, %v2600
    %v2612 = vxor.u32 %v2604, 2147483648
    %v2613 = vxor.u32 %v2605, 2147483648
    %v2614 = vxor.u32 %v2606, 2147483648
    %v2615 = vxor.u32 %v2608, 2147483648
    %v2616 = vxor.u32 %v2609, 2147483648
    %v2617 = vxor.u32 %v2610, 2147483648
    %v2618 = vmul.f32 %v2612, 1.442695
    %v2619 = vpow.pop %v2618
    %v2620 = vmul.f32 %v2613, 1.442695
    %v2621 = vpow.pop %v2620
    %v2622 = vmul.f32 %v2614, 1.442695
    %v2623 = vpow.pop %v2622
    %v2624 = vmul.f32 %v2615, 1.442695
    %v2625 = vpow.pop %v2624
    %v2626 = vmul.f32 %v2616, 1.442695
    %v2627 = vpow.pop %v2626
    %v2628 = vmul.f32 %v2617, 1.442695
    %v2629 = vpow.pop %v2628
    %v2630 = vadd.f32 %v2619, 1.0
    %v2631 = vadd.f32 %v2621, 1.0
    %v2632 = vadd.f32 %v2623, 1.0
    %v2633 = vadd.f32 %v2625, 1.0
    %v2634 = vadd.f32 %v2627, 1.0
    %v2635 = vadd.f32 %v2629, 1.0
    %v2636 = vrcp.pop %v2630
    %v2637 = vmul.f32 1.0, %v2636
    %v2638 = vrcp.pop %v2631
    %v2639 = vmul.f32 1.0, %v2638
    %v2640 = vrcp.pop %v2632
    %v2641 = vmul.f32 1.0, %v2640
    %v2642 = vrcp.pop %v2633
    %v2643 = vmul.f32 1.0, %v2642
    %v2644 = vrcp.pop %v2634
    %v2645 = vmul.f32 1.0, %v2644
    %v2646 = vrcp.pop %v2635
    %v2647 = vmul.f32 1.0, %v2646
    %v2648 = vtanh.pop %v2607
    %v2649 = vtanh.pop %v2611
    %v2650 = vmul.f32 %v2639, %v2430
    %v2651 = vmul.f32 %v2645, %v2431
    %v2652 = vmul.f32 %v2637, %v2648
    %v2653 = vmul.f32 %v2643, %v2649
    %v2654 = vadd.f32 %v2650, %v2652
    %v2655 = vadd.f32 %v2651, %v2653
    %v2656 = vtanh.pop %v2654
    %v2657 = vtanh.pop %v2655
    %v2658 = vmul.f32 %v2641, %v2656
    %v2659 = vmul.f32 %v2647, %v2657
    %2660 = vst [vmem:[#allocation2 + $0x70] sm:$0xff] %v2658
    %2661 = vst [vmem:[#allocation2 + $0x48] sm:$0xff] %v2659
    %v2662 = vpack.c.bf16 %v2658, %v2658
    %v2663 = vpack.c.bf16 %v2659, %v2659
    %2664 = vmatprep.subr.bf16.mxu0 %v1065
    %2665 = vmatpush1.bf16.msra.mxu0 %v1064
    %2666 = vmatprep.subr.bf16.mxu0 %v1073
    %2667 = vmatpush1.bf16.msra.mxu0 %v1072
    %2668 = vmatprep.subr.bf16.mxu0 %v1081
    %2669 = vmatpush1.bf16.msra.mxu0 %v1080
    %2670 = vmatprep.subr.bf16.mxu0 %v1089
    %2671 = vmatpush1.bf16.msra.mxu0 %v1088
    %2672 = vmatprep.subr.bf16.mxu0 %v1097
    %2673 = vmatpush1.bf16.msra.mxu0 %v1096
    %2674 = vmatprep.subr.bf16.mxu0 %v1105
    %2675 = vmatpush1.bf16.msra.mxu0 %v1104
    %2676 = vmatprep.subr.bf16.mxu0 %v1113
    %2677 = vmatpush1.bf16.msra.mxu0 %v1112
    %2678 = vmatprep.subr.bf16.mxu0 %v1121
    %2679 = vmatpush1.bf16.msra.mxu0 %v1120
    %2680 = vmatprep.subr.bf16.mxu0 %v1129
    %2681 = vmatpush1.bf16.msra.mxu0 %v1128
    %2682 = vmatprep.subr.bf16.mxu0 %v1137
    %2683 = vmatpush1.bf16.msra.mxu0 %v1136
    %2684 = vmatprep.subr.bf16.mxu0 %v1145
    %2685 = vmatpush1.bf16.msra.mxu0 %v1144
    %2686 = vmatprep.subr.bf16.mxu0 %v1153
    %2687 = vmatpush1.bf16.msra.mxu0 %v1152
    %2688 = vmatprep.subr.bf16.mxu0 %v1161
    %2689 = vmatpush1.bf16.msra.mxu0 %v1160
    %2690 = vmatprep.subr.bf16.mxu0 %v1169
    %2691 = vmatpush1.bf16.msra.mxu0 %v1168
    %2692 = vmatprep.subr.bf16.mxu0 %v1177
    %2693 = vmatpush1.bf16.msra.mxu0 %v1176
    %2694 = vmatprep.subr.bf16.mxu0 %v1185
    %2695 = vmatpush1.bf16.msra.mxu0 %v1184
    %2696 = vmatprep.mubr.bf16.mxu0 %v2663
    %2697 = vmatmul.mubr.bf16.gmra.mrb[0].mxu0 %v2662
    %v2698 = vpop.f32.mrb[0].mxu0
    %v2699 = vadd.f32 0.0, %v2698
    %v2700 = vpop.f32.mrb[0].mxu0
    %v2701 = vadd.f32 0.0, %v2700
    %v2702 = vpop.f32.mrb[0].mxu0
    %v2703 = vpop.f32.mrb[0].mxu0
    %2704 = vdwg.mxu0
    %2705 = vmatprep.subr.bf16.mxu0 %v1067
    %2706 = vmatpush1.bf16.msra.mxu0 %v1066
    %2707 = vmatprep.subr.bf16.mxu0 %v1075
    %2708 = vmatpush1.bf16.msra.mxu0 %v1074
    %2709 = vmatprep.subr.bf16.mxu0 %v1083
    %2710 = vmatpush1.bf16.msra.mxu0 %v1082
    %2711 = vmatprep.subr.bf16.mxu0 %v1091
    %2712 = vmatpush1.bf16.msra.mxu0 %v1090
    %2713 = vmatprep.subr.bf16.mxu0 %v1099
    %2714 = vmatpush1.bf16.msra.mxu0 %v1098
    %2715 = vmatprep.subr.bf16.mxu0 %v1107
    %2716 = vmatpush1.bf16.msra.mxu0 %v1106
    %2717 = vmatprep.subr.bf16.mxu0 %v1115
    %2718 = vmatpush1.bf16.msra.mxu0 %v1114
    %2719 = vmatprep.subr.bf16.mxu0 %v1123
    %2720 = vmatpush1.bf16.msra.mxu0 %v1122
    %2721 = vmatprep.subr.bf16.mxu0 %v1131
    %2722 = vmatpush1.bf16.msra.mxu0 %v1130
    %2723 = vmatprep.subr.bf16.mxu0 %v1139
    %2724 = vmatpush1.bf16.msra.mxu0 %v1138
    %2725 = vmatprep.subr.bf16.mxu0 %v1147
    %2726 = vmatpush1.bf16.msra.mxu0 %v1146
    %2727 = vmatprep.subr.bf16.mxu0 %v1155
    %2728 = vmatpush1.bf16.msra.mxu0 %v1154
    %2729 = vmatprep.subr.bf16.mxu0 %v1163
    %2730 = vmatpush1.bf16.msra.mxu0 %v1162
    %2731 = vmatprep.subr.bf16.mxu0 %v1171
    %2732 = vmatpush1.bf16.msra.mxu0 %v1170
    %2733 = vmatprep.subr.bf16.mxu0 %v1179
    %2734 = vmatpush1.bf16.msra.mxu0 %v1178
    %2735 = vmatprep.subr.bf16.mxu0 %v1187
    %2736 = vmatpush1.bf16.msra.mxu0 %v1186
    %2737 = vmatprep.mubr.bf16.mxu0 %v2663
    %2738 = vmatmul.mubr.bf16.gmra.mrb[0].mxu0 %v2662
    %v2739 = vpop.f32.mrb[0].mxu0
    %v2740 = vadd.f32 0.0, %v2739
    %v2741 = vpop.f32.mrb[0].mxu0
    %v2742 = vadd.f32 0.0, %v2741
    %v2743 = vpop.f32.mrb[0].mxu0
    %v2744 = vpop.f32.mrb[0].mxu0
    %2745 = vdwg.mxu0
    %2746 = vmatprep.subr.bf16.mxu0 %v1069
    %2747 = vmatpush1.bf16.msra.mxu0 %v1068
    %2748 = vmatprep.subr.bf16.mxu0 %v1077
    %2749 = vmatpush1.bf16.msra.mxu0 %v1076
    %2750 = vmatprep.subr.bf16.mxu0 %v1085
    %2751 = vmatpush1.bf16.msra.mxu0 %v1084
    %2752 = vmatprep.subr.bf16.mxu0 %v1093
    %2753 = vmatpush1.bf16.msra.mxu0 %v1092
    %2754 = vmatprep.subr.bf16.mxu0 %v1101
    %2755 = vmatpush1.bf16.msra.mxu0 %v1100
    %2756 = vmatprep.subr.bf16.mxu0 %v1109
    %2757 = vmatpush1.bf16.msra.mxu0 %v1108
    %2758 = vmatprep.subr.bf16.mxu0 %v1117
    %2759 = vmatpush1.bf16.msra.mxu0 %v1116
    %2760 = vmatprep.subr.bf16.mxu0 %v1125
    %2761 = vmatpush1.bf16.msra.mxu0 %v1124
    %2762 = vmatprep.subr.bf16.mxu0 %v1133
    %2763 = vmatpush1.bf16.msra.mxu0 %v1132
    %2764 = vmatprep.subr.bf16.mxu0 %v1141
    %2765 = vmatpush1.bf16.msra.mxu0 %v1140
    %2766 = vmatprep.subr.bf16.mxu0 %v1149
    %2767 = vmatpush1.bf16.msra.mxu0 %v1148
    %2768 = vmatprep.subr.bf16.mxu0 %v1157
    %2769 = vmatpush1.bf16.msra.mxu0 %v1156
    %2770 = vmatprep.subr.bf16.mxu0 %v1165
    %2771 = vmatpush1.bf16.msra.mxu0 %v1164
    %2772 = vmatprep.subr.bf16.mxu0 %v1173
    %2773 = vmatpush1.bf16.msra.mxu0 %v1172
    %2774 = vmatprep.subr.bf16.mxu0 %v1181
    %2775 = vmatpush1.bf16.msra.mxu0 %v1180
    %2776 = vmatprep.subr.bf16.mxu0 %v1189
    %2777 = vmatpush1.bf16.msra.mxu0 %v1188
    %2778 = vmatprep.mubr.bf16.mxu0 %v2663
    %2779 = vmatmul.mubr.bf16.gmra.mrb[0].mxu0 %v2662
    %v2780 = vpop.f32.mrb[0].mxu0
    %v2781 = vadd.f32 0.0, %v2780
    %v2782 = vpop.f32.mrb[0].mxu0
    %v2783 = vadd.f32 0.0, %v2782
    %v2784 = vpop.f32.mrb[0].mxu0
    %v2785 = vpop.f32.mrb[0].mxu0
    %2786 = vdwg.mxu0
    %2787 = vmatprep.subr.bf16.mxu0 %v1071
    %2788 = vmatpush1.bf16.msra.mxu0 %v1070
    %2789 = vmatprep.subr.bf16.mxu0 %v1079
    %2790 = vmatpush1.bf16.msra.mxu0 %v1078
    %2791 = vmatprep.subr.bf16.mxu0 %v1087
    %2792 = vmatpush1.bf16.msra.mxu0 %v1086
    %2793 = vmatprep.subr.bf16.mxu0 %v1095
    %2794 = vmatpush1.bf16.msra.mxu0 %v1094
    %2795 = vmatprep.subr.bf16.mxu0 %v1103
    %2796 = vmatpush1.bf16.msra.mxu0 %v1102
    %2797 = vmatprep.subr.bf16.mxu0 %v1111
    %2798 = vmatpush1.bf16.msra.mxu0 %v1110
    %2799 = vmatprep.subr.bf16.mxu0 %v1119
    %2800 = vmatpush1.bf16.msra.mxu0 %v1118
    %2801 = vmatprep.subr.bf16.mxu0 %v1127
    %2802 = vmatpush1.bf16.msra.mxu0 %v1126
    %2803 = vmatprep.subr.bf16.mxu0 %v1135
    %2804 = vmatpush1.bf16.msra.mxu0 %v1134
    %2805 = vmatprep.subr.bf16.mxu0 %v1143
    %2806 = vmatpush1.bf16.msra.mxu0 %v1142
    %2807 = vmatprep.subr.bf16.mxu0 %v1151
    %2808 = vmatpush1.bf16.msra.mxu0 %v1150
    %2809 = vmatprep.subr.bf16.mxu0 %v1159
    %2810 = vmatpush1.bf16.msra.mxu0 %v1158
    %2811 = vmatprep.subr.bf16.mxu0 %v1167
    %2812 = vmatpush1.bf16.msra.mxu0 %v1166
    %2813 = vmatprep.subr.bf16.mxu0 %v1175
    %2814 = vmatpush1.bf16.msra.mxu0 %v1174
    %2815 = vmatprep.subr.bf16.mxu0 %v1183
    %2816 = vmatpush1.bf16.msra.mxu0 %v1182
    %2817 = vmatprep.subr.bf16.mxu0 %v1191
    %2818 = vmatpush1.bf16.msra.mxu0 %v1190
    %2819 = vmatprep.mubr.bf16.mxu0 %v2663
    %2820 = vmatmul.mubr.bf16.gmra.mrb[0].mxu0 %v2662
    %v2821 = vpop.f32.mrb[0].mxu0
    %v2822 = vadd.f32 0.0, %v2821
    %v2823 = vpop.f32.mrb[0].mxu0
    %v2824 = vadd.f32 0.0, %v2823
    %v2825 = vpop.f32.mrb[0].mxu0
    %v2826 = vpop.f32.mrb[0].mxu0
    %2827 = vdwg.mxu0
    %v2828 = vadd.f32 %v319, %v2699
    %v2829 = vadd.f32 %v321, %v2701
    %v2830 = vadd.f32 %v392, %v2740
    %v2831 = vadd.f32 %v394, %v2742
    %v2832 = vadd.f32 %v439, %v2781
    %v2833 = vadd.f32 %v441, %v2783
    %v2834 = vadd.f32 %v512, %v2822
    %v2835 = vadd.f32 %v514, %v2824
    %v2836 = vxor.u32 %v2828, 2147483648
    %v2837 = vxor.u32 %v2829, 2147483648
    %v2838 = vxor.u32 %v2830, 2147483648
    %v2839 = vxor.u32 %v2832, 2147483648
    %v2840 = vxor.u32 %v2833, 2147483648
    %v2841 = vxor.u32 %v2834, 2147483648
    %v2842 = vmul.f32 %v2836, 1.442695
    %v2843 = vpow.pop %v2842
    %v2844 = vmul.f32 %v2837, 1.442695
    %v2845 = vpow.pop %v2844
    %v2846 = vmul.f32 %v2838, 1.442695
    %v2847 = vpow.pop %v2846
    %v2848 = vmul.f32 %v2839, 1.442695
    %v2849 = vpow.pop %v2848
    %v2850 = vmul.f32 %v2840, 1.442695
    %v2851 = vpow.pop %v2850
    %v2852 = vmul.f32 %v2841, 1.442695
    %v2853 = vpow.pop %v2852
    %v2854 = vadd.f32 %v2843, 1.0
    %v2855 = vadd.f32 %v2845, 1.0
    %v2856 = vadd.f32 %v2847, 1.0
    %v2857 = vadd.f32 %v2849, 1.0
    %v2858 = vadd.f32 %v2851, 1.0
    %v2859 = vadd.f32 %v2853, 1.0
    %v2860 = vrcp.pop %v2854
    %v2861 = vmul.f32 1.0, %v2860
    %v2862 = vrcp.pop %v2855
    %v2863 = vmul.f32 1.0, %v2862
    %v2864 = vrcp.pop %v2856
    %v2865 = vmul.f32 1.0, %v2864
    %v2866 = vrcp.pop %v2857
    %v2867 = vmul.f32 1.0, %v2866
    %v2868 = vrcp.pop %v2858
    %v2869 = vmul.f32 1.0, %v2868
    %v2870 = vrcp.pop %v2859
    %v2871 = vmul.f32 1.0, %v2870
    %v2872 = vtanh.pop %v2831
    %v2873 = vtanh.pop %v2835
    %v2874 = vmul.f32 %v2863, %v2654
    %v2875 = vmul.f32 %v2869, %v2655
    %v2876 = vmul.f32 %v2861, %v2872
    %v2877 = vmul.f32 %v2867, %v2873
    %v2878 = vadd.f32 %v2874, %v2876
    %v2879 = vadd.f32 %v2875, %v2877
    %v2880 = vtanh.pop %v2878
    %v2881 = vtanh.pop %v2879
    %v2882 = vmul.f32 %v2865, %v2880
    %v2883 = vmul.f32 %v2871, %v2881
    %2884 = vst [vmem:[#allocation2 + $0x80] sm:$0xff] %v2882
    %2885 = vst [vmem:[#allocation2 + $0x38] sm:$0xff] %v2883
    %v2886 = vpack.c.bf16 %v2882, %v2882
    %v2887 = vpack.c.bf16 %v2883, %v2883
    %2888 = vmatprep.subr.bf16.mxu0 %v1065
    %2889 = vmatpush1.bf16.msra.mxu0 %v1064
    %2890 = vmatprep.subr.bf16.mxu0 %v1073
    %2891 = vmatpush1.bf16.msra.mxu0 %v1072
    %2892 = vmatprep.subr.bf16.mxu0 %v1081
    %2893 = vmatpush1.bf16.msra.mxu0 %v1080
    %2894 = vmatprep.subr.bf16.mxu0 %v1089
    %2895 = vmatpush1.bf16.msra.mxu0 %v1088
    %2896 = vmatprep.subr.bf16.mxu0 %v1097
    %2897 = vmatpush1.bf16.msra.mxu0 %v1096
    %2898 = vmatprep.subr.bf16.mxu0 %v1105
    %2899 = vmatpush1.bf16.msra.mxu0 %v1104
    %2900 = vmatprep.subr.bf16.mxu0 %v1113
    %2901 = vmatpush1.bf16.msra.mxu0 %v1112
    %2902 = vmatprep.subr.bf16.mxu0 %v1121
    %2903 = vmatpush1.bf16.msra.mxu0 %v1120
    %2904 = vmatprep.subr.bf16.mxu0 %v1129
    %2905 = vmatpush1.bf16.msra.mxu0 %v1128
    %2906 = vmatprep.subr.bf16.mxu0 %v1137
    %2907 = vmatpush1.bf16.msra.mxu0 %v1136
    %2908 = vmatprep.subr.bf16.mxu0 %v1145
    %2909 = vmatpush1.bf16.msra.mxu0 %v1144
    %2910 = vmatprep.subr.bf16.mxu0 %v1153
    %2911 = vmatpush1.bf16.msra.mxu0 %v1152
    %2912 = vmatprep.subr.bf16.mxu0 %v1161
    %2913 = vmatpush1.bf16.msra.mxu0 %v1160
    %2914 = vmatprep.subr.bf16.mxu0 %v1169
    %2915 = vmatpush1.bf16.msra.mxu0 %v1168
    %2916 = vmatprep.subr.bf16.mxu0 %v1177
    %2917 = vmatpush1.bf16.msra.mxu0 %v1176
    %2918 = vmatprep.subr.bf16.mxu0 %v1185
    %2919 = vmatpush1.bf16.msra.mxu0 %v1184
    %2920 = vmatprep.mubr.bf16.mxu0 %v2887
    %2921 = vmatmul.mubr.bf16.gmra.mrb[0].mxu0 %v2886
    %v2922 = vpop.f32.mrb[0].mxu0
    %v2923 = vadd.f32 0.0, %v2922
    %v2924 = vpop.f32.mrb[0].mxu0
    %v2925 = vadd.f32 0.0, %v2924
    %v2926 = vpop.f32.mrb[0].mxu0
    %v2927 = vpop.f32.mrb[0].mxu0
    %2928 = vdwg.mxu0
    %2929 = vmatprep.subr.bf16.mxu0 %v1067
    %2930 = vmatpush1.bf16.msra.mxu0 %v1066
    %2931 = vmatprep.subr.bf16.mxu0 %v1075
    %2932 = vmatpush1.bf16.msra.mxu0 %v1074
    %2933 = vmatprep.subr.bf16.mxu0 %v1083
    %2934 = vmatpush1.bf16.msra.mxu0 %v1082
    %2935 = vmatprep.subr.bf16.mxu0 %v1091
    %2936 = vmatpush1.bf16.msra.mxu0 %v1090
    %2937 = vmatprep.subr.bf16.mxu0 %v1099
    %2938 = vmatpush1.bf16.msra.mxu0 %v1098
    %2939 = vmatprep.subr.bf16.mxu0 %v1107
    %2940 = vmatpush1.bf16.msra.mxu0 %v1106
    %2941 = vmatprep.subr.bf16.mxu0 %v1115
    %2942 = vmatpush1.bf16.msra.mxu0 %v1114
    %2943 = vmatprep.subr.bf16.mxu0 %v1123
    %2944 = vmatpush1.bf16.msra.mxu0 %v1122
    %2945 = vmatprep.subr.bf16.mxu0 %v1131
    %2946 = vmatpush1.bf16.msra.mxu0 %v1130
    %2947 = vmatprep.subr.bf16.mxu0 %v1139
    %2948 = vmatpush1.bf16.msra.mxu0 %v1138
    %2949 = vmatprep.subr.bf16.mxu0 %v1147
    %2950 = vmatpush1.bf16.msra.mxu0 %v1146
    %2951 = vmatprep.subr.bf16.mxu0 %v1155
    %2952 = vmatpush1.bf16.msra.mxu0 %v1154
    %2953 = vmatprep.subr.bf16.mxu0 %v1163
    %2954 = vmatpush1.bf16.msra.mxu0 %v1162
    %2955 = vmatprep.subr.bf16.mxu0 %v1171
    %2956 = vmatpush1.bf16.msra.mxu0 %v1170
    %2957 = vmatprep.subr.bf16.mxu0 %v1179
    %2958 = vmatpush1.bf16.msra.mxu0 %v1178
    %2959 = vmatprep.subr.bf16.mxu0 %v1187
    %2960 = vmatpush1.bf16.msra.mxu0 %v1186
    %2961 = vmatprep.mubr.bf16.mxu0 %v2887
    %2962 = vmatmul.mubr.bf16.gmra.mrb[0].mxu0 %v2886
    %v2963 = vpop.f32.mrb[0].mxu0
    %v2964 = vadd.f32 0.0, %v2963
    %v2965 = vpop.f32.mrb[0].mxu0
    %v2966 = vadd.f32 0.0, %v2965
    %v2967 = vpop.f32.mrb[0].mxu0
    %v2968 = vpop.f32.mrb[0].mxu0
    %2969 = vdwg.mxu0
    %2970 = vmatprep.subr.bf16.mxu0 %v1069
    %2971 = vmatpush1.bf16.msra.mxu0 %v1068
    %2972 = vmatprep.subr.bf16.mxu0 %v1077
    %2973 = vmatpush1.bf16.msra.mxu0 %v1076
    %2974 = vmatprep.subr.bf16.mxu0 %v1085
    %2975 = vmatpush1.bf16.msra.mxu0 %v1084
    %2976 = vmatprep.subr.bf16.mxu0 %v1093
    %2977 = vmatpush1.bf16.msra.mxu0 %v1092
    %2978 = vmatprep.subr.bf16.mxu0 %v1101
    %2979 = vmatpush1.bf16.msra.mxu0 %v1100
    %2980 = vmatprep.subr.bf16.mxu0 %v1109
    %2981 = vmatpush1.bf16.msra.mxu0 %v1108
    %2982 = vmatprep.subr.bf16.mxu0 %v1117
    %2983 = vmatpush1.bf16.msra.mxu0 %v1116
    %2984 = vmatprep.subr.bf16.mxu0 %v1125
    %2985 = vmatpush1.bf16.msra.mxu0 %v1124
    %2986 = vmatprep.subr.bf16.mxu0 %v1133
    %2987 = vmatpush1.bf16.msra.mxu0 %v1132
    %2988 = vmatprep.subr.bf16.mxu0 %v1141
    %2989 = vmatpush1.bf16.msra.mxu0 %v1140
    %2990 = vmatprep.subr.bf16.mxu0 %v1149
    %2991 = vmatpush1.bf16.msra.mxu0 %v1148
    %2992 = vmatprep.subr.bf16.mxu0 %v1157
    %2993 = vmatpush1.bf16.msra.mxu0 %v1156
    %2994 = vmatprep.subr.bf16.mxu0 %v1165
    %2995 = vmatpush1.bf16.msra.mxu0 %v1164
    %2996 = vmatprep.subr.bf16.mxu0 %v1173
    %2997 = vmatpush1.bf16.msra.mxu0 %v1172
    %2998 = vmatprep.subr.bf16.mxu0 %v1181
    %2999 = vmatpush1.bf16.msra.mxu0 %v1180
    %3000 = vmatprep.subr.bf16.mxu0 %v1189
    %3001 = vmatpush1.bf16.msra.mxu0 %v1188
    %3002 = vmatprep.mubr.bf16.mxu0 %v2887
    %3003 = vmatmul.mubr.bf16.gmra.mrb[0].mxu0 %v2886
    %v3004 = vpop.f32.mrb[0].mxu0
    %v3005 = vadd.f32 0.0, %v3004
    %v3006 = vpop.f32.mrb[0].mxu0
    %v3007 = vadd.f32 0.0, %v3006
    %v3008 = vpop.f32.mrb[0].mxu0
    %v3009 = vpop.f32.mrb[0].mxu0
    %3010 = vdwg.mxu0
    %3011 = vmatprep.subr.bf16.mxu0 %v1071
    %3012 = vmatpush1.bf16.msra.mxu0 %v1070
    %3013 = vmatprep.subr.bf16.mxu0 %v1079
    %3014 = vmatpush1.bf16.msra.mxu0 %v1078
    %3015 = vmatprep.subr.bf16.mxu0 %v1087
    %3016 = vmatpush1.bf16.msra.mxu0 %v1086
    %3017 = vmatprep.subr.bf16.mxu0 %v1095
    %3018 = vmatpush1.bf16.msra.mxu0 %v1094
    %3019 = vmatprep.subr.bf16.mxu0 %v1103
    %3020 = vmatpush1.bf16.msra.mxu0 %v1102
    %3021 = vmatprep.subr.bf16.mxu0 %v1111
    %3022 = vmatpush1.bf16.msra.mxu0 %v1110
    %3023 = vmatprep.subr.bf16.mxu0 %v1119
    %3024 = vmatpush1.bf16.msra.mxu0 %v1118
    %3025 = vmatprep.subr.bf16.mxu0 %v1127
    %3026 = vmatpush1.bf16.msra.mxu0 %v1126
    %3027 = vmatprep.subr.bf16.mxu0 %v1135
    %3028 = vmatpush1.bf16.msra.mxu0 %v1134
    %3029 = vmatprep.subr.bf16.mxu0 %v1143
    %3030 = vmatpush1.bf16.msra.mxu0 %v1142
    %3031 = vmatprep.subr.bf16.mxu0 %v1151
    %3032 = vmatpush1.bf16.msra.mxu0 %v1150
    %3033 = vmatprep.subr.bf16.mxu0 %v1159
    %3034 = vmatpush1.bf16.msra.mxu0 %v1158
    %3035 = vmatprep.subr.bf16.mxu0 %v1167
    %3036 = vmatpush1.bf16.msra.mxu0 %v1166
    %3037 = vmatprep.subr.bf16.mxu0 %v1175
    %3038 = vmatpush1.bf16.msra.mxu0 %v1174
    %3039 = vmatprep.subr.bf16.mxu0 %v1183
    %3040 = vmatpush1.bf16.msra.mxu0 %v1182
    %3041 = vmatprep.subr.bf16.mxu0 %v1191
    %3042 = vmatpush1.bf16.msra.mxu0 %v1190
    %3043 = vmatprep.mubr.bf16.mxu0 %v2887
    %3044 = vmatmul.mubr.bf16.gmra.mrb[0].mxu0 %v2886
    %v3045 = vpop.f32.mrb[0].mxu0
    %v3046 = vadd.f32 0.0, %v3045
    %v3047 = vpop.f32.mrb[0].mxu0
    %v3048 = vadd.f32 0.0, %v3047
    %v3049 = vpop.f32.mrb[0].mxu0
    %v3050 = vpop.f32.mrb[0].mxu0
    %3051 = vdwg.mxu0
    %v3052 = vadd.f32 %v323, %v2923
    %v3053 = vadd.f32 %v325, %v2925
    %v3054 = vadd.f32 %v396, %v2964
    %v3055 = vadd.f32 %v398, %v2966
    %v3056 = vadd.f32 %v435, %v3005
    %v3057 = vadd.f32 %v437, %v3007
    %v3058 = vadd.f32 %v508, %v3046
    %v3059 = vadd.f32 %v510, %v3048
    %v3060 = vxor.u32 %v3052, 2147483648
    %v3061 = vxor.u32 %v3053, 2147483648
    %v3062 = vxor.u32 %v3054, 2147483648
    %v3063 = vxor.u32 %v3056, 2147483648
    %v3064 = vxor.u32 %v3057, 2147483648
    %v3065 = vxor.u32 %v3058, 2147483648
    %v3066 = vmul.f32 %v3060, 1.442695
    %v3067 = vpow.pop %v3066
    %v3068 = vmul.f32 %v3061, 1.442695
    %v3069 = vpow.pop %v3068
    %v3070 = vmul.f32 %v3062, 1.442695
    %v3071 = vpow.pop %v3070
    %v3072 = vmul.f32 %v3063, 1.442695
    %v3073 = vpow.pop %v3072
    %v3074 = vmul.f32 %v3064, 1.442695
    %v3075 = vpow.pop %v3074
    %v3076 = vmul.f32 %v3065, 1.442695
    %v3077 = vpow.pop %v3076
    %v3078 = vadd.f32 %v3067, 1.0
    %v3079 = vadd.f32 %v3069, 1.0
    %v3080 = vadd.f32 %v3071, 1.0
    %v3081 = vadd.f32 %v3073, 1.0
    %v3082 = vadd.f32 %v3075, 1.0
    %v3083 = vadd.f32 %v3077, 1.0
    %v3084 = vrcp.pop %v3078
    %v3085 = vmul.f32 1.0, %v3084
    %v3086 = vrcp.pop %v3079
    %v3087 = vmul.f32 1.0, %v3086
    %v3088 = vrcp.pop %v3080
    %v3089 = vmul.f32 1.0, %v3088
    %v3090 = vrcp.pop %v3081
    %v3091 = vmul.f32 1.0, %v3090
    %v3092 = vrcp.pop %v3082
    %v3093 = vmul.f32 1.0, %v3092
    %v3094 = vrcp.pop %v3083
    %v3095 = vmul.f32 1.0, %v3094
    %v3096 = vtanh.pop %v3055
    %v3097 = vtanh.pop %v3059
    %v3098 = vmul.f32 %v3087, %v2878
    %v3099 = vmul.f32 %v3093, %v2879
    %v3100 = vmul.f32 %v3085, %v3096
    %v3101 = vmul.f32 %v3091, %v3097
    %v3102 = vadd.f32 %v3098, %v3100
    %v3103 = vadd.f32 %v3099, %v3101
    %v3104 = vtanh.pop %v3102
    %v3105 = vtanh.pop %v3103
    %v3106 = vmul.f32 %v3089, %v3104
    %v3107 = vmul.f32 %v3095, %v3105
    %3108 = vst [vmem:[#allocation2 + $0x90] sm:$0xff] %v3106
    %3109 = vst [vmem:[#allocation2 + $0x28] sm:$0xff] %v3107
    %v3110 = vld [vmem:[#allocation2] sm:$0xff]
    %v3111 = vld [vmem:[#allocation2 + $0x8] sm:$0xff]
    %v3112 = vld [vmem:[#allocation2 + $0x10] sm:$0xff]
    %v3113 = vld [vmem:[#allocation2 + $0x18] sm:$0xff]
    %v3114 = vld [vmem:[#allocation2 + $0x20] sm:$0xff]
    %v3115 = vld [vmem:[#allocation2 + $0x28] sm:$0xff]
    %v3116 = vld [vmem:[#allocation2 + $0x30] sm:$0xff]
    %v3117 = vld [vmem:[#allocation2 + $0x38] sm:$0xff]
    %v3118 = vld [vmem:[#allocation2 + $0x40] sm:$0xff]
    %v3119 = vld [vmem:[#allocation2 + $0x48] sm:$0xff]
    %v3120 = vld [vmem:[#allocation2 + $0x50] sm:$0xff]
    %v3121 = vld [vmem:[#allocation2 + $0x58] sm:$0xff]
    %v3122 = vld [vmem:[#allocation2 + $0x60] sm:$0xff]
    %v3123 = vld [vmem:[#allocation2 + $0x68] sm:$0xff]
    %v3124 = vld [vmem:[#allocation2 + $0x70] sm:$0xff]
    %v3125 = vld [vmem:[#allocation2 + $0x78] sm:$0xff]
    %v3126 = vpack.c.bf16 %v3112, %v3110
    %v3127 = vpack.c.bf16 %v3113, %v3111
    %v3128 = vpack.c.bf16 %v3116, %v3114
    %v3129 = vpack.c.bf16 %v3117, %v3115
    %v3130 = vpack.c.bf16 %v3120, %v3118
    %v3131 = vpack.c.bf16 %v3121, %v3119
    %v3132 = vpack.c.bf16 %v3124, %v3122
    %v3133 = vpack.c.bf16 %v3125, %v3123
    %v3134 = vld [vmem:[#allocation5] sm:$0xff]
    %v3135 = vld [vmem:[#allocation5 + $0x8] sm:$0xf]
    %v3136 = vld [vmem:[#allocation5 + $0xc] sm:$0xff]
    %v3137 = vld [vmem:[#allocation5 + $0x14] sm:$0xf]
    %v3138 = vld [vmem:[#allocation5 + $0x18] sm:$0xff]
    %v3139 = vld [vmem:[#allocation5 + $0x20] sm:$0xf]
    %v3140 = vld [vmem:[#allocation5 + $0x24] sm:$0xff]
    %v3141 = vld [vmem:[#allocation5 + $0x2c] sm:$0xf]
    %v3142 = vld [vmem:[#allocation5 + $0x30] sm:$0xff]
    %v3143 = vld [vmem:[#allocation5 + $0x38] sm:$0xf]
    %v3144 = vld [vmem:[#allocation5 + $0x3c] sm:$0xff]
    %v3145 = vld [vmem:[#allocation5 + $0x44] sm:$0xf]
    %v3146 = vld [vmem:[#allocation5 + $0x48] sm:$0xff]
    %v3147 = vld [vmem:[#allocation5 + $0x50] sm:$0xf]
    %v3148 = vld [vmem:[#allocation5 + $0x54] sm:$0xff]
    %v3149 = vld [vmem:[#allocation5 + $0x5c] sm:$0xf]
    %v3150 = vld [vmem:[#allocation5 + $0x60] sm:$0xff]
    %v3151 = vld [vmem:[#allocation5 + $0x68] sm:$0xf]
    %v3152 = vld [vmem:[#allocation5 + $0x6c] sm:$0xff]
    %v3153 = vld [vmem:[#allocation5 + $0x74] sm:$0xf]
    %v3154 = vld [vmem:[#allocation5 + $0x78] sm:$0xff]
    %v3155 = vld [vmem:[#allocation5 + $0x80] sm:$0xf]
    %v3156 = vld [vmem:[#allocation5 + $0x84] sm:$0xff]
    %v3157 = vld [vmem:[#allocation5 + $0x8c] sm:$0xf]
    %v3158 = vld [vmem:[#allocation5 + $0x90] sm:$0xff]
    %v3159 = vld [vmem:[#allocation5 + $0x98] sm:$0xf]
    %v3160 = vld [vmem:[#allocation5 + $0x9c] sm:$0xff]
    %v3161 = vld [vmem:[#allocation5 + $0xa4] sm:$0xf]
    %v3162 = vld [vmem:[#allocation5 + $0xa8] sm:$0xff]
    %v3163 = vld [vmem:[#allocation5 + $0xb0] sm:$0xf]
    %v3164 = vld [vmem:[#allocation5 + $0xb4] sm:$0xff]
    %v3165 = vld [vmem:[#allocation5 + $0xbc] sm:$0xf]
    %v3166 = vld [vmem:[#allocation5 + $0xc0] sm:$0xff]
    %v3167 = vld [vmem:[#allocation5 + $0xc8] sm:$0xf]
    %v3168 = vld [vmem:[#allocation5 + $0xcc] sm:$0xff]
    %v3169 = vld [vmem:[#allocation5 + $0xd4] sm:$0xf]
    %v3170 = vld [vmem:[#allocation5 + $0xd8] sm:$0xff]
    %v3171 = vld [vmem:[#allocation5 + $0xe0] sm:$0xf]
    %v3172 = vld [vmem:[#allocation5 + $0xe4] sm:$0xff]
    %v3173 = vld [vmem:[#allocation5 + $0xec] sm:$0xf]
    %v3174 = vld [vmem:[#allocation5 + $0xf0] sm:$0xff]
    %v3175 = vld [vmem:[#allocation5 + $0xf8] sm:$0xf]
    %v3176 = vld [vmem:[#allocation5 + $0xfc] sm:$0xff]
    %v3177 = vld [vmem:[#allocation5 + $0x104] sm:$0xf]
    %v3178 = vld [vmem:[#allocation5 + $0x108] sm:$0xff]
    %v3179 = vld [vmem:[#allocation5 + $0x110] sm:$0xf]
    %v3180 = vld [vmem:[#allocation5 + $0x114] sm:$0xff]
    %v3181 = vld [vmem:[#allocation5 + $0x11c] sm:$0xf]
    %v3182 = vld [vmem:[#allocation5 + $0x120] sm:$0xff]
    %v3183 = vld [vmem:[#allocation5 + $0x128] sm:$0xf]
    %v3184 = vld [vmem:[#allocation5 + $0x12c] sm:$0xff]
    %v3185 = vld [vmem:[#allocation5 + $0x134] sm:$0xf]
    %v3186 = vld [vmem:[#allocation5 + $0x138] sm:$0xff]
    %v3187 = vld [vmem:[#allocation5 + $0x140] sm:$0xf]
    %v3188 = vld [vmem:[#allocation5 + $0x144] sm:$0xff]
    %v3189 = vld [vmem:[#allocation5 + $0x14c] sm:$0xf]
    %v3190 = vld [vmem:[#allocation5 + $0x150] sm:$0xff]
    %v3191 = vld [vmem:[#allocation5 + $0x158] sm:$0xf]
    %v3192 = vld [vmem:[#allocation5 + $0x15c] sm:$0xff]
    %v3193 = vld [vmem:[#allocation5 + $0x164] sm:$0xf]
    %v3194 = vld [vmem:[#allocation5 + $0x168] sm:$0xff]
    %v3195 = vld [vmem:[#allocation5 + $0x170] sm:$0xf]
    %v3196 = vld [vmem:[#allocation5 + $0x174] sm:$0xff]
    %v3197 = vld [vmem:[#allocation5 + $0x17c] sm:$0xf]
    %v3198 = vld [vmem:[#allocation2 + $0x80] sm:$0xff]
    %v3199 = vld [vmem:[#allocation2 + $0x88] sm:$0xff]
    %v3200 = vpack.c.bf16 %v3114, %v3112
    %v3201 = vpack.c.bf16 %v3115, %v3113
    %v3202 = vpack.c.bf16 %v3118, %v3116
    %v3203 = vpack.c.bf16 %v3119, %v3117
    %v3204 = vpack.c.bf16 %v3122, %v3120
    %v3205 = vpack.c.bf16 %v3123, %v3121
    %v3206 = vpack.c.bf16 %v3198, %v3124
    %v3207 = vpack.c.bf16 %v3199, %v3125
    %s3208 = scalar_lea.vmem [#allocation5], 384
    %v3209 = vld [vmem:[%s3208] sm:$0xff]
    %v3210 = vld [vmem:[%s3208 + $0x8] sm:$0xf]
    %v3211 = vld [vmem:[%s3208 + $0xc] sm:$0xff]
    %v3212 = vld [vmem:[%s3208 + $0x14] sm:$0xf]
    %v3213 = vld [vmem:[%s3208 + $0x18] sm:$0xff]
    %v3214 = vld [vmem:[%s3208 + $0x20] sm:$0xf]
    %v3215 = vld [vmem:[%s3208 + $0x24] sm:$0xff]
    %v3216 = vld [vmem:[%s3208 + $0x2c] sm:$0xf]
    %v3217 = vld [vmem:[%s3208 + $0x30] sm:$0xff]
    %v3218 = vld [vmem:[%s3208 + $0x38] sm:$0xf]
    %v3219 = vld [vmem:[%s3208 + $0x3c] sm:$0xff]
    %v3220 = vld [vmem:[%s3208 + $0x44] sm:$0xf]
    %v3221 = vld [vmem:[%s3208 + $0x48] sm:$0xff]
    %v3222 = vld [vmem:[%s3208 + $0x50] sm:$0xf]
    %v3223 = vld [vmem:[%s3208 + $0x54] sm:$0xff]
    %v3224 = vld [vmem:[%s3208 + $0x5c] sm:$0xf]
    %v3225 = vld [vmem:[%s3208 + $0x60] sm:$0xff]
    %v3226 = vld [vmem:[%s3208 + $0x68] sm:$0xf]
    %v3227 = vld [vmem:[%s3208 + $0x6c] sm:$0xff]
    %v3228 = vld [vmem:[%s3208 + $0x74] sm:$0xf]
    %v3229 = vld [vmem:[%s3208 + $0x78] sm:$0xff]
    %v3230 = vld [vmem:[%s3208 + $0x80] sm:$0xf]
    %v3231 = vld [vmem:[%s3208 + $0x84] sm:$0xff]
    %v3232 = vld [vmem:[%s3208 + $0x8c] sm:$0xf]
    %v3233 = vld [vmem:[%s3208 + $0x90] sm:$0xff]
    %v3234 = vld [vmem:[%s3208 + $0x98] sm:$0xf]
    %v3235 = vld [vmem:[%s3208 + $0x9c] sm:$0xff]
    %v3236 = vld [vmem:[%s3208 + $0xa4] sm:$0xf]
    %v3237 = vld [vmem:[%s3208 + $0xa8] sm:$0xff]
    %v3238 = vld [vmem:[%s3208 + $0xb0] sm:$0xf]
    %v3239 = vld [vmem:[%s3208 + $0xb4] sm:$0xff]
    %v3240 = vld [vmem:[%s3208 + $0xbc] sm:$0xf]
    %v3241 = vld [vmem:[%s3208 + $0xc0] sm:$0xff]
    %v3242 = vld [vmem:[%s3208 + $0xc8] sm:$0xf]
    %v3243 = vld [vmem:[%s3208 + $0xcc] sm:$0xff]
    %v3244 = vld [vmem:[%s3208 + $0xd4] sm:$0xf]
    %v3245 = vld [vmem:[%s3208 + $0xd8] sm:$0xff]
    %v3246 = vld [vmem:[%s3208 + $0xe0] sm:$0xf]
    %v3247 = vld [vmem:[%s3208 + $0xe4] sm:$0xff]
    %v3248 = vld [vmem:[%s3208 + $0xec] sm:$0xf]
    %v3249 = vld [vmem:[%s3208 + $0xf0] sm:$0xff]
    %v3250 = vld [vmem:[%s3208 + $0xf8] sm:$0xf]
    %v3251 = vld [vmem:[%s3208 + $0xfc] sm:$0xff]
    %v3252 = vld [vmem:[%s3208 + $0x104] sm:$0xf]
    %v3253 = vld [vmem:[%s3208 + $0x108] sm:$0xff]
    %v3254 = vld [vmem:[%s3208 + $0x110] sm:$0xf]
    %v3255 = vld [vmem:[%s3208 + $0x114] sm:$0xff]
    %v3256 = vld [vmem:[%s3208 + $0x11c] sm:$0xf]
    %v3257 = vld [vmem:[%s3208 + $0x120] sm:$0xff]
    %v3258 = vld [vmem:[%s3208 + $0x128] sm:$0xf]
    %v3259 = vld [vmem:[%s3208 + $0x12c] sm:$0xff]
    %v3260 = vld [vmem:[%s3208 + $0x134] sm:$0xf]
    %v3261 = vld [vmem:[%s3208 + $0x138] sm:$0xff]
    %v3262 = vld [vmem:[%s3208 + $0x140] sm:$0xf]
    %v3263 = vld [vmem:[%s3208 + $0x144] sm:$0xff]
    %v3264 = vld [vmem:[%s3208 + $0x14c] sm:$0xf]
    %v3265 = vld [vmem:[%s3208 + $0x150] sm:$0xff]
    %v3266 = vld [vmem:[%s3208 + $0x158] sm:$0xf]
    %v3267 = vld [vmem:[%s3208 + $0x15c] sm:$0xff]
    %v3268 = vld [vmem:[%s3208 + $0x164] sm:$0xf]
    %v3269 = vld [vmem:[%s3208 + $0x168] sm:$0xff]
    %v3270 = vld [vmem:[%s3208 + $0x170] sm:$0xf]
    %v3271 = vld [vmem:[%s3208 + $0x174] sm:$0xff]
    %v3272 = vld [vmem:[%s3208 + $0x17c] sm:$0xf]
    %v3337 = vunpack.c.l.b16 %v3209
    %v3338 = vunpack.c.h.b16 %v3209
    %v3339 = vunpack.c.l.b16 %v3210
    %v3340 = vunpack.c.l.b16 %v3211
    %v3341 = vunpack.c.h.b16 %v3211
    %v3342 = vunpack.c.l.b16 %v3212
    %v3343 = vunpack.c.l.b16 %v3213
    %v3344 = vunpack.c.h.b16 %v3213
    %v3345 = vunpack.c.l.b16 %v3214
    %v3346 = vunpack.c.l.b16 %v3215
    %v3347 = vunpack.c.h.b16 %v3215
    %v3348 = vunpack.c.l.b16 %v3216
    %v3349 = vunpack.c.l.b16 %v3217
    %v3350 = vunpack.c.h.b16 %v3217
    %v3351 = vunpack.c.l.b16 %v3218
    %v3352 = vunpack.c.l.b16 %v3219
    %v3353 = vunpack.c.h.b16 %v3219
    %v3354 = vunpack.c.l.b16 %v3220
    %v3355 = vunpack.c.l.b16 %v3221
    %v3356 = vunpack.c.h.b16 %v3221
    %v3357 = vunpack.c.l.b16 %v3222
    %v3358 = vunpack.c.l.b16 %v3223
    %v3359 = vunpack.c.h.b16 %v3223
    %v3360 = vunpack.c.l.b16 %v3224
    %v3361 = vunpack.c.l.b16 %v3225
    %v3362 = vunpack.c.h.b16 %v3225
    %v3363 = vunpack.c.l.b16 %v3226
    %v3364 = vunpack.c.l.b16 %v3227
    %v3365 = vunpack.c.h.b16 %v3227
    %v3366 = vunpack.c.l.b16 %v3228
    %v3367 = vunpack.c.l.b16 %v3229
    %v3368 = vunpack.c.h.b16 %v3229
    %v3369 = vunpack.c.l.b16 %v3230
    %v3370 = vunpack.c.l.b16 %v3231
    %v3371 = vunpack.c.h.b16 %v3231
    %v3372 = vunpack.c.l.b16 %v3232
    %v3373 = vunpack.c.l.b16 %v3233
    %v3374 = vunpack.c.h.b16 %v3233
    %v3375 = vunpack.c.l.b16 %v3234
    %v3376 = vunpack.c.l.b16 %v3235
    %v3377 = vunpack.c.h.b16 %v3235
    %v3378 = vunpack.c.l.b16 %v3236
    %v3379 = vunpack.c.l.b16 %v3237
    %v3380 = vunpack.c.h.b16 %v3237
    %v3381 = vunpack.c.l.b16 %v3238
    %v3382 = vunpack.c.l.b16 %v3239
    %v3383 = vunpack.c.h.b16 %v3239
    %v3384 = vunpack.c.l.b16 %v3240
    %v3385 = vunpack.c.l.b16 %v3241
    %v3386 = vunpack.c.h.b16 %v3241
    %v3387 = vunpack.c.l.b16 %v3242
    %v3388 = vunpack.c.l.b16 %v3243
    %v3389 = vunpack.c.h.b16 %v3243
    %v3390 = vunpack.c.l.b16 %v3244
    %v3391 = vunpack.c.l.b16 %v3245
    %v3392 = vunpack.c.h.b16 %v3245
    %v3393 = vunpack.c.l.b16 %v3246
    %v3394 = vunpack.c.l.b16 %v3247
    %v3395 = vunpack.c.h.b16 %v3247
    %v3396 = vunpack.c.l.b16 %v3248
    %v3397 = vunpack.c.l.b16 %v3249
    %v3398 = vunpack.c.h.b16 %v3249
    %v3399 = vunpack.c.l.b16 %v3250
    %v3400 = vunpack.c.l.b16 %v3251
    %v3401 = vunpack.c.h.b16 %v3251
    %v3402 = vunpack.c.l.b16 %v3252
    %v3403 = vunpack.c.l.b16 %v3253
    %v3404 = vunpack.c.h.b16 %v3253
    %v3405 = vunpack.c.l.b16 %v3254
    %v3406 = vunpack.c.l.b16 %v3255
    %v3407 = vunpack.c.h.b16 %v3255
    %v3408 = vunpack.c.l.b16 %v3256
    %v3409 = vunpack.c.l.b16 %v3257
    %v3410 = vunpack.c.h.b16 %v3257
    %v3411 = vunpack.c.l.b16 %v3258
    %v3412 = vunpack.c.l.b16 %v3259
    %v3413 = vunpack.c.h.b16 %v3259
    %v3414 = vunpack.c.l.b16 %v3260
    %v3415 = vunpack.c.l.b16 %v3261
    %v3416 = vunpack.c.h.b16 %v3261
    %v3417 = vunpack.c.l.b16 %v3262
    %v3418 = vunpack.c.l.b16 %v3263
    %v3419 = vunpack.c.h.b16 %v3263
    %v3420 = vunpack.c.l.b16 %v3264
    %v3421 = vunpack.c.l.b16 %v3265
    %v3422 = vunpack.c.h.b16 %v3265
    %v3423 = vunpack.c.l.b16 %v3266
    %v3424 = vunpack.c.l.b16 %v3267
    %v3425 = vunpack.c.h.b16 %v3267
    %v3426 = vunpack.c.l.b16 %v3268
    %v3427 = vunpack.c.l.b16 %v3269
    %v3428 = vunpack.c.h.b16 %v3269
    %v3429 = vunpack.c.l.b16 %v3270
    %v3430 = vunpack.c.l.b16 %v3271
    %v3431 = vunpack.c.h.b16 %v3271
    %v3432 = vunpack.c.l.b16 %v3272
    %v3433 = vpack.c.b16 %v3340, %v3337
    %v3434 = vpack.c.b16 %v3341, %v3338
    %v3435 = vpack.c.b16 %v3342, %v3339
    %v3436 = vpack.c.b16 %v3346, %v3343
    %v3437 = vpack.c.b16 %v3347, %v3344
    %v3438 = vpack.c.b16 %v3348, %v3345
    %v3439 = vpack.c.b16 %v3352, %v3349
    %v3440 = vpack.c.b16 %v3353, %v3350
    %v3441 = vpack.c.b16 %v3354, %v3351
    %v3442 = vpack.c.b16 %v3358, %v3355
    %v3443 = vpack.c.b16 %v3359, %v3356
    %v3444 = vpack.c.b16 %v3360, %v3357
    %v3445 = vpack.c.b16 %v3364, %v3361
    %v3446 = vpack.c.b16 %v3365, %v3362
    %v3447 = vpack.c.b16 %v3366, %v3363
    %v3448 = vpack.c.b16 %v3370, %v3367
    %v3449 = vpack.c.b16 %v3371, %v3368
    %v3450 = vpack.c.b16 %v3372, %v3369
    %v3451 = vpack.c.b16 %v3376, %v3373
    %v3452 = vpack.c.b16 %v3377, %v3374
    %v3453 = vpack.c.b16 %v3378, %v3375
    %v3454 = vpack.c.b16 %v3382, %v3379
    %v3455 = vpack.c.b16 %v3383, %v3380
    %v3456 = vpack.c.b16 %v3384, %v3381
    %v3457 = vpack.c.b16 %v3388, %v3385
    %v3458 = vpack.c.b16 %v3389, %v3386
    %v3459 = vpack.c.b16 %v3390, %v3387
    %v3460 = vpack.c.b16 %v3394, %v3391
    %v3461 = vpack.c.b16 %v3395, %v3392
    %v3462 = vpack.c.b16 %v3396, %v3393
    %v3463 = vpack.c.b16 %v3400, %v3397
    %v3464 = vpack.c.b16 %v3401, %v3398
    %v3465 = vpack.c.b16 %v3402, %v3399
    %v3466 = vpack.c.b16 %v3406, %v3403
    %v3467 = vpack.c.b16 %v3407, %v3404
    %v3468 = vpack.c.b16 %v3408, %v3405
    %v3469 = vpack.c.b16 %v3412, %v3409
    %v3470 = vpack.c.b16 %v3413, %v3410
    %v3471 = vpack.c.b16 %v3414, %v3411
    %v3472 = vpack.c.b16 %v3418, %v3415
    %v3473 = vpack.c.b16 %v3419, %v3416
    %v3474 = vpack.c.b16 %v3420, %v3417
    %v3475 = vpack.c.b16 %v3424, %v3421
    %v3476 = vpack.c.b16 %v3425, %v3422
    %v3477 = vpack.c.b16 %v3426, %v3423
    %v3478 = vpack.c.b16 %v3430, %v3427
    %v3479 = vpack.c.b16 %v3431, %v3428
    %v3480 = vpack.c.b16 %v3432, %v3429
    %3529 = vmatprep.subr.bf16.mxu0 %v3434
    %3530 = vmatpush1.bf16.msra.mxu0 %v3433
    %3531 = vmatprep.subr.bf16.mxu0 %v3437
    %3532 = vmatpush1.bf16.msra.mxu0 %v3436
    %3533 = vmatprep.subr.bf16.mxu0 %v3440
    %3534 = vmatpush1.bf16.msra.mxu0 %v3439
    %3535 = vmatprep.subr.bf16.mxu0 %v3443
    %3536 = vmatpush1.bf16.msra.mxu0 %v3442
    %3537 = vmatprep.subr.bf16.mxu0 %v3446
    %3538 = vmatpush1.bf16.msra.mxu0 %v3445
    %3539 = vmatprep.subr.bf16.mxu0 %v3449
    %3540 = vmatpush1.bf16.msra.mxu0 %v3448
    %3541 = vmatprep.subr.bf16.mxu0 %v3452
    %3542 = vmatpush1.bf16.msra.mxu0 %v3451
    %3543 = vmatprep.subr.bf16.mxu0 %v3455
    %3544 = vmatpush1.bf16.msra.mxu0 %v3454
    %3545 = vmatprep.subr.bf16.mxu0 %v3458
    %3546 = vmatpush1.bf16.msra.mxu0 %v3457
    %3547 = vmatprep.subr.bf16.mxu0 %v3461
    %3548 = vmatpush1.bf16.msra.mxu0 %v3460
    %3549 = vmatprep.subr.bf16.mxu0 %v3464
    %3550 = vmatpush1.bf16.msra.mxu0 %v3463
    %3551 = vmatprep.subr.bf16.mxu0 %v3467
    %3552 = vmatpush1.bf16.msra.mxu0 %v3466
    %3553 = vmatprep.subr.bf16.mxu0 %v3470
    %3554 = vmatpush1.bf16.msra.mxu0 %v3469
    %3555 = vmatprep.subr.bf16.mxu0 %v3473
    %3556 = vmatpush1.bf16.msra.mxu0 %v3472
    %3557 = vmatprep.subr.bf16.mxu0 %v3476
    %3558 = vmatpush1.bf16.msra.mxu0 %v3475
    %3559 = vmatprep.subr.bf16.mxu0 %v3479
    %3560 = vmatpush1.bf16.msra.mxu0 %v3478
    %3561 = vmatprep.mubr.bf16.mxu0 %v3201
    %3562 = vmatmul.mubr.bf16.gmra.mrb[0].mxu0 %v3200
    %v3563 = vpop.f32.mrb[0].mxu0
    %v3564 = vadd.f32 0.0, %v3563
    %v3565 = vpop.f32.mrb[0].mxu0
    %v3566 = vadd.f32 0.0, %v3565
    %v3567 = vpop.f32.mrb[0].mxu0
    %v3568 = vadd.f32 0.0, %v3567
    %v3569 = vpop.f32.mrb[0].mxu0
    %v3570 = vadd.f32 0.0, %v3569
    %3571 = vmatprep.mubr.bf16.mxu0 %v3203
    %3572 = vmatmul.mubr.bf16.gmra.mrb[0].mxu0 %v3202
    %v3573 = vpop.f32.mrb[0].mxu0
    %v3574 = vadd.f32 0.0, %v3573
    %v3575 = vpop.f32.mrb[0].mxu0
    %v3576 = vadd.f32 0.0, %v3575
    %v3577 = vpop.f32.mrb[0].mxu0
    %v3578 = vadd.f32 0.0, %v3577
    %v3579 = vpop.f32.mrb[0].mxu0
    %v3580 = vadd.f32 0.0, %v3579
    %3581 = vmatprep.mubr.bf16.mxu0 %v3205
    %3582 = vmatmul.mubr.bf16.gmra.mrb[0].mxu0 %v3204
    %v3583 = vpop.f32.mrb[0].mxu0
    %v3584 = vadd.f32 0.0, %v3583
    %v3585 = vpop.f32.mrb[0].mxu0
    %v3586 = vadd.f32 0.0, %v3585
    %v3587 = vpop.f32.mrb[0].mxu0
    %v3588 = vadd.f32 0.0, %v3587
    %v3589 = vpop.f32.mrb[0].mxu0
    %v3590 = vadd.f32 0.0, %v3589
    %3591 = vmatprep.mubr.bf16.mxu0 %v3207
    %3592 = vmatmul.mubr.bf16.gmra.mrb[0].mxu0 %v3206
    %v3593 = vpop.f32.mrb[0].mxu0
    %v3594 = vadd.f32 0.0, %v3593
    %v3595 = vpop.f32.mrb[0].mxu0
    %v3596 = vadd.f32 0.0, %v3595
    %v3597 = vpop.f32.mrb[0].mxu0
    %v3598 = vadd.f32 0.0, %v3597
    %v3599 = vpop.f32.mrb[0].mxu0
    %v3600 = vadd.f32 0.0, %v3599
    %3601 = vdwg.mxu0
    %3602 = vmatprep.subr.bf16.mxu0 0
    %3603 = vmatpush1.bf16.msra.mxu0 %v3435
    %3604 = vmatprep.subr.bf16.mxu0 0
    %3605 = vmatpush1.bf16.msra.mxu0 %v3438
    %3606 = vmatprep.subr.bf16.mxu0 0
    %3607 = vmatpush1.bf16.msra.mxu0 %v3441
    %3608 = vmatprep.subr.bf16.mxu0 0
    %3609 = vmatpush1.bf16.msra.mxu0 %v3444
    %3610 = vmatprep.subr.bf16.mxu0 0
    %3611 = vmatpush1.bf16.msra.mxu0 %v3447
    %3612 = vmatprep.subr.bf16.mxu0 0
    %3613 = vmatpush1.bf16.msra.mxu0 %v3450
    %3614 = vmatprep.subr.bf16.mxu0 0
    %3615 = vmatpush1.bf16.msra.mxu0 %v3453
    %3616 = vmatprep.subr.bf16.mxu0 0
    %3617 = vmatpush1.bf16.msra.mxu0 %v3456
    %3618 = vmatprep.subr.bf16.mxu0 0
    %3619 = vmatpush1.bf16.msra.mxu0 %v3459
    %3620 = vmatprep.subr.bf16.mxu0 0
    %3621 = vmatpush1.bf16.msra.mxu0 %v3462
    %3622 = vmatprep.subr.bf16.mxu0 0
    %3623 = vmatpush1.bf16.msra.mxu0 %v3465
    %3624 = vmatprep.subr.bf16.mxu0 0
    %3625 = vmatpush1.bf16.msra.mxu0 %v3468
    %3626 = vmatprep.subr.bf16.mxu0 0
    %3627 = vmatpush1.bf16.msra.mxu0 %v3471
    %3628 = vmatprep.subr.bf16.mxu0 0
    %3629 = vmatpush1.bf16.msra.mxu0 %v3474
    %3630 = vmatprep.subr.bf16.mxu0 0
    %3631 = vmatpush1.bf16.msra.mxu0 %v3477
    %3632 = vmatprep.subr.bf16.mxu0 0
    %3633 = vmatpush1.bf16.msra.mxu0 %v3480
    %3634 = vmatprep.mubr.bf16.mxu0 %v3201
    %3635 = vmatmul.mubr.bf16.gmra.mrb[0].mxu0 %v3200
    %v3636 = vpop.f32.mrb[0].mxu0
    %v3637 = vadd.f32 0.0, %v3636
    %v3638 = vpop.f32.mrb[0].mxu0
    %v3639 = vpop.f32.mrb[0].mxu0
    %v3640 = vadd.f32 0.0, %v3639
    %v3641 = vpop.f32.mrb[0].mxu0
    %3642 = vmatprep.mubr.bf16.mxu0 %v3203
    %3643 = vmatmul.mubr.bf16.gmra.mrb[0].mxu0 %v3202
    %v3644 = vpop.f32.mrb[0].mxu0
    %v3645 = vadd.f32 0.0, %v3644
    %v3646 = vpop.f32.mrb[0].mxu0
    %v3647 = vpop.f32.mrb[0].mxu0
    %v3648 = vadd.f32 0.0, %v3647
    %v3649 = vpop.f32.mrb[0].mxu0
    %3650 = vmatprep.mubr.bf16.mxu0 %v3205
    %3651 = vmatmul.mubr.bf16.gmra.mrb[0].mxu0 %v3204
    %v3652 = vpop.f32.mrb[0].mxu0
    %v3653 = vadd.f32 0.0, %v3652
    %v3654 = vpop.f32.mrb[0].mxu0
    %v3655 = vpop.f32.mrb[0].mxu0
    %v3656 = vadd.f32 0.0, %v3655
    %v3657 = vpop.f32.mrb[0].mxu0
    %3658 = vmatprep.mubr.bf16.mxu0 %v3207
    %3659 = vmatmul.mubr.bf16.gmra.mrb[0].mxu0 %v3206
    %v3660 = vpop.f32.mrb[0].mxu0
    %v3661 = vadd.f32 0.0, %v3660
    %v3662 = vpop.f32.mrb[0].mxu0
    %v3663 = vpop.f32.mrb[0].mxu0
    %v3664 = vadd.f32 0.0, %v3663
    %v3665 = vpop.f32.mrb[0].mxu0
    %3666 = vdwg.mxu0
    %v3731 = vunpack.c.l.b16 %v3134
    %v3732 = vunpack.c.h.b16 %v3134
    %v3733 = vunpack.c.l.b16 %v3135
    %v3734 = vunpack.c.l.b16 %v3136
    %v3735 = vunpack.c.h.b16 %v3136
    %v3736 = vunpack.c.l.b16 %v3137
    %v3737 = vunpack.c.l.b16 %v3138
    %v3738 = vunpack.c.h.b16 %v3138
    %v3739 = vunpack.c.l.b16 %v3139
    %v3740 = vunpack.c.l.b16 %v3140
    %v3741 = vunpack.c.h.b16 %v3140
    %v3742 = vunpack.c.l.b16 %v3141
    %v3743 = vunpack.c.l.b16 %v3142
    %v3744 = vunpack.c.h.b16 %v3142
    %v3745 = vunpack.c.l.b16 %v3143
    %v3746 = vunpack.c.l.b16 %v3144
    %v3747 = vunpack.c.h.b16 %v3144
    %v3748 = vunpack.c.l.b16 %v3145
    %v3749 = vunpack.c.l.b16 %v3146
    %v3750 = vunpack.c.h.b16 %v3146
    %v3751 = vunpack.c.l.b16 %v3147
    %v3752 = vunpack.c.l.b16 %v3148
    %v3753 = vunpack.c.h.b16 %v3148
    %v3754 = vunpack.c.l.b16 %v3149
    %v3755 = vunpack.c.l.b16 %v3150
    %v3756 = vunpack.c.h.b16 %v3150
    %v3757 = vunpack.c.l.b16 %v3151
    %v3758 = vunpack.c.l.b16 %v3152
    %v3759 = vunpack.c.h.b16 %v3152
    %v3760 = vunpack.c.l.b16 %v3153
    %v3761 = vunpack.c.l.b16 %v3154
    %v3762 = vunpack.c.h.b16 %v3154
    %v3763 = vunpack.c.l.b16 %v3155
    %v3764 = vunpack.c.l.b16 %v3156
    %v3765 = vunpack.c.h.b16 %v3156
    %v3766 = vunpack.c.l.b16 %v3157
    %v3767 = vunpack.c.l.b16 %v3158
    %v3768 = vunpack.c.h.b16 %v3158
    %v3769 = vunpack.c.l.b16 %v3159
    %v3770 = vunpack.c.l.b16 %v3160
    %v3771 = vunpack.c.h.b16 %v3160
    %v3772 = vunpack.c.l.b16 %v3161
    %v3773 = vunpack.c.l.b16 %v3162
    %v3774 = vunpack.c.h.b16 %v3162
    %v3775 = vunpack.c.l.b16 %v3163
    %v3776 = vunpack.c.l.b16 %v3164
    %v3777 = vunpack.c.h.b16 %v3164
    %v3778 = vunpack.c.l.b16 %v3165
    %v3779 = vunpack.c.l.b16 %v3166
    %v3780 = vunpack.c.h.b16 %v3166
    %v3781 = vunpack.c.l.b16 %v3167
    %v3782 = vunpack.c.l.b16 %v3168
    %v3783 = vunpack.c.h.b16 %v3168
    %v3784 = vunpack.c.l.b16 %v3169
    %v3785 = vunpack.c.l.b16 %v3170
    %v3786 = vunpack.c.h.b16 %v3170
    %v3787 = vunpack.c.l.b16 %v3171
    %v3788 = vunpack.c.l.b16 %v3172
    %v3789 = vunpack.c.h.b16 %v3172
    %v3790 = vunpack.c.l.b16 %v3173
    %v3791 = vunpack.c.l.b16 %v3174
    %v3792 = vunpack.c.h.b16 %v3174
    %v3793 = vunpack.c.l.b16 %v3175
    %v3794 = vunpack.c.l.b16 %v3176
    %v3795 = vunpack.c.h.b16 %v3176
    %v3796 = vunpack.c.l.b16 %v3177
    %v3797 = vunpack.c.l.b16 %v3178
    %v3798 = vunpack.c.h.b16 %v3178
    %v3799 = vunpack.c.l.b16 %v3179
    %v3800 = vunpack.c.l.b16 %v3180
    %v3801 = vunpack.c.h.b16 %v3180
    %v3802 = vunpack.c.l.b16 %v3181
    %v3803 = vunpack.c.l.b16 %v3182
    %v3804 = vunpack.c.h.b16 %v3182
    %v3805 = vunpack.c.l.b16 %v3183
    %v3806 = vunpack.c.l.b16 %v3184
    %v3807 = vunpack.c.h.b16 %v3184
    %v3808 = vunpack.c.l.b16 %v3185
    %v3809 = vunpack.c.l.b16 %v3186
    %v3810 = vunpack.c.h.b16 %v3186
    %v3811 = vunpack.c.l.b16 %v3187
    %v3812 = vunpack.c.l.b16 %v3188
    %v3813 = vunpack.c.h.b16 %v3188
    %v3814 = vunpack.c.l.b16 %v3189
    %v3815 = vunpack.c.l.b16 %v3190
    %v3816 = vunpack.c.h.b16 %v3190
    %v3817 = vunpack.c.l.b16 %v3191
    %v3818 = vunpack.c.l.b16 %v3192
    %v3819 = vunpack.c.h.b16 %v3192
    %v3820 = vunpack.c.l.b16 %v3193
    %v3821 = vunpack.c.l.b16 %v3194
    %v3822 = vunpack.c.h.b16 %v3194
    %v3823 = vunpack.c.l.b16 %v3195
    %v3824 = vunpack.c.l.b16 %v3196
    %v3825 = vunpack.c.h.b16 %v3196
    %v3826 = vunpack.c.l.b16 %v3197
    %v3827 = vpack.c.b16 %v3734, %v3731
    %v3828 = vpack.c.b16 %v3735, %v3732
    %v3829 = vpack.c.b16 %v3736, %v3733
    %v3830 = vpack.c.b16 %v3740, %v3737
    %v3831 = vpack.c.b16 %v3741, %v3738
    %v3832 = vpack.c.b16 %v3742, %v3739
    %v3833 = vpack.c.b16 %v3746, %v3743
    %v3834 = vpack.c.b16 %v3747, %v3744
    %v3835 = vpack.c.b16 %v3748, %v3745
    %v3836 = vpack.c.b16 %v3752, %v3749
    %v3837 = vpack.c.b16 %v3753, %v3750
    %v3838 = vpack.c.b16 %v3754, %v3751
    %v3839 = vpack.c.b16 %v3758, %v3755
    %v3840 = vpack.c.b16 %v3759, %v3756
    %v3841 = vpack.c.b16 %v3760, %v3757
    %v3842 = vpack.c.b16 %v3764, %v3761
    %v3843 = vpack.c.b16 %v3765, %v3762
    %v3844 = vpack.c.b16 %v3766, %v3763
    %v3845 = vpack.c.b16 %v3770, %v3767
    %v3846 = vpack.c.b16 %v3771, %v3768
    %v3847 = vpack.c.b16 %v3772, %v3769
    %v3848 = vpack.c.b16 %v3776, %v3773
    %v3849 = vpack.c.b16 %v3777, %v3774
    %v3850 = vpack.c.b16 %v3778, %v3775
    %v3851 = vpack.c.b16 %v3782, %v3779
    %v3852 = vpack.c.b16 %v3783, %v3780
    %v3853 = vpack.c.b16 %v3784, %v3781
    %v3854 = vpack.c.b16 %v3788, %v3785
    %v3855 = vpack.c.b16 %v3789, %v3786
    %v3856 = vpack.c.b16 %v3790, %v3787
    %v3857 = vpack.c.b16 %v3794, %v3791
    %v3858 = vpack.c.b16 %v3795, %v3792
    %v3859 = vpack.c.b16 %v3796, %v3793
    %v3860 = vpack.c.b16 %v3800, %v3797
    %v3861 = vpack.c.b16 %v3801, %v3798
    %v3862 = vpack.c.b16 %v3802, %v3799
    %v3863 = vpack.c.b16 %v3806, %v3803
    %v3864 = vpack.c.b16 %v3807, %v3804
    %v3865 = vpack.c.b16 %v3808, %v3805
    %v3866 = vpack.c.b16 %v3812, %v3809
    %v3867 = vpack.c.b16 %v3813, %v3810
    %v3868 = vpack.c.b16 %v3814, %v3811
    %v3869 = vpack.c.b16 %v3818, %v3815
    %v3870 = vpack.c.b16 %v3819, %v3816
    %v3871 = vpack.c.b16 %v3820, %v3817
    %v3872 = vpack.c.b16 %v3824, %v3821
    %v3873 = vpack.c.b16 %v3825, %v3822
    %v3874 = vpack.c.b16 %v3826, %v3823
    %3923 = vmatprep.subr.bf16.mxu0 %v3828
    %3924 = vmatpush1.bf16.msra.mxu0 %v3827
    %3925 = vmatprep.subr.bf16.mxu0 %v3831
    %3926 = vmatpush1.bf16.msra.mxu0 %v3830
    %3927 = vmatprep.subr.bf16.mxu0 %v3834
    %3928 = vmatpush1.bf16.msra.mxu0 %v3833
    %3929 = vmatprep.subr.bf16.mxu0 %v3837
    %3930 = vmatpush1.bf16.msra.mxu0 %v3836
    %3931 = vmatprep.subr.bf16.mxu0 %v3840
    %3932 = vmatpush1.bf16.msra.mxu0 %v3839
    %3933 = vmatprep.subr.bf16.mxu0 %v3843
    %3934 = vmatpush1.bf16.msra.mxu0 %v3842
    %3935 = vmatprep.subr.bf16.mxu0 %v3846
    %3936 = vmatpush1.bf16.msra.mxu0 %v3845
    %3937 = vmatprep.subr.bf16.mxu0 %v3849
    %3938 = vmatpush1.bf16.msra.mxu0 %v3848
    %3939 = vmatprep.subr.bf16.mxu0 %v3852
    %3940 = vmatpush1.bf16.msra.mxu0 %v3851
    %3941 = vmatprep.subr.bf16.mxu0 %v3855
    %3942 = vmatpush1.bf16.msra.mxu0 %v3854
    %3943 = vmatprep.subr.bf16.mxu0 %v3858
    %3944 = vmatpush1.bf16.msra.mxu0 %v3857
    %3945 = vmatprep.subr.bf16.mxu0 %v3861
    %3946 = vmatpush1.bf16.msra.mxu0 %v3860
    %3947 = vmatprep.subr.bf16.mxu0 %v3864
    %3948 = vmatpush1.bf16.msra.mxu0 %v3863
    %3949 = vmatprep.subr.bf16.mxu0 %v3867
    %3950 = vmatpush1.bf16.msra.mxu0 %v3866
    %3951 = vmatprep.subr.bf16.mxu0 %v3870
    %3952 = vmatpush1.bf16.msra.mxu0 %v3869
    %3953 = vmatprep.subr.bf16.mxu0 %v3873
    %3954 = vmatpush1.bf16.msra.mxu0 %v3872
    %3955 = vmatprep.mubr.bf16.mxu0 %v3127
    %3956 = vmatmul.mubr.bf16.gmra.mrb[0].mxu0 %v3126
    %v3957 = vpop.f32.mrb[0].mxu0
    %v3958 = vadd.f32 %v3564, %v3957
    %v3959 = vpop.f32.mrb[0].mxu0
    %v3960 = vadd.f32 %v3566, %v3959
    %v3961 = vpop.f32.mrb[0].mxu0
    %v3962 = vadd.f32 %v3568, %v3961
    %v3963 = vpop.f32.mrb[0].mxu0
    %v3964 = vadd.f32 %v3570, %v3963
    %3965 = vmatprep.mubr.bf16.mxu0 %v3129
    %3966 = vmatmul.mubr.bf16.gmra.mrb[0].mxu0 %v3128
    %v3967 = vpop.f32.mrb[0].mxu0
    %v3968 = vadd.f32 %v3574, %v3967
    %v3969 = vpop.f32.mrb[0].mxu0
    %v3970 = vadd.f32 %v3576, %v3969
    %v3971 = vpop.f32.mrb[0].mxu0
    %v3972 = vadd.f32 %v3578, %v3971
    %v3973 = vpop.f32.mrb[0].mxu0
    %v3974 = vadd.f32 %v3580, %v3973
    %3975 = vmatprep.mubr.bf16.mxu0 %v3131
    %3976 = vmatmul.mubr.bf16.gmra.mrb[0].mxu0 %v3130
    %v3977 = vpop.f32.mrb[0].mxu0
    %v3978 = vadd.f32 %v3584, %v3977
    %v3979 = vpop.f32.mrb[0].mxu0
    %v3980 = vadd.f32 %v3586, %v3979
    %v3981 = vpop.f32.mrb[0].mxu0
    %v3982 = vadd.f32 %v3588, %v3981
    %v3983 = vpop.f32.mrb[0].mxu0
    %v3984 = vadd.f32 %v3590, %v3983
    %3985 = vmatprep.mubr.bf16.mxu0 %v3133
    %3986 = vmatmul.mubr.bf16.gmra.mrb[0].mxu0 %v3132
    %v3987 = vpop.f32.mrb[0].mxu0
    %v3988 = vadd.f32 %v3594, %v3987
    %v3989 = vpop.f32.mrb[0].mxu0
    %v3990 = vadd.f32 %v3596, %v3989
    %v3991 = vpop.f32.mrb[0].mxu0
    %v3992 = vadd.f32 %v3598, %v3991
    %v3993 = vpop.f32.mrb[0].mxu0
    %v3994 = vadd.f32 %v3600, %v3993
    %3995 = vdwg.mxu0
    %3996 = vmatprep.subr.bf16.mxu0 0
    %3997 = vmatpush1.bf16.msra.mxu0 %v3829
    %3998 = vmatprep.subr.bf16.mxu0 0
    %3999 = vmatpush1.bf16.msra.mxu0 %v3832
    %4000 = vmatprep.subr.bf16.mxu0 0
    %4001 = vmatpush1.bf16.msra.mxu0 %v3835
    %4002 = vmatprep.subr.bf16.mxu0 0
    %4003 = vmatpush1.bf16.msra.mxu0 %v3838
    %4004 = vmatprep.subr.bf16.mxu0 0
    %4005 = vmatpush1.bf16.msra.mxu0 %v3841
    %4006 = vmatprep.subr.bf16.mxu0 0
    %4007 = vmatpush1.bf16.msra.mxu0 %v3844
    %4008 = vmatprep.subr.bf16.mxu0 0
    %4009 = vmatpush1.bf16.msra.mxu0 %v3847
    %4010 = vmatprep.subr.bf16.mxu0 0
    %4011 = vmatpush1.bf16.msra.mxu0 %v3850
    %4012 = vmatprep.subr.bf16.mxu0 0
    %4013 = vmatpush1.bf16.msra.mxu0 %v3853
    %4014 = vmatprep.subr.bf16.mxu0 0
    %4015 = vmatpush1.bf16.msra.mxu0 %v3856
    %4016 = vmatprep.subr.bf16.mxu0 0
    %4017 = vmatpush1.bf16.msra.mxu0 %v3859
    %4018 = vmatprep.subr.bf16.mxu0 0
    %4019 = vmatpush1.bf16.msra.mxu0 %v3862
    %4020 = vmatprep.subr.bf16.mxu0 0
    %4021 = vmatpush1.bf16.msra.mxu0 %v3865
    %4022 = vmatprep.subr.bf16.mxu0 0
    %4023 = vmatpush1.bf16.msra.mxu0 %v3868
    %4024 = vmatprep.subr.bf16.mxu0 0
    %4025 = vmatpush1.bf16.msra.mxu0 %v3871
    %4026 = vmatprep.subr.bf16.mxu0 0
    %4027 = vmatpush1.bf16.msra.mxu0 %v3874
    %4028 = vmatprep.mubr.bf16.mxu0 %v3127
    %4029 = vmatmul.mubr.bf16.gmra.mrb[0].mxu0 %v3126
    %v4030 = vpop.f32.mrb[0].mxu0
    %v4031 = vadd.f32 %v3637, %v4030
    %v4032 = vpop.f32.mrb[0].mxu0
    %v4033 = vpop.f32.mrb[0].mxu0
    %v4034 = vadd.f32 %v3640, %v4033
    %v4035 = vpop.f32.mrb[0].mxu0
    %4036 = vmatprep.mubr.bf16.mxu0 %v3129
    %4037 = vmatmul.mubr.bf16.gmra.mrb[0].mxu0 %v3128
    %v4038 = vpop.f32.mrb[0].mxu0
    %v4039 = vadd.f32 %v3645, %v4038
    %v4040 = vpop.f32.mrb[0].mxu0
    %v4041 = vpop.f32.mrb[0].mxu0
    %v4042 = vadd.f32 %v3648, %v4041
    %v4043 = vpop.f32.mrb[0].mxu0
    %4044 = vmatprep.mubr.bf16.mxu0 %v3131
    %4045 = vmatmul.mubr.bf16.gmra.mrb[0].mxu0 %v3130
    %v4046 = vpop.f32.mrb[0].mxu0
    %v4047 = vadd.f32 %v3653, %v4046
    %v4048 = vpop.f32.mrb[0].mxu0
    %v4049 = vpop.f32.mrb[0].mxu0
    %v4050 = vadd.f32 %v3656, %v4049
    %v4051 = vpop.f32.mrb[0].mxu0
    %4052 = vmatprep.mubr.bf16.mxu0 %v3133
    %4053 = vmatmul.mubr.bf16.gmra.mrb[0].mxu0 %v3132
    %v4054 = vpop.f32.mrb[0].mxu0
    %v4055 = vadd.f32 %v3661, %v4054
    %v4056 = vpop.f32.mrb[0].mxu0
    %v4057 = vpop.f32.mrb[0].mxu0
    %v4058 = vadd.f32 %v3664, %v4057
    %v4059 = vpop.f32.mrb[0].mxu0
    %4060 = vdwg.mxu0
    %v4061 = vld [vmem:[#allocation2 + $0x20] sm:$0xff]
    %v4062 = vld [vmem:[#allocation2 + $0x28] sm:$0xff]
    %v4063 = vld [vmem:[#allocation2 + $0x30] sm:$0xff]
    %v4064 = vld [vmem:[#allocation2 + $0x38] sm:$0xff]
    %v4065 = vld [vmem:[#allocation2 + $0x40] sm:$0xff]
    %v4066 = vld [vmem:[#allocation2 + $0x48] sm:$0xff]
    %v4067 = vld [vmem:[#allocation2 + $0x50] sm:$0xff]
    %v4068 = vld [vmem:[#allocation2 + $0x58] sm:$0xff]
    %v4069 = vld [vmem:[#allocation2 + $0x60] sm:$0xff]
    %v4070 = vld [vmem:[#allocation2 + $0x68] sm:$0xff]
    %v4071 = vld [vmem:[#allocation2 + $0x70] sm:$0xff]
    %v4072 = vld [vmem:[#allocation2 + $0x78] sm:$0xff]
    %v4073 = vld [vmem:[#allocation2 + $0x80] sm:$0xff]
    %v4074 = vld [vmem:[#allocation2 + $0x88] sm:$0xff]
    %v4075 = vld [vmem:[#allocation2 + $0x90] sm:$0xff]
    %v4076 = vld [vmem:[#allocation2 + $0x98] sm:$0xff]
    %v4077 = vpack.c.bf16 %v4063, %v4061
    %v4078 = vpack.c.bf16 %v4064, %v4062
    %v4079 = vpack.c.bf16 %v4067, %v4065
    %v4080 = vpack.c.bf16 %v4068, %v4066
    %v4081 = vpack.c.bf16 %v4071, %v4069
    %v4082 = vpack.c.bf16 %v4072, %v4070
    %v4083 = vpack.c.bf16 %v4075, %v4073
    %v4084 = vpack.c.bf16 %v4076, %v4074
    %s4085 = scalar_lea.vmem [#allocation5], 768
    %v4086 = vld [vmem:[%s4085] sm:$0xff]
    %v4087 = vld [vmem:[%s4085 + $0x8] sm:$0xf]
    %v4088 = vld [vmem:[%s4085 + $0xc] sm:$0xff]
    %v4089 = vld [vmem:[%s4085 + $0x14] sm:$0xf]
    %v4090 = vld [vmem:[%s4085 + $0x18] sm:$0xff]
    %v4091 = vld [vmem:[%s4085 + $0x20] sm:$0xf]
    %v4092 = vld [vmem:[%s4085 + $0x24] sm:$0xff]
    %v4093 = vld [vmem:[%s4085 + $0x2c] sm:$0xf]
    %v4094 = vld [vmem:[%s4085 + $0x30] sm:$0xff]
    %v4095 = vld [vmem:[%s4085 + $0x38] sm:$0xf]
    %v4096 = vld [vmem:[%s4085 + $0x3c] sm:$0xff]
    %v4097 = vld [vmem:[%s4085 + $0x44] sm:$0xf]
    %v4098 = vld [vmem:[%s4085 + $0x48] sm:$0xff]
    %v4099 = vld [vmem:[%s4085 + $0x50] sm:$0xf]
    %v4100 = vld [vmem:[%s4085 + $0x54] sm:$0xff]
    %v4101 = vld [vmem:[%s4085 + $0x5c] sm:$0xf]
    %v4102 = vld [vmem:[%s4085 + $0x60] sm:$0xff]
    %v4103 = vld [vmem:[%s4085 + $0x68] sm:$0xf]
    %v4104 = vld [vmem:[%s4085 + $0x6c] sm:$0xff]
    %v4105 = vld [vmem:[%s4085 + $0x74] sm:$0xf]
    %v4106 = vld [vmem:[%s4085 + $0x78] sm:$0xff]
    %v4107 = vld [vmem:[%s4085 + $0x80] sm:$0xf]
    %v4108 = vld [vmem:[%s4085 + $0x84] sm:$0xff]
    %v4109 = vld [vmem:[%s4085 + $0x8c] sm:$0xf]
    %v4110 = vld [vmem:[%s4085 + $0x90] sm:$0xff]
    %v4111 = vld [vmem:[%s4085 + $0x98] sm:$0xf]
    %v4112 = vld [vmem:[%s4085 + $0x9c] sm:$0xff]
    %v4113 = vld [vmem:[%s4085 + $0xa4] sm:$0xf]
    %v4114 = vld [vmem:[%s4085 + $0xa8] sm:$0xff]
    %v4115 = vld [vmem:[%s4085 + $0xb0] sm:$0xf]
    %v4116 = vld [vmem:[%s4085 + $0xb4] sm:$0xff]
    %v4117 = vld [vmem:[%s4085 + $0xbc] sm:$0xf]
    %v4118 = vld [vmem:[%s4085 + $0xc0] sm:$0xff]
    %v4119 = vld [vmem:[%s4085 + $0xc8] sm:$0xf]
    %v4120 = vld [vmem:[%s4085 + $0xcc] sm:$0xff]
    %v4121 = vld [vmem:[%s4085 + $0xd4] sm:$0xf]
    %v4122 = vld [vmem:[%s4085 + $0xd8] sm:$0xff]
    %v4123 = vld [vmem:[%s4085 + $0xe0] sm:$0xf]
    %v4124 = vld [vmem:[%s4085 + $0xe4] sm:$0xff]
    %v4125 = vld [vmem:[%s4085 + $0xec] sm:$0xf]
    %v4126 = vld [vmem:[%s4085 + $0xf0] sm:$0xff]
    %v4127 = vld [vmem:[%s4085 + $0xf8] sm:$0xf]
    %v4128 = vld [vmem:[%s4085 + $0xfc] sm:$0xff]
    %v4129 = vld [vmem:[%s4085 + $0x104] sm:$0xf]
    %v4130 = vld [vmem:[%s4085 + $0x108] sm:$0xff]
    %v4131 = vld [vmem:[%s4085 + $0x110] sm:$0xf]
    %v4132 = vld [vmem:[%s4085 + $0x114] sm:$0xff]
    %v4133 = vld [vmem:[%s4085 + $0x11c] sm:$0xf]
    %v4134 = vld [vmem:[%s4085 + $0x120] sm:$0xff]
    %v4135 = vld [vmem:[%s4085 + $0x128] sm:$0xf]
    %v4136 = vld [vmem:[%s4085 + $0x12c] sm:$0xff]
    %v4137 = vld [vmem:[%s4085 + $0x134] sm:$0xf]
    %v4138 = vld [vmem:[%s4085 + $0x138] sm:$0xff]
    %v4139 = vld [vmem:[%s4085 + $0x140] sm:$0xf]
    %v4140 = vld [vmem:[%s4085 + $0x144] sm:$0xff]
    %v4141 = vld [vmem:[%s4085 + $0x14c] sm:$0xf]
    %v4142 = vld [vmem:[%s4085 + $0x150] sm:$0xff]
    %v4143 = vld [vmem:[%s4085 + $0x158] sm:$0xf]
    %v4144 = vld [vmem:[%s4085 + $0x15c] sm:$0xff]
    %v4145 = vld [vmem:[%s4085 + $0x164] sm:$0xf]
    %v4146 = vld [vmem:[%s4085 + $0x168] sm:$0xff]
    %v4147 = vld [vmem:[%s4085 + $0x170] sm:$0xf]
    %v4148 = vld [vmem:[%s4085 + $0x174] sm:$0xff]
    %v4149 = vld [vmem:[%s4085 + $0x17c] sm:$0xf]
    %v4214 = vunpack.c.l.b16 %v4086
    %v4215 = vunpack.c.h.b16 %v4086
    %v4216 = vunpack.c.l.b16 %v4087
    %v4217 = vunpack.c.l.b16 %v4088
    %v4218 = vunpack.c.h.b16 %v4088
    %v4219 = vunpack.c.l.b16 %v4089
    %v4220 = vunpack.c.l.b16 %v4090
    %v4221 = vunpack.c.h.b16 %v4090
    %v4222 = vunpack.c.l.b16 %v4091
    %v4223 = vunpack.c.l.b16 %v4092
    %v4224 = vunpack.c.h.b16 %v4092
    %v4225 = vunpack.c.l.b16 %v4093
    %v4226 = vunpack.c.l.b16 %v4094
    %v4227 = vunpack.c.h.b16 %v4094
    %v4228 = vunpack.c.l.b16 %v4095
    %v4229 = vunpack.c.l.b16 %v4096
    %v4230 = vunpack.c.h.b16 %v4096
    %v4231 = vunpack.c.l.b16 %v4097
    %v4232 = vunpack.c.l.b16 %v4098
    %v4233 = vunpack.c.h.b16 %v4098
    %v4234 = vunpack.c.l.b16 %v4099
    %v4235 = vunpack.c.l.b16 %v4100
    %v4236 = vunpack.c.h.b16 %v4100
    %v4237 = vunpack.c.l.b16 %v4101
    %v4238 = vunpack.c.l.b16 %v4102
    %v4239 = vunpack.c.h.b16 %v4102
    %v4240 = vunpack.c.l.b16 %v4103
    %v4241 = vunpack.c.l.b16 %v4104
    %v4242 = vunpack.c.h.b16 %v4104
    %v4243 = vunpack.c.l.b16 %v4105
    %v4244 = vunpack.c.l.b16 %v4106
    %v4245 = vunpack.c.h.b16 %v4106
    %v4246 = vunpack.c.l.b16 %v4107
    %v4247 = vunpack.c.l.b16 %v4108
    %v4248 = vunpack.c.h.b16 %v4108
    %v4249 = vunpack.c.l.b16 %v4109
    %v4250 = vunpack.c.l.b16 %v4110
    %v4251 = vunpack.c.h.b16 %v4110
    %v4252 = vunpack.c.l.b16 %v4111
    %v4253 = vunpack.c.l.b16 %v4112
    %v4254 = vunpack.c.h.b16 %v4112
    %v4255 = vunpack.c.l.b16 %v4113
    %v4256 = vunpack.c.l.b16 %v4114
    %v4257 = vunpack.c.h.b16 %v4114
    %v4258 = vunpack.c.l.b16 %v4115
    %v4259 = vunpack.c.l.b16 %v4116
    %v4260 = vunpack.c.h.b16 %v4116
    %v4261 = vunpack.c.l.b16 %v4117
    %v4262 = vunpack.c.l.b16 %v4118
    %v4263 = vunpack.c.h.b16 %v4118
    %v4264 = vunpack.c.l.b16 %v4119
    %v4265 = vunpack.c.l.b16 %v4120
    %v4266 = vunpack.c.h.b16 %v4120
    %v4267 = vunpack.c.l.b16 %v4121
    %v4268 = vunpack.c.l.b16 %v4122
    %v4269 = vunpack.c.h.b16 %v4122
    %v4270 = vunpack.c.l.b16 %v4123
    %v4271 = vunpack.c.l.b16 %v4124
    %v4272 = vunpack.c.h.b16 %v4124
    %v4273 = vunpack.c.l.b16 %v4125
    %v4274 = vunpack.c.l.b16 %v4126
    %v4275 = vunpack.c.h.b16 %v4126
    %v4276 = vunpack.c.l.b16 %v4127
    %v4277 = vunpack.c.l.b16 %v4128
    %v4278 = vunpack.c.h.b16 %v4128
    %v4279 = vunpack.c.l.b16 %v4129
    %v4280 = vunpack.c.l.b16 %v4130
    %v4281 = vunpack.c.h.b16 %v4130
    %v4282 = vunpack.c.l.b16 %v4131
    %v4283 = vunpack.c.l.b16 %v4132
    %v4284 = vunpack.c.h.b16 %v4132
    %v4285 = vunpack.c.l.b16 %v4133
    %v4286 = vunpack.c.l.b16 %v4134
    %v4287 = vunpack.c.h.b16 %v4134
    %v4288 = vunpack.c.l.b16 %v4135
    %v4289 = vunpack.c.l.b16 %v4136
    %v4290 = vunpack.c.h.b16 %v4136
    %v4291 = vunpack.c.l.b16 %v4137
    %v4292 = vunpack.c.l.b16 %v4138
    %v4293 = vunpack.c.h.b16 %v4138
    %v4294 = vunpack.c.l.b16 %v4139
    %v4295 = vunpack.c.l.b16 %v4140
    %v4296 = vunpack.c.h.b16 %v4140
    %v4297 = vunpack.c.l.b16 %v4141
    %v4298 = vunpack.c.l.b16 %v4142
    %v4299 = vunpack.c.h.b16 %v4142
    %v4300 = vunpack.c.l.b16 %v4143
    %v4301 = vunpack.c.l.b16 %v4144
    %v4302 = vunpack.c.h.b16 %v4144
    %v4303 = vunpack.c.l.b16 %v4145
    %v4304 = vunpack.c.l.b16 %v4146
    %v4305 = vunpack.c.h.b16 %v4146
    %v4306 = vunpack.c.l.b16 %v4147
    %v4307 = vunpack.c.l.b16 %v4148
    %v4308 = vunpack.c.h.b16 %v4148
    %v4309 = vunpack.c.l.b16 %v4149
    %v4310 = vpack.c.b16 %v4217, %v4214
    %v4311 = vpack.c.b16 %v4218, %v4215
    %v4312 = vpack.c.b16 %v4219, %v4216
    %v4313 = vpack.c.b16 %v4223, %v4220
    %v4314 = vpack.c.b16 %v4224, %v4221
    %v4315 = vpack.c.b16 %v4225, %v4222
    %v4316 = vpack.c.b16 %v4229, %v4226
    %v4317 = vpack.c.b16 %v4230, %v4227
    %v4318 = vpack.c.b16 %v4231, %v4228
    %v4319 = vpack.c.b16 %v4235, %v4232
    %v4320 = vpack.c.b16 %v4236, %v4233
    %v4321 = vpack.c.b16 %v4237, %v4234
    %v4322 = vpack.c.b16 %v4241, %v4238
    %v4323 = vpack.c.b16 %v4242, %v4239
    %v4324 = vpack.c.b16 %v4243, %v4240
    %v4325 = vpack.c.b16 %v4247, %v4244
    %v4326 = vpack.c.b16 %v4248, %v4245
    %v4327 = vpack.c.b16 %v4249, %v4246
    %v4328 = vpack.c.b16 %v4253, %v4250
    %v4329 = vpack.c.b16 %v4254, %v4251
    %v4330 = vpack.c.b16 %v4255, %v4252
    %v4331 = vpack.c.b16 %v4259, %v4256
    %v4332 = vpack.c.b16 %v4260, %v4257
    %v4333 = vpack.c.b16 %v4261, %v4258
    %v4334 = vpack.c.b16 %v4265, %v4262
    %v4335 = vpack.c.b16 %v4266, %v4263
    %v4336 = vpack.c.b16 %v4267, %v4264
    %v4337 = vpack.c.b16 %v4271, %v4268
    %v4338 = vpack.c.b16 %v4272, %v4269
    %v4339 = vpack.c.b16 %v4273, %v4270
    %v4340 = vpack.c.b16 %v4277, %v4274
    %v4341 = vpack.c.b16 %v4278, %v4275
    %v4342 = vpack.c.b16 %v4279, %v4276
    %v4343 = vpack.c.b16 %v4283, %v4280
    %v4344 = vpack.c.b16 %v4284, %v4281
    %v4345 = vpack.c.b16 %v4285, %v4282
    %v4346 = vpack.c.b16 %v4289, %v4286
    %v4347 = vpack.c.b16 %v4290, %v4287
    %v4348 = vpack.c.b16 %v4291, %v4288
    %v4349 = vpack.c.b16 %v4295, %v4292
    %v4350 = vpack.c.b16 %v4296, %v4293
    %v4351 = vpack.c.b16 %v4297, %v4294
    %v4352 = vpack.c.b16 %v4301, %v4298
    %v4353 = vpack.c.b16 %v4302, %v4299
    %v4354 = vpack.c.b16 %v4303, %v4300
    %v4355 = vpack.c.b16 %v4307, %v4304
    %v4356 = vpack.c.b16 %v4308, %v4305
    %v4357 = vpack.c.b16 %v4309, %v4306
    %4406 = vmatprep.subr.bf16.mxu0 %v4311
    %4407 = vmatpush1.bf16.msra.mxu0 %v4310
    %4408 = vmatprep.subr.bf16.mxu0 %v4314
    %4409 = vmatpush1.bf16.msra.mxu0 %v4313
    %4410 = vmatprep.subr.bf16.mxu0 %v4317
    %4411 = vmatpush1.bf16.msra.mxu0 %v4316
    %4412 = vmatprep.subr.bf16.mxu0 %v4320
    %4413 = vmatpush1.bf16.msra.mxu0 %v4319
    %4414 = vmatprep.subr.bf16.mxu0 %v4323
    %4415 = vmatpush1.bf16.msra.mxu0 %v4322
    %4416 = vmatprep.subr.bf16.mxu0 %v4326
    %4417 = vmatpush1.bf16.msra.mxu0 %v4325
    %4418 = vmatprep.subr.bf16.mxu0 %v4329
    %4419 = vmatpush1.bf16.msra.mxu0 %v4328
    %4420 = vmatprep.subr.bf16.mxu0 %v4332
    %4421 = vmatpush1.bf16.msra.mxu0 %v4331
    %4422 = vmatprep.subr.bf16.mxu0 %v4335
    %4423 = vmatpush1.bf16.msra.mxu0 %v4334
    %4424 = vmatprep.subr.bf16.mxu0 %v4338
    %4425 = vmatpush1.bf16.msra.mxu0 %v4337
    %4426 = vmatprep.subr.bf16.mxu0 %v4341
    %4427 = vmatpush1.bf16.msra.mxu0 %v4340
    %4428 = vmatprep.subr.bf16.mxu0 %v4344
    %4429 = vmatpush1.bf16.msra.mxu0 %v4343
    %4430 = vmatprep.subr.bf16.mxu0 %v4347
    %4431 = vmatpush1.bf16.msra.mxu0 %v4346
    %4432 = vmatprep.subr.bf16.mxu0 %v4350
    %4433 = vmatpush1.bf16.msra.mxu0 %v4349
    %4434 = vmatprep.subr.bf16.mxu0 %v4353
    %4435 = vmatpush1.bf16.msra.mxu0 %v4352
    %4436 = vmatprep.subr.bf16.mxu0 %v4356
    %4437 = vmatpush1.bf16.msra.mxu0 %v4355
    %4438 = vmatprep.mubr.bf16.mxu0 %v4078
    %4439 = vmatmul.mubr.bf16.gmra.mrb[0].mxu0 %v4077
    %v4440 = vpop.f32.mrb[0].mxu0
    %v4441 = vadd.f32 0.0, %v4440
    %v4442 = vpop.f32.mrb[0].mxu0
    %v4443 = vadd.f32 0.0, %v4442
    %v4444 = vpop.f32.mrb[0].mxu0
    %v4445 = vadd.f32 0.0, %v4444
    %v4446 = vpop.f32.mrb[0].mxu0
    %v4447 = vadd.f32 0.0, %v4446
    %4448 = vmatprep.mubr.bf16.mxu0 %v4080
    %4449 = vmatmul.mubr.bf16.gmra.mrb[0].mxu0 %v4079
    %v4450 = vpop.f32.mrb[0].mxu0
    %v4451 = vadd.f32 0.0, %v4450
    %v4452 = vpop.f32.mrb[0].mxu0
    %v4453 = vadd.f32 0.0, %v4452
    %v4454 = vpop.f32.mrb[0].mxu0
    %v4455 = vadd.f32 0.0, %v4454
    %v4456 = vpop.f32.mrb[0].mxu0
    %v4457 = vadd.f32 0.0, %v4456
    %4458 = vmatprep.mubr.bf16.mxu0 %v4082
    %4459 = vmatmul.mubr.bf16.gmra.mrb[0].mxu0 %v4081
    %v4460 = vpop.f32.mrb[0].mxu0
    %v4461 = vadd.f32 0.0, %v4460
    %v4462 = vpop.f32.mrb[0].mxu0
    %v4463 = vadd.f32 0.0, %v4462
    %v4464 = vpop.f32.mrb[0].mxu0
    %v4465 = vadd.f32 0.0, %v4464
    %v4466 = vpop.f32.mrb[0].mxu0
    %v4467 = vadd.f32 0.0, %v4466
    %4468 = vmatprep.mubr.bf16.mxu0 %v4084
    %4469 = vmatmul.mubr.bf16.gmra.mrb[0].mxu0 %v4083
    %v4470 = vpop.f32.mrb[0].mxu0
    %v4471 = vadd.f32 0.0, %v4470
    %v4472 = vpop.f32.mrb[0].mxu0
    %v4473 = vadd.f32 0.0, %v4472
    %v4474 = vpop.f32.mrb[0].mxu0
    %v4475 = vadd.f32 0.0, %v4474
    %v4476 = vpop.f32.mrb[0].mxu0
    %v4477 = vadd.f32 0.0, %v4476
    %4478 = vdwg.mxu0
    %4479 = vmatprep.subr.bf16.mxu0 0
    %4480 = vmatpush1.bf16.msra.mxu0 %v4312
    %4481 = vmatprep.subr.bf16.mxu0 0
    %4482 = vmatpush1.bf16.msra.mxu0 %v4315
    %4483 = vmatprep.subr.bf16.mxu0 0
    %4484 = vmatpush1.bf16.msra.mxu0 %v4318
    %4485 = vmatprep.subr.bf16.mxu0 0
    %4486 = vmatpush1.bf16.msra.mxu0 %v4321
    %4487 = vmatprep.subr.bf16.mxu0 0
    %4488 = vmatpush1.bf16.msra.mxu0 %v4324
    %4489 = vmatprep.subr.bf16.mxu0 0
    %4490 = vmatpush1.bf16.msra.mxu0 %v4327
    %4491 = vmatprep.subr.bf16.mxu0 0
    %4492 = vmatpush1.bf16.msra.mxu0 %v4330
    %4493 = vmatprep.subr.bf16.mxu0 0
    %4494 = vmatpush1.bf16.msra.mxu0 %v4333
    %4495 = vmatprep.subr.bf16.mxu0 0
    %4496 = vmatpush1.bf16.msra.mxu0 %v4336
    %4497 = vmatprep.subr.bf16.mxu0 0
    %4498 = vmatpush1.bf16.msra.mxu0 %v4339
    %4499 = vmatprep.subr.bf16.mxu0 0
    %4500 = vmatpush1.bf16.msra.mxu0 %v4342
    %4501 = vmatprep.subr.bf16.mxu0 0
    %4502 = vmatpush1.bf16.msra.mxu0 %v4345
    %4503 = vmatprep.subr.bf16.mxu0 0
    %4504 = vmatpush1.bf16.msra.mxu0 %v4348
    %4505 = vmatprep.subr.bf16.mxu0 0
    %4506 = vmatpush1.bf16.msra.mxu0 %v4351
    %4507 = vmatprep.subr.bf16.mxu0 0
    %4508 = vmatpush1.bf16.msra.mxu0 %v4354
    %4509 = vmatprep.subr.bf16.mxu0 0
    %4510 = vmatpush1.bf16.msra.mxu0 %v4357
    %4511 = vmatprep.mubr.bf16.mxu0 %v4078
    %4512 = vmatmul.mubr.bf16.gmra.mrb[0].mxu0 %v4077
    %v4513 = vpop.f32.mrb[0].mxu0
    %v4514 = vadd.f32 0.0, %v4513
    %v4515 = vpop.f32.mrb[0].mxu0
    %v4516 = vpop.f32.mrb[0].mxu0
    %v4517 = vadd.f32 0.0, %v4516
    %v4518 = vpop.f32.mrb[0].mxu0
    %4519 = vmatprep.mubr.bf16.mxu0 %v4080
    %4520 = vmatmul.mubr.bf16.gmra.mrb[0].mxu0 %v4079
    %v4521 = vpop.f32.mrb[0].mxu0
    %v4522 = vadd.f32 0.0, %v4521
    %v4523 = vpop.f32.mrb[0].mxu0
    %v4524 = vpop.f32.mrb[0].mxu0
    %v4525 = vadd.f32 0.0, %v4524
    %v4526 = vpop.f32.mrb[0].mxu0
    %4527 = vmatprep.mubr.bf16.mxu0 %v4082
    %4528 = vmatmul.mubr.bf16.gmra.mrb[0].mxu0 %v4081
    %v4529 = vpop.f32.mrb[0].mxu0
    %v4530 = vadd.f32 0.0, %v4529
    %v4531 = vpop.f32.mrb[0].mxu0
    %v4532 = vpop.f32.mrb[0].mxu0
    %v4533 = vadd.f32 0.0, %v4532
    %v4534 = vpop.f32.mrb[0].mxu0
    %4535 = vmatprep.mubr.bf16.mxu0 %v4084
    %4536 = vmatmul.mubr.bf16.gmra.mrb[0].mxu0 %v4083
    %v4537 = vpop.f32.mrb[0].mxu0
    %v4538 = vadd.f32 0.0, %v4537
    %v4539 = vpop.f32.mrb[0].mxu0
    %v4540 = vpop.f32.mrb[0].mxu0
    %v4541 = vadd.f32 0.0, %v4540
    %v4542 = vpop.f32.mrb[0].mxu0
    %4543 = vdwg.mxu0
    %v4544 = vadd.f32 %v3958, %v4441
    %v4545 = vadd.f32 %v3960, %v4443
    %v4546 = vadd.f32 %v4031, %v4514
    %v4547 = vadd.f32 %v3962, %v4445
    %v4548 = vadd.f32 %v3964, %v4447
    %v4549 = vadd.f32 %v4034, %v4517
    %v4550 = vadd.f32 %v3968, %v4451
    %v4551 = vadd.f32 %v3970, %v4453
    %v4552 = vadd.f32 %v4039, %v4522
    %v4553 = vadd.f32 %v3972, %v4455
    %v4554 = vadd.f32 %v3974, %v4457
    %v4555 = vadd.f32 %v4042, %v4525
    %v4556 = vadd.f32 %v3978, %v4461
    %v4557 = vadd.f32 %v3980, %v4463
    %v4558 = vadd.f32 %v4047, %v4530
    %v4559 = vadd.f32 %v3982, %v4465
    %v4560 = vadd.f32 %v3984, %v4467
    %v4561 = vadd.f32 %v4050, %v4533
    %v4562 = vadd.f32 %v3988, %v4471
    %v4563 = vadd.f32 %v3990, %v4473
    %v4564 = vadd.f32 %v4055, %v4538
    %v4565 = vadd.f32 %v3992, %v4475
    %v4566 = vadd.f32 %v3994, %v4477
    %v4567 = vadd.f32 %v4058, %v4541
    %v4568 = vld [vmem:[#allocation2 + $0x30] sm:$0xff]
    %v4569 = vld [vmem:[#allocation2 + $0x38] sm:$0xff]
    %v4570 = vld [vmem:[#allocation2 + $0x40] sm:$0xff]
    %v4571 = vld [vmem:[#allocation2 + $0x48] sm:$0xff]
    %v4572 = vld [vmem:[#allocation2 + $0x50] sm:$0xff]
    %v4573 = vld [vmem:[#allocation2 + $0x58] sm:$0xff]
    %v4574 = vld [vmem:[#allocation2 + $0x60] sm:$0xff]
    %v4575 = vld [vmem:[#allocation2 + $0x68] sm:$0xff]
    %v4576 = vld [vmem:[#allocation2 + $0x70] sm:$0xff]
    %v4577 = vld [vmem:[#allocation2 + $0x78] sm:$0xff]
    %v4578 = vld [vmem:[#allocation2 + $0x80] sm:$0xff]
    %v4579 = vld [vmem:[#allocation2 + $0x88] sm:$0xff]
    %v4580 = vld [vmem:[#allocation2 + $0x90] sm:$0xff]
    %v4581 = vld [vmem:[#allocation2 + $0x98] sm:$0xff]
    %v4582 = vld [vmem:[#allocation2 + $0xa0] sm:$0xff]
    %v4583 = vld [vmem:[#allocation2 + $0xa8] sm:$0xff]
    %v4584 = vpack.c.bf16 %v4570, %v4568
    %v4585 = vpack.c.bf16 %v4571, %v4569
    %v4586 = vpack.c.bf16 %v4574, %v4572
    %v4587 = vpack.c.bf16 %v4575, %v4573
    %v4588 = vpack.c.bf16 %v4578, %v4576
    %v4589 = vpack.c.bf16 %v4579, %v4577
    %v4590 = vpack.c.bf16 %v4582, %v4580
    %v4591 = vpack.c.bf16 %v4583, %v4581
    %s4592 = scalar_lea.vmem [#allocation5], 1152
    %v4593 = vld [vmem:[%s4592] sm:$0xff]
    %v4594 = vld [vmem:[%s4592 + $0x8] sm:$0xf]
    %v4595 = vld [vmem:[%s4592 + $0xc] sm:$0xff]
    %v4596 = vld [vmem:[%s4592 + $0x14] sm:$0xf]
    %v4597 = vld [vmem:[%s4592 + $0x18] sm:$0xff]
    %v4598 = vld [vmem:[%s4592 + $0x20] sm:$0xf]
    %v4599 = vld [vmem:[%s4592 + $0x24] sm:$0xff]
    %v4600 = vld [vmem:[%s4592 + $0x2c] sm:$0xf]
    %v4601 = vld [vmem:[%s4592 + $0x30] sm:$0xff]
    %v4602 = vld [vmem:[%s4592 + $0x38] sm:$0xf]
    %v4603 = vld [vmem:[%s4592 + $0x3c] sm:$0xff]
    %v4604 = vld [vmem:[%s4592 + $0x44] sm:$0xf]
    %v4605 = vld [vmem:[%s4592 + $0x48] sm:$0xff]
    %v4606 = vld [vmem:[%s4592 + $0x50] sm:$0xf]
    %v4607 = vld [vmem:[%s4592 + $0x54] sm:$0xff]
    %v4608 = vld [vmem:[%s4592 + $0x5c] sm:$0xf]
    %v4609 = vld [vmem:[%s4592 + $0x60] sm:$0xff]
    %v4610 = vld [vmem:[%s4592 + $0x68] sm:$0xf]
    %v4611 = vld [vmem:[%s4592 + $0x6c] sm:$0xff]
    %v4612 = vld [vmem:[%s4592 + $0x74] sm:$0xf]
    %v4613 = vld [vmem:[%s4592 + $0x78] sm:$0xff]
    %v4614 = vld [vmem:[%s4592 + $0x80] sm:$0xf]
    %v4615 = vld [vmem:[%s4592 + $0x84] sm:$0xff]
    %v4616 = vld [vmem:[%s4592 + $0x8c] sm:$0xf]
    %v4617 = vld [vmem:[%s4592 + $0x90] sm:$0xff]
    %v4618 = vld [vmem:[%s4592 + $0x98] sm:$0xf]
    %v4619 = vld [vmem:[%s4592 + $0x9c] sm:$0xff]
    %v4620 = vld [vmem:[%s4592 + $0xa4] sm:$0xf]
    %v4621 = vld [vmem:[%s4592 + $0xa8] sm:$0xff]
    %v4622 = vld [vmem:[%s4592 + $0xb0] sm:$0xf]
    %v4623 = vld [vmem:[%s4592 + $0xb4] sm:$0xff]
    %v4624 = vld [vmem:[%s4592 + $0xbc] sm:$0xf]
    %v4625 = vld [vmem:[%s4592 + $0xc0] sm:$0xff]
    %v4626 = vld [vmem:[%s4592 + $0xc8] sm:$0xf]
    %v4627 = vld [vmem:[%s4592 + $0xcc] sm:$0xff]
    %v4628 = vld [vmem:[%s4592 + $0xd4] sm:$0xf]
    %v4629 = vld [vmem:[%s4592 + $0xd8] sm:$0xff]
    %v4630 = vld [vmem:[%s4592 + $0xe0] sm:$0xf]
    %v4631 = vld [vmem:[%s4592 + $0xe4] sm:$0xff]
    %v4632 = vld [vmem:[%s4592 + $0xec] sm:$0xf]
    %v4633 = vld [vmem:[%s4592 + $0xf0] sm:$0xff]
    %v4634 = vld [vmem:[%s4592 + $0xf8] sm:$0xf]
    %v4635 = vld [vmem:[%s4592 + $0xfc] sm:$0xff]
    %v4636 = vld [vmem:[%s4592 + $0x104] sm:$0xf]
    %v4637 = vld [vmem:[%s4592 + $0x108] sm:$0xff]
    %v4638 = vld [vmem:[%s4592 + $0x110] sm:$0xf]
    %v4639 = vld [vmem:[%s4592 + $0x114] sm:$0xff]
    %v4640 = vld [vmem:[%s4592 + $0x11c] sm:$0xf]
    %v4641 = vld [vmem:[%s4592 + $0x120] sm:$0xff]
    %v4642 = vld [vmem:[%s4592 + $0x128] sm:$0xf]
    %v4643 = vld [vmem:[%s4592 + $0x12c] sm:$0xff]
    %v4644 = vld [vmem:[%s4592 + $0x134] sm:$0xf]
    %v4645 = vld [vmem:[%s4592 + $0x138] sm:$0xff]
    %v4646 = vld [vmem:[%s4592 + $0x140] sm:$0xf]
    %v4647 = vld [vmem:[%s4592 + $0x144] sm:$0xff]
    %v4648 = vld [vmem:[%s4592 + $0x14c] sm:$0xf]
    %v4649 = vld [vmem:[%s4592 + $0x150] sm:$0xff]
    %v4650 = vld [vmem:[%s4592 + $0x158] sm:$0xf]
    %v4651 = vld [vmem:[%s4592 + $0x15c] sm:$0xff]
    %v4652 = vld [vmem:[%s4592 + $0x164] sm:$0xf]
    %v4653 = vld [vmem:[%s4592 + $0x168] sm:$0xff]
    %v4654 = vld [vmem:[%s4592 + $0x170] sm:$0xf]
    %v4655 = vld [vmem:[%s4592 + $0x174] sm:$0xff]
    %v4656 = vld [vmem:[%s4592 + $0x17c] sm:$0xf]
    %v4721 = vunpack.c.l.b16 %v4593
    %v4722 = vunpack.c.h.b16 %v4593
    %v4723 = vunpack.c.l.b16 %v4594
    %v4724 = vunpack.c.l.b16 %v4595
    %v4725 = vunpack.c.h.b16 %v4595
    %v4726 = vunpack.c.l.b16 %v4596
    %v4727 = vunpack.c.l.b16 %v4597
    %v4728 = vunpack.c.h.b16 %v4597
    %v4729 = vunpack.c.l.b16 %v4598
    %v4730 = vunpack.c.l.b16 %v4599
    %v4731 = vunpack.c.h.b16 %v4599
    %v4732 = vunpack.c.l.b16 %v4600
    %v4733 = vunpack.c.l.b16 %v4601
    %v4734 = vunpack.c.h.b16 %v4601
    %v4735 = vunpack.c.l.b16 %v4602
    %v4736 = vunpack.c.l.b16 %v4603
    %v4737 = vunpack.c.h.b16 %v4603
    %v4738 = vunpack.c.l.b16 %v4604
    %v4739 = vunpack.c.l.b16 %v4605
    %v4740 = vunpack.c.h.b16 %v4605
    %v4741 = vunpack.c.l.b16 %v4606
    %v4742 = vunpack.c.l.b16 %v4607
    %v4743 = vunpack.c.h.b16 %v4607
    %v4744 = vunpack.c.l.b16 %v4608
    %v4745 = vunpack.c.l.b16 %v4609
    %v4746 = vunpack.c.h.b16 %v4609
    %v4747 = vunpack.c.l.b16 %v4610
    %v4748 = vunpack.c.l.b16 %v4611
    %v4749 = vunpack.c.h.b16 %v4611
    %v4750 = vunpack.c.l.b16 %v4612
    %v4751 = vunpack.c.l.b16 %v4613
    %v4752 = vunpack.c.h.b16 %v4613
    %v4753 = vunpack.c.l.b16 %v4614
    %v4754 = vunpack.c.l.b16 %v4615
    %v4755 = vunpack.c.h.b16 %v4615
    %v4756 = vunpack.c.l.b16 %v4616
    %v4757 = vunpack.c.l.b16 %v4617
    %v4758 = vunpack.c.h.b16 %v4617
    %v4759 = vunpack.c.l.b16 %v4618
    %v4760 = vunpack.c.l.b16 %v4619
    %v4761 = vunpack.c.h.b16 %v4619
    %v4762 = vunpack.c.l.b16 %v4620
    %v4763 = vunpack.c.l.b16 %v4621
    %v4764 = vunpack.c.h.b16 %v4621
    %v4765 = vunpack.c.l.b16 %v4622
    %v4766 = vunpack.c.l.b16 %v4623
    %v4767 = vunpack.c.h.b16 %v4623
    %v4768 = vunpack.c.l.b16 %v4624
    %v4769 = vunpack.c.l.b16 %v4625
    %v4770 = vunpack.c.h.b16 %v4625
    %v4771 = vunpack.c.l.b16 %v4626
    %v4772 = vunpack.c.l.b16 %v4627
    %v4773 = vunpack.c.h.b16 %v4627
    %v4774 = vunpack.c.l.b16 %v4628
    %v4775 = vunpack.c.l.b16 %v4629
    %v4776 = vunpack.c.h.b16 %v4629
    %v4777 = vunpack.c.l.b16 %v4630
    %v4778 = vunpack.c.l.b16 %v4631
    %v4779 = vunpack.c.h.b16 %v4631
    %v4780 = vunpack.c.l.b16 %v4632
    %v4781 = vunpack.c.l.b16 %v4633
    %v4782 = vunpack.c.h.b16 %v4633
    %v4783 = vunpack.c.l.b16 %v4634
    %v4784 = vunpack.c.l.b16 %v4635
    %v4785 = vunpack.c.h.b16 %v4635
    %v4786 = vunpack.c.l.b16 %v4636
    %v4787 = vunpack.c.l.b16 %v4637
    %v4788 = vunpack.c.h.b16 %v4637
    %v4789 = vunpack.c.l.b16 %v4638
    %v4790 = vunpack.c.l.b16 %v4639
    %v4791 = vunpack.c.h.b16 %v4639
    %v4792 = vunpack.c.l.b16 %v4640
    %v4793 = vunpack.c.l.b16 %v4641
    %v4794 = vunpack.c.h.b16 %v4641
    %v4795 = vunpack.c.l.b16 %v4642
    %v4796 = vunpack.c.l.b16 %v4643
    %v4797 = vunpack.c.h.b16 %v4643
    %v4798 = vunpack.c.l.b16 %v4644
    %v4799 = vunpack.c.l.b16 %v4645
    %v4800 = vunpack.c.h.b16 %v4645
    %v4801 = vunpack.c.l.b16 %v4646
    %v4802 = vunpack.c.l.b16 %v4647
    %v4803 = vunpack.c.h.b16 %v4647
    %v4804 = vunpack.c.l.b16 %v4648
    %v4805 = vunpack.c.l.b16 %v4649
    %v4806 = vunpack.c.h.b16 %v4649
    %v4807 = vunpack.c.l.b16 %v4650
    %v4808 = vunpack.c.l.b16 %v4651
    %v4809 = vunpack.c.h.b16 %v4651
    %v4810 = vunpack.c.l.b16 %v4652
    %v4811 = vunpack.c.l.b16 %v4653
    %v4812 = vunpack.c.h.b16 %v4653
    %v4813 = vunpack.c.l.b16 %v4654
    %v4814 = vunpack.c.l.b16 %v4655
    %v4815 = vunpack.c.h.b16 %v4655
    %v4816 = vunpack.c.l.b16 %v4656
    %v4817 = vpack.c.b16 %v4724, %v4721
    %v4818 = vpack.c.b16 %v4725, %v4722
    %v4819 = vpack.c.b16 %v4726, %v4723
    %v4820 = vpack.c.b16 %v4730, %v4727
    %v4821 = vpack.c.b16 %v4731, %v4728
    %v4822 = vpack.c.b16 %v4732, %v4729
    %v4823 = vpack.c.b16 %v4736, %v4733
    %v4824 = vpack.c.b16 %v4737, %v4734
    %v4825 = vpack.c.b16 %v4738, %v4735
    %v4826 = vpack.c.b16 %v4742, %v4739
    %v4827 = vpack.c.b16 %v4743, %v4740
    %v4828 = vpack.c.b16 %v4744, %v4741
    %v4829 = vpack.c.b16 %v4748, %v4745
    %v4830 = vpack.c.b16 %v4749, %v4746
    %v4831 = vpack.c.b16 %v4750, %v4747
    %v4832 = vpack.c.b16 %v4754, %v4751
    %v4833 = vpack.c.b16 %v4755, %v4752
    %v4834 = vpack.c.b16 %v4756, %v4753
    %v4835 = vpack.c.b16 %v4760, %v4757
    %v4836 = vpack.c.b16 %v4761, %v4758
    %v4837 = vpack.c.b16 %v4762, %v4759
    %v4838 = vpack.c.b16 %v4766, %v4763
    %v4839 = vpack.c.b16 %v4767, %v4764
    %v4840 = vpack.c.b16 %v4768, %v4765
    %v4841 = vpack.c.b16 %v4772, %v4769
    %v4842 = vpack.c.b16 %v4773, %v4770
    %v4843 = vpack.c.b16 %v4774, %v4771
    %v4844 = vpack.c.b16 %v4778, %v4775
    %v4845 = vpack.c.b16 %v4779, %v4776
    %v4846 = vpack.c.b16 %v4780, %v4777
    %v4847 = vpack.c.b16 %v4784, %v4781
    %v4848 = vpack.c.b16 %v4785, %v4782
    %v4849 = vpack.c.b16 %v4786, %v4783
    %v4850 = vpack.c.b16 %v4790, %v4787
    %v4851 = vpack.c.b16 %v4791, %v4788
    %v4852 = vpack.c.b16 %v4792, %v4789
    %v4853 = vpack.c.b16 %v4796, %v4793
    %v4854 = vpack.c.b16 %v4797, %v4794
    %v4855 = vpack.c.b16 %v4798, %v4795
    %v4856 = vpack.c.b16 %v4802, %v4799
    %v4857 = vpack.c.b16 %v4803, %v4800
    %v4858 = vpack.c.b16 %v4804, %v4801
    %v4859 = vpack.c.b16 %v4808, %v4805
    %v4860 = vpack.c.b16 %v4809, %v4806
    %v4861 = vpack.c.b16 %v4810, %v4807
    %v4862 = vpack.c.b16 %v4814, %v4811
    %v4863 = vpack.c.b16 %v4815, %v4812
    %v4864 = vpack.c.b16 %v4816, %v4813
    %4913 = vmatprep.subr.bf16.mxu0 %v4818
    %4914 = vmatpush1.bf16.msra.mxu0 %v4817
    %4915 = vmatprep.subr.bf16.mxu0 %v4821
    %4916 = vmatpush1.bf16.msra.mxu0 %v4820
    %4917 = vmatprep.subr.bf16.mxu0 %v4824
    %4918 = vmatpush1.bf16.msra.mxu0 %v4823
    %4919 = vmatprep.subr.bf16.mxu0 %v4827
    %4920 = vmatpush1.bf16.msra.mxu0 %v4826
    %4921 = vmatprep.subr.bf16.mxu0 %v4830
    %4922 = vmatpush1.bf16.msra.mxu0 %v4829
    %4923 = vmatprep.subr.bf16.mxu0 %v4833
    %4924 = vmatpush1.bf16.msra.mxu0 %v4832
    %4925 = vmatprep.subr.bf16.mxu0 %v4836
    %4926 = vmatpush1.bf16.msra.mxu0 %v4835
    %4927 = vmatprep.subr.bf16.mxu0 %v4839
    %4928 = vmatpush1.bf16.msra.mxu0 %v4838
    %4929 = vmatprep.subr.bf16.mxu0 %v4842
    %4930 = vmatpush1.bf16.msra.mxu0 %v4841
    %4931 = vmatprep.subr.bf16.mxu0 %v4845
    %4932 = vmatpush1.bf16.msra.mxu0 %v4844
    %4933 = vmatprep.subr.bf16.mxu0 %v4848
    %4934 = vmatpush1.bf16.msra.mxu0 %v4847
    %4935 = vmatprep.subr.bf16.mxu0 %v4851
    %4936 = vmatpush1.bf16.msra.mxu0 %v4850
    %4937 = vmatprep.subr.bf16.mxu0 %v4854
    %4938 = vmatpush1.bf16.msra.mxu0 %v4853
    %4939 = vmatprep.subr.bf16.mxu0 %v4857
    %4940 = vmatpush1.bf16.msra.mxu0 %v4856
    %4941 = vmatprep.subr.bf16.mxu0 %v4860
    %4942 = vmatpush1.bf16.msra.mxu0 %v4859
    %4943 = vmatprep.subr.bf16.mxu0 %v4863
    %4944 = vmatpush1.bf16.msra.mxu0 %v4862
    %4945 = vmatprep.mubr.bf16.mxu0 %v4585
    %4946 = vmatmul.mubr.bf16.gmra.mrb[0].mxu0 %v4584
    %v4947 = vpop.f32.mrb[0].mxu0
    %v4948 = vadd.f32 0.0, %v4947
    %v4949 = vpop.f32.mrb[0].mxu0
    %v4950 = vadd.f32 0.0, %v4949
    %v4951 = vpop.f32.mrb[0].mxu0
    %v4952 = vadd.f32 0.0, %v4951
    %v4953 = vpop.f32.mrb[0].mxu0
    %v4954 = vadd.f32 0.0, %v4953
    %4955 = vmatprep.mubr.bf16.mxu0 %v4587
    %4956 = vmatmul.mubr.bf16.gmra.mrb[0].mxu0 %v4586
    %v4957 = vpop.f32.mrb[0].mxu0
    %v4958 = vadd.f32 0.0, %v4957
    %v4959 = vpop.f32.mrb[0].mxu0
    %v4960 = vadd.f32 0.0, %v4959
    %v4961 = vpop.f32.mrb[0].mxu0
    %v4962 = vadd.f32 0.0, %v4961
    %v4963 = vpop.f32.mrb[0].mxu0
    %v4964 = vadd.f32 0.0, %v4963
    %4965 = vmatprep.mubr.bf16.mxu0 %v4589
    %4966 = vmatmul.mubr.bf16.gmra.mrb[0].mxu0 %v4588
    %v4967 = vpop.f32.mrb[0].mxu0
    %v4968 = vadd.f32 0.0, %v4967
    %v4969 = vpop.f32.mrb[0].mxu0
    %v4970 = vadd.f32 0.0, %v4969
    %v4971 = vpop.f32.mrb[0].mxu0
    %v4972 = vadd.f32 0.0, %v4971
    %v4973 = vpop.f32.mrb[0].mxu0
    %v4974 = vadd.f32 0.0, %v4973
    %4975 = vmatprep.mubr.bf16.mxu0 %v4591
    %4976 = vmatmul.mubr.bf16.gmra.mrb[0].mxu0 %v4590
    %v4977 = vpop.f32.mrb[0].mxu0
    %v4978 = vadd.f32 0.0, %v4977
    %v4979 = vpop.f32.mrb[0].mxu0
    %v4980 = vadd.f32 0.0, %v4979
    %v4981 = vpop.f32.mrb[0].mxu0
    %v4982 = vadd.f32 0.0, %v4981
    %v4983 = vpop.f32.mrb[0].mxu0
    %v4984 = vadd.f32 0.0, %v4983
    %4985 = vdwg.mxu0
    %4986 = vmatprep.subr.bf16.mxu0 0
    %4987 = vmatpush1.bf16.msra.mxu0 %v4819
    %4988 = vmatprep.subr.bf16.mxu0 0
    %4989 = vmatpush1.bf16.msra.mxu0 %v4822
    %4990 = vmatprep.subr.bf16.mxu0 0
    %4991 = vmatpush1.bf16.msra.mxu0 %v4825
    %4992 = vmatprep.subr.bf16.mxu0 0
    %4993 = vmatpush1.bf16.msra.mxu0 %v4828
    %4994 = vmatprep.subr.bf16.mxu0 0
    %4995 = vmatpush1.bf16.msra.mxu0 %v4831
    %4996 = vmatprep.subr.bf16.mxu0 0
    %4997 = vmatpush1.bf16.msra.mxu0 %v4834
    %4998 = vmatprep.subr.bf16.mxu0 0
    %4999 = vmatpush1.bf16.msra.mxu0 %v4837
    %5000 = vmatprep.subr.bf16.mxu0 0
    %5001 = vmatpush1.bf16.msra.mxu0 %v4840
    %5002 = vmatprep.subr.bf16.mxu0 0
    %5003 = vmatpush1.bf16.msra.mxu0 %v4843
    %5004 = vmatprep.subr.bf16.mxu0 0
    %5005 = vmatpush1.bf16.msra.mxu0 %v4846
    %5006 = vmatprep.subr.bf16.mxu0 0
    %5007 = vmatpush1.bf16.msra.mxu0 %v4849
    %5008 = vmatprep.subr.bf16.mxu0 0
    %5009 = vmatpush1.bf16.msra.mxu0 %v4852
    %5010 = vmatprep.subr.bf16.mxu0 0
    %5011 = vmatpush1.bf16.msra.mxu0 %v4855
    %5012 = vmatprep.subr.bf16.mxu0 0
    %5013 = vmatpush1.bf16.msra.mxu0 %v4858
    %5014 = vmatprep.subr.bf16.mxu0 0
    %5015 = vmatpush1.bf16.msra.mxu0 %v4861
    %5016 = vmatprep.subr.bf16.mxu0 0
    %5017 = vmatpush1.bf16.msra.mxu0 %v4864
    %5018 = vmatprep.mubr.bf16.mxu0 %v4585
    %5019 = vmatmul.mubr.bf16.gmra.mrb[0].mxu0 %v4584
    %v5020 = vpop.f32.mrb[0].mxu0
    %v5021 = vadd.f32 0.0, %v5020
    %v5022 = vpop.f32.mrb[0].mxu0
    %v5023 = vpop.f32.mrb[0].mxu0
    %v5024 = vadd.f32 0.0, %v5023
    %v5025 = vpop.f32.mrb[0].mxu0
    %5026 = vmatprep.mubr.bf16.mxu0 %v4587
    %5027 = vmatmul.mubr.bf16.gmra.mrb[0].mxu0 %v4586
    %v5028 = vpop.f32.mrb[0].mxu0
    %v5029 = vadd.f32 0.0, %v5028
    %v5030 = vpop.f32.mrb[0].mxu0
    %v5031 = vpop.f32.mrb[0].mxu0
    %v5032 = vadd.f32 0.0, %v5031
    %v5033 = vpop.f32.mrb[0].mxu0
    %5034 = vmatprep.mubr.bf16.mxu0 %v4589
    %5035 = vmatmul.mubr.bf16.gmra.mrb[0].mxu0 %v4588
    %v5036 = vpop.f32.mrb[0].mxu0
    %v5037 = vadd.f32 0.0, %v5036
    %v5038 = vpop.f32.mrb[0].mxu0
    %v5039 = vpop.f32.mrb[0].mxu0
    %v5040 = vadd.f32 0.0, %v5039
    %v5041 = vpop.f32.mrb[0].mxu0
    %5042 = vmatprep.mubr.bf16.mxu0 %v4591
    %5043 = vmatmul.mubr.bf16.gmra.mrb[0].mxu0 %v4590
    %v5044 = vpop.f32.mrb[0].mxu0
    %v5045 = vadd.f32 0.0, %v5044
    %v5046 = vpop.f32.mrb[0].mxu0
    %v5047 = vpop.f32.mrb[0].mxu0
    %v5048 = vadd.f32 0.0, %v5047
    %v5049 = vpop.f32.mrb[0].mxu0
    %5050 = vdwg.mxu0
    %v5051 = vadd.f32 %v4544, %v4948
    %v5052 = vadd.f32 %v4545, %v4950
    %v5053 = vadd.f32 %v4546, %v5021
    %v5054 = vadd.f32 %v4547, %v4952
    %v5055 = vadd.f32 %v4548, %v4954
    %v5056 = vadd.f32 %v4549, %v5024
    %v5057 = vadd.f32 %v4550, %v4958
    %v5058 = vadd.f32 %v4551, %v4960
    %v5059 = vadd.f32 %v4552, %v5029
    %v5060 = vadd.f32 %v4553, %v4962
    %v5061 = vadd.f32 %v4554, %v4964
    %v5062 = vadd.f32 %v4555, %v5032
    %v5063 = vadd.f32 %v4556, %v4968
    %v5064 = vadd.f32 %v4557, %v4970
    %v5065 = vadd.f32 %v4558, %v5037
    %v5066 = vadd.f32 %v4559, %v4972
    %v5067 = vadd.f32 %v4560, %v4974
    %v5068 = vadd.f32 %v4561, %v5040
    %v5069 = vadd.f32 %v4562, %v4978
    %v5070 = vadd.f32 %v4563, %v4980
    %v5071 = vadd.f32 %v4564, %v5045
    %v5072 = vadd.f32 %v4565, %v4982
    %v5073 = vadd.f32 %v4566, %v4984
    %v5074 = vadd.f32 %v4567, %v5048
    %v5075 = vld [vmem:[%s5] sm:$0x7]
    %v5077 = vlaneseq
    %v5078 = vshrl.u32 %v5077, 7
    %v5079 = vsub.s32 0, %v5078
    %v5080 = vrot.slane %v5075, %v5079
    %v5081 = vlaneseq
    %v5082 = vshrl.u32 %v5081, 7
    %v5083 = vsub.s32 1, %v5082
    %v5084 = vrot.slane %v5075, %v5083
    %v5085 = vlaneseq
    %v5086 = vshrl.u32 %v5085, 7
    %v5087 = vsub.s32 2, %v5086
    %v5088 = vrot.slane %v5075, %v5087
    %v5092 = vadd.f32 %v5051, %v5080
    %v5093 = vadd.f32 %v5052, %v5084
    %v5094 = vadd.f32 %v5053, %v5088
    %v5095 = vadd.f32 %v5054, %v5080
    %v5096 = vadd.f32 %v5055, %v5084
    %v5097 = vadd.f32 %v5056, %v5088
    %v5098 = vadd.f32 %v5057, %v5080
    %v5099 = vadd.f32 %v5058, %v5084
    %v5100 = vadd.f32 %v5059, %v5088
    %v5101 = vadd.f32 %v5060, %v5080
    %v5102 = vadd.f32 %v5061, %v5084
    %v5103 = vadd.f32 %v5062, %v5088
    %v5104 = vadd.f32 %v5063, %v5080
    %v5105 = vadd.f32 %v5064, %v5084
    %v5106 = vadd.f32 %v5065, %v5088
    %v5107 = vadd.f32 %v5066, %v5080
    %v5108 = vadd.f32 %v5067, %v5084
    %v5109 = vadd.f32 %v5068, %v5088
    %v5110 = vadd.f32 %v5069, %v5080
    %v5111 = vadd.f32 %v5070, %v5084
    %v5112 = vadd.f32 %v5071, %v5088
    %v5113 = vadd.f32 %v5072, %v5080
    %v5114 = vadd.f32 %v5073, %v5084
    %v5115 = vadd.f32 %v5074, %v5088
    %v5116 = vmax.f32 %v5092, 0.0
    %v5117 = vmax.f32 %v5093, 0.0
    %v5118 = vmax.f32 %v5094, 0.0
    %v5119 = vmax.f32 %v5095, 0.0
    %v5120 = vmax.f32 %v5096, 0.0
    %v5121 = vmax.f32 %v5097, 0.0
    %v5122 = vmax.f32 %v5098, 0.0
    %v5123 = vmax.f32 %v5099, 0.0
    %v5124 = vmax.f32 %v5100, 0.0
    %v5125 = vmax.f32 %v5101, 0.0
    %v5126 = vmax.f32 %v5102, 0.0
    %v5127 = vmax.f32 %v5103, 0.0
    %v5128 = vmax.f32 %v5104, 0.0
    %v5129 = vmax.f32 %v5105, 0.0
    %v5130 = vmax.f32 %v5106, 0.0
    %v5131 = vmax.f32 %v5107, 0.0
    %v5132 = vmax.f32 %v5108, 0.0
    %v5133 = vmax.f32 %v5109, 0.0
    %v5134 = vmax.f32 %v5110, 0.0
    %v5135 = vmax.f32 %v5111, 0.0
    %v5136 = vmax.f32 %v5112, 0.0
    %v5137 = vmax.f32 %v5113, 0.0
    %v5138 = vmax.f32 %v5114, 0.0
    %v5139 = vmax.f32 %v5115, 0.0
    %v5140 = vadd.f32 %v5116, %v5117
    %v5141 = vadd.f32 %v5119, %v5120
    %v5142 = vadd.f32 %v5122, %v5123
    %v5143 = vadd.f32 %v5125, %v5126
    %v5144 = vadd.f32 %v5128, %v5129
    %v5145 = vadd.f32 %v5131, %v5132
    %v5146 = vadd.f32 %v5134, %v5135
    %v5147 = vadd.f32 %v5137, %v5138
    %v5148 = vadd.f32 %v5140, %v5118
    %v5149 = vadd.f32 %v5141, %v5121
    %v5150 = vadd.f32 %v5142, %v5124
    %v5151 = vadd.f32 %v5143, %v5127
    %v5152 = vadd.f32 %v5144, %v5130
    %v5153 = vadd.f32 %v5145, %v5133
    %v5154 = vadd.f32 %v5146, %v5136
    %v5155 = vadd.f32 %v5147, %v5139
    %v5156 = vpack.c.bf16 %v5148, %v5148
    %v5157 = vpack.c.bf16 %v5149, %v5149
    %v5158 = vpack.c.bf16 %v5150, %v5150
    %v5159 = vpack.c.bf16 %v5151, %v5151
    %v5160 = vpack.c.bf16 %v5152, %v5152
    %v5161 = vpack.c.bf16 %v5153, %v5153
    %v5162 = vpack.c.bf16 %v5154, %v5154
    %v5163 = vpack.c.bf16 %v5155, %v5155
    %v5164 = vld [vmem:[#allocation7] sm:$0xff]
    %v5165 = vld [vmem:[#allocation7 + $0x8] sm:$0xff]
    %v5166 = vld [vmem:[#allocation7 + $0x10] sm:$0xff]
    %v5167 = vld [vmem:[#allocation7 + $0x18] sm:$0xff]
    %v5168 = vld [vmem:[#allocation7 + $0x20] sm:$0xff]
    %v5169 = vld [vmem:[#allocation7 + $0x28] sm:$0xff]
    %v5170 = vld [vmem:[#allocation7 + $0x30] sm:$0xff]
    %v5171 = vld [vmem:[#allocation7 + $0x38] sm:$0xff]
    %v5172 = vld [vmem:[#allocation7 + $0x40] sm:$0xff]
    %v5173 = vld [vmem:[#allocation7 + $0x48] sm:$0xff]
    %v5174 = vld [vmem:[#allocation7 + $0x50] sm:$0xff]
    %v5175 = vld [vmem:[#allocation7 + $0x58] sm:$0xff]
    %v5176 = vld [vmem:[#allocation7 + $0x60] sm:$0xff]
    %v5177 = vld [vmem:[#allocation7 + $0x68] sm:$0xff]
    %v5178 = vld [vmem:[#allocation7 + $0x70] sm:$0xff]
    %v5179 = vld [vmem:[#allocation7 + $0x78] sm:$0xff]
    %v5180 = vld [vmem:[#allocation7 + $0x80] sm:$0xff]
    %v5181 = vld [vmem:[#allocation7 + $0x88] sm:$0xff]
    %v5182 = vld [vmem:[#allocation7 + $0x90] sm:$0xff]
    %v5183 = vld [vmem:[#allocation7 + $0x98] sm:$0xff]
    %v5184 = vld [vmem:[#allocation7 + $0xa0] sm:$0xff]
    %v5185 = vld [vmem:[#allocation7 + $0xa8] sm:$0xff]
    %v5186 = vld [vmem:[#allocation7 + $0xb0] sm:$0xff]
    %v5187 = vld [vmem:[#allocation7 + $0xb8] sm:$0xff]
    %v5188 = vld [vmem:[#allocation7 + $0xc0] sm:$0xff]
    %v5189 = vld [vmem:[#allocation7 + $0xc8] sm:$0xff]
    %v5190 = vld [vmem:[#allocation7 + $0xd0] sm:$0xff]
    %v5191 = vld [vmem:[#allocation7 + $0xd8] sm:$0xff]
    %v5192 = vld [vmem:[#allocation7 + $0xe0] sm:$0xff]
    %v5193 = vld [vmem:[#allocation7 + $0xe8] sm:$0xff]
    %v5194 = vld [vmem:[#allocation7 + $0xf0] sm:$0xff]
    %v5195 = vld [vmem:[#allocation7 + $0xf8] sm:$0xff]
    %v5196 = vld [vmem:[#allocation7 + $0x100] sm:$0xff]
    %v5197 = vld [vmem:[#allocation7 + $0x108] sm:$0xff]
    %v5198 = vld [vmem:[#allocation7 + $0x110] sm:$0xff]
    %v5199 = vld [vmem:[#allocation7 + $0x118] sm:$0xff]
    %v5200 = vld [vmem:[#allocation7 + $0x120] sm:$0xff]
    %v5201 = vld [vmem:[#allocation7 + $0x128] sm:$0xff]
    %v5202 = vld [vmem:[#allocation7 + $0x130] sm:$0xff]
    %v5203 = vld [vmem:[#allocation7 + $0x138] sm:$0xff]
    %v5204 = vld [vmem:[#allocation7 + $0x140] sm:$0xff]
    %v5205 = vld [vmem:[#allocation7 + $0x148] sm:$0xff]
    %v5206 = vld [vmem:[#allocation7 + $0x150] sm:$0xff]
    %v5207 = vld [vmem:[#allocation7 + $0x158] sm:$0xff]
    %v5208 = vld [vmem:[#allocation7 + $0x160] sm:$0xff]
    %v5209 = vld [vmem:[#allocation7 + $0x168] sm:$0xff]
    %v5210 = vld [vmem:[#allocation7 + $0x170] sm:$0xff]
    %v5211 = vld [vmem:[#allocation7 + $0x178] sm:$0xff]
    %v5212 = vld [vmem:[#allocation7 + $0x180] sm:$0xff]
    %v5213 = vld [vmem:[#allocation7 + $0x188] sm:$0xff]
    %v5214 = vld [vmem:[#allocation7 + $0x190] sm:$0xff]
    %v5215 = vld [vmem:[#allocation7 + $0x198] sm:$0xff]
    %v5216 = vld [vmem:[#allocation7 + $0x1a0] sm:$0xff]
    %v5217 = vld [vmem:[#allocation7 + $0x1a8] sm:$0xff]
    %v5218 = vld [vmem:[#allocation7 + $0x1b0] sm:$0xff]
    %v5219 = vld [vmem:[#allocation7 + $0x1b8] sm:$0xff]
    %v5220 = vld [vmem:[#allocation7 + $0x1c0] sm:$0xff]
    %v5221 = vld [vmem:[#allocation7 + $0x1c8] sm:$0xff]
    %v5222 = vld [vmem:[#allocation7 + $0x1d0] sm:$0xff]
    %v5223 = vld [vmem:[#allocation7 + $0x1d8] sm:$0xff]
    %v5224 = vld [vmem:[#allocation7 + $0x1e0] sm:$0xff]
    %v5225 = vld [vmem:[#allocation7 + $0x1e8] sm:$0xff]
    %v5226 = vld [vmem:[#allocation7 + $0x1f0] sm:$0xff]
    %v5227 = vld [vmem:[#allocation7 + $0x1f8] sm:$0xff]
    %v5228 = vld [vmem:[#allocation7 + $0x200] sm:$0xff]
    %v5229 = vld [vmem:[#allocation7 + $0x208] sm:$0xff]
    %v5230 = vld [vmem:[#allocation7 + $0x210] sm:$0xff]
    %v5231 = vld [vmem:[#allocation7 + $0x218] sm:$0xff]
    %v5232 = vld [vmem:[#allocation7 + $0x220] sm:$0xff]
    %v5233 = vld [vmem:[#allocation7 + $0x228] sm:$0xff]
    %v5234 = vld [vmem:[#allocation7 + $0x230] sm:$0xff]
    %v5235 = vld [vmem:[#allocation7 + $0x238] sm:$0xff]
    %v5236 = vld [vmem:[#allocation7 + $0x240] sm:$0xff]
    %v5237 = vld [vmem:[#allocation7 + $0x248] sm:$0xff]
    %v5238 = vld [vmem:[#allocation7 + $0x250] sm:$0xff]
    %v5239 = vld [vmem:[#allocation7 + $0x258] sm:$0xff]
    %v5240 = vld [vmem:[#allocation7 + $0x260] sm:$0xff]
    %v5241 = vld [vmem:[#allocation7 + $0x268] sm:$0xff]
    %v5242 = vld [vmem:[#allocation7 + $0x270] sm:$0xff]
    %v5243 = vld [vmem:[#allocation7 + $0x278] sm:$0xff]
    %v5244 = vld [vmem:[#allocation7 + $0x280] sm:$0xff]
    %v5245 = vld [vmem:[#allocation7 + $0x288] sm:$0xff]
    %v5246 = vld [vmem:[#allocation7 + $0x290] sm:$0xff]
    %v5247 = vld [vmem:[#allocation7 + $0x298] sm:$0xff]
    %v5248 = vld [vmem:[#allocation7 + $0x2a0] sm:$0xff]
    %v5249 = vld [vmem:[#allocation7 + $0x2a8] sm:$0xff]
    %v5250 = vld [vmem:[#allocation7 + $0x2b0] sm:$0xff]
    %v5251 = vld [vmem:[#allocation7 + $0x2b8] sm:$0xff]
    %v5252 = vld [vmem:[#allocation7 + $0x2c0] sm:$0xff]
    %v5253 = vld [vmem:[#allocation7 + $0x2c8] sm:$0xff]
    %v5254 = vld [vmem:[#allocation7 + $0x2d0] sm:$0xff]
    %v5255 = vld [vmem:[#allocation7 + $0x2d8] sm:$0xff]
    %v5256 = vld [vmem:[#allocation7 + $0x2e0] sm:$0xff]
    %v5257 = vld [vmem:[#allocation7 + $0x2e8] sm:$0xff]
    %v5258 = vld [vmem:[#allocation7 + $0x2f0] sm:$0xff]
    %v5259 = vld [vmem:[#allocation7 + $0x2f8] sm:$0xff]
    %v5260 = vld [vmem:[#allocation7 + $0x300] sm:$0xff]
    %v5261 = vld [vmem:[#allocation7 + $0x308] sm:$0xff]
    %v5262 = vld [vmem:[#allocation7 + $0x310] sm:$0xff]
    %v5263 = vld [vmem:[#allocation7 + $0x318] sm:$0xff]
    %v5264 = vld [vmem:[#allocation7 + $0x320] sm:$0xff]
    %v5265 = vld [vmem:[#allocation7 + $0x328] sm:$0xff]
    %v5266 = vld [vmem:[#allocation7 + $0x330] sm:$0xff]
    %v5267 = vld [vmem:[#allocation7 + $0x338] sm:$0xff]
    %v5268 = vld [vmem:[#allocation7 + $0x340] sm:$0xff]
    %v5269 = vld [vmem:[#allocation7 + $0x348] sm:$0xff]
    %v5270 = vld [vmem:[#allocation7 + $0x350] sm:$0xff]
    %v5271 = vld [vmem:[#allocation7 + $0x358] sm:$0xff]
    %v5272 = vld [vmem:[#allocation7 + $0x360] sm:$0xff]
    %v5273 = vld [vmem:[#allocation7 + $0x368] sm:$0xff]
    %v5274 = vld [vmem:[#allocation7 + $0x370] sm:$0xff]
    %v5275 = vld [vmem:[#allocation7 + $0x378] sm:$0xff]
    %v5276 = vld [vmem:[#allocation7 + $0x380] sm:$0xff]
    %v5277 = vld [vmem:[#allocation7 + $0x388] sm:$0xff]
    %v5278 = vld [vmem:[#allocation7 + $0x390] sm:$0xff]
    %v5279 = vld [vmem:[#allocation7 + $0x398] sm:$0xff]
    %v5280 = vld [vmem:[#allocation7 + $0x3a0] sm:$0xff]
    %v5281 = vld [vmem:[#allocation7 + $0x3a8] sm:$0xff]
    %v5282 = vld [vmem:[#allocation7 + $0x3b0] sm:$0xff]
    %v5283 = vld [vmem:[#allocation7 + $0x3b8] sm:$0xff]
    %v5284 = vld [vmem:[#allocation7 + $0x3c0] sm:$0xff]
    %v5285 = vld [vmem:[#allocation7 + $0x3c8] sm:$0xff]
    %v5286 = vld [vmem:[#allocation7 + $0x3d0] sm:$0xff]
    %v5287 = vld [vmem:[#allocation7 + $0x3d8] sm:$0xff]
    %v5288 = vld [vmem:[#allocation7 + $0x3e0] sm:$0xff]
    %v5289 = vld [vmem:[#allocation7 + $0x3e8] sm:$0xff]
    %v5290 = vld [vmem:[#allocation7 + $0x3f0] sm:$0xff]
    %v5291 = vld [vmem:[#allocation7 + $0x3f8] sm:$0xff]
    %v5292 = vld [vmem:[#allocation7 + $0x400] sm:$0xff]
    %v5293 = vld [vmem:[#allocation7 + $0x408] sm:$0xff]
    %v5294 = vld [vmem:[#allocation7 + $0x410] sm:$0xff]
    %v5295 = vld [vmem:[#allocation7 + $0x418] sm:$0xff]
    %v5296 = vld [vmem:[#allocation7 + $0x420] sm:$0xff]
    %v5297 = vld [vmem:[#allocation7 + $0x428] sm:$0xff]
    %v5298 = vld [vmem:[#allocation7 + $0x430] sm:$0xff]
    %v5299 = vld [vmem:[#allocation7 + $0x438] sm:$0xff]
    %v5300 = vld [vmem:[#allocation7 + $0x440] sm:$0xff]
    %v5301 = vld [vmem:[#allocation7 + $0x448] sm:$0xff]
    %v5302 = vld [vmem:[#allocation7 + $0x450] sm:$0xff]
    %v5303 = vld [vmem:[#allocation7 + $0x458] sm:$0xff]
    %v5304 = vld [vmem:[#allocation7 + $0x460] sm:$0xff]
    %v5305 = vld [vmem:[#allocation7 + $0x468] sm:$0xff]
    %v5306 = vld [vmem:[#allocation7 + $0x470] sm:$0xff]
    %v5307 = vld [vmem:[#allocation7 + $0x478] sm:$0xff]
    %v5308 = vld [vmem:[#allocation7 + $0x480] sm:$0xff]
    %v5309 = vld [vmem:[#allocation7 + $0x488] sm:$0xff]
    %v5310 = vld [vmem:[#allocation7 + $0x490] sm:$0xff]
    %v5311 = vld [vmem:[#allocation7 + $0x498] sm:$0xff]
    %v5312 = vld [vmem:[#allocation7 + $0x4a0] sm:$0xff]
    %v5313 = vld [vmem:[#allocation7 + $0x4a8] sm:$0xff]
    %v5314 = vld [vmem:[#allocation7 + $0x4b0] sm:$0xff]
    %v5315 = vld [vmem:[#allocation7 + $0x4b8] sm:$0xff]
    %v5316 = vld [vmem:[#allocation7 + $0x4c0] sm:$0xff]
    %v5317 = vld [vmem:[#allocation7 + $0x4c8] sm:$0xff]
    %v5318 = vld [vmem:[#allocation7 + $0x4d0] sm:$0xff]
    %v5319 = vld [vmem:[#allocation7 + $0x4d8] sm:$0xff]
    %v5320 = vld [vmem:[#allocation7 + $0x4e0] sm:$0xff]
    %v5321 = vld [vmem:[#allocation7 + $0x4e8] sm:$0xff]
    %v5322 = vld [vmem:[#allocation7 + $0x4f0] sm:$0xff]
    %v5323 = vld [vmem:[#allocation7 + $0x4f8] sm:$0xff]
    %v5324 = vld [vmem:[#allocation7 + $0x500] sm:$0xff]
    %v5325 = vld [vmem:[#allocation7 + $0x508] sm:$0xff]
    %v5326 = vld [vmem:[#allocation7 + $0x510] sm:$0xff]
    %v5327 = vld [vmem:[#allocation7 + $0x518] sm:$0xff]
    %v5328 = vld [vmem:[#allocation7 + $0x520] sm:$0xff]
    %v5329 = vld [vmem:[#allocation7 + $0x528] sm:$0xff]
    %v5330 = vld [vmem:[#allocation7 + $0x530] sm:$0xff]
    %v5331 = vld [vmem:[#allocation7 + $0x538] sm:$0xff]
    %v5332 = vld [vmem:[#allocation7 + $0x540] sm:$0xff]
    %v5333 = vld [vmem:[#allocation7 + $0x548] sm:$0xff]
    %v5334 = vld [vmem:[#allocation7 + $0x550] sm:$0xff]
    %v5335 = vld [vmem:[#allocation7 + $0x558] sm:$0xff]
    %v5336 = vld [vmem:[#allocation7 + $0x560] sm:$0xff]
    %v5337 = vld [vmem:[#allocation7 + $0x568] sm:$0xff]
    %v5338 = vld [vmem:[#allocation7 + $0x570] sm:$0xff]
    %v5339 = vld [vmem:[#allocation7 + $0x578] sm:$0xff]
    %v5340 = vld [vmem:[#allocation7 + $0x580] sm:$0xff]
    %v5341 = vld [vmem:[#allocation7 + $0x588] sm:$0xff]
    %v5342 = vld [vmem:[#allocation7 + $0x590] sm:$0xff]
    %v5343 = vld [vmem:[#allocation7 + $0x598] sm:$0xff]
    %v5344 = vld [vmem:[#allocation7 + $0x5a0] sm:$0xff]
    %v5345 = vld [vmem:[#allocation7 + $0x5a8] sm:$0xff]
    %v5346 = vld [vmem:[#allocation7 + $0x5b0] sm:$0xff]
    %v5347 = vld [vmem:[#allocation7 + $0x5b8] sm:$0xff]
    %v5348 = vld [vmem:[#allocation7 + $0x5c0] sm:$0xff]
    %v5349 = vld [vmem:[#allocation7 + $0x5c8] sm:$0xff]
    %v5350 = vld [vmem:[#allocation7 + $0x5d0] sm:$0xff]
    %v5351 = vld [vmem:[#allocation7 + $0x5d8] sm:$0xff]
    %v5352 = vld [vmem:[#allocation7 + $0x5e0] sm:$0xff]
    %v5353 = vld [vmem:[#allocation7 + $0x5e8] sm:$0xff]
    %v5354 = vld [vmem:[#allocation7 + $0x5f0] sm:$0xff]
    %v5355 = vld [vmem:[#allocation7 + $0x5f8] sm:$0xff]
    %v5356 = vld [vmem:[#allocation7 + $0x600] sm:$0xff]
    %v5357 = vld [vmem:[#allocation7 + $0x608] sm:$0xff]
    %v5358 = vld [vmem:[#allocation7 + $0x610] sm:$0xff]
    %v5359 = vld [vmem:[#allocation7 + $0x618] sm:$0xff]
    %v5360 = vld [vmem:[#allocation7 + $0x620] sm:$0xff]
    %v5361 = vld [vmem:[#allocation7 + $0x628] sm:$0xff]
    %v5362 = vld [vmem:[#allocation7 + $0x630] sm:$0xff]
    %v5363 = vld [vmem:[#allocation7 + $0x638] sm:$0xff]
    %v5364 = vld [vmem:[#allocation7 + $0x640] sm:$0xff]
    %v5365 = vld [vmem:[#allocation7 + $0x648] sm:$0xff]
    %v5366 = vld [vmem:[#allocation7 + $0x650] sm:$0xff]
    %v5367 = vld [vmem:[#allocation7 + $0x658] sm:$0xff]
    %v5368 = vld [vmem:[#allocation7 + $0x660] sm:$0xff]
    %v5369 = vld [vmem:[#allocation7 + $0x668] sm:$0xff]
    %v5370 = vld [vmem:[#allocation7 + $0x670] sm:$0xff]
    %v5371 = vld [vmem:[#allocation7 + $0x678] sm:$0xff]
    %v5372 = vld [vmem:[#allocation7 + $0x680] sm:$0xff]
    %v5373 = vld [vmem:[#allocation7 + $0x688] sm:$0xff]
    %v5374 = vld [vmem:[#allocation7 + $0x690] sm:$0xff]
    %v5375 = vld [vmem:[#allocation7 + $0x698] sm:$0xff]
    %v5376 = vld [vmem:[#allocation7 + $0x6a0] sm:$0xff]
    %v5377 = vld [vmem:[#allocation7 + $0x6a8] sm:$0xff]
    %v5378 = vld [vmem:[#allocation7 + $0x6b0] sm:$0xff]
    %v5379 = vld [vmem:[#allocation7 + $0x6b8] sm:$0xff]
    %v5380 = vld [vmem:[#allocation7 + $0x6c0] sm:$0xff]
    %v5381 = vld [vmem:[#allocation7 + $0x6c8] sm:$0xff]
    %v5382 = vld [vmem:[#allocation7 + $0x6d0] sm:$0xff]
    %v5383 = vld [vmem:[#allocation7 + $0x6d8] sm:$0xff]
    %v5384 = vld [vmem:[#allocation7 + $0x6e0] sm:$0xff]
    %v5385 = vld [vmem:[#allocation7 + $0x6e8] sm:$0xff]
    %v5386 = vld [vmem:[#allocation7 + $0x6f0] sm:$0xff]
    %v5387 = vld [vmem:[#allocation7 + $0x6f8] sm:$0xff]
    %v5388 = vld [vmem:[#allocation7 + $0x700] sm:$0xff]
    %v5389 = vld [vmem:[#allocation7 + $0x708] sm:$0xff]
    %v5390 = vld [vmem:[#allocation7 + $0x710] sm:$0xff]
    %v5391 = vld [vmem:[#allocation7 + $0x718] sm:$0xff]
    %v5392 = vld [vmem:[#allocation7 + $0x720] sm:$0xff]
    %v5393 = vld [vmem:[#allocation7 + $0x728] sm:$0xff]
    %v5394 = vld [vmem:[#allocation7 + $0x730] sm:$0xff]
    %v5395 = vld [vmem:[#allocation7 + $0x738] sm:$0xff]
    %v5396 = vld [vmem:[#allocation7 + $0x740] sm:$0xff]
    %v5397 = vld [vmem:[#allocation7 + $0x748] sm:$0xff]
    %v5398 = vld [vmem:[#allocation7 + $0x750] sm:$0xff]
    %v5399 = vld [vmem:[#allocation7 + $0x758] sm:$0xff]
    %v5400 = vld [vmem:[#allocation7 + $0x760] sm:$0xff]
    %v5401 = vld [vmem:[#allocation7 + $0x768] sm:$0xff]
    %v5402 = vld [vmem:[#allocation7 + $0x770] sm:$0xff]
    %v5403 = vld [vmem:[#allocation7 + $0x778] sm:$0xff]
    %v5404 = vld [vmem:[#allocation7 + $0x780] sm:$0xff]
    %v5405 = vld [vmem:[#allocation7 + $0x788] sm:$0xff]
    %v5406 = vld [vmem:[#allocation7 + $0x790] sm:$0xff]
    %v5407 = vld [vmem:[#allocation7 + $0x798] sm:$0xff]
    %v5408 = vld [vmem:[#allocation7 + $0x7a0] sm:$0xff]
    %v5409 = vld [vmem:[#allocation7 + $0x7a8] sm:$0xff]
    %v5410 = vld [vmem:[#allocation7 + $0x7b0] sm:$0xff]
    %v5411 = vld [vmem:[#allocation7 + $0x7b8] sm:$0xff]
    %v5412 = vld [vmem:[#allocation7 + $0x7c0] sm:$0xff]
    %v5413 = vld [vmem:[#allocation7 + $0x7c8] sm:$0xff]
    %v5414 = vld [vmem:[#allocation7 + $0x7d0] sm:$0xff]
    %v5415 = vld [vmem:[#allocation7 + $0x7d8] sm:$0xff]
    %v5416 = vld [vmem:[#allocation7 + $0x7e0] sm:$0xff]
    %v5417 = vld [vmem:[#allocation7 + $0x7e8] sm:$0xff]
    %v5418 = vld [vmem:[#allocation7 + $0x7f0] sm:$0xff]
    %v5419 = vld [vmem:[#allocation7 + $0x7f8] sm:$0xff]
    %v5420 = vld [vmem:[%s7] sm:$0xf]
    %v5422 = vlaneseq
    %v5423 = vshrl.u32 %v5422, 7
    %v5424 = vsub.s32 0, %v5423
    %v5425 = vrot.slane %v5420, %v5424
    %v5426 = vlaneseq
    %v5427 = vshrl.u32 %v5426, 7
    %v5428 = vsub.s32 1, %v5427
    %v5429 = vrot.slane %v5420, %v5428
    %v5430 = vlaneseq
    %v5431 = vshrl.u32 %v5430, 7
    %v5432 = vsub.s32 2, %v5431
    %v5433 = vrot.slane %v5420, %v5432
    %v5434 = vlaneseq
    %v5435 = vshrl.u32 %v5434, 7
    %v5436 = vsub.s32 3, %v5435
    %v5437 = vrot.slane %v5420, %v5436
    %v5698 = vunpack.c.l.b16 %v5164
    %v5699 = vunpack.c.h.b16 %v5164
    %v5700 = vunpack.c.l.b16 %v5165
    %v5701 = vunpack.c.h.b16 %v5165
    %v5702 = vunpack.c.l.b16 %v5166
    %v5703 = vunpack.c.h.b16 %v5166
    %v5704 = vunpack.c.l.b16 %v5167
    %v5705 = vunpack.c.h.b16 %v5167
    %v5706 = vunpack.c.l.b16 %v5168
    %v5707 = vunpack.c.h.b16 %v5168
    %v5708 = vunpack.c.l.b16 %v5169
    %v5709 = vunpack.c.h.b16 %v5169
    %v5710 = vunpack.c.l.b16 %v5170
    %v5711 = vunpack.c.h.b16 %v5170
    %v5712 = vunpack.c.l.b16 %v5171
    %v5713 = vunpack.c.h.b16 %v5171
    %v5714 = vunpack.c.l.b16 %v5172
    %v5715 = vunpack.c.h.b16 %v5172
    %v5716 = vunpack.c.l.b16 %v5173
    %v5717 = vunpack.c.h.b16 %v5173
    %v5718 = vunpack.c.l.b16 %v5174
    %v5719 = vunpack.c.h.b16 %v5174
    %v5720 = vunpack.c.l.b16 %v5175
    %v5721 = vunpack.c.h.b16 %v5175
    %v5722 = vunpack.c.l.b16 %v5176
    %v5723 = vunpack.c.h.b16 %v5176
    %v5724 = vunpack.c.l.b16 %v5177
    %v5725 = vunpack.c.h.b16 %v5177
    %v5726 = vunpack.c.l.b16 %v5178
    %v5727 = vunpack.c.h.b16 %v5178
    %v5728 = vunpack.c.l.b16 %v5179
    %v5729 = vunpack.c.h.b16 %v5179
    %v5730 = vunpack.c.l.b16 %v5180
    %v5731 = vunpack.c.h.b16 %v5180
    %v5732 = vunpack.c.l.b16 %v5181
    %v5733 = vunpack.c.h.b16 %v5181
    %v5734 = vunpack.c.l.b16 %v5182
    %v5735 = vunpack.c.h.b16 %v5182
    %v5736 = vunpack.c.l.b16 %v5183
    %v5737 = vunpack.c.h.b16 %v5183
    %v5738 = vunpack.c.l.b16 %v5184
    %v5739 = vunpack.c.h.b16 %v5184
    %v5740 = vunpack.c.l.b16 %v5185
    %v5741 = vunpack.c.h.b16 %v5185
    %v5742 = vunpack.c.l.b16 %v5186
    %v5743 = vunpack.c.h.b16 %v5186
    %v5744 = vunpack.c.l.b16 %v5187
    %v5745 = vunpack.c.h.b16 %v5187
    %v5746 = vunpack.c.l.b16 %v5188
    %v5747 = vunpack.c.h.b16 %v5188
    %v5748 = vunpack.c.l.b16 %v5189
    %v5749 = vunpack.c.h.b16 %v5189
    %v5750 = vunpack.c.l.b16 %v5190
    %v5751 = vunpack.c.h.b16 %v5190
    %v5752 = vunpack.c.l.b16 %v5191
    %v5753 = vunpack.c.h.b16 %v5191
    %v5754 = vunpack.c.l.b16 %v5192
    %v5755 = vunpack.c.h.b16 %v5192
    %v5756 = vunpack.c.l.b16 %v5193
    %v5757 = vunpack.c.h.b16 %v5193
    %v5758 = vunpack.c.l.b16 %v5194
    %v5759 = vunpack.c.h.b16 %v5194
    %v5760 = vunpack.c.l.b16 %v5195
    %v5761 = vunpack.c.h.b16 %v5195
    %v5762 = vunpack.c.l.b16 %v5196
    %v5763 = vunpack.c.h.b16 %v5196
    %v5764 = vunpack.c.l.b16 %v5197
    %v5765 = vunpack.c.h.b16 %v5197
    %v5766 = vunpack.c.l.b16 %v5198
    %v5767 = vunpack.c.h.b16 %v5198
    %v5768 = vunpack.c.l.b16 %v5199
    %v5769 = vunpack.c.h.b16 %v5199
    %v5770 = vunpack.c.l.b16 %v5200
    %v5771 = vunpack.c.h.b16 %v5200
    %v5772 = vunpack.c.l.b16 %v5201
    %v5773 = vunpack.c.h.b16 %v5201
    %v5774 = vunpack.c.l.b16 %v5202
    %v5775 = vunpack.c.h.b16 %v5202
    %v5776 = vunpack.c.l.b16 %v5203
    %v5777 = vunpack.c.h.b16 %v5203
    %v5778 = vunpack.c.l.b16 %v5204
    %v5779 = vunpack.c.h.b16 %v5204
    %v5780 = vunpack.c.l.b16 %v5205
    %v5781 = vunpack.c.h.b16 %v5205
    %v5782 = vunpack.c.l.b16 %v5206
    %v5783 = vunpack.c.h.b16 %v5206
    %v5784 = vunpack.c.l.b16 %v5207
    %v5785 = vunpack.c.h.b16 %v5207
    %v5786 = vunpack.c.l.b16 %v5208
    %v5787 = vunpack.c.h.b16 %v5208
    %v5788 = vunpack.c.l.b16 %v5209
    %v5789 = vunpack.c.h.b16 %v5209
    %v5790 = vunpack.c.l.b16 %v5210
    %v5791 = vunpack.c.h.b16 %v5210
    %v5792 = vunpack.c.l.b16 %v5211
    %v5793 = vunpack.c.h.b16 %v5211
    %v5794 = vunpack.c.l.b16 %v5212
    %v5795 = vunpack.c.h.b16 %v5212
    %v5796 = vunpack.c.l.b16 %v5213
    %v5797 = vunpack.c.h.b16 %v5213
    %v5798 = vunpack.c.l.b16 %v5214
    %v5799 = vunpack.c.h.b16 %v5214
    %v5800 = vunpack.c.l.b16 %v5215
    %v5801 = vunpack.c.h.b16 %v5215
    %v5802 = vunpack.c.l.b16 %v5216
    %v5803 = vunpack.c.h.b16 %v5216
    %v5804 = vunpack.c.l.b16 %v5217
    %v5805 = vunpack.c.h.b16 %v5217
    %v5806 = vunpack.c.l.b16 %v5218
    %v5807 = vunpack.c.h.b16 %v5218
    %v5808 = vunpack.c.l.b16 %v5219
    %v5809 = vunpack.c.h.b16 %v5219
    %v5810 = vunpack.c.l.b16 %v5220
    %v5811 = vunpack.c.h.b16 %v5220
    %v5812 = vunpack.c.l.b16 %v5221
    %v5813 = vunpack.c.h.b16 %v5221
    %v5814 = vunpack.c.l.b16 %v5222
    %v5815 = vunpack.c.h.b16 %v5222
    %v5816 = vunpack.c.l.b16 %v5223
    %v5817 = vunpack.c.h.b16 %v5223
    %v5818 = vunpack.c.l.b16 %v5224
    %v5819 = vunpack.c.h.b16 %v5224
    %v5820 = vunpack.c.l.b16 %v5225
    %v5821 = vunpack.c.h.b16 %v5225
    %v5822 = vunpack.c.l.b16 %v5226
    %v5823 = vunpack.c.h.b16 %v5226
    %v5824 = vunpack.c.l.b16 %v5227
    %v5825 = vunpack.c.h.b16 %v5227
    %v5826 = vunpack.c.l.b16 %v5228
    %v5827 = vunpack.c.h.b16 %v5228
    %v5828 = vunpack.c.l.b16 %v5229
    %v5829 = vunpack.c.h.b16 %v5229
    %v5830 = vunpack.c.l.b16 %v5230
    %v5831 = vunpack.c.h.b16 %v5230
    %v5832 = vunpack.c.l.b16 %v5231
    %v5833 = vunpack.c.h.b16 %v5231
    %v5834 = vunpack.c.l.b16 %v5232
    %v5835 = vunpack.c.h.b16 %v5232
    %v5836 = vunpack.c.l.b16 %v5233
    %v5837 = vunpack.c.h.b16 %v5233
    %v5838 = vunpack.c.l.b16 %v5234
    %v5839 = vunpack.c.h.b16 %v5234
    %v5840 = vunpack.c.l.b16 %v5235
    %v5841 = vunpack.c.h.b16 %v5235
    %v5842 = vunpack.c.l.b16 %v5236
    %v5843 = vunpack.c.h.b16 %v5236
    %v5844 = vunpack.c.l.b16 %v5237
    %v5845 = vunpack.c.h.b16 %v5237
    %v5846 = vunpack.c.l.b16 %v5238
    %v5847 = vunpack.c.h.b16 %v5238
    %v5848 = vunpack.c.l.b16 %v5239
    %v5849 = vunpack.c.h.b16 %v5239
    %v5850 = vunpack.c.l.b16 %v5240
    %v5851 = vunpack.c.h.b16 %v5240
    %v5852 = vunpack.c.l.b16 %v5241
    %v5853 = vunpack.c.h.b16 %v5241
    %v5854 = vunpack.c.l.b16 %v5242
    %v5855 = vunpack.c.h.b16 %v5242
    %v5856 = vunpack.c.l.b16 %v5243
    %v5857 = vunpack.c.h.b16 %v5243
    %v5858 = vunpack.c.l.b16 %v5244
    %v5859 = vunpack.c.h.b16 %v5244
    %v5860 = vunpack.c.l.b16 %v5245
    %v5861 = vunpack.c.h.b16 %v5245
    %v5862 = vunpack.c.l.b16 %v5246
    %v5863 = vunpack.c.h.b16 %v5246
    %v5864 = vunpack.c.l.b16 %v5247
    %v5865 = vunpack.c.h.b16 %v5247
    %v5866 = vunpack.c.l.b16 %v5248
    %v5867 = vunpack.c.h.b16 %v5248
    %v5868 = vunpack.c.l.b16 %v5249
    %v5869 = vunpack.c.h.b16 %v5249
    %v5870 = vunpack.c.l.b16 %v5250
    %v5871 = vunpack.c.h.b16 %v5250
    %v5872 = vunpack.c.l.b16 %v5251
    %v5873 = vunpack.c.h.b16 %v5251
    %v5874 = vunpack.c.l.b16 %v5252
    %v5875 = vunpack.c.h.b16 %v5252
    %v5876 = vunpack.c.l.b16 %v5253
    %v5877 = vunpack.c.h.b16 %v5253
    %v5878 = vunpack.c.l.b16 %v5254
    %v5879 = vunpack.c.h.b16 %v5254
    %v5880 = vunpack.c.l.b16 %v5255
    %v5881 = vunpack.c.h.b16 %v5255
    %v5882 = vunpack.c.l.b16 %v5256
    %v5883 = vunpack.c.h.b16 %v5256
    %v5884 = vunpack.c.l.b16 %v5257
    %v5885 = vunpack.c.h.b16 %v5257
    %v5886 = vunpack.c.l.b16 %v5258
    %v5887 = vunpack.c.h.b16 %v5258
    %v5888 = vunpack.c.l.b16 %v5259
    %v5889 = vunpack.c.h.b16 %v5259
    %v5890 = vunpack.c.l.b16 %v5260
    %v5891 = vunpack.c.h.b16 %v5260
    %v5892 = vunpack.c.l.b16 %v5261
    %v5893 = vunpack.c.h.b16 %v5261
    %v5894 = vunpack.c.l.b16 %v5262
    %v5895 = vunpack.c.h.b16 %v5262
    %v5896 = vunpack.c.l.b16 %v5263
    %v5897 = vunpack.c.h.b16 %v5263
    %v5898 = vunpack.c.l.b16 %v5264
    %v5899 = vunpack.c.h.b16 %v5264
    %v5900 = vunpack.c.l.b16 %v5265
    %v5901 = vunpack.c.h.b16 %v5265
    %v5902 = vunpack.c.l.b16 %v5266
    %v5903 = vunpack.c.h.b16 %v5266
    %v5904 = vunpack.c.l.b16 %v5267
    %v5905 = vunpack.c.h.b16 %v5267
    %v5906 = vunpack.c.l.b16 %v5268
    %v5907 = vunpack.c.h.b16 %v5268
    %v5908 = vunpack.c.l.b16 %v5269
    %v5909 = vunpack.c.h.b16 %v5269
    %v5910 = vunpack.c.l.b16 %v5270
    %v5911 = vunpack.c.h.b16 %v5270
    %v5912 = vunpack.c.l.b16 %v5271
    %v5913 = vunpack.c.h.b16 %v5271
    %v5914 = vunpack.c.l.b16 %v5272
    %v5915 = vunpack.c.h.b16 %v5272
    %v5916 = vunpack.c.l.b16 %v5273
    %v5917 = vunpack.c.h.b16 %v5273
    %v5918 = vunpack.c.l.b16 %v5274
    %v5919 = vunpack.c.h.b16 %v5274
    %v5920 = vunpack.c.l.b16 %v5275
    %v5921 = vunpack.c.h.b16 %v5275
    %v5922 = vunpack.c.l.b16 %v5276
    %v5923 = vunpack.c.h.b16 %v5276
    %v5924 = vunpack.c.l.b16 %v5277
    %v5925 = vunpack.c.h.b16 %v5277
    %v5926 = vunpack.c.l.b16 %v5278
    %v5927 = vunpack.c.h.b16 %v5278
    %v5928 = vunpack.c.l.b16 %v5279
    %v5929 = vunpack.c.h.b16 %v5279
    %v5930 = vunpack.c.l.b16 %v5280
    %v5931 = vunpack.c.h.b16 %v5280
    %v5932 = vunpack.c.l.b16 %v5281
    %v5933 = vunpack.c.h.b16 %v5281
    %v5934 = vunpack.c.l.b16 %v5282
    %v5935 = vunpack.c.h.b16 %v5282
    %v5936 = vunpack.c.l.b16 %v5283
    %v5937 = vunpack.c.h.b16 %v5283
    %v5938 = vunpack.c.l.b16 %v5284
    %v5939 = vunpack.c.h.b16 %v5284
    %v5940 = vunpack.c.l.b16 %v5285
    %v5941 = vunpack.c.h.b16 %v5285
    %v5942 = vunpack.c.l.b16 %v5286
    %v5943 = vunpack.c.h.b16 %v5286
    %v5944 = vunpack.c.l.b16 %v5287
    %v5945 = vunpack.c.h.b16 %v5287
    %v5946 = vunpack.c.l.b16 %v5288
    %v5947 = vunpack.c.h.b16 %v5288
    %v5948 = vunpack.c.l.b16 %v5289
    %v5949 = vunpack.c.h.b16 %v5289
    %v5950 = vunpack.c.l.b16 %v5290
    %v5951 = vunpack.c.h.b16 %v5290
    %v5952 = vunpack.c.l.b16 %v5291
    %v5953 = vunpack.c.h.b16 %v5291
    %v5954 = vunpack.c.l.b16 %v5292
    %v5955 = vunpack.c.h.b16 %v5292
    %v5956 = vunpack.c.l.b16 %v5293
    %v5957 = vunpack.c.h.b16 %v5293
    %v5958 = vunpack.c.l.b16 %v5294
    %v5959 = vunpack.c.h.b16 %v5294
    %v5960 = vunpack.c.l.b16 %v5295
    %v5961 = vunpack.c.h.b16 %v5295
    %v5962 = vunpack.c.l.b16 %v5296
    %v5963 = vunpack.c.h.b16 %v5296
    %v5964 = vunpack.c.l.b16 %v5297
    %v5965 = vunpack.c.h.b16 %v5297
    %v5966 = vunpack.c.l.b16 %v5298
    %v5967 = vunpack.c.h.b16 %v5298
    %v5968 = vunpack.c.l.b16 %v5299
    %v5969 = vunpack.c.h.b16 %v5299
    %v5970 = vunpack.c.l.b16 %v5300
    %v5971 = vunpack.c.h.b16 %v5300
    %v5972 = vunpack.c.l.b16 %v5301
    %v5973 = vunpack.c.h.b16 %v5301
    %v5974 = vunpack.c.l.b16 %v5302
    %v5975 = vunpack.c.h.b16 %v5302
    %v5976 = vunpack.c.l.b16 %v5303
    %v5977 = vunpack.c.h.b16 %v5303
    %v5978 = vunpack.c.l.b16 %v5304
    %v5979 = vunpack.c.h.b16 %v5304
    %v5980 = vunpack.c.l.b16 %v5305
    %v5981 = vunpack.c.h.b16 %v5305
    %v5982 = vunpack.c.l.b16 %v5306
    %v5983 = vunpack.c.h.b16 %v5306
    %v5984 = vunpack.c.l.b16 %v5307
    %v5985 = vunpack.c.h.b16 %v5307
    %v5986 = vunpack.c.l.b16 %v5308
    %v5987 = vunpack.c.h.b16 %v5308
    %v5988 = vunpack.c.l.b16 %v5309
    %v5989 = vunpack.c.h.b16 %v5309
    %v5990 = vunpack.c.l.b16 %v5310
    %v5991 = vunpack.c.h.b16 %v5310
    %v5992 = vunpack.c.l.b16 %v5311
    %v5993 = vunpack.c.h.b16 %v5311
    %v5994 = vunpack.c.l.b16 %v5312
    %v5995 = vunpack.c.h.b16 %v5312
    %v5996 = vunpack.c.l.b16 %v5313
    %v5997 = vunpack.c.h.b16 %v5313
    %v5998 = vunpack.c.l.b16 %v5314
    %v5999 = vunpack.c.h.b16 %v5314
    %v6000 = vunpack.c.l.b16 %v5315
    %v6001 = vunpack.c.h.b16 %v5315
    %v6002 = vunpack.c.l.b16 %v5316
    %v6003 = vunpack.c.h.b16 %v5316
    %v6004 = vunpack.c.l.b16 %v5317
    %v6005 = vunpack.c.h.b16 %v5317
    %v6006 = vunpack.c.l.b16 %v5318
    %v6007 = vunpack.c.h.b16 %v5318
    %v6008 = vunpack.c.l.b16 %v5319
    %v6009 = vunpack.c.h.b16 %v5319
    %v6010 = vunpack.c.l.b16 %v5320
    %v6011 = vunpack.c.h.b16 %v5320
    %v6012 = vunpack.c.l.b16 %v5321
    %v6013 = vunpack.c.h.b16 %v5321
    %v6014 = vunpack.c.l.b16 %v5322
    %v6015 = vunpack.c.h.b16 %v5322
    %v6016 = vunpack.c.l.b16 %v5323
    %v6017 = vunpack.c.h.b16 %v5323
    %v6018 = vunpack.c.l.b16 %v5324
    %v6019 = vunpack.c.h.b16 %v5324
    %v6020 = vunpack.c.l.b16 %v5325
    %v6021 = vunpack.c.h.b16 %v5325
    %v6022 = vunpack.c.l.b16 %v5326
    %v6023 = vunpack.c.h.b16 %v5326
    %v6024 = vunpack.c.l.b16 %v5327
    %v6025 = vunpack.c.h.b16 %v5327
    %v6026 = vunpack.c.l.b16 %v5328
    %v6027 = vunpack.c.h.b16 %v5328
    %v6028 = vunpack.c.l.b16 %v5329
    %v6029 = vunpack.c.h.b16 %v5329
    %v6030 = vunpack.c.l.b16 %v5330
    %v6031 = vunpack.c.h.b16 %v5330
    %v6032 = vunpack.c.l.b16 %v5331
    %v6033 = vunpack.c.h.b16 %v5331
    %v6034 = vunpack.c.l.b16 %v5332
    %v6035 = vunpack.c.h.b16 %v5332
    %v6036 = vunpack.c.l.b16 %v5333
    %v6037 = vunpack.c.h.b16 %v5333
    %v6038 = vunpack.c.l.b16 %v5334
    %v6039 = vunpack.c.h.b16 %v5334
    %v6040 = vunpack.c.l.b16 %v5335
    %v6041 = vunpack.c.h.b16 %v5335
    %v6042 = vunpack.c.l.b16 %v5336
    %v6043 = vunpack.c.h.b16 %v5336
    %v6044 = vunpack.c.l.b16 %v5337
    %v6045 = vunpack.c.h.b16 %v5337
    %v6046 = vunpack.c.l.b16 %v5338
    %v6047 = vunpack.c.h.b16 %v5338
    %v6048 = vunpack.c.l.b16 %v5339
    %v6049 = vunpack.c.h.b16 %v5339
    %v6050 = vunpack.c.l.b16 %v5340
    %v6051 = vunpack.c.h.b16 %v5340
    %v6052 = vunpack.c.l.b16 %v5341
    %v6053 = vunpack.c.h.b16 %v5341
    %v6054 = vunpack.c.l.b16 %v5342
    %v6055 = vunpack.c.h.b16 %v5342
    %v6056 = vunpack.c.l.b16 %v5343
    %v6057 = vunpack.c.h.b16 %v5343
    %v6058 = vunpack.c.l.b16 %v5344
    %v6059 = vunpack.c.h.b16 %v5344
    %v6060 = vunpack.c.l.b16 %v5345
    %v6061 = vunpack.c.h.b16 %v5345
    %v6062 = vunpack.c.l.b16 %v5346
    %v6063 = vunpack.c.h.b16 %v5346
    %v6064 = vunpack.c.l.b16 %v5347
    %v6065 = vunpack.c.h.b16 %v5347
    %v6066 = vunpack.c.l.b16 %v5348
    %v6067 = vunpack.c.h.b16 %v5348
    %v6068 = vunpack.c.l.b16 %v5349
    %v6069 = vunpack.c.h.b16 %v5349
    %v6070 = vunpack.c.l.b16 %v5350
    %v6071 = vunpack.c.h.b16 %v5350
    %v6072 = vunpack.c.l.b16 %v5351
    %v6073 = vunpack.c.h.b16 %v5351
    %v6074 = vunpack.c.l.b16 %v5352
    %v6075 = vunpack.c.h.b16 %v5352
    %v6076 = vunpack.c.l.b16 %v5353
    %v6077 = vunpack.c.h.b16 %v5353
    %v6078 = vunpack.c.l.b16 %v5354
    %v6079 = vunpack.c.h.b16 %v5354
    %v6080 = vunpack.c.l.b16 %v5355
    %v6081 = vunpack.c.h.b16 %v5355
    %v6082 = vunpack.c.l.b16 %v5356
    %v6083 = vunpack.c.h.b16 %v5356
    %v6084 = vunpack.c.l.b16 %v5357
    %v6085 = vunpack.c.h.b16 %v5357
    %v6086 = vunpack.c.l.b16 %v5358
    %v6087 = vunpack.c.h.b16 %v5358
    %v6088 = vunpack.c.l.b16 %v5359
    %v6089 = vunpack.c.h.b16 %v5359
    %v6090 = vunpack.c.l.b16 %v5360
    %v6091 = vunpack.c.h.b16 %v5360
    %v6092 = vunpack.c.l.b16 %v5361
    %v6093 = vunpack.c.h.b16 %v5361
    %v6094 = vunpack.c.l.b16 %v5362
    %v6095 = vunpack.c.h.b16 %v5362
    %v6096 = vunpack.c.l.b16 %v5363
    %v6097 = vunpack.c.h.b16 %v5363
    %v6098 = vunpack.c.l.b16 %v5364
    %v6099 = vunpack.c.h.b16 %v5364
    %v6100 = vunpack.c.l.b16 %v5365
    %v6101 = vunpack.c.h.b16 %v5365
    %v6102 = vunpack.c.l.b16 %v5366
    %v6103 = vunpack.c.h.b16 %v5366
    %v6104 = vunpack.c.l.b16 %v5367
    %v6105 = vunpack.c.h.b16 %v5367
    %v6106 = vunpack.c.l.b16 %v5368
    %v6107 = vunpack.c.h.b16 %v5368
    %v6108 = vunpack.c.l.b16 %v5369
    %v6109 = vunpack.c.h.b16 %v5369
    %v6110 = vunpack.c.l.b16 %v5370
    %v6111 = vunpack.c.h.b16 %v5370
    %v6112 = vunpack.c.l.b16 %v5371
    %v6113 = vunpack.c.h.b16 %v5371
    %v6114 = vunpack.c.l.b16 %v5372
    %v6115 = vunpack.c.h.b16 %v5372
    %v6116 = vunpack.c.l.b16 %v5373
    %v6117 = vunpack.c.h.b16 %v5373
    %v6118 = vunpack.c.l.b16 %v5374
    %v6119 = vunpack.c.h.b16 %v5374
    %v6120 = vunpack.c.l.b16 %v5375
    %v6121 = vunpack.c.h.b16 %v5375
    %v6122 = vunpack.c.l.b16 %v5376
    %v6123 = vunpack.c.h.b16 %v5376
    %v6124 = vunpack.c.l.b16 %v5377
    %v6125 = vunpack.c.h.b16 %v5377
    %v6126 = vunpack.c.l.b16 %v5378
    %v6127 = vunpack.c.h.b16 %v5378
    %v6128 = vunpack.c.l.b16 %v5379
    %v6129 = vunpack.c.h.b16 %v5379
    %v6130 = vunpack.c.l.b16 %v5380
    %v6131 = vunpack.c.h.b16 %v5380
    %v6132 = vunpack.c.l.b16 %v5381
    %v6133 = vunpack.c.h.b16 %v5381
    %v6134 = vunpack.c.l.b16 %v5382
    %v6135 = vunpack.c.h.b16 %v5382
    %v6136 = vunpack.c.l.b16 %v5383
    %v6137 = vunpack.c.h.b16 %v5383
    %v6138 = vunpack.c.l.b16 %v5384
    %v6139 = vunpack.c.h.b16 %v5384
    %v6140 = vunpack.c.l.b16 %v5385
    %v6141 = vunpack.c.h.b16 %v5385
    %v6142 = vunpack.c.l.b16 %v5386
    %v6143 = vunpack.c.h.b16 %v5386
    %v6144 = vunpack.c.l.b16 %v5387
    %v6145 = vunpack.c.h.b16 %v5387
    %v6146 = vunpack.c.l.b16 %v5388
    %v6147 = vunpack.c.h.b16 %v5388
    %v6148 = vunpack.c.l.b16 %v5389
    %v6149 = vunpack.c.h.b16 %v5389
    %v6150 = vunpack.c.l.b16 %v5390
    %v6151 = vunpack.c.h.b16 %v5390
    %v6152 = vunpack.c.l.b16 %v5391
    %v6153 = vunpack.c.h.b16 %v5391
    %v6154 = vunpack.c.l.b16 %v5392
    %v6155 = vunpack.c.h.b16 %v5392
    %v6156 = vunpack.c.l.b16 %v5393
    %v6157 = vunpack.c.h.b16 %v5393
    %v6158 = vunpack.c.l.b16 %v5394
    %v6159 = vunpack.c.h.b16 %v5394
    %v6160 = vunpack.c.l.b16 %v5395
    %v6161 = vunpack.c.h.b16 %v5395
    %v6162 = vunpack.c.l.b16 %v5396
    %v6163 = vunpack.c.h.b16 %v5396
    %v6164 = vunpack.c.l.b16 %v5397
    %v6165 = vunpack.c.h.b16 %v5397
    %v6166 = vunpack.c.l.b16 %v5398
    %v6167 = vunpack.c.h.b16 %v5398
    %v6168 = vunpack.c.l.b16 %v5399
    %v6169 = vunpack.c.h.b16 %v5399
    %v6170 = vunpack.c.l.b16 %v5400
    %v6171 = vunpack.c.h.b16 %v5400
    %v6172 = vunpack.c.l.b16 %v5401
    %v6173 = vunpack.c.h.b16 %v5401
    %v6174 = vunpack.c.l.b16 %v5402
    %v6175 = vunpack.c.h.b16 %v5402
    %v6176 = vunpack.c.l.b16 %v5403
    %v6177 = vunpack.c.h.b16 %v5403
    %v6178 = vunpack.c.l.b16 %v5404
    %v6179 = vunpack.c.h.b16 %v5404
    %v6180 = vunpack.c.l.b16 %v5405
    %v6181 = vunpack.c.h.b16 %v5405
    %v6182 = vunpack.c.l.b16 %v5406
    %v6183 = vunpack.c.h.b16 %v5406
    %v6184 = vunpack.c.l.b16 %v5407
    %v6185 = vunpack.c.h.b16 %v5407
    %v6186 = vunpack.c.l.b16 %v5408
    %v6187 = vunpack.c.h.b16 %v5408
    %v6188 = vunpack.c.l.b16 %v5409
    %v6189 = vunpack.c.h.b16 %v5409
    %v6190 = vunpack.c.l.b16 %v5410
    %v6191 = vunpack.c.h.b16 %v5410
    %v6192 = vunpack.c.l.b16 %v5411
    %v6193 = vunpack.c.h.b16 %v5411
    %v6194 = vunpack.c.l.b16 %v5412
    %v6195 = vunpack.c.h.b16 %v5412
    %v6196 = vunpack.c.l.b16 %v5413
    %v6197 = vunpack.c.h.b16 %v5413
    %v6198 = vunpack.c.l.b16 %v5414
    %v6199 = vunpack.c.h.b16 %v5414
    %v6200 = vunpack.c.l.b16 %v5415
    %v6201 = vunpack.c.h.b16 %v5415
    %v6202 = vunpack.c.l.b16 %v5416
    %v6203 = vunpack.c.h.b16 %v5416
    %v6204 = vunpack.c.l.b16 %v5417
    %v6205 = vunpack.c.h.b16 %v5417
    %v6206 = vunpack.c.l.b16 %v5418
    %v6207 = vunpack.c.h.b16 %v5418
    %v6208 = vunpack.c.l.b16 %v5419
    %v6209 = vunpack.c.h.b16 %v5419
    %v6210 = vpack.c.b16 %v5702, %v5698
    %v6211 = vpack.c.b16 %v5703, %v5699
    %v6212 = vpack.c.b16 %v5704, %v5700
    %v6213 = vpack.c.b16 %v5705, %v5701
    %v6214 = vpack.c.b16 %v5710, %v5706
    %v6215 = vpack.c.b16 %v5711, %v5707
    %v6216 = vpack.c.b16 %v5712, %v5708
    %v6217 = vpack.c.b16 %v5713, %v5709
    %v6218 = vpack.c.b16 %v5718, %v5714
    %v6219 = vpack.c.b16 %v5719, %v5715
    %v6220 = vpack.c.b16 %v5720, %v5716
    %v6221 = vpack.c.b16 %v5721, %v5717
    %v6222 = vpack.c.b16 %v5726, %v5722
    %v6223 = vpack.c.b16 %v5727, %v5723
    %v6224 = vpack.c.b16 %v5728, %v5724
    %v6225 = vpack.c.b16 %v5729, %v5725
    %v6226 = vpack.c.b16 %v5734, %v5730
    %v6227 = vpack.c.b16 %v5735, %v5731
    %v6228 = vpack.c.b16 %v5736, %v5732
    %v6229 = vpack.c.b16 %v5737, %v5733
    %v6230 = vpack.c.b16 %v5742, %v5738
    %v6231 = vpack.c.b16 %v5743, %v5739
    %v6232 = vpack.c.b16 %v5744, %v5740
    %v6233 = vpack.c.b16 %v5745, %v5741
    %v6234 = vpack.c.b16 %v5750, %v5746
    %v6235 = vpack.c.b16 %v5751, %v5747
    %v6236 = vpack.c.b16 %v5752, %v5748
    %v6237 = vpack.c.b16 %v5753, %v5749
    %v6238 = vpack.c.b16 %v5758, %v5754
    %v6239 = vpack.c.b16 %v5759, %v5755
    %v6240 = vpack.c.b16 %v5760, %v5756
    %v6241 = vpack.c.b16 %v5761, %v5757
    %v6242 = vpack.c.b16 %v5766, %v5762
    %v6243 = vpack.c.b16 %v5767, %v5763
    %v6244 = vpack.c.b16 %v5768, %v5764
    %v6245 = vpack.c.b16 %v5769, %v5765
    %v6246 = vpack.c.b16 %v5774, %v5770
    %v6247 = vpack.c.b16 %v5775, %v5771
    %v6248 = vpack.c.b16 %v5776, %v5772
    %v6249 = vpack.c.b16 %v5777, %v5773
    %v6250 = vpack.c.b16 %v5782, %v5778
    %v6251 = vpack.c.b16 %v5783, %v5779
    %v6252 = vpack.c.b16 %v5784, %v5780
    %v6253 = vpack.c.b16 %v5785, %v5781
    %v6254 = vpack.c.b16 %v5790, %v5786
    %v6255 = vpack.c.b16 %v5791, %v5787
    %v6256 = vpack.c.b16 %v5792, %v5788
    %v6257 = vpack.c.b16 %v5793, %v5789
    %v6258 = vpack.c.b16 %v5798, %v5794
    %v6259 = vpack.c.b16 %v5799, %v5795
    %v6260 = vpack.c.b16 %v5800, %v5796
    %v6261 = vpack.c.b16 %v5801, %v5797
    %v6262 = vpack.c.b16 %v5806, %v5802
    %v6263 = vpack.c.b16 %v5807, %v5803
    %v6264 = vpack.c.b16 %v5808, %v5804
    %v6265 = vpack.c.b16 %v5809, %v5805
    %v6266 = vpack.c.b16 %v5814, %v5810
    %v6267 = vpack.c.b16 %v5815, %v5811
    %v6268 = vpack.c.b16 %v5816, %v5812
    %v6269 = vpack.c.b16 %v5817, %v5813
    %v6270 = vpack.c.b16 %v5822, %v5818
    %v6271 = vpack.c.b16 %v5823, %v5819
    %v6272 = vpack.c.b16 %v5824, %v5820
    %v6273 = vpack.c.b16 %v5825, %v5821
    %v6274 = vpack.c.b16 %v5830, %v5826
    %v6275 = vpack.c.b16 %v5831, %v5827
    %v6276 = vpack.c.b16 %v5832, %v5828
    %v6277 = vpack.c.b16 %v5833, %v5829
    %v6278 = vpack.c.b16 %v5838, %v5834
    %v6279 = vpack.c.b16 %v5839, %v5835
    %v6280 = vpack.c.b16 %v5840, %v5836
    %v6281 = vpack.c.b16 %v5841, %v5837
    %v6282 = vpack.c.b16 %v5846, %v5842
    %v6283 = vpack.c.b16 %v5847, %v5843
    %v6284 = vpack.c.b16 %v5848, %v5844
    %v6285 = vpack.c.b16 %v5849, %v5845
    %v6286 = vpack.c.b16 %v5854, %v5850
    %v6287 = vpack.c.b16 %v5855, %v5851
    %v6288 = vpack.c.b16 %v5856, %v5852
    %v6289 = vpack.c.b16 %v5857, %v5853
    %v6290 = vpack.c.b16 %v5862, %v5858
    %v6291 = vpack.c.b16 %v5863, %v5859
    %v6292 = vpack.c.b16 %v5864, %v5860
    %v6293 = vpack.c.b16 %v5865, %v5861
    %v6294 = vpack.c.b16 %v5870, %v5866
    %v6295 = vpack.c.b16 %v5871, %v5867
    %v6296 = vpack.c.b16 %v5872, %v5868
    %v6297 = vpack.c.b16 %v5873, %v5869
    %v6298 = vpack.c.b16 %v5878, %v5874
    %v6299 = vpack.c.b16 %v5879, %v5875
    %v6300 = vpack.c.b16 %v5880, %v5876
    %v6301 = vpack.c.b16 %v5881, %v5877
    %v6302 = vpack.c.b16 %v5886, %v5882
    %v6303 = vpack.c.b16 %v5887, %v5883
    %v6304 = vpack.c.b16 %v5888, %v5884
    %v6305 = vpack.c.b16 %v5889, %v5885
    %v6306 = vpack.c.b16 %v5894, %v5890
    %v6307 = vpack.c.b16 %v5895, %v5891
    %v6308 = vpack.c.b16 %v5896, %v5892
    %v6309 = vpack.c.b16 %v5897, %v5893
    %v6310 = vpack.c.b16 %v5902, %v5898
    %v6311 = vpack.c.b16 %v5903, %v5899
    %v6312 = vpack.c.b16 %v5904, %v5900
    %v6313 = vpack.c.b16 %v5905, %v5901
    %v6314 = vpack.c.b16 %v5910, %v5906
    %v6315 = vpack.c.b16 %v5911, %v5907
    %v6316 = vpack.c.b16 %v5912, %v5908
    %v6317 = vpack.c.b16 %v5913, %v5909
    %v6318 = vpack.c.b16 %v5918, %v5914
    %v6319 = vpack.c.b16 %v5919, %v5915
    %v6320 = vpack.c.b16 %v5920, %v5916
    %v6321 = vpack.c.b16 %v5921, %v5917
    %v6322 = vpack.c.b16 %v5926, %v5922
    %v6323 = vpack.c.b16 %v5927, %v5923
    %v6324 = vpack.c.b16 %v5928, %v5924
    %v6325 = vpack.c.b16 %v5929, %v5925
    %v6326 = vpack.c.b16 %v5934, %v5930
    %v6327 = vpack.c.b16 %v5935, %v5931
    %v6328 = vpack.c.b16 %v5936, %v5932
    %v6329 = vpack.c.b16 %v5937, %v5933
    %v6330 = vpack.c.b16 %v5942, %v5938
    %v6331 = vpack.c.b16 %v5943, %v5939
    %v6332 = vpack.c.b16 %v5944, %v5940
    %v6333 = vpack.c.b16 %v5945, %v5941
    %v6334 = vpack.c.b16 %v5950, %v5946
    %v6335 = vpack.c.b16 %v5951, %v5947
    %v6336 = vpack.c.b16 %v5952, %v5948
    %v6337 = vpack.c.b16 %v5953, %v5949
    %v6338 = vpack.c.b16 %v5958, %v5954
    %v6339 = vpack.c.b16 %v5959, %v5955
    %v6340 = vpack.c.b16 %v5960, %v5956
    %v6341 = vpack.c.b16 %v5961, %v5957
    %v6342 = vpack.c.b16 %v5966, %v5962
    %v6343 = vpack.c.b16 %v5967, %v5963
    %v6344 = vpack.c.b16 %v5968, %v5964
    %v6345 = vpack.c.b16 %v5969, %v5965
    %v6346 = vpack.c.b16 %v5974, %v5970
    %v6347 = vpack.c.b16 %v5975, %v5971
    %v6348 = vpack.c.b16 %v5976, %v5972
    %v6349 = vpack.c.b16 %v5977, %v5973
    %v6350 = vpack.c.b16 %v5982, %v5978
    %v6351 = vpack.c.b16 %v5983, %v5979
    %v6352 = vpack.c.b16 %v5984, %v5980
    %v6353 = vpack.c.b16 %v5985, %v5981
    %v6354 = vpack.c.b16 %v5990, %v5986
    %v6355 = vpack.c.b16 %v5991, %v5987
    %v6356 = vpack.c.b16 %v5992, %v5988
    %v6357 = vpack.c.b16 %v5993, %v5989
    %v6358 = vpack.c.b16 %v5998, %v5994
    %v6359 = vpack.c.b16 %v5999, %v5995
    %v6360 = vpack.c.b16 %v6000, %v5996
    %v6361 = vpack.c.b16 %v6001, %v5997
    %v6362 = vpack.c.b16 %v6006, %v6002
    %v6363 = vpack.c.b16 %v6007, %v6003
    %v6364 = vpack.c.b16 %v6008, %v6004
    %v6365 = vpack.c.b16 %v6009, %v6005
    %v6366 = vpack.c.b16 %v6014, %v6010
    %v6367 = vpack.c.b16 %v6015, %v6011
    %v6368 = vpack.c.b16 %v6016, %v6012
    %v6369 = vpack.c.b16 %v6017, %v6013
    %v6370 = vpack.c.b16 %v6022, %v6018
    %v6371 = vpack.c.b16 %v6023, %v6019
    %v6372 = vpack.c.b16 %v6024, %v6020
    %v6373 = vpack.c.b16 %v6025, %v6021
    %v6374 = vpack.c.b16 %v6030, %v6026
    %v6375 = vpack.c.b16 %v6031, %v6027
    %v6376 = vpack.c.b16 %v6032, %v6028
    %v6377 = vpack.c.b16 %v6033, %v6029
    %v6378 = vpack.c.b16 %v6038, %v6034
    %v6379 = vpack.c.b16 %v6039, %v6035
    %v6380 = vpack.c.b16 %v6040, %v6036
    %v6381 = vpack.c.b16 %v6041, %v6037
    %v6382 = vpack.c.b16 %v6046, %v6042
    %v6383 = vpack.c.b16 %v6047, %v6043
    %v6384 = vpack.c.b16 %v6048, %v6044
    %v6385 = vpack.c.b16 %v6049, %v6045
    %v6386 = vpack.c.b16 %v6054, %v6050
    %v6387 = vpack.c.b16 %v6055, %v6051
    %v6388 = vpack.c.b16 %v6056, %v6052
    %v6389 = vpack.c.b16 %v6057, %v6053
    %v6390 = vpack.c.b16 %v6062, %v6058
    %v6391 = vpack.c.b16 %v6063, %v6059
    %v6392 = vpack.c.b16 %v6064, %v6060
    %v6393 = vpack.c.b16 %v6065, %v6061
    %v6394 = vpack.c.b16 %v6070, %v6066
    %v6395 = vpack.c.b16 %v6071, %v6067
    %v6396 = vpack.c.b16 %v6072, %v6068
    %v6397 = vpack.c.b16 %v6073, %v6069
    %v6398 = vpack.c.b16 %v6078, %v6074
    %v6399 = vpack.c.b16 %v6079, %v6075
    %v6400 = vpack.c.b16 %v6080, %v6076
    %v6401 = vpack.c.b16 %v6081, %v6077
    %v6402 = vpack.c.b16 %v6086, %v6082
    %v6403 = vpack.c.b16 %v6087, %v6083
    %v6404 = vpack.c.b16 %v6088, %v6084
    %v6405 = vpack.c.b16 %v6089, %v6085
    %v6406 = vpack.c.b16 %v6094, %v6090
    %v6407 = vpack.c.b16 %v6095, %v6091
    %v6408 = vpack.c.b16 %v6096, %v6092
    %v6409 = vpack.c.b16 %v6097, %v6093
    %v6410 = vpack.c.b16 %v6102, %v6098
    %v6411 = vpack.c.b16 %v6103, %v6099
    %v6412 = vpack.c.b16 %v6104, %v6100
    %v6413 = vpack.c.b16 %v6105, %v6101
    %v6414 = vpack.c.b16 %v6110, %v6106
    %v6415 = vpack.c.b16 %v6111, %v6107
    %v6416 = vpack.c.b16 %v6112, %v6108
    %v6417 = vpack.c.b16 %v6113, %v6109
    %v6418 = vpack.c.b16 %v6118, %v6114
    %v6419 = vpack.c.b16 %v6119, %v6115
    %v6420 = vpack.c.b16 %v6120, %v6116
    %v6421 = vpack.c.b16 %v6121, %v6117
    %v6422 = vpack.c.b16 %v6126, %v6122
    %v6423 = vpack.c.b16 %v6127, %v6123
    %v6424 = vpack.c.b16 %v6128, %v6124
    %v6425 = vpack.c.b16 %v6129, %v6125
    %v6426 = vpack.c.b16 %v6134, %v6130
    %v6427 = vpack.c.b16 %v6135, %v6131
    %v6428 = vpack.c.b16 %v6136, %v6132
    %v6429 = vpack.c.b16 %v6137, %v6133
    %v6430 = vpack.c.b16 %v6142, %v6138
    %v6431 = vpack.c.b16 %v6143, %v6139
    %v6432 = vpack.c.b16 %v6144, %v6140
    %v6433 = vpack.c.b16 %v6145, %v6141
    %v6434 = vpack.c.b16 %v6150, %v6146
    %v6435 = vpack.c.b16 %v6151, %v6147
    %v6436 = vpack.c.b16 %v6152, %v6148
    %v6437 = vpack.c.b16 %v6153, %v6149
    %v6438 = vpack.c.b16 %v6158, %v6154
    %v6439 = vpack.c.b16 %v6159, %v6155
    %v6440 = vpack.c.b16 %v6160, %v6156
    %v6441 = vpack.c.b16 %v6161, %v6157
    %v6442 = vpack.c.b16 %v6166, %v6162
    %v6443 = vpack.c.b16 %v6167, %v6163
    %v6444 = vpack.c.b16 %v6168, %v6164
    %v6445 = vpack.c.b16 %v6169, %v6165
    %v6446 = vpack.c.b16 %v6174, %v6170
    %v6447 = vpack.c.b16 %v6175, %v6171
    %v6448 = vpack.c.b16 %v6176, %v6172
    %v6449 = vpack.c.b16 %v6177, %v6173
    %v6450 = vpack.c.b16 %v6182, %v6178
    %v6451 = vpack.c.b16 %v6183, %v6179
    %v6452 = vpack.c.b16 %v6184, %v6180
    %v6453 = vpack.c.b16 %v6185, %v6181
    %v6454 = vpack.c.b16 %v6190, %v6186
    %v6455 = vpack.c.b16 %v6191, %v6187
    %v6456 = vpack.c.b16 %v6192, %v6188
    %v6457 = vpack.c.b16 %v6193, %v6189
    %v6458 = vpack.c.b16 %v6198, %v6194
    %v6459 = vpack.c.b16 %v6199, %v6195
    %v6460 = vpack.c.b16 %v6200, %v6196
    %v6461 = vpack.c.b16 %v6201, %v6197
    %v6462 = vpack.c.b16 %v6206, %v6202
    %v6463 = vpack.c.b16 %v6207, %v6203
    %v6464 = vpack.c.b16 %v6208, %v6204
    %v6465 = vpack.c.b16 %v6209, %v6205
    %6722 = vmatprep.subr.bf16.mxu0 %v6211
    %6723 = vmatpush1.bf16.msra.mxu0 %v6210
    %6724 = vmatprep.subr.bf16.mxu0 %v6215
    %6725 = vmatpush1.bf16.msra.mxu0 %v6214
    %6726 = vmatprep.subr.bf16.mxu0 %v6219
    %6727 = vmatpush1.bf16.msra.mxu0 %v6218
    %6728 = vmatprep.subr.bf16.mxu0 %v6223
    %6729 = vmatpush1.bf16.msra.mxu0 %v6222
    %6730 = vmatprep.subr.bf16.mxu0 %v6227
    %6731 = vmatpush1.bf16.msra.mxu0 %v6226
    %6732 = vmatprep.subr.bf16.mxu0 %v6231
    %6733 = vmatpush1.bf16.msra.mxu0 %v6230
    %6734 = vmatprep.subr.bf16.mxu0 %v6235
    %6735 = vmatpush1.bf16.msra.mxu0 %v6234
    %6736 = vmatprep.subr.bf16.mxu0 %v6239
    %6737 = vmatpush1.bf16.msra.mxu0 %v6238
    %6738 = vmatprep.subr.bf16.mxu0 %v6243
    %6739 = vmatpush1.bf16.msra.mxu0 %v6242
    %6740 = vmatprep.subr.bf16.mxu0 %v6247
    %6741 = vmatpush1.bf16.msra.mxu0 %v6246
    %6742 = vmatprep.subr.bf16.mxu0 %v6251
    %6743 = vmatpush1.bf16.msra.mxu0 %v6250
    %6744 = vmatprep.subr.bf16.mxu0 %v6255
    %6745 = vmatpush1.bf16.msra.mxu0 %v6254
    %6746 = vmatprep.subr.bf16.mxu0 %v6259
    %6747 = vmatpush1.bf16.msra.mxu0 %v6258
    %6748 = vmatprep.subr.bf16.mxu0 %v6263
    %6749 = vmatpush1.bf16.msra.mxu0 %v6262
    %6750 = vmatprep.subr.bf16.mxu0 %v6267
    %6751 = vmatpush1.bf16.msra.mxu0 %v6266
    %6752 = vmatprep.subr.bf16.mxu0 %v6271
    %6753 = vmatpush1.bf16.msra.mxu0 %v6270
    %6754 = vmatprep.mubr.bf16.mxu0 %v5157
    %6755 = vmatmul.mubr.bf16.gmra.mrb[0].mxu0 %v5156
    %v6756 = vpop.f32.mrb[0].mxu0
    %v6757 = vadd.f32 %v5425, %v6756
    %v6758 = vpop.f32.mrb[0].mxu0
    %v6759 = vadd.f32 %v5429, %v6758
    %v6760 = vpop.f32.mrb[0].mxu0
    %v6761 = vpop.f32.mrb[0].mxu0
    %6762 = vdwg.mxu0
    %6763 = vmatprep.subr.bf16.mxu0 %v6275
    %6764 = vmatpush1.bf16.msra.mxu0 %v6274
    %6765 = vmatprep.subr.bf16.mxu0 %v6279
    %6766 = vmatpush1.bf16.msra.mxu0 %v6278
    %6767 = vmatprep.subr.bf16.mxu0 %v6283
    %6768 = vmatpush1.bf16.msra.mxu0 %v6282
    %6769 = vmatprep.subr.bf16.mxu0 %v6287
    %6770 = vmatpush1.bf16.msra.mxu0 %v6286
    %6771 = vmatprep.subr.bf16.mxu0 %v6291
    %6772 = vmatpush1.bf16.msra.mxu0 %v6290
    %6773 = vmatprep.subr.bf16.mxu0 %v6295
    %6774 = vmatpush1.bf16.msra.mxu0 %v6294
    %6775 = vmatprep.subr.bf16.mxu0 %v6299
    %6776 = vmatpush1.bf16.msra.mxu0 %v6298
    %6777 = vmatprep.subr.bf16.mxu0 %v6303
    %6778 = vmatpush1.bf16.msra.mxu0 %v6302
    %6779 = vmatprep.subr.bf16.mxu0 %v6307
    %6780 = vmatpush1.bf16.msra.mxu0 %v6306
    %6781 = vmatprep.subr.bf16.mxu0 %v6311
    %6782 = vmatpush1.bf16.msra.mxu0 %v6310
    %6783 = vmatprep.subr.bf16.mxu0 %v6315
    %6784 = vmatpush1.bf16.msra.mxu0 %v6314
    %6785 = vmatprep.subr.bf16.mxu0 %v6319
    %6786 = vmatpush1.bf16.msra.mxu0 %v6318
    %6787 = vmatprep.subr.bf16.mxu0 %v6323
    %6788 = vmatpush1.bf16.msra.mxu0 %v6322
    %6789 = vmatprep.subr.bf16.mxu0 %v6327
    %6790 = vmatpush1.bf16.msra.mxu0 %v6326
    %6791 = vmatprep.subr.bf16.mxu0 %v6331
    %6792 = vmatpush1.bf16.msra.mxu0 %v6330
    %6793 = vmatprep.subr.bf16.mxu0 %v6335
    %6794 = vmatpush1.bf16.msra.mxu0 %v6334
    %6795 = vmatprep.mubr.bf16.mxu0 %v5159
    %6796 = vmatmul.mubr.bf16.gmra.mrb[0].mxu0 %v5158
    %v6797 = vpop.f32.mrb[0].mxu0
    %v6798 = vadd.f32 %v6757, %v6797
    %v6799 = vpop.f32.mrb[0].mxu0
    %v6800 = vadd.f32 %v6759, %v6799
    %v6801 = vpop.f32.mrb[0].mxu0
    %v6802 = vpop.f32.mrb[0].mxu0
    %6803 = vdwg.mxu0
    %6804 = vmatprep.subr.bf16.mxu0 %v6339
    %6805 = vmatpush1.bf16.msra.mxu0 %v6338
    %6806 = vmatprep.subr.bf16.mxu0 %v6343
    %6807 = vmatpush1.bf16.msra.mxu0 %v6342
    %6808 = vmatprep.subr.bf16.mxu0 %v6347
    %6809 = vmatpush1.bf16.msra.mxu0 %v6346
    %6810 = vmatprep.subr.bf16.mxu0 %v6351
    %6811 = vmatpush1.bf16.msra.mxu0 %v6350
    %6812 = vmatprep.subr.bf16.mxu0 %v6355
    %6813 = vmatpush1.bf16.msra.mxu0 %v6354
    %6814 = vmatprep.subr.bf16.mxu0 %v6359
    %6815 = vmatpush1.bf16.msra.mxu0 %v6358
    %6816 = vmatprep.subr.bf16.mxu0 %v6363
    %6817 = vmatpush1.bf16.msra.mxu0 %v6362
    %6818 = vmatprep.subr.bf16.mxu0 %v6367
    %6819 = vmatpush1.bf16.msra.mxu0 %v6366
    %6820 = vmatprep.subr.bf16.mxu0 %v6371
    %6821 = vmatpush1.bf16.msra.mxu0 %v6370
    %6822 = vmatprep.subr.bf16.mxu0 %v6375
    %6823 = vmatpush1.bf16.msra.mxu0 %v6374
    %6824 = vmatprep.subr.bf16.mxu0 %v6379
    %6825 = vmatpush1.bf16.msra.mxu0 %v6378
    %6826 = vmatprep.subr.bf16.mxu0 %v6383
    %6827 = vmatpush1.bf16.msra.mxu0 %v6382
    %6828 = vmatprep.subr.bf16.mxu0 %v6387
    %6829 = vmatpush1.bf16.msra.mxu0 %v6386
    %6830 = vmatprep.subr.bf16.mxu0 %v6391
    %6831 = vmatpush1.bf16.msra.mxu0 %v6390
    %6832 = vmatprep.subr.bf16.mxu0 %v6395
    %6833 = vmatpush1.bf16.msra.mxu0 %v6394
    %6834 = vmatprep.subr.bf16.mxu0 %v6399
    %6835 = vmatpush1.bf16.msra.mxu0 %v6398
    %6836 = vmatprep.mubr.bf16.mxu0 %v5161
    %6837 = vmatmul.mubr.bf16.gmra.mrb[0].mxu0 %v5160
    %v6838 = vpop.f32.mrb[0].mxu0
    %v6839 = vadd.f32 %v6798, %v6838
    %v6840 = vpop.f32.mrb[0].mxu0
    %v6841 = vadd.f32 %v6800, %v6840
    %v6842 = vpop.f32.mrb[0].mxu0
    %v6843 = vpop.f32.mrb[0].mxu0
    %6844 = vdwg.mxu0
    %6845 = vmatprep.subr.bf16.mxu0 %v6403
    %6846 = vmatpush1.bf16.msra.mxu0 %v6402
    %6847 = vmatprep.subr.bf16.mxu0 %v6407
    %6848 = vmatpush1.bf16.msra.mxu0 %v6406
    %6849 = vmatprep.subr.bf16.mxu0 %v6411
    %6850 = vmatpush1.bf16.msra.mxu0 %v6410
    %6851 = vmatprep.subr.bf16.mxu0 %v6415
    %6852 = vmatpush1.bf16.msra.mxu0 %v6414
    %6853 = vmatprep.subr.bf16.mxu0 %v6419
    %6854 = vmatpush1.bf16.msra.mxu0 %v6418
    %6855 = vmatprep.subr.bf16.mxu0 %v6423
    %6856 = vmatpush1.bf16.msra.mxu0 %v6422
    %6857 = vmatprep.subr.bf16.mxu0 %v6427
    %6858 = vmatpush1.bf16.msra.mxu0 %v6426
    %6859 = vmatprep.subr.bf16.mxu0 %v6431
    %6860 = vmatpush1.bf16.msra.mxu0 %v6430
    %6861 = vmatprep.subr.bf16.mxu0 %v6435
    %6862 = vmatpush1.bf16.msra.mxu0 %v6434
    %6863 = vmatprep.subr.bf16.mxu0 %v6439
    %6864 = vmatpush1.bf16.msra.mxu0 %v6438
    %6865 = vmatprep.subr.bf16.mxu0 %v6443
    %6866 = vmatpush1.bf16.msra.mxu0 %v6442
    %6867 = vmatprep.subr.bf16.mxu0 %v6447
    %6868 = vmatpush1.bf16.msra.mxu0 %v6446
    %6869 = vmatprep.subr.bf16.mxu0 %v6451
    %6870 = vmatpush1.bf16.msra.mxu0 %v6450
    %6871 = vmatprep.subr.bf16.mxu0 %v6455
    %6872 = vmatpush1.bf16.msra.mxu0 %v6454
    %6873 = vmatprep.subr.bf16.mxu0 %v6459
    %6874 = vmatpush1.bf16.msra.mxu0 %v6458
    %6875 = vmatprep.subr.bf16.mxu0 %v6463
    %6876 = vmatpush1.bf16.msra.mxu0 %v6462
    %6877 = vmatprep.mubr.bf16.mxu0 %v5163
    %6878 = vmatmul.mubr.bf16.gmra.mrb[0].mxu0 %v5162
    %v6879 = vpop.f32.mrb[0].mxu0
    %v6880 = vadd.f32 %v6839, %v6879
    %v6881 = vpop.f32.mrb[0].mxu0
    %v6882 = vadd.f32 %v6841, %v6881
    %v6883 = vpop.f32.mrb[0].mxu0
    %v6884 = vpop.f32.mrb[0].mxu0
    %6885 = vdwg.mxu0
    %6886 = vmatprep.subr.bf16.mxu0 %v6213
    %6887 = vmatpush1.bf16.msra.mxu0 %v6212
    %6888 = vmatprep.subr.bf16.mxu0 %v6217
    %6889 = vmatpush1.bf16.msra.mxu0 %v6216
    %6890 = vmatprep.subr.bf16.mxu0 %v6221
    %6891 = vmatpush1.bf16.msra.mxu0 %v6220
    %6892 = vmatprep.subr.bf16.mxu0 %v6225
    %6893 = vmatpush1.bf16.msra.mxu0 %v6224
    %6894 = vmatprep.subr.bf16.mxu0 %v6229
    %6895 = vmatpush1.bf16.msra.mxu0 %v6228
    %6896 = vmatprep.subr.bf16.mxu0 %v6233
    %6897 = vmatpush1.bf16.msra.mxu0 %v6232
    %6898 = vmatprep.subr.bf16.mxu0 %v6237
    %6899 = vmatpush1.bf16.msra.mxu0 %v6236
    %6900 = vmatprep.subr.bf16.mxu0 %v6241
    %6901 = vmatpush1.bf16.msra.mxu0 %v6240
    %6902 = vmatprep.subr.bf16.mxu0 %v6245
    %6903 = vmatpush1.bf16.msra.mxu0 %v6244
    %6904 = vmatprep.subr.bf16.mxu0 %v6249
    %6905 = vmatpush1.bf16.msra.mxu0 %v6248
    %6906 = vmatprep.subr.bf16.mxu0 %v6253
    %6907 = vmatpush1.bf16.msra.mxu0 %v6252
    %6908 = vmatprep.subr.bf16.mxu0 %v6257
    %6909 = vmatpush1.bf16.msra.mxu0 %v6256
    %6910 = vmatprep.subr.bf16.mxu0 %v6261
    %6911 = vmatpush1.bf16.msra.mxu0 %v6260
    %6912 = vmatprep.subr.bf16.mxu0 %v6265
    %6913 = vmatpush1.bf16.msra.mxu0 %v6264
    %6914 = vmatprep.subr.bf16.mxu0 %v6269
    %6915 = vmatpush1.bf16.msra.mxu0 %v6268
    %6916 = vmatprep.subr.bf16.mxu0 %v6273
    %6917 = vmatpush1.bf16.msra.mxu0 %v6272
    %6918 = vmatprep.mubr.bf16.mxu0 %v5157
    %6919 = vmatmul.mubr.bf16.gmra.mrb[0].mxu0 %v5156
    %v6920 = vpop.f32.mrb[0].mxu0
    %v6921 = vadd.f32 %v5433, %v6920
    %v6922 = vpop.f32.mrb[0].mxu0
    %v6923 = vadd.f32 %v5437, %v6922
    %v6924 = vpop.f32.mrb[0].mxu0
    %v6925 = vpop.f32.mrb[0].mxu0
    %6926 = vdwg.mxu0
    %6927 = vmatprep.subr.bf16.mxu0 %v6277
    %6928 = vmatpush1.bf16.msra.mxu0 %v6276
    %6929 = vmatprep.subr.bf16.mxu0 %v6281
    %6930 = vmatpush1.bf16.msra.mxu0 %v6280
    %6931 = vmatprep.subr.bf16.mxu0 %v6285
    %6932 = vmatpush1.bf16.msra.mxu0 %v6284
    %6933 = vmatprep.subr.bf16.mxu0 %v6289
    %6934 = vmatpush1.bf16.msra.mxu0 %v6288
    %6935 = vmatprep.subr.bf16.mxu0 %v6293
    %6936 = vmatpush1.bf16.msra.mxu0 %v6292
    %6937 = vmatprep.subr.bf16.mxu0 %v6297
    %6938 = vmatpush1.bf16.msra.mxu0 %v6296
    %6939 = vmatprep.subr.bf16.mxu0 %v6301
    %6940 = vmatpush1.bf16.msra.mxu0 %v6300
    %6941 = vmatprep.subr.bf16.mxu0 %v6305
    %6942 = vmatpush1.bf16.msra.mxu0 %v6304
    %6943 = vmatprep.subr.bf16.mxu0 %v6309
    %6944 = vmatpush1.bf16.msra.mxu0 %v6308
    %6945 = vmatprep.subr.bf16.mxu0 %v6313
    %6946 = vmatpush1.bf16.msra.mxu0 %v6312
    %6947 = vmatprep.subr.bf16.mxu0 %v6317
    %6948 = vmatpush1.bf16.msra.mxu0 %v6316
    %6949 = vmatprep.subr.bf16.mxu0 %v6321
    %6950 = vmatpush1.bf16.msra.mxu0 %v6320
    %6951 = vmatprep.subr.bf16.mxu0 %v6325
    %6952 = vmatpush1.bf16.msra.mxu0 %v6324
    %6953 = vmatprep.subr.bf16.mxu0 %v6329
    %6954 = vmatpush1.bf16.msra.mxu0 %v6328
    %6955 = vmatprep.subr.bf16.mxu0 %v6333
    %6956 = vmatpush1.bf16.msra.mxu0 %v6332
    %6957 = vmatprep.subr.bf16.mxu0 %v6337
    %6958 = vmatpush1.bf16.msra.mxu0 %v6336
    %6959 = vmatprep.mubr.bf16.mxu0 %v5159
    %6960 = vmatmul.mubr.bf16.gmra.mrb[0].mxu0 %v5158
    %v6961 = vpop.f32.mrb[0].mxu0
    %v6962 = vadd.f32 %v6921, %v6961
    %v6963 = vpop.f32.mrb[0].mxu0
    %v6964 = vadd.f32 %v6923, %v6963
    %v6965 = vpop.f32.mrb[0].mxu0
    %v6966 = vpop.f32.mrb[0].mxu0
    %6967 = vdwg.mxu0
    %6968 = vmatprep.subr.bf16.mxu0 %v6341
    %6969 = vmatpush1.bf16.msra.mxu0 %v6340
    %6970 = vmatprep.subr.bf16.mxu0 %v6345
    %6971 = vmatpush1.bf16.msra.mxu0 %v6344
    %6972 = vmatprep.subr.bf16.mxu0 %v6349
    %6973 = vmatpush1.bf16.msra.mxu0 %v6348
    %6974 = vmatprep.subr.bf16.mxu0 %v6353
    %6975 = vmatpush1.bf16.msra.mxu0 %v6352
    %6976 = vmatprep.subr.bf16.mxu0 %v6357
    %6977 = vmatpush1.bf16.msra.mxu0 %v6356
    %6978 = vmatprep.subr.bf16.mxu0 %v6361
    %6979 = vmatpush1.bf16.msra.mxu0 %v6360
    %6980 = vmatprep.subr.bf16.mxu0 %v6365
    %6981 = vmatpush1.bf16.msra.mxu0 %v6364
    %6982 = vmatprep.subr.bf16.mxu0 %v6369
    %6983 = vmatpush1.bf16.msra.mxu0 %v6368
    %6984 = vmatprep.subr.bf16.mxu0 %v6373
    %6985 = vmatpush1.bf16.msra.mxu0 %v6372
    %6986 = vmatprep.subr.bf16.mxu0 %v6377
    %6987 = vmatpush1.bf16.msra.mxu0 %v6376
    %6988 = vmatprep.subr.bf16.mxu0 %v6381
    %6989 = vmatpush1.bf16.msra.mxu0 %v6380
    %6990 = vmatprep.subr.bf16.mxu0 %v6385
    %6991 = vmatpush1.bf16.msra.mxu0 %v6384
    %6992 = vmatprep.subr.bf16.mxu0 %v6389
    %6993 = vmatpush1.bf16.msra.mxu0 %v6388
    %6994 = vmatprep.subr.bf16.mxu0 %v6393
    %6995 = vmatpush1.bf16.msra.mxu0 %v6392
    %6996 = vmatprep.subr.bf16.mxu0 %v6397
    %6997 = vmatpush1.bf16.msra.mxu0 %v6396
    %6998 = vmatprep.subr.bf16.mxu0 %v6401
    %6999 = vmatpush1.bf16.msra.mxu0 %v6400
    %7000 = vmatprep.mubr.bf16.mxu0 %v5161
    %7001 = vmatmul.mubr.bf16.gmra.mrb[0].mxu0 %v5160
    %v7002 = vpop.f32.mrb[0].mxu0
    %v7003 = vadd.f32 %v6962, %v7002
    %v7004 = vpop.f32.mrb[0].mxu0
    %v7005 = vadd.f32 %v6964, %v7004
    %v7006 = vpop.f32.mrb[0].mxu0
    %v7007 = vpop.f32.mrb[0].mxu0
    %7008 = vdwg.mxu0
    %7009 = vmatprep.subr.bf16.mxu0 %v6405
    %7010 = vmatpush1.bf16.msra.mxu0 %v6404
    %7011 = vmatprep.subr.bf16.mxu0 %v6409
    %7012 = vmatpush1.bf16.msra.mxu0 %v6408
    %7013 = vmatprep.subr.bf16.mxu0 %v6413
    %7014 = vmatpush1.bf16.msra.mxu0 %v6412
    %7015 = vmatprep.subr.bf16.mxu0 %v6417
    %7016 = vmatpush1.bf16.msra.mxu0 %v6416
    %7017 = vmatprep.subr.bf16.mxu0 %v6421
    %7018 = vmatpush1.bf16.msra.mxu0 %v6420
    %7019 = vmatprep.subr.bf16.mxu0 %v6425
    %7020 = vmatpush1.bf16.msra.mxu0 %v6424
    %7021 = vmatprep.subr.bf16.mxu0 %v6429
    %7022 = vmatpush1.bf16.msra.mxu0 %v6428
    %7023 = vmatprep.subr.bf16.mxu0 %v6433
    %7024 = vmatpush1.bf16.msra.mxu0 %v6432
    %7025 = vmatprep.subr.bf16.mxu0 %v6437
    %7026 = vmatpush1.bf16.msra.mxu0 %v6436
    %7027 = vmatprep.subr.bf16.mxu0 %v6441
    %7028 = vmatpush1.bf16.msra.mxu0 %v6440
    %7029 = vmatprep.subr.bf16.mxu0 %v6445
    %7030 = vmatpush1.bf16.msra.mxu0 %v6444
    %7031 = vmatprep.subr.bf16.mxu0 %v6449
    %7032 = vmatpush1.bf16.msra.mxu0 %v6448
    %7033 = vmatprep.subr.bf16.mxu0 %v6453
    %7034 = vmatpush1.bf16.msra.mxu0 %v6452
    %7035 = vmatprep.subr.bf16.mxu0 %v6457
    %7036 = vmatpush1.bf16.msra.mxu0 %v6456
    %7037 = vmatprep.subr.bf16.mxu0 %v6461
    %7038 = vmatpush1.bf16.msra.mxu0 %v6460
    %7039 = vmatprep.subr.bf16.mxu0 %v6465
    %7040 = vmatpush1.bf16.msra.mxu0 %v6464
    %7041 = vmatprep.mubr.bf16.mxu0 %v5163
    %7042 = vmatmul.mubr.bf16.gmra.mrb[0].mxu0 %v5162
    %v7043 = vpop.f32.mrb[0].mxu0
    %v7044 = vadd.f32 %v7003, %v7043
    %v7045 = vpop.f32.mrb[0].mxu0
    %v7046 = vadd.f32 %v7005, %v7045
    %v7047 = vpop.f32.mrb[0].mxu0
    %v7048 = vpop.f32.mrb[0].mxu0
    %7049 = vdwg.mxu0
    %v7050 = vpack.c.bf16 %v6880, %v6880
    %v7051 = vpack.c.bf16 %v6882, %v6882
    %v7052 = vpack.c.bf16 %v7044, %v7044
    %v7053 = vpack.c.bf16 %v7046, %v7046
    %v7054 = vld [vmem:[#allocation8] sm:$0xf]
    %v7055 = vld [vmem:[#allocation8 + $0x4] sm:$0xf]
    %v7056 = vld [vmem:[#allocation8 + $0x8] sm:$0xf]
    %v7057 = vld [vmem:[#allocation8 + $0xc] sm:$0xf]
    %v7058 = vld [vmem:[#allocation8 + $0x10] sm:$0xf]
    %v7059 = vld [vmem:[#allocation8 + $0x14] sm:$0xf]
    %v7060 = vld [vmem:[#allocation8 + $0x18] sm:$0xf]
    %v7061 = vld [vmem:[#allocation8 + $0x1c] sm:$0xf]
    %v7062 = vld [vmem:[#allocation8 + $0x20] sm:$0xf]
    %v7063 = vld [vmem:[#allocation8 + $0x24] sm:$0xf]
    %v7064 = vld [vmem:[#allocation8 + $0x28] sm:$0xf]
    %v7065 = vld [vmem:[#allocation8 + $0x2c] sm:$0xf]
    %v7066 = vld [vmem:[#allocation8 + $0x30] sm:$0xf]
    %v7067 = vld [vmem:[#allocation8 + $0x34] sm:$0xf]
    %v7068 = vld [vmem:[#allocation8 + $0x38] sm:$0xf]
    %v7069 = vld [vmem:[#allocation8 + $0x3c] sm:$0xf]
    %v7070 = vld [vmem:[#allocation8 + $0x40] sm:$0xf]
    %v7071 = vld [vmem:[#allocation8 + $0x44] sm:$0xf]
    %v7072 = vld [vmem:[#allocation8 + $0x48] sm:$0xf]
    %v7073 = vld [vmem:[#allocation8 + $0x4c] sm:$0xf]
    %v7074 = vld [vmem:[#allocation8 + $0x50] sm:$0xf]
    %v7075 = vld [vmem:[#allocation8 + $0x54] sm:$0xf]
    %v7076 = vld [vmem:[#allocation8 + $0x58] sm:$0xf]
    %v7077 = vld [vmem:[#allocation8 + $0x5c] sm:$0xf]
    %v7078 = vld [vmem:[#allocation8 + $0x60] sm:$0xf]
    %v7079 = vld [vmem:[#allocation8 + $0x64] sm:$0xf]
    %v7080 = vld [vmem:[#allocation8 + $0x68] sm:$0xf]
    %v7081 = vld [vmem:[#allocation8 + $0x6c] sm:$0xf]
    %v7082 = vld [vmem:[#allocation8 + $0x70] sm:$0xf]
    %v7083 = vld [vmem:[#allocation8 + $0x74] sm:$0xf]
    %v7084 = vld [vmem:[#allocation8 + $0x78] sm:$0xf]
    %v7085 = vld [vmem:[#allocation8 + $0x7c] sm:$0xf]
    %v7086 = vld [vmem:[#allocation8 + $0x80] sm:$0xf]
    %v7087 = vld [vmem:[#allocation8 + $0x84] sm:$0xf]
    %v7088 = vld [vmem:[#allocation8 + $0x88] sm:$0xf]
    %v7089 = vld [vmem:[#allocation8 + $0x8c] sm:$0xf]
    %v7090 = vld [vmem:[#allocation8 + $0x90] sm:$0xf]
    %v7091 = vld [vmem:[#allocation8 + $0x94] sm:$0xf]
    %v7092 = vld [vmem:[#allocation8 + $0x98] sm:$0xf]
    %v7093 = vld [vmem:[#allocation8 + $0x9c] sm:$0xf]
    %v7094 = vld [vmem:[#allocation8 + $0xa0] sm:$0xf]
    %v7095 = vld [vmem:[#allocation8 + $0xa4] sm:$0xf]
    %v7096 = vld [vmem:[#allocation8 + $0xa8] sm:$0xf]
    %v7097 = vld [vmem:[#allocation8 + $0xac] sm:$0xf]
    %v7098 = vld [vmem:[#allocation8 + $0xb0] sm:$0xf]
    %v7099 = vld [vmem:[#allocation8 + $0xb4] sm:$0xf]
    %v7100 = vld [vmem:[#allocation8 + $0xb8] sm:$0xf]
    %v7101 = vld [vmem:[#allocation8 + $0xbc] sm:$0xf]
    %v7102 = vld [vmem:[#allocation8 + $0xc0] sm:$0xf]
    %v7103 = vld [vmem:[#allocation8 + $0xc4] sm:$0xf]
    %v7104 = vld [vmem:[#allocation8 + $0xc8] sm:$0xf]
    %v7105 = vld [vmem:[#allocation8 + $0xcc] sm:$0xf]
    %v7106 = vld [vmem:[#allocation8 + $0xd0] sm:$0xf]
    %v7107 = vld [vmem:[#allocation8 + $0xd4] sm:$0xf]
    %v7108 = vld [vmem:[#allocation8 + $0xd8] sm:$0xf]
    %v7109 = vld [vmem:[#allocation8 + $0xdc] sm:$0xf]
    %v7110 = vld [vmem:[#allocation8 + $0xe0] sm:$0xf]
    %v7111 = vld [vmem:[#allocation8 + $0xe4] sm:$0xf]
    %v7112 = vld [vmem:[#allocation8 + $0xe8] sm:$0xf]
    %v7113 = vld [vmem:[#allocation8 + $0xec] sm:$0xf]
    %v7114 = vld [vmem:[#allocation8 + $0xf0] sm:$0xf]
    %v7115 = vld [vmem:[#allocation8 + $0xf4] sm:$0xf]
    %v7116 = vld [vmem:[#allocation8 + $0xf8] sm:$0xf]
    %v7117 = vld [vmem:[#allocation8 + $0xfc] sm:$0xf]
    %v7118 = vld [vmem:[%s9] sm:$0x1]
    %v7120 = vlaneseq
    %v7121 = vshrl.u32 %v7120, 7
    %v7122 = vsub.s32 0, %v7121
    %v7123 = vrot.slane %v7118, %v7122
    %v7189 = vunpack.c.l.b16 %v7054
    %v7190 = vunpack.c.l.b16 %v7055
    %v7191 = vunpack.c.l.b16 %v7056
    %v7192 = vunpack.c.l.b16 %v7057
    %v7193 = vunpack.c.l.b16 %v7058
    %v7194 = vunpack.c.l.b16 %v7059
    %v7195 = vunpack.c.l.b16 %v7060
    %v7196 = vunpack.c.l.b16 %v7061
    %v7197 = vunpack.c.l.b16 %v7062
    %v7198 = vunpack.c.l.b16 %v7063
    %v7199 = vunpack.c.l.b16 %v7064
    %v7200 = vunpack.c.l.b16 %v7065
    %v7201 = vunpack.c.l.b16 %v7066
    %v7202 = vunpack.c.l.b16 %v7067
    %v7203 = vunpack.c.l.b16 %v7068
    %v7204 = vunpack.c.l.b16 %v7069
    %v7205 = vunpack.c.l.b16 %v7070
    %v7206 = vunpack.c.l.b16 %v7071
    %v7207 = vunpack.c.l.b16 %v7072
    %v7208 = vunpack.c.l.b16 %v7073
    %v7209 = vunpack.c.l.b16 %v7074
    %v7210 = vunpack.c.l.b16 %v7075
    %v7211 = vunpack.c.l.b16 %v7076
    %v7212 = vunpack.c.l.b16 %v7077
    %v7213 = vunpack.c.l.b16 %v7078
    %v7214 = vunpack.c.l.b16 %v7079
    %v7215 = vunpack.c.l.b16 %v7080
    %v7216 = vunpack.c.l.b16 %v7081
    %v7217 = vunpack.c.l.b16 %v7082
    %v7218 = vunpack.c.l.b16 %v7083
    %v7219 = vunpack.c.l.b16 %v7084
    %v7220 = vunpack.c.l.b16 %v7085
    %v7221 = vunpack.c.l.b16 %v7086
    %v7222 = vunpack.c.l.b16 %v7087
    %v7223 = vunpack.c.l.b16 %v7088
    %v7224 = vunpack.c.l.b16 %v7089
    %v7225 = vunpack.c.l.b16 %v7090
    %v7226 = vunpack.c.l.b16 %v7091
    %v7227 = vunpack.c.l.b16 %v7092
    %v7228 = vunpack.c.l.b16 %v7093
    %v7229 = vunpack.c.l.b16 %v7094
    %v7230 = vunpack.c.l.b16 %v7095
    %v7231 = vunpack.c.l.b16 %v7096
    %v7232 = vunpack.c.l.b16 %v7097
    %v7233 = vunpack.c.l.b16 %v7098
    %v7234 = vunpack.c.l.b16 %v7099
    %v7235 = vunpack.c.l.b16 %v7100
    %v7236 = vunpack.c.l.b16 %v7101
    %v7237 = vunpack.c.l.b16 %v7102
    %v7238 = vunpack.c.l.b16 %v7103
    %v7239 = vunpack.c.l.b16 %v7104
    %v7240 = vunpack.c.l.b16 %v7105
    %v7241 = vunpack.c.l.b16 %v7106
    %v7242 = vunpack.c.l.b16 %v7107
    %v7243 = vunpack.c.l.b16 %v7108
    %v7244 = vunpack.c.l.b16 %v7109
    %v7245 = vunpack.c.l.b16 %v7110
    %v7246 = vunpack.c.l.b16 %v7111
    %v7247 = vunpack.c.l.b16 %v7112
    %v7248 = vunpack.c.l.b16 %v7113
    %v7249 = vunpack.c.l.b16 %v7114
    %v7250 = vunpack.c.l.b16 %v7115
    %v7251 = vunpack.c.l.b16 %v7116
    %v7252 = vunpack.c.l.b16 %v7117
    %v7253 = vpack.c.b16 %v7190, %v7189
    %v7254 = vpack.c.b16 %v7192, %v7191
    %v7255 = vpack.c.b16 %v7194, %v7193
    %v7256 = vpack.c.b16 %v7196, %v7195
    %v7257 = vpack.c.b16 %v7198, %v7197
    %v7258 = vpack.c.b16 %v7200, %v7199
    %v7259 = vpack.c.b16 %v7202, %v7201
    %v7260 = vpack.c.b16 %v7204, %v7203
    %v7261 = vpack.c.b16 %v7206, %v7205
    %v7262 = vpack.c.b16 %v7208, %v7207
    %v7263 = vpack.c.b16 %v7210, %v7209
    %v7264 = vpack.c.b16 %v7212, %v7211
    %v7265 = vpack.c.b16 %v7214, %v7213
    %v7266 = vpack.c.b16 %v7216, %v7215
    %v7267 = vpack.c.b16 %v7218, %v7217
    %v7268 = vpack.c.b16 %v7220, %v7219
    %v7269 = vpack.c.b16 %v7222, %v7221
    %v7270 = vpack.c.b16 %v7224, %v7223
    %v7271 = vpack.c.b16 %v7226, %v7225
    %v7272 = vpack.c.b16 %v7228, %v7227
    %v7273 = vpack.c.b16 %v7230, %v7229
    %v7274 = vpack.c.b16 %v7232, %v7231
    %v7275 = vpack.c.b16 %v7234, %v7233
    %v7276 = vpack.c.b16 %v7236, %v7235
    %v7277 = vpack.c.b16 %v7238, %v7237
    %v7278 = vpack.c.b16 %v7240, %v7239
    %v7279 = vpack.c.b16 %v7242, %v7241
    %v7280 = vpack.c.b16 %v7244, %v7243
    %v7281 = vpack.c.b16 %v7246, %v7245
    %v7282 = vpack.c.b16 %v7248, %v7247
    %v7283 = vpack.c.b16 %v7250, %v7249
    %v7284 = vpack.c.b16 %v7252, %v7251
    %7317 = vmatprep.subr.bf16.mxu0 0
    %7318 = vmatpush1.bf16.msra.mxu0 %v7253
    %7319 = vmatprep.subr.bf16.mxu0 0
    %7320 = vmatpush1.bf16.msra.mxu0 %v7254
    %7321 = vmatprep.subr.bf16.mxu0 0
    %7322 = vmatpush1.bf16.msra.mxu0 %v7255
    %7323 = vmatprep.subr.bf16.mxu0 0
    %7324 = vmatpush1.bf16.msra.mxu0 %v7256
    %7325 = vmatprep.subr.bf16.mxu0 0
    %7326 = vmatpush1.bf16.msra.mxu0 %v7257
    %7327 = vmatprep.subr.bf16.mxu0 0
    %7328 = vmatpush1.bf16.msra.mxu0 %v7258
    %7329 = vmatprep.subr.bf16.mxu0 0
    %7330 = vmatpush1.bf16.msra.mxu0 %v7259
    %7331 = vmatprep.subr.bf16.mxu0 0
    %7332 = vmatpush1.bf16.msra.mxu0 %v7260
    %7333 = vmatprep.subr.bf16.mxu0 0
    %7334 = vmatpush1.bf16.msra.mxu0 %v7261
    %7335 = vmatprep.subr.bf16.mxu0 0
    %7336 = vmatpush1.bf16.msra.mxu0 %v7262
    %7337 = vmatprep.subr.bf16.mxu0 0
    %7338 = vmatpush1.bf16.msra.mxu0 %v7263
    %7339 = vmatprep.subr.bf16.mxu0 0
    %7340 = vmatpush1.bf16.msra.mxu0 %v7264
    %7341 = vmatprep.subr.bf16.mxu0 0
    %7342 = vmatpush1.bf16.msra.mxu0 %v7265
    %7343 = vmatprep.subr.bf16.mxu0 0
    %7344 = vmatpush1.bf16.msra.mxu0 %v7266
    %7345 = vmatprep.subr.bf16.mxu0 0
    %7346 = vmatpush1.bf16.msra.mxu0 %v7267
    %7347 = vmatprep.subr.bf16.mxu0 0
    %7348 = vmatpush1.bf16.msra.mxu0 %v7268
    %7349 = vmatprep.mubr.bf16.mxu0 %v7051
    %7350 = vmatmul.mubr.bf16.gmra.mrb[0].mxu0 %v7050
    %v7351 = vpop.f32.mrb[0].mxu0
    %v7352 = vadd.f32 %v7123, %v7351
    %v7353 = vpop.f32.mrb[0].mxu0
    %v7354 = vpop.f32.mrb[0].mxu0
    %v7355 = vpop.f32.mrb[0].mxu0
    %7356 = vdwg.mxu0
    %7357 = vmatprep.subr.bf16.mxu0 0
    %7358 = vmatpush1.bf16.msra.mxu0 %v7269
    %7359 = vmatprep.subr.bf16.mxu0 0
    %7360 = vmatpush1.bf16.msra.mxu0 %v7270
    %7361 = vmatprep.subr.bf16.mxu0 0
    %7362 = vmatpush1.bf16.msra.mxu0 %v7271
    %7363 = vmatprep.subr.bf16.mxu0 0
    %7364 = vmatpush1.bf16.msra.mxu0 %v7272
    %7365 = vmatprep.subr.bf16.mxu0 0
    %7366 = vmatpush1.bf16.msra.mxu0 %v7273
    %7367 = vmatprep.subr.bf16.mxu0 0
    %7368 = vmatpush1.bf16.msra.mxu0 %v7274
    %7369 = vmatprep.subr.bf16.mxu0 0
    %7370 = vmatpush1.bf16.msra.mxu0 %v7275
    %7371 = vmatprep.subr.bf16.mxu0 0
    %7372 = vmatpush1.bf16.msra.mxu0 %v7276
    %7373 = vmatprep.subr.bf16.mxu0 0
    %7374 = vmatpush1.bf16.msra.mxu0 %v7277
    %7375 = vmatprep.subr.bf16.mxu0 0
    %7376 = vmatpush1.bf16.msra.mxu0 %v7278
    %7377 = vmatprep.subr.bf16.mxu0 0
    %7378 = vmatpush1.bf16.msra.mxu0 %v7279
    %7379 = vmatprep.subr.bf16.mxu0 0
    %7380 = vmatpush1.bf16.msra.mxu0 %v7280
    %7381 = vmatprep.subr.bf16.mxu0 0
    %7382 = vmatpush1.bf16.msra.mxu0 %v7281
    %7383 = vmatprep.subr.bf16.mxu0 0
    %7384 = vmatpush1.bf16.msra.mxu0 %v7282
    %7385 = vmatprep.subr.bf16.mxu0 0
    %7386 = vmatpush1.bf16.msra.mxu0 %v7283
    %7387 = vmatprep.subr.bf16.mxu0 0
    %7388 = vmatpush1.bf16.msra.mxu0 %v7284
    %7389 = vmatprep.mubr.bf16.mxu0 %v7053
    %7390 = vmatmul.mubr.bf16.gmra.mrb[0].mxu0 %v7052
    %v7391 = vpop.f32.mrb[0].mxu0
    %v7392 = vadd.f32 %v7352, %v7391
    %v7393 = vpop.f32.mrb[0].mxu0
    %v7394 = vpop.f32.mrb[0].mxu0
    %v7395 = vpop.f32.mrb[0].mxu0
    %7396 = vdwg.mxu0
    %7397 = vst [vmem:[%s10] sm:$0xff] %v7392
    // Predicated region
    $region58: #{model_forward.1} parent=1 // pred_check
      _
    $region59: #{model_forward.1} parent=1 // pred_check_branch
      %7399 = sbr.rel (0) target = $region61
    $region60: #{model_forward.1} parent=1 // pred_region
      _
    $region61: #{model_forward.1} parent=1 // pred_fallthru
      _
    // Predicated region
    $region62: #{model_forward.1} parent=1 // pred_check
      _
    $region63: #{model_forward.1} parent=1 // pred_check_branch
      %7401 = sbr.rel (0) target = $region65
    $region64: #{model_forward.1} parent=1 // pred_region
      _
    $region65: #{model_forward.1} parent=1 // pred_fallthru
      _
    %7402 = vsyncpa [#allocation4], 1
    %7403 = vsyncpa [#allocation6], 1
    %7404 = vsyncpa [#allocation9], 1

</llo_original>
